<compile_context>
chip_gen: v5e
topology: v5e:2x2
jax: 0.10.0
libtpu: 0.0.40
codegen_flags: <defaults>
</compile_context>

<pallas_src>
import functools
import math

import jax
import jax.numpy as jnp
from jax.experimental import pallas as pl
from jax.experimental.pallas import tpu as pltpu


# ----------------------------- in-kernel helpers -----------------------------

def _layer_norm(x, g, b, eps=1e-5):
    mu = jnp.mean(x, axis=-1, keepdims=True)
    var = jnp.mean(jnp.square(x - mu), axis=-1, keepdims=True)
    return (x - mu) * jax.lax.rsqrt(var + eps) * g + b


def _attention(q, k, v, bias, num_heads):
    """Multi-head attention for one batch tile.

    q : (Tq, H) f32, already scaled by 1/sqrt(head_dim).   k, v : (Tk, H) f32.
    bias : additive mask bias broadcastable to (num_heads, Tq, Tk).
    Heads are the leading batch dim of a single dot_general (no per-head loop/concat).
    """
    Tq, H = q.shape
    Tk = k.shape[0]
    hd = H // num_heads
    qh = jnp.swapaxes(q.reshape(Tq, num_heads, hd), 0, 1).astype(jnp.bfloat16)  # (nh,Tq,hd)
    kh = jnp.swapaxes(k.reshape(Tk, num_heads, hd), 0, 1).astype(jnp.bfloat16)  # (nh,Tk,hd)
    vh = jnp.swapaxes(v.reshape(Tk, num_heads, hd), 0, 1).astype(jnp.bfloat16)  # (nh,Tk,hd)
    s = jax.lax.dot_general(qh, kh, (((2,), (2,)), ((0,), (0,))),
                            preferred_element_type=jnp.float32)                  # (nh,Tq,Tk)
    s = s + bias
    s = s - jnp.max(s, axis=-1, keepdims=True)
    p = jnp.exp(s)
    p = p / jnp.sum(p, axis=-1, keepdims=True)       # exact softmax (parity w/ reference)
    o = jax.lax.dot_general(p.astype(jnp.bfloat16), vh, (((2,), (1,)), ((0,), (0,))),
                            preferred_element_type=jnp.float32)                  # (nh,Tq,hd)
    return jnp.swapaxes(o, 0, 1).reshape(Tq, H)


# ------------------------------ layer-stack kernel ----------------------------

def decoder_layer_kernel(x_ref, mem_ref, sbias_ref, cbias_ref,
                         wqkv_s_ref, bqkv_s_ref, wo_s_ref, bo_s_ref,
                         wq_c_ref, bq_c_ref, wkv_c_ref, bkv_c_ref,
                         wo_c_ref, bo_c_ref,
                         lng_ref, lnb_ref,
                         w1_ref, b1_ref, w2_ref, b2_ref,
                         fng_ref, fnb_ref,
                         xf_ref,
                         x_scr,
                         *, num_heads):
    layer = pl.program_id(1)
    n_layers = pl.num_programs(1)

    @pl.when(layer == 0)
    def _():
        x_scr[...] = x_ref[0]          # (T, H): embedded + position-encoded tokens

    x = x_scr[...]                      # (T, H) f32, carried across the layer axis
    H = x.shape[-1]
    hd = H // num_heads
    qk_scale = 1.0 / math.sqrt(hd)

    lng = lng_ref[0]                    # (3, H)
    lnb = lnb_ref[0]

    # ---- self-attention: fused QKV projection, one (H, 3H) MXU pass ----
    xb = x.astype(jnp.bfloat16)
    qkv = jnp.dot(xb, wqkv_s_ref[0], preferred_element_type=jnp.float32) + bqkv_s_ref[0]
    q = qkv[:, :H] * qk_scale           # exact: scale applied to full projected q (incl. bias)
    k = qkv[:, H:2 * H]
    v = qkv[:, 2 * H:]
    sa = _attention(q, k, v, sbias_ref[...], num_heads)
    sa = jnp.dot(sa.astype(jnp.bfloat16), wo_s_ref[0],
                 preferred_element_type=jnp.float32) + bo_s_ref[0]
    x = _layer_norm(x + sa, lng[0], lnb[0])          # dropout = identity (eval mode)

    # ---- cross-attention: fused KV projection of memory ----
    xb = x.astype(jnp.bfloat16)
    q = (jnp.dot(xb, wq_c_ref[0], preferred_element_type=jnp.float32)
         + bq_c_ref[0]) * qk_scale
    kv = jnp.dot(mem_ref[0], wkv_c_ref[0],
                 preferred_element_type=jnp.float32) + bkv_c_ref[0]
    k = kv[:, :H]
    v = kv[:, H:]
    ca = _attention(q, k, v, cbias_ref[...], num_heads)
    ca = jnp.dot(ca.astype(jnp.bfloat16), wo_c_ref[0],
                 preferred_element_type=jnp.float32) + bo_c_ref[0]
    x = _layer_norm(x + ca, lng[1], lnb[1])

    # ---- feed-forward (ReLU fused with the bf16 downcast) ----
    xb = x.astype(jnp.bfloat16)
    h1 = jnp.maximum(jnp.dot(xb, w1_ref[0], preferred_element_type=jnp.float32)
                     + b1_ref[0], 0.0).astype(jnp.bfloat16)
    ff = jnp.dot(h1, w2_ref[0], preferred_element_type=jnp.float32) + b2_ref[0]
    x = _layer_norm(x + ff, lng[2], lnb[2])

    x_scr[...] = x

    # ---- final LayerNorm folded into the last layer step ----
    @pl.when(layer == n_layers - 1)
    def _():
        xf_ref[0] = _layer_norm(x, fng_ref[0], fnb_ref[0])


# ------------------------------- head kernels ---------------------------------

def head_logits_kernel(xf_ref, wout_ref, bout_ref, logits_ref):
    logits_ref[...] = (jnp.dot(xf_ref[...].astype(jnp.bfloat16), wout_ref[...],
                               preferred_element_type=jnp.float32) + bout_ref[...])


def cultural_kernel(xf_ref, wc_ref, bc_ref, cult_ref):
    cult_ref[...] = jnp.tanh(jnp.dot(xf_ref[...].astype(jnp.bfloat16), wc_ref[...],
                                     preferred_element_type=jnp.float32) + bc_ref[...])


# ------------------------------- Python wrapper --------------------------------

def _vmem_limit(block_bytes):
    # actual per-step blocks (double-buffered) + headroom for in-kernel temporaries;
    # never set below the platform default (32 MiB), cap under physical VMEM.
    est = int(block_bytes * 1.5) + (4 << 20)
    return max(32 << 20, min(est, 100 << 20))


def multilingual_decoder_forward(tgt, memory, params, tgt_mask=None, memory_mask=None,
                                 script_mask=None, *, num_heads):
    B, T = tgt.shape
    S = memory.shape[1]
    H = params["emb"].shape[1]
    L = params["wqkv_s"].shape[0]
    F = params["w1"].shape[-1]
    Vpad = params["wout"].shape[-1]
    V = params["vocab_size"]

    # embedding gather + positional encoding (+ dropout identity): plain JAX glue
    x_emb = (params["emb"][tgt] + params["pos"][0, :T]).astype(jnp.float32)      # (B,T,H)
    mem = memory.astype(jnp.bfloat16)                                             # (B,S,H)

    # hoist mask -> additive-bias conversion out of the kernel
    neg = jnp.float32(-1e9)
    if tgt_mask is None:
        tgt_mask = jnp.ones((T, T), jnp.float32)
    if memory_mask is None:
        memory_mask = jnp.ones((B, S), jnp.float32)
    if script_mask is None:
        script_mask = jnp.ones((B, S), jnp.float32)
    self_bias = jnp.where(tgt_mask > 0, 0.0, neg).astype(jnp.float32).reshape(1, T, T)
    cross_bias = jnp.where((memory_mask * script_mask) > 0, 0.0, neg
                           ).astype(jnp.float32).reshape(B, 1, S)

    # ---- kernel 1: the layer stack, grid = (batch "parallel", layer "arbitrary") ----
    def bspec(block_shape, kind):
        nd = len(block_shape)
        if kind == "b":      # indexed by batch tile
            imap = lambda b, l: (b,) + (0,) * (nd - 1)
        elif kind == "l":    # indexed by layer
            imap = lambda b, l: (l,) + (0,) * (nd - 1)
        else:                # grid-invariant
            imap = lambda b, l: (0,) * nd
        return pl.BlockSpec(block_shape, imap)

    operands = [
        (x_emb,             (1, T, H),      "b"),
        (mem,               (1, S, H),      "b"),
        (self_bias,         (1, T, T),      "c"),
        (cross_bias,        (1, 1, S),      "b"),
        (params["wqkv_s"],  (1, H, 3 * H),  "l"),
        (params["bqkv_s"],  (1, 1, 3 * H),  "l"),
        (params["wo_s"],    (1, H, H),      "l"),
        (params["bo_s"],    (1, 1, H),      "l"),
        (params["wq_c"],    (1, H, H),      "l"),
        (params["bq_c"],    (1, 1, H),      "l"),
        (params["wkv_c"],   (1, H, 2 * H),  "l"),
        (params["bkv_c"],   (1, 1, 2 * H),  "l"),
        (params["wo_c"],    (1, H, H),      "l"),
        (params["bo_c"],    (1, 1, H),      "l"),
        (params["lng"],     (1, 3, H),      "l"),
        (params["lnb"],     (1, 3, H),      "l"),
        (params["w1"],      (1, H, F),      "l"),
        (params["b1"],      (1, 1, F),      "l"),
        (params["w2"],      (1, F, H),      "l"),
        (params["b2"],      (1, 1, H),      "l"),
        (params["fng"],     (1, H),         "c"),
        (params["fnb"],     (1, H),         "c"),
    ]
    in_specs = [bspec(bs, kind) for _, bs, kind in operands]
    in_arrays = [a for a, _, _ in operands]

    layer_block_bytes = sum(math.prod(bs) * a.dtype.itemsize for a, bs, _ in operands)
    layer_block_bytes = 2 * (layer_block_bytes + T * H * 4)            # double-buffered + out
    layer_block_bytes += T * H * 4                                     # carried scratch
    layer_block_bytes += (T * 3 * H * 4                                # qkv temp
                          + 3 * num_heads * T * max(T, S) * 4          # scores/probs temps
                          + T * F * 4)                                 # ffn hidden temp

    xf = pl.pallas_call(
        functools.partial(decoder_layer_kernel, num_heads=num_heads),
        out_shape=jax.ShapeDtypeStruct((B, T, H), jnp.float32),
        grid=(B, L),
        in_specs=in_specs,
        out_specs=pl.BlockSpec((1, T, H), lambda b, l: (b, 0, 0)),
        scratch_shapes=[pltpu.VMEM((T, H), jnp.float32)],
        compiler_params=pltpu.CompilerParams(
            dimension_semantics=("parallel", "arbitrary"),
            vmem_limit_bytes=_vmem_limit(layer_block_bytes)),
    )(*in_arrays)

    xf_flat = xf.reshape(B * T, H)

    # ---- kernel 2: vocab-tiled, lane-dense output projection ("parallel" vocab axis) ----
    TV = 128
    for cand in (2048, 1024, 512, 256):
        if Vpad % cand == 0 and Vpad // cand >= 2:
            TV = cand
            break
    head_block_bytes = 2 * (B * T * H * 4 + H * TV * params["wout"].dtype.itemsize
                            + TV * 4 + B * T * TV * 4)

    logits_flat = pl.pallas_call(
        head_logits_kernel,
        out_shape=jax.ShapeDtypeStruct((B * T, Vpad), jnp.float32),
        grid=(Vpad // TV,),
        in_specs=[pl.BlockSpec((B * T, H), lambda j: (0, 0)),
                  pl.BlockSpec((H, TV), lambda j: (0, j)),
                  pl.BlockSpec((1, TV), lambda j: (0, j))],
        out_specs=pl.BlockSpec((B * T, TV), lambda j: (0, j)),
        compiler_params=pltpu.CompilerParams(
            dimension_semantics=("parallel",),
            vmem_limit_bytes=_vmem_limit(head_block_bytes)),
    )(xf_flat, params["wout"], params["bout"])

    # ---- kernel 3: cultural mapper (Linear(H, H) + tanh) ----
    cult_block_bytes = 2 * (B * T * H * 4 + H * H * 2 + H * 4 + B * T * H * 4)
    cult_flat = pl.pallas_call(
        cultural_kernel,
        out_shape=jax.ShapeDtypeStruct((B * T, H), jnp.float32),
        grid=(1,),
        in_specs=[pl.BlockSpec((B * T, H), lambda i: (0, 0)),
                  pl.BlockSpec((H, H), lambda i: (0, 0)),
                  pl.BlockSpec((1, H), lambda i: (0, 0))],
        out_specs=pl.BlockSpec((B * T, H), lambda i: (0, 0)),
        compiler_params=pltpu.CompilerParams(
            dimension_semantics=("arbitrary",),
            vmem_limit_bytes=_vmem_limit(cult_block_bytes)),
    )(xf_flat, params["wc"], params["bc"])

    logits = logits_flat[:, :V].reshape(B, T, V)     # strip lane padding
    cult = cult_flat.reshape(B, T, H)
    return logits, {"cultural_embedding": cult}


# ------------------------------- parameter init --------------------------------

def init_params(key, vocab_size, hidden, num_layers, num_heads, max_length):
    ff = 4 * hidden
    vpad = ((vocab_size + 127) // 128) * 128          # lane-dense logits (multiple of 128)
    keys = jax.random.split(key, 10)

    def n(k, shape, s=0.02):
        return jax.random.normal(k, shape, jnp.float32) * s

    wout = jnp.zeros((hidden, vpad), jnp.float32).at[:, :vocab_size].set(
        n(keys[7], (hidden, vocab_size)))

    return {
        "vocab_size": vocab_size,
        "emb": n(keys[0], (vocab_size, hidden)),
        "pos": jnp.zeros((1, max_length, hidden), jnp.float32),     # torch.zeros init
        # self-attention: fused Wq|Wk|Wv and separate Wo
        "wqkv_s": n(keys[1], (num_layers, hidden, 3 * hidden)).astype(jnp.bfloat16),
        "bqkv_s": jnp.zeros((num_layers, 1, 3 * hidden), jnp.float32),
        "wo_s": n(keys[2], (num_layers, hidden, hidden)).astype(jnp.bfloat16),
        "bo_s": jnp.zeros((num_layers, 1, hidden), jnp.float32),
        # cross-attention: Wq, fused Wk|Wv, Wo
        "wq_c": n(keys[3], (num_layers, hidden, hidden)).astype(jnp.bfloat16),
        "bq_c": jnp.zeros((num_layers, 1, hidden), jnp.float32),
        "wkv_c": n(keys[4], (num_layers, hidden, 2 * hidden)).astype(jnp.bfloat16),
        "bkv_c": jnp.zeros((num_layers, 1, 2 * hidden), jnp.float32),
        "wo_c": n(keys[5], (num_layers, hidden, hidden)).astype(jnp.bfloat16),
        "bo_c": jnp.zeros((num_layers, 1, hidden), jnp.float32),
        "lng": jnp.ones((num_layers, 3, hidden), jnp.float32),
        "lnb": jnp.zeros((num_layers, 3, hidden), jnp.float32),
        "w1": n(keys[6], (num_layers, hidden, ff)).astype(jnp.bfloat16),
        "b1": jnp.zeros((num_layers, 1, ff), jnp.float32),
        "w2": n(keys[8], (num_layers, ff, hidden)).astype(jnp.bfloat16),
        "b2": jnp.zeros((num_layers, 1, hidden), jnp.float32),
        "fng": jnp.ones((1, hidden), jnp.float32),
        "fnb": jnp.zeros((1, hidden), jnp.float32),
        "wout": wout.astype(jnp.bfloat16),
        "bout": jnp.zeros((1, vpad), jnp.float32),
        "wc": n(keys[9], (hidden, hidden)).astype(jnp.bfloat16),
        "bc": jnp.zeros((1, hidden), jnp.float32),
    }


# ------------------------------------ main --------------------------------------

if __name__ == "__main__":
    # head_dim = HIDDEN // NUM_HEADS = 128 keeps all lane slices / reshapes 128-aligned.
    VOCAB, HIDDEN, NUM_LAYERS, NUM_HEADS, MAX_LEN = 500, 256, 2, 2, 32
    B, T, S = 2, 8, 16

    key = jax.random.PRNGKey(0)
    k_par, k_tgt, k_mem = jax.random.split(key, 3)

    params = init_params(k_par, VOCAB, HIDDEN, NUM_LAYERS, NUM_HEADS, MAX_LEN)

    tgt = jax.random.randint(k_tgt, (B, T), 0, VOCAB, dtype=jnp.int32)
    memory = jax.random.normal(k_mem, (B, S, HIDDEN), jnp.float32)

    # causal target mask (1 = attend), full memory mask, script mask with last 2 positions off
    tgt_mask = jnp.tril(jnp.ones((T, T), jnp.float32))
    mem_mask = jnp.ones((B, S), jnp.float32)
    script_mask = jnp.ones((B, S), jnp.float32).at[:, -2:].set(0.0)

    logits, cultural_outputs = multilingual_decoder_forward(
        tgt, memory, params, tgt_mask, mem_mask, script_mask, num_heads=NUM_HEADS)

    jax.block_until_ready(logits)
    jax.block_until_ready(cultural_outputs["cultural_embedding"])

    assert logits.shape == (B, T, VOCAB)
    assert cultural_outputs["cultural_embedding"].shape == (B, T, HIDDEN)
    print("KERNEL_OK")
</pallas_src>

<mosaic_0001>
module attributes {stable_mosaic.version = 11 : i64} {
  func.func @decoder_layer_kernel(%arg0: i32, %arg1: i32, %arg2: memref<1x8x256xf32, #tpu.memory_space<vmem>>, %arg3: memref<1x16x256xbf16, #tpu.memory_space<vmem>>, %arg4: memref<1x8x8xf32, #tpu.memory_space<vmem>>, %arg5: memref<1x1x16xf32, #tpu.memory_space<vmem>>, %arg6: memref<1x256x768xbf16, #tpu.memory_space<vmem>>, %arg7: memref<1x1x768xf32, #tpu.memory_space<vmem>>, %arg8: memref<1x256x256xbf16, #tpu.memory_space<vmem>>, %arg9: memref<1x1x256xf32, #tpu.memory_space<vmem>>, %arg10: memref<1x256x256xbf16, #tpu.memory_space<vmem>>, %arg11: memref<1x1x256xf32, #tpu.memory_space<vmem>>, %arg12: memref<1x256x512xbf16, #tpu.memory_space<vmem>>, %arg13: memref<1x1x512xf32, #tpu.memory_space<vmem>>, %arg14: memref<1x256x256xbf16, #tpu.memory_space<vmem>>, %arg15: memref<1x1x256xf32, #tpu.memory_space<vmem>>, %arg16: memref<1x3x256xf32, #tpu.memory_space<vmem>>, %arg17: memref<1x3x256xf32, #tpu.memory_space<vmem>>, %arg18: memref<1x256x1024xbf16, #tpu.memory_space<vmem>>, %arg19: memref<1x1x1024xf32, #tpu.memory_space<vmem>>, %arg20: memref<1x1024x256xbf16, #tpu.memory_space<vmem>>, %arg21: memref<1x1x256xf32, #tpu.memory_space<vmem>>, %arg22: memref<1x256xf32, #tpu.memory_space<vmem>>, %arg23: memref<1x256xf32, #tpu.memory_space<vmem>>, %arg24: memref<1x8x256xf32, #tpu.memory_space<vmem>>, %arg25: memref<8x256xf32, #tpu.memory_space<vmem>>) attributes {dimension_semantics = [#tpu.dimension_semantics<parallel>, #tpu.dimension_semantics<arbitrary>], iteration_bounds = array<i64: 2, 2>, scalar_prefetch = 0 : i64, scratch_operands = 1 : i64, tpu.core_type = #tpu.core_type<tc>, window_params = [{transform_indices = @transform_0, window_bounds = array<i64: 1, 8, 256>}, {transform_indices = @transform_1, window_bounds = array<i64: 1, 16, 256>}, {pipeline_mode = #tpu.pipeline_mode<synchronous>, transform_indices = @transform_2, window_bounds = array<i64: 1, 8, 8>}, {transform_indices = @transform_3, window_bounds = array<i64: 1, 1, 16>}, {transform_indices = @transform_4, window_bounds = array<i64: 1, 256, 768>}, {transform_indices = @transform_5, window_bounds = array<i64: 1, 1, 768>}, {transform_indices = @transform_6, window_bounds = array<i64: 1, 256, 256>}, {transform_indices = @transform_7, window_bounds = array<i64: 1, 1, 256>}, {transform_indices = @transform_8, window_bounds = array<i64: 1, 256, 256>}, {transform_indices = @transform_9, window_bounds = array<i64: 1, 1, 256>}, {transform_indices = @transform_10, window_bounds = array<i64: 1, 256, 512>}, {transform_indices = @transform_11, window_bounds = array<i64: 1, 1, 512>}, {transform_indices = @transform_12, window_bounds = array<i64: 1, 256, 256>}, {transform_indices = @transform_13, window_bounds = array<i64: 1, 1, 256>}, {transform_indices = @transform_14, window_bounds = array<i64: 1, 3, 256>}, {transform_indices = @transform_15, window_bounds = array<i64: 1, 3, 256>}, {transform_indices = @transform_16, window_bounds = array<i64: 1, 256, 1024>}, {transform_indices = @transform_17, window_bounds = array<i64: 1, 1, 1024>}, {transform_indices = @transform_18, window_bounds = array<i64: 1, 1024, 256>}, {transform_indices = @transform_19, window_bounds = array<i64: 1, 1, 256>}, {pipeline_mode = #tpu.pipeline_mode<synchronous>, transform_indices = @transform_20, window_bounds = array<i64: 1, 256>}, {pipeline_mode = #tpu.pipeline_mode<synchronous>, transform_indices = @transform_21, window_bounds = array<i64: 1, 256>}, {transform_indices = @transform_22, window_bounds = array<i64: 1, 8, 256>}]} {
    %c0_i32 = arith.constant 0 : i32
    %0 = arith.cmpi eq, %arg1, %c0_i32 : i32
    %1 = arith.extui %0 : i1 to i32
    %c0_i32_0 = arith.constant 0 : i32
    %2 = arith.cmpi ne, %1, %c0_i32_0 : i32
    scf.if %2 {
      %c0_94 = arith.constant 0 : index
      %c0_95 = arith.constant 0 : index
      %c0_96 = arith.constant 0 : index
      %219 = vector.load %arg2[%c0_94, %c0_95, %c0_96] : memref<1x8x256xf32, #tpu.memory_space<vmem>>, vector<1x8x256xf32>
      %220 = vector.shape_cast %219 : vector<1x8x256xf32> to vector<8x256xf32>
      %c0_97 = arith.constant 0 : index
      %c0_98 = arith.constant 0 : index
      %221 = vector.load %arg25[%c0_97, %c0_98] : memref<8x256xf32, #tpu.memory_space<vmem>>, vector<8x256xf32>
      tpu.vector_store %arg25[%c0_97, %c0_98], %220 {strides = array<i32>} : memref<8x256xf32, #tpu.memory_space<vmem>>, vector<8x256xf32>,
    } else {
    }
    %c0 = arith.constant 0 : index
    %c0_1 = arith.constant 0 : index
    %3 = vector.load %arg25[%c0, %c0_1] : memref<8x256xf32, #tpu.memory_space<vmem>>, vector<8x256xf32>
    %c0_2 = arith.constant 0 : index
    %c0_3 = arith.constant 0 : index
    %c0_4 = arith.constant 0 : index
    %4 = vector.load %arg16[%c0_2, %c0_3, %c0_4] : memref<1x3x256xf32, #tpu.memory_space<vmem>>, vector<1x3x256xf32>
    %5 = vector.shape_cast %4 : vector<1x3x256xf32> to vector<3x256xf32>
    %c0_5 = arith.constant 0 : index
    %c0_6 = arith.constant 0 : index
    %c0_7 = arith.constant 0 : index
    %6 = vector.load %arg17[%c0_5, %c0_6, %c0_7] : memref<1x3x256xf32, #tpu.memory_space<vmem>>, vector<1x3x256xf32>
    %7 = vector.shape_cast %6 : vector<1x3x256xf32> to vector<3x256xf32>
    %8 = arith.truncf %3 : vector<8x256xf32> to vector<8x256xbf16>
    %c0_8 = arith.constant 0 : index
    %c0_9 = arith.constant 0 : index
    %c0_10 = arith.constant 0 : index
    %9 = vector.load %arg6[%c0_8, %c0_9, %c0_10] : memref<1x256x768xbf16, #tpu.memory_space<vmem>>, vector<1x256x768xbf16>
    %10 = vector.shape_cast %9 : vector<1x256x768xbf16> to vector<256x768xbf16>
    %cst = arith.constant dense<0.000000e+00> : vector<8x768xf32>
    %11 = tpu.matmul %8, %10, %cst {dimension_numbers = #tpu.dot_dimension_numbers<[1], [0], [0], [1], [0, 0, 1, 1], [], []>} : vector<8x256xbf16>, vector<256x768xbf16>, vector<8x768xf32> -> vector<8x768xf32>
    %c0_11 = arith.constant 0 : index
    %c0_12 = arith.constant 0 : index
    %c0_13 = arith.constant 0 : index
    %12 = vector.load %arg7[%c0_11, %c0_12, %c0_13] : memref<1x1x768xf32, #tpu.memory_space<vmem>>, vector<1x1x768xf32>
    %13 = vector.shape_cast %12 : vector<1x1x768xf32> to vector<1x768xf32>
    %14 = vector.broadcast %13 : vector<1x768xf32> to vector<8x768xf32>
    %15 = arith.addf %11, %14 : vector<8x768xf32>
    %16 = vector.extract_strided_slice %15 {offsets = [0, 0], sizes = [8, 256], strides = [1, 1]} : vector<8x768xf32> to vector<8x256xf32>
    %cst_14 = arith.constant 0.0883883461 : f32
    %17 = vector.broadcast %cst_14 : f32 to vector<8x256xf32>
    %18 = arith.mulf %16, %17 : vector<8x256xf32>
    %19 = vector.extract_strided_slice %15 {offsets = [0, 256], sizes = [8, 256], strides = [1, 1]} : vector<8x768xf32> to vector<8x256xf32>
    %20 = vector.extract_strided_slice %15 {offsets = [0, 512], sizes = [8, 256], strides = [1, 1]} : vector<8x768xf32> to vector<8x256xf32>
    %c0_15 = arith.constant 0 : index
    %c0_16 = arith.constant 0 : index
    %c0_17 = arith.constant 0 : index
    %21 = vector.load %arg4[%c0_15, %c0_16, %c0_17] : memref<1x8x8xf32, #tpu.memory_space<vmem>>, vector<1x8x8xf32>
    %22 = vector.shape_cast %18 : vector<8x256xf32> to vector<8x2x128xf32>
    %23 = tpu.transpose %22, [1, 0, 2] : vector<8x2x128xf32> -> vector<2x8x128xf32>
    %24 = arith.truncf %23 : vector<2x8x128xf32> to vector<2x8x128xbf16>
    %25 = vector.shape_cast %19 : vector<8x256xf32> to vector<8x2x128xf32>
    %26 = tpu.transpose %25, [1, 0, 2] : vector<8x2x128xf32> -> vector<2x8x128xf32>
    %27 = arith.truncf %26 : vector<2x8x128xf32> to vector<2x8x128xbf16>
    %28 = vector.shape_cast %20 : vector<8x256xf32> to vector<8x2x128xf32>
    %29 = tpu.transpose %28, [1, 0, 2] : vector<8x2x128xf32> -> vector<2x8x128xf32>
    %30 = arith.truncf %29 : vector<2x8x128xf32> to vector<2x8x128xbf16>
    %cst_18 = arith.constant dense<0.000000e+00> : vector<2x8x8xf32>
    %31 = tpu.matmul %24, %27, %cst_18 {dimension_numbers = #tpu.dot_dimension_numbers<[2], [2], [1], [1], [0, 0, 0, 1, 1, 1], [0], [0]>} : vector<2x8x128xbf16>, vector<2x8x128xbf16>, vector<2x8x8xf32> -> vector<2x8x8xf32>
    %32 = vector.broadcast %21 : vector<1x8x8xf32> to vector<2x8x8xf32>
    %33 = arith.addf %31, %32 : vector<2x8x8xf32>
    %cst_19 = arith.constant dense<0xFF800000> : vector<2x8xf32>
    %34 = vector.multi_reduction <maximumf>, %33, %cst_19 [2] : vector<2x8x8xf32> to vector<2x8xf32>
    %35 = vector.shape_cast %34 : vector<2x8xf32> to vector<2x8x1xf32>
    %36 = vector.broadcast %35 : vector<2x8x1xf32> to vector<2x8x8xf32>
    %37 = arith.subf %33, %36 : vector<2x8x8xf32>
    %38 = math.exp %37 : vector<2x8x8xf32>
    %cst_20 = arith.constant dense<0.000000e+00> : vector<2x8xf32>
    %39 = vector.multi_reduction <add>, %38, %cst_20 [2] : vector<2x8x8xf32> to vector<2x8xf32>
    %40 = vector.shape_cast %39 : vector<2x8xf32> to vector<2x8x1xf32>
    %41 = vector.broadcast %40 : vector<2x8x1xf32> to vector<2x8x8xf32>
    %42 = arith.divf %38, %41 : vector<2x8x8xf32>
    %43 = arith.truncf %42 : vector<2x8x8xf32> to vector<2x8x8xbf16>
    %cst_21 = arith.constant dense<0.000000e+00> : vector<2x8x128xf32>
    %44 = tpu.matmul %43, %30, %cst_21 {dimension_numbers = #tpu.dot_dimension_numbers<[2], [1], [1], [2], [0, 0, 0, 1, 1, 2], [0], [0]>} : vector<2x8x8xbf16>, vector<2x8x128xbf16>, vector<2x8x128xf32> -> vector<2x8x128xf32>
    %45 = tpu.transpose %44, [1, 0, 2] : vector<2x8x128xf32> -> vector<8x2x128xf32>
    %46 = vector.shape_cast %45 : vector<8x2x128xf32> to vector<8x256xf32>
    %47 = arith.truncf %46 : vector<8x256xf32> to vector<8x256xbf16>
    %c0_22 = arith.constant 0 : index
    %c0_23 = arith.constant 0 : index
    %c0_24 = arith.constant 0 : index
    %48 = vector.load %arg8[%c0_22, %c0_23, %c0_24] : memref<1x256x256xbf16, #tpu.memory_space<vmem>>, vector<1x256x256xbf16>
    %49 = vector.shape_cast %48 : vector<1x256x256xbf16> to vector<256x256xbf16>
    %cst_25 = arith.constant dense<0.000000e+00> : vector<8x256xf32>
    %50 = tpu.matmul %47, %49, %cst_25 {dimension_numbers = #tpu.dot_dimension_numbers<[1], [0], [0], [1], [0, 0, 1, 1], [], []>} : vector<8x256xbf16>, vector<256x256xbf16>, vector<8x256xf32> -> vector<8x256xf32>
    %c0_26 = arith.constant 0 : index
    %c0_27 = arith.constant 0 : index
    %c0_28 = arith.constant 0 : index
    %51 = vector.load %arg9[%c0_26, %c0_27, %c0_28] : memref<1x1x256xf32, #tpu.memory_space<vmem>>, vector<1x1x256xf32>
    %52 = vector.shape_cast %51 : vector<1x1x256xf32> to vector<1x256xf32>
    %53 = vector.broadcast %52 : vector<1x256xf32> to vector<8x256xf32>
    %54 = arith.addf %50, %53 : vector<8x256xf32>
    %55 = arith.addf %3, %54 : vector<8x256xf32>
    %56 = vector.extract_strided_slice %5 {offsets = [0, 0], sizes = [1, 256], strides = [1, 1]} : vector<3x256xf32> to vector<1x256xf32>
    %57 = vector.shape_cast %56 : vector<1x256xf32> to vector<256xf32>
    %58 = vector.extract_strided_slice %7 {offsets = [0, 0], sizes = [1, 256], strides = [1, 1]} : vector<3x256xf32> to vector<1x256xf32>
    %59 = vector.shape_cast %58 : vector<1x256xf32> to vector<256xf32>
    %cst_29 = arith.constant dense<0.000000e+00> : vector<8xf32>
    %60 = vector.multi_reduction <add>, %55, %cst_29 [1] : vector<8x256xf32> to vector<8xf32>
    %61 = vector.shape_cast %60 : vector<8xf32> to vector<8x1xf32>
    %cst_30 = arith.constant 2.560000e+02 : f32
    %62 = vector.broadcast %cst_30 : f32 to vector<8x1xf32>
    %63 = arith.divf %61, %62 : vector<8x1xf32>
    %64 = vector.broadcast %63 : vector<8x1xf32> to vector<8x256xf32>
    %65 = arith.subf %55, %64 : vector<8x256xf32>
    %66 = arith.mulf %65, %65 : vector<8x256xf32>
    %cst_31 = arith.constant dense<0.000000e+00> : vector<8xf32>
    %67 = vector.multi_reduction <add>, %66, %cst_31 [1] : vector<8x256xf32> to vector<8xf32>
    %68 = vector.shape_cast %67 : vector<8xf32> to vector<8x1xf32>
    %cst_32 = arith.constant 2.560000e+02 : f32
    %69 = vector.broadcast %cst_32 : f32 to vector<8x1xf32>
    %70 = arith.divf %68, %69 : vector<8x1xf32>
    %71 = vector.broadcast %63 : vector<8x1xf32> to vector<8x256xf32>
    %72 = arith.subf %55, %71 : vector<8x256xf32>
    %cst_33 = arith.constant 9.99999974E-6 : f32
    %73 = vector.broadcast %cst_33 : f32 to vector<8x1xf32>
    %74 = arith.addf %70, %73 : vector<8x1xf32>
    %75 = math.rsqrt %74 : vector<8x1xf32>
    %76 = vector.broadcast %75 : vector<8x1xf32> to vector<8x256xf32>
    %77 = arith.mulf %72, %76 : vector<8x256xf32>
    %78 = vector.shape_cast %57 : vector<256xf32> to vector<1x256xf32>
    %79 = vector.broadcast %78 : vector<1x256xf32> to vector<8x256xf32>
    %80 = arith.mulf %77, %79 : vector<8x256xf32>
    %81 = vector.shape_cast %59 : vector<256xf32> to vector<1x256xf32>
    %82 = vector.broadcast %81 : vector<1x256xf32> to vector<8x256xf32>
    %83 = arith.addf %80, %82 : vector<8x256xf32>
    %84 = arith.truncf %83 : vector<8x256xf32> to vector<8x256xbf16>
    %c0_34 = arith.constant 0 : index
    %c0_35 = arith.constant 0 : index
    %c0_36 = arith.constant 0 : index
    %85 = vector.load %arg10[%c0_34, %c0_35, %c0_36] : memref<1x256x256xbf16, #tpu.memory_space<vmem>>, vector<1x256x256xbf16>
    %86 = vector.shape_cast %85 : vector<1x256x256xbf16> to vector<256x256xbf16>
    %cst_37 = arith.constant dense<0.000000e+00> : vector<8x256xf32>
    %87 = tpu.matmul %84, %86, %cst_37 {dimension_numbers = #tpu.dot_dimension_numbers<[1], [0], [0], [1], [0, 0, 1, 1], [], []>} : vector<8x256xbf16>, vector<256x256xbf16>, vector<8x256xf32> -> vector<8x256xf32>
    %c0_38 = arith.constant 0 : index
    %c0_39 = arith.constant 0 : index
    %c0_40 = arith.constant 0 : index
    %88 = vector.load %arg11[%c0_38, %c0_39, %c0_40] : memref<1x1x256xf32, #tpu.memory_space<vmem>>, vector<1x1x256xf32>
    %89 = vector.shape_cast %88 : vector<1x1x256xf32> to vector<1x256xf32>
    %90 = vector.broadcast %89 : vector<1x256xf32> to vector<8x256xf32>
    %91 = arith.addf %87, %90 : vector<8x256xf32>
    %cst_41 = arith.constant 0.0883883461 : f32
    %92 = vector.broadcast %cst_41 : f32 to vector<8x256xf32>
    %93 = arith.mulf %91, %92 : vector<8x256xf32>
    %c0_42 = arith.constant 0 : index
    %c0_43 = arith.constant 0 : index
    %c0_44 = arith.constant 0 : index
    %94 = vector.load %arg3[%c0_42, %c0_43, %c0_44] : memref<1x16x256xbf16, #tpu.memory_space<vmem>>, vector<1x16x256xbf16>
    %95 = vector.shape_cast %94 : vector<1x16x256xbf16> to vector<16x256xbf16>
    %c0_45 = arith.constant 0 : index
    %c0_46 = arith.constant 0 : index
    %c0_47 = arith.constant 0 : index
    %96 = vector.load %arg12[%c0_45, %c0_46, %c0_47] : memref<1x256x512xbf16, #tpu.memory_space<vmem>>, vector<1x256x512xbf16>
    %97 = vector.shape_cast %96 : vector<1x256x512xbf16> to vector<256x512xbf16>
    %cst_48 = arith.constant dense<0.000000e+00> : vector<16x512xf32>
    %98 = tpu.matmul %95, %97, %cst_48 {dimension_numbers = #tpu.dot_dimension_numbers<[1], [0], [0], [1], [0, 0, 1, 1], [], []>} : vector<16x256xbf16>, vector<256x512xbf16>, vector<16x512xf32> -> vector<16x512xf32>
    %c0_49 = arith.constant 0 : index
    %c0_50 = arith.constant 0 : index
    %c0_51 = arith.constant 0 : index
    %99 = vector.load %arg13[%c0_49, %c0_50, %c0_51] : memref<1x1x512xf32, #tpu.memory_space<vmem>>, vector<1x1x512xf32>
    %100 = vector.shape_cast %99 : vector<1x1x512xf32> to vector<1x512xf32>
    %101 = vector.broadcast %100 : vector<1x512xf32> to vector<16x512xf32>
    %102 = arith.addf %98, %101 : vector<16x512xf32>
    %103 = vector.extract_strided_slice %102 {offsets = [0, 0], sizes = [16, 256], strides = [1, 1]} : vector<16x512xf32> to vector<16x256xf32>
    %104 = vector.extract_strided_slice %102 {offsets = [0, 256], sizes = [16, 256], strides = [1, 1]} : vector<16x512xf32> to vector<16x256xf32>
    %c0_52 = arith.constant 0 : index
    %c0_53 = arith.constant 0 : index
    %c0_54 = arith.constant 0 : index
    %105 = vector.load %arg5[%c0_52, %c0_53, %c0_54] : memref<1x1x16xf32, #tpu.memory_space<vmem>>, vector<1x1x16xf32>
    %106 = vector.shape_cast %93 : vector<8x256xf32> to vector<8x2x128xf32>
    %107 = tpu.transpose %106, [1, 0, 2] : vector<8x2x128xf32> -> vector<2x8x128xf32>
    %108 = arith.truncf %107 : vector<2x8x128xf32> to vector<2x8x128xbf16>
    %109 = vector.shape_cast %103 : vector<16x256xf32> to vector<16x2x128xf32>
    %110 = tpu.transpose %109, [1, 0, 2] : vector<16x2x128xf32> -> vector<2x16x128xf32>
    %111 = arith.truncf %110 : vector<2x16x128xf32> to vector<2x16x128xbf16>
    %112 = vector.shape_cast %104 : vector<16x256xf32> to vector<16x2x128xf32>
    %113 = tpu.transpose %112, [1, 0, 2] : vector<16x2x128xf32> -> vector<2x16x128xf32>
    %114 = arith.truncf %113 : vector<2x16x128xf32> to vector<2x16x128xbf16>
    %cst_55 = arith.constant dense<0.000000e+00> : vector<2x8x16xf32>
    %115 = tpu.matmul %108, %111, %cst_55 {dimension_numbers = #tpu.dot_dimension_numbers<[2], [2], [1], [1], [0, 0, 0, 1, 1, 1], [0], [0]>} : vector<2x8x128xbf16>, vector<2x16x128xbf16>, vector<2x8x16xf32> -> vector<2x8x16xf32>
    %116 = vector.broadcast %105 : vector<1x1x16xf32> to vector<2x8x16xf32>
    %117 = arith.addf %115, %116 : vector<2x8x16xf32>
    %cst_56 = arith.constant dense<0xFF800000> : vector<2x8xf32>
    %118 = vector.multi_reduction <maximumf>, %117, %cst_56 [2] : vector<2x8x16xf32> to vector<2x8xf32>
    %119 = vector.shape_cast %118 : vector<2x8xf32> to vector<2x8x1xf32>
    %120 = vector.broadcast %119 : vector<2x8x1xf32> to vector<2x8x16xf32>
    %121 = arith.subf %117, %120 : vector<2x8x16xf32>
    %122 = math.exp %121 : vector<2x8x16xf32>
    %cst_57 = arith.constant dense<0.000000e+00> : vector<2x8xf32>
    %123 = vector.multi_reduction <add>, %122, %cst_57 [2] : vector<2x8x16xf32> to vector<2x8xf32>
    %124 = vector.shape_cast %123 : vector<2x8xf32> to vector<2x8x1xf32>
    %125 = vector.broadcast %124 : vector<2x8x1xf32> to vector<2x8x16xf32>
    %126 = arith.divf %122, %125 : vector<2x8x16xf32>
    %127 = arith.truncf %126 : vector<2x8x16xf32> to vector<2x8x16xbf16>
    %cst_58 = arith.constant dense<0.000000e+00> : vector<2x8x128xf32>
    %128 = tpu.matmul %127, %114, %cst_58 {dimension_numbers = #tpu.dot_dimension_numbers<[2], [1], [1], [2], [0, 0, 0, 1, 1, 2], [0], [0]>} : vector<2x8x16xbf16>, vector<2x16x128xbf16>, vector<2x8x128xf32> -> vector<2x8x128xf32>
    %129 = tpu.transpose %128, [1, 0, 2] : vector<2x8x128xf32> -> vector<8x2x128xf32>
    %130 = vector.shape_cast %129 : vector<8x2x128xf32> to vector<8x256xf32>
    %131 = arith.truncf %130 : vector<8x256xf32> to vector<8x256xbf16>
    %c0_59 = arith.constant 0 : index
    %c0_60 = arith.constant 0 : index
    %c0_61 = arith.constant 0 : index
    %132 = vector.load %arg14[%c0_59, %c0_60, %c0_61] : memref<1x256x256xbf16, #tpu.memory_space<vmem>>, vector<1x256x256xbf16>
    %133 = vector.shape_cast %132 : vector<1x256x256xbf16> to vector<256x256xbf16>
    %cst_62 = arith.constant dense<0.000000e+00> : vector<8x256xf32>
    %134 = tpu.matmul %131, %133, %cst_62 {dimension_numbers = #tpu.dot_dimension_numbers<[1], [0], [0], [1], [0, 0, 1, 1], [], []>} : vector<8x256xbf16>, vector<256x256xbf16>, vector<8x256xf32> -> vector<8x256xf32>
    %c0_63 = arith.constant 0 : index
    %c0_64 = arith.constant 0 : index
    %c0_65 = arith.constant 0 : index
    %135 = vector.load %arg15[%c0_63, %c0_64, %c0_65] : memref<1x1x256xf32, #tpu.memory_space<vmem>>, vector<1x1x256xf32>
    %136 = vector.shape_cast %135 : vector<1x1x256xf32> to vector<1x256xf32>
    %137 = vector.broadcast %136 : vector<1x256xf32> to vector<8x256xf32>
    %138 = arith.addf %134, %137 : vector<8x256xf32>
    %139 = arith.addf %83, %138 : vector<8x256xf32>
    %140 = vector.extract_strided_slice %5 {offsets = [1, 0], sizes = [1, 256], strides = [1, 1]} : vector<3x256xf32> to vector<1x256xf32>
    %141 = vector.shape_cast %140 : vector<1x256xf32> to vector<256xf32>
    %142 = vector.extract_strided_slice %7 {offsets = [1, 0], sizes = [1, 256], strides = [1, 1]} : vector<3x256xf32> to vector<1x256xf32>
    %143 = vector.shape_cast %142 : vector<1x256xf32> to vector<256xf32>
    %cst_66 = arith.constant dense<0.000000e+00> : vector<8xf32>
    %144 = vector.multi_reduction <add>, %139, %cst_66 [1] : vector<8x256xf32> to vector<8xf32>
    %145 = vector.shape_cast %144 : vector<8xf32> to vector<8x1xf32>
    %cst_67 = arith.constant 2.560000e+02 : f32
    %146 = vector.broadcast %cst_67 : f32 to vector<8x1xf32>
    %147 = arith.divf %145, %146 : vector<8x1xf32>
    %148 = vector.broadcast %147 : vector<8x1xf32> to vector<8x256xf32>
    %149 = arith.subf %139, %148 : vector<8x256xf32>
    %150 = arith.mulf %149, %149 : vector<8x256xf32>
    %cst_68 = arith.constant dense<0.000000e+00> : vector<8xf32>
    %151 = vector.multi_reduction <add>, %150, %cst_68 [1] : vector<8x256xf32> to vector<8xf32>
    %152 = vector.shape_cast %151 : vector<8xf32> to vector<8x1xf32>
    %cst_69 = arith.constant 2.560000e+02 : f32
    %153 = vector.broadcast %cst_69 : f32 to vector<8x1xf32>
    %154 = arith.divf %152, %153 : vector<8x1xf32>
    %155 = vector.broadcast %147 : vector<8x1xf32> to vector<8x256xf32>
    %156 = arith.subf %139, %155 : vector<8x256xf32>
    %cst_70 = arith.constant 9.99999974E-6 : f32
    %157 = vector.broadcast %cst_70 : f32 to vector<8x1xf32>
    %158 = arith.addf %154, %157 : vector<8x1xf32>
    %159 = math.rsqrt %158 : vector<8x1xf32>
    %160 = vector.broadcast %159 : vector<8x1xf32> to vector<8x256xf32>
    %161 = arith.mulf %156, %160 : vector<8x256xf32>
    %162 = vector.shape_cast %141 : vector<256xf32> to vector<1x256xf32>
    %163 = vector.broadcast %162 : vector<1x256xf32> to vector<8x256xf32>
    %164 = arith.mulf %161, %163 : vector<8x256xf32>
    %165 = vector.shape_cast %143 : vector<256xf32> to vector<1x256xf32>
    %166 = vector.broadcast %165 : vector<1x256xf32> to vector<8x256xf32>
    %167 = arith.addf %164, %166 : vector<8x256xf32>
    %168 = arith.truncf %167 : vector<8x256xf32> to vector<8x256xbf16>
    %c0_71 = arith.constant 0 : index
    %c0_72 = arith.constant 0 : index
    %c0_73 = arith.constant 0 : index
    %169 = vector.load %arg18[%c0_71, %c0_72, %c0_73] : memref<1x256x1024xbf16, #tpu.memory_space<vmem>>, vector<1x256x1024xbf16>
    %170 = vector.shape_cast %169 : vector<1x256x1024xbf16> to vector<256x1024xbf16>
    %cst_74 = arith.constant dense<0.000000e+00> : vector<8x1024xf32>
    %171 = tpu.matmul %168, %170, %cst_74 {dimension_numbers = #tpu.dot_dimension_numbers<[1], [0], [0], [1], [0, 0, 1, 1], [], []>} : vector<8x256xbf16>, vector<256x1024xbf16>, vector<8x1024xf32> -> vector<8x1024xf32>
    %c0_75 = arith.constant 0 : index
    %c0_76 = arith.constant 0 : index
    %c0_77 = arith.constant 0 : index
    %172 = vector.load %arg19[%c0_75, %c0_76, %c0_77] : memref<1x1x1024xf32, #tpu.memory_space<vmem>>, vector<1x1x1024xf32>
    %173 = vector.shape_cast %172 : vector<1x1x1024xf32> to vector<1x1024xf32>
    %174 = vector.broadcast %173 : vector<1x1024xf32> to vector<8x1024xf32>
    %175 = arith.addf %171, %174 : vector<8x1024xf32>
    %cst_78 = arith.constant 0.000000e+00 : f32
    %176 = vector.broadcast %cst_78 : f32 to vector<8x1024xf32>
    %177 = arith.maximumf %175, %176 : vector<8x1024xf32>
    %178 = arith.truncf %177 : vector<8x1024xf32> to vector<8x1024xbf16>
    %c0_79 = arith.constant 0 : index
    %c0_80 = arith.constant 0 : index
    %c0_81 = arith.constant 0 : index
    %179 = vector.load %arg20[%c0_79, %c0_80, %c0_81] : memref<1x1024x256xbf16, #tpu.memory_space<vmem>>, vector<1x1024x256xbf16>
    %180 = vector.shape_cast %179 : vector<1x1024x256xbf16> to vector<1024x256xbf16>
    %cst_82 = arith.constant dense<0.000000e+00> : vector<8x256xf32>
    %181 = tpu.matmul %178, %180, %cst_82 {dimension_numbers = #tpu.dot_dimension_numbers<[1], [0], [0], [1], [0, 0, 1, 1], [], []>} : vector<8x1024xbf16>, vector<1024x256xbf16>, vector<8x256xf32> -> vector<8x256xf32>
    %c0_83 = arith.constant 0 : index
    %c0_84 = arith.constant 0 : index
    %c0_85 = arith.constant 0 : index
    %182 = vector.load %arg21[%c0_83, %c0_84, %c0_85] : memref<1x1x256xf32, #tpu.memory_space<vmem>>, vector<1x1x256xf32>
    %183 = vector.shape_cast %182 : vector<1x1x256xf32> to vector<1x256xf32>
    %184 = vector.broadcast %183 : vector<1x256xf32> to vector<8x256xf32>
    %185 = arith.addf %181, %184 : vector<8x256xf32>
    %186 = arith.addf %167, %185 : vector<8x256xf32>
    %187 = vector.extract_strided_slice %5 {offsets = [2, 0], sizes = [1, 256], strides = [1, 1]} : vector<3x256xf32> to vector<1x256xf32>
    %188 = vector.shape_cast %187 : vector<1x256xf32> to vector<256xf32>
    %189 = vector.extract_strided_slice %7 {offsets = [2, 0], sizes = [1, 256], strides = [1, 1]} : vector<3x256xf32> to vector<1x256xf32>
    %190 = vector.shape_cast %189 : vector<1x256xf32> to vector<256xf32>
    %cst_86 = arith.constant dense<0.000000e+00> : vector<8xf32>
    %191 = vector.multi_reduction <add>, %186, %cst_86 [1] : vector<8x256xf32> to vector<8xf32>
    %192 = vector.shape_cast %191 : vector<8xf32> to vector<8x1xf32>
    %cst_87 = arith.constant 2.560000e+02 : f32
    %193 = vector.broadcast %cst_87 : f32 to vector<8x1xf32>
    %194 = arith.divf %192, %193 : vector<8x1xf32>
    %195 = vector.broadcast %194 : vector<8x1xf32> to vector<8x256xf32>
    %196 = arith.subf %186, %195 : vector<8x256xf32>
    %197 = arith.mulf %196, %196 : vector<8x256xf32>
    %cst_88 = arith.constant dense<0.000000e+00> : vector<8xf32>
    %198 = vector.multi_reduction <add>, %197, %cst_88 [1] : vector<8x256xf32> to vector<8xf32>
    %199 = vector.shape_cast %198 : vector<8xf32> to vector<8x1xf32>
    %cst_89 = arith.constant 2.560000e+02 : f32
    %200 = vector.broadcast %cst_89 : f32 to vector<8x1xf32>
    %201 = arith.divf %199, %200 : vector<8x1xf32>
    %202 = vector.broadcast %194 : vector<8x1xf32> to vector<8x256xf32>
    %203 = arith.subf %186, %202 : vector<8x256xf32>
    %cst_90 = arith.constant 9.99999974E-6 : f32
    %204 = vector.broadcast %cst_90 : f32 to vector<8x1xf32>
    %205 = arith.addf %201, %204 : vector<8x1xf32>
    %206 = math.rsqrt %205 : vector<8x1xf32>
    %207 = vector.broadcast %206 : vector<8x1xf32> to vector<8x256xf32>
    %208 = arith.mulf %203, %207 : vector<8x256xf32>
    %209 = vector.shape_cast %188 : vector<256xf32> to vector<1x256xf32>
    %210 = vector.broadcast %209 : vector<1x256xf32> to vector<8x256xf32>
    %211 = arith.mulf %208, %210 : vector<8x256xf32>
    %212 = vector.shape_cast %190 : vector<256xf32> to vector<1x256xf32>
    %213 = vector.broadcast %212 : vector<1x256xf32> to vector<8x256xf32>
    %214 = arith.addf %211, %213 : vector<8x256xf32>
    %c0_91 = arith.constant 0 : index
    %c0_92 = arith.constant 0 : index
    %215 = vector.load %arg25[%c0_91, %c0_92] : memref<8x256xf32, #tpu.memory_space<vmem>>, vector<8x256xf32>
    tpu.vector_store %arg25[%c0_91, %c0_92], %214 {strides = array<i32>} : memref<8x256xf32, #tpu.memory_space<vmem>>, vector<8x256xf32>,
    %c1_i32 = arith.constant 1 : i32
    %216 = arith.cmpi eq, %arg1, %c1_i32 : i32
    %217 = arith.extui %216 : i1 to i32
    %c0_i32_93 = arith.constant 0 : i32
    %218 = arith.cmpi ne, %217, %c0_i32_93 : i32
    scf.if %218 {
      %c0_94 = arith.constant 0 : index
      %c0_95 = arith.constant 0 : index
      %219 = vector.load %arg22[%c0_94, %c0_95] : memref<1x256xf32, #tpu.memory_space<vmem>>, vector<1x256xf32>
      %220 = vector.shape_cast %219 : vector<1x256xf32> to vector<256xf32>
      %c0_96 = arith.constant 0 : index
      %c0_97 = arith.constant 0 : index
      %221 = vector.load %arg23[%c0_96, %c0_97] : memref<1x256xf32, #tpu.memory_space<vmem>>, vector<1x256xf32>
      %222 = vector.shape_cast %221 : vector<1x256xf32> to vector<256xf32>
      %cst_98 = arith.constant dense<0.000000e+00> : vector<8xf32>
      %223 = vector.multi_reduction <add>, %214, %cst_98 [1] : vector<8x256xf32> to vector<8xf32>
      %224 = vector.shape_cast %223 : vector<8xf32> to vector<8x1xf32>
      %cst_99 = arith.constant 2.560000e+02 : f32
      %225 = vector.broadcast %cst_99 : f32 to vector<8x1xf32>
      %226 = arith.divf %224, %225 : vector<8x1xf32>
      %227 = vector.broadcast %226 : vector<8x1xf32> to vector<8x256xf32>
      %228 = arith.subf %214, %227 : vector<8x256xf32>
      %229 = arith.mulf %228, %228 : vector<8x256xf32>
      %cst_100 = arith.constant dense<0.000000e+00> : vector<8xf32>
      %230 = vector.multi_reduction <add>, %229, %cst_100 [1] : vector<8x256xf32> to vector<8xf32>
      %231 = vector.shape_cast %230 : vector<8xf32> to vector<8x1xf32>
      %cst_101 = arith.constant 2.560000e+02 : f32
      %232 = vector.broadcast %cst_101 : f32 to vector<8x1xf32>
      %233 = arith.divf %231, %232 : vector<8x1xf32>
      %234 = vector.broadcast %226 : vector<8x1xf32> to vector<8x256xf32>
      %235 = arith.subf %214, %234 : vector<8x256xf32>
      %cst_102 = arith.constant 9.99999974E-6 : f32
      %236 = vector.broadcast %cst_102 : f32 to vector<8x1xf32>
      %237 = arith.addf %233, %236 : vector<8x1xf32>
      %238 = math.rsqrt %237 : vector<8x1xf32>
      %239 = vector.broadcast %238 : vector<8x1xf32> to vector<8x256xf32>
      %240 = arith.mulf %235, %239 : vector<8x256xf32>
      %241 = vector.shape_cast %220 : vector<256xf32> to vector<1x256xf32>
      %242 = vector.broadcast %241 : vector<1x256xf32> to vector<8x256xf32>
      %243 = arith.mulf %240, %242 : vector<8x256xf32>
      %244 = vector.shape_cast %222 : vector<256xf32> to vector<1x256xf32>
      %245 = vector.broadcast %244 : vector<1x256xf32> to vector<8x256xf32>
      %246 = arith.addf %243, %245 : vector<8x256xf32>
      %c0_103 = arith.constant 0 : index
      %c0_104 = arith.constant 0 : index
      %c0_105 = arith.constant 0 : index
      %247 = vector.load %arg24[%c0_103, %c0_104, %c0_105] : memref<1x8x256xf32, #tpu.memory_space<vmem>>, vector<1x8x256xf32>
      %248 = vector.shape_cast %247 : vector<1x8x256xf32> to vector<8x256xf32>
      %249 = vector.shape_cast %246 : vector<8x256xf32> to vector<1x8x256xf32>
      tpu.vector_store %arg24[%c0_103, %c0_104, %c0_105], %249 {strides = array<i32>} : memref<1x8x256xf32, #tpu.memory_space<vmem>>, vector<1x8x256xf32>,
    } else {
    }
    return
  }
  func.func @transform_0(%arg0: i32, %arg1: i32) -> (i32, i32, i32) {
    %c0_i32 = arith.constant 0 : i32
    %c0_i32_0 = arith.constant 0 : i32
    %c0_i32_1 = arith.constant 0 : i32
    return %arg0, %c0_i32, %c0_i32_0 : i32, i32, i32
  }
  func.func @transform_1(%arg0: i32, %arg1: i32) -> (i32, i32, i32) {
    %c0_i32 = arith.constant 0 : i32
    %c0_i32_0 = arith.constant 0 : i32
    %c0_i32_1 = arith.constant 0 : i32
    return %arg0, %c0_i32, %c0_i32_0 : i32, i32, i32
  }
  func.func @transform_2(%arg0: i32, %arg1: i32) -> (i32, i32, i32) {
    %c0_i32 = arith.constant 0 : i32
    %c0_i32_0 = arith.constant 0 : i32
    %c0_i32_1 = arith.constant 0 : i32
    %c0_i32_2 = arith.constant 0 : i32
    return %c0_i32, %c0_i32_0, %c0_i32_1 : i32, i32, i32
  }
  func.func @transform_3(%arg0: i32, %arg1: i32) -> (i32, i32, i32) {
    %c0_i32 = arith.constant 0 : i32
    %c0_i32_0 = arith.constant 0 : i32
    %c0_i32_1 = arith.constant 0 : i32
    return %arg0, %c0_i32, %c0_i32_0 : i32, i32, i32
  }
  func.func @transform_4(%arg0: i32, %arg1: i32) -> (i32, i32, i32) {
    %c0_i32 = arith.constant 0 : i32
    %c0_i32_0 = arith.constant 0 : i32
    %c0_i32_1 = arith.constant 0 : i32
    return %arg1, %c0_i32, %c0_i32_0 : i32, i32, i32
  }
  func.func @transform_5(%arg0: i32, %arg1: i32) -> (i32, i32, i32) {
    %c0_i32 = arith.constant 0 : i32
    %c0_i32_0 = arith.constant 0 : i32
    %c0_i32_1 = arith.constant 0 : i32
    return %arg1, %c0_i32, %c0_i32_0 : i32, i32, i32
  }
  func.func @transform_6(%arg0: i32, %arg1: i32) -> (i32, i32, i32) {
    %c0_i32 = arith.constant 0 : i32
    %c0_i32_0 = arith.constant 0 : i32
    %c0_i32_1 = arith.constant 0 : i32
    return %arg1, %c0_i32, %c0_i32_0 : i32, i32, i32
  }
  func.func @transform_7(%arg0: i32, %arg1: i32) -> (i32, i32, i32) {
    %c0_i32 = arith.constant 0 : i32
    %c0_i32_0 = arith.constant 0 : i32
    %c0_i32_1 = arith.constant 0 : i32
    return %arg1, %c0_i32, %c0_i32_0 : i32, i32, i32
  }
  func.func @transform_8(%arg0: i32, %arg1: i32) -> (i32, i32, i32) {
    %c0_i32 = arith.constant 0 : i32
    %c0_i32_0 = arith.constant 0 : i32
    %c0_i32_1 = arith.constant 0 : i32
    return %arg1, %c0_i32, %c0_i32_0 : i32, i32, i32
  }
  func.func @transform_9(%arg0: i32, %arg1: i32) -> (i32, i32, i32) {
    %c0_i32 = arith.constant 0 : i32
    %c0_i32_0 = arith.constant 0 : i32
    %c0_i32_1 = arith.constant 0 : i32
    return %arg1, %c0_i32, %c0_i32_0 : i32, i32, i32
  }
  func.func @transform_10(%arg0: i32, %arg1: i32) -> (i32, i32, i32) {
    %c0_i32 = arith.constant 0 : i32
    %c0_i32_0 = arith.constant 0 : i32
    %c0_i32_1 = arith.constant 0 : i32
    return %arg1, %c0_i32, %c0_i32_0 : i32, i32, i32
  }
  func.func @transform_11(%arg0: i32, %arg1: i32) -> (i32, i32, i32) {
    %c0_i32 = arith.constant 0 : i32
    %c0_i32_0 = arith.constant 0 : i32
    %c0_i32_1 = arith.constant 0 : i32
    return %arg1, %c0_i32, %c0_i32_0 : i32, i32, i32
  }
  func.func @transform_12(%arg0: i32, %arg1: i32) -> (i32, i32, i32) {
    %c0_i32 = arith.constant 0 : i32
    %c0_i32_0 = arith.constant 0 : i32
    %c0_i32_1 = arith.constant 0 : i32
    return %arg1, %c0_i32, %c0_i32_0 : i32, i32, i32
  }
  func.func @transform_13(%arg0: i32, %arg1: i32) -> (i32, i32, i32) {
    %c0_i32 = arith.constant 0 : i32
    %c0_i32_0 = arith.constant 0 : i32
    %c0_i32_1 = arith.constant 0 : i32
    return %arg1, %c0_i32, %c0_i32_0 : i32, i32, i32
  }
  func.func @transform_14(%arg0: i32, %arg1: i32) -> (i32, i32, i32) {
    %c0_i32 = arith.constant 0 : i32
    %c0_i32_0 = arith.constant 0 : i32
    %c0_i32_1 = arith.constant 0 : i32
    return %arg1, %c0_i32, %c0_i32_0 : i32, i32, i32
  }
  func.func @transform_15(%arg0: i32, %arg1: i32) -> (i32, i32, i32) {
    %c0_i32 = arith.constant 0 : i32
    %c0_i32_0 = arith.constant 0 : i32
    %c0_i32_1 = arith.constant 0 : i32
    return %arg1, %c0_i32, %c0_i32_0 : i32, i32, i32
  }
  func.func @transform_16(%arg0: i32, %arg1: i32) -> (i32, i32, i32) {
    %c0_i32 = arith.constant 0 : i32
    %c0_i32_0 = arith.constant 0 : i32
    %c0_i32_1 = arith.constant 0 : i32
    return %arg1, %c0_i32, %c0_i32_0 : i32, i32, i32
  }
  func.func @transform_17(%arg0: i32, %arg1: i32) -> (i32, i32, i32) {
    %c0_i32 = arith.constant 0 : i32
    %c0_i32_0 = arith.constant 0 : i32
    %c0_i32_1 = arith.constant 0 : i32
    return %arg1, %c0_i32, %c0_i32_0 : i32, i32, i32
  }
  func.func @transform_18(%arg0: i32, %arg1: i32) -> (i32, i32, i32) {
    %c0_i32 = arith.constant 0 : i32
    %c0_i32_0 = arith.constant 0 : i32
    %c0_i32_1 = arith.constant 0 : i32
    return %arg1, %c0_i32, %c0_i32_0 : i32, i32, i32
  }
  func.func @transform_19(%arg0: i32, %arg1: i32) -> (i32, i32, i32) {
    %c0_i32 = arith.constant 0 : i32
    %c0_i32_0 = arith.constant 0 : i32
    %c0_i32_1 = arith.constant 0 : i32
    return %arg1, %c0_i32, %c0_i32_0 : i32, i32, i32
  }
  func.func @transform_20(%arg0: i32, %arg1: i32) -> (i32, i32) {
    %c0_i32 = arith.constant 0 : i32
    %c0_i32_0 = arith.constant 0 : i32
    %c0_i32_1 = arith.constant 0 : i32
    return %c0_i32, %c0_i32_0 : i32, i32
  }
  func.func @transform_21(%arg0: i32, %arg1: i32) -> (i32, i32) {
    %c0_i32 = arith.constant 0 : i32
    %c0_i32_0 = arith.constant 0 : i32
    %c0_i32_1 = arith.constant 0 : i32
    return %c0_i32, %c0_i32_0 : i32, i32
  }
  func.func @transform_22(%arg0: i32, %arg1: i32) -> (i32, i32, i32) {
    %c0_i32 = arith.constant 0 : i32
    %c0_i32_0 = arith.constant 0 : i32
    %c0_i32_1 = arith.constant 0 : i32
    return %arg0, %c0_i32, %c0_i32_0 : i32, i32, i32
  }
}

</mosaic_0001>

<llo_original>
// kernel: tpu_custom_call.1
$region0: #{tpu_custom_call.1}
  #allocation0 [shape = 'u32[]', space=smem, size = 0x4, offset = 0x4, fixed_abs, tag = 'smem constant byte address 0x4 - core index']
  #allocation1 [shape = 'u32[72,128]{1,0:T(1,128)}', space=vmem, size = 0x9000, scoped, tag = 'internal scratch']
  #allocation2 [shape = 'f32[8,256]{1,0:T(8,128)}', space=vmem, size = 0x2000, scoped, tag = 'scratch operand']
  %s0 = inlined_call_operand.vmem [shape: f32[2,8,256], index: 0, kind: input, shape index: {}]
  %s1 = inlined_call_operand.hbm [shape: bf16[2,16,256], index: 1, kind: input, shape index: {}]
  %s2 = inlined_call_operand.hbm [shape: f32[1,8,8], index: 2, kind: input, shape index: {}]
  %s3 = inlined_call_operand.hbm [shape: f32[2,1,16], index: 3, kind: input, shape index: {}]
  %s4 = inlined_call_operand.hbm [shape: bf16[2,256,768], index: 4, kind: input, shape index: {}]
  %s5 = inlined_call_operand.vmem [shape: f32[2,1,768], index: 5, kind: input, shape index: {}]
  %s6 = inlined_call_operand.hbm [shape: bf16[2,256,256], index: 6, kind: input, shape index: {}]
  %s7 = inlined_call_operand.hbm [shape: f32[2,1,256], index: 7, kind: input, shape index: {}]
  %s8 = inlined_call_operand.hbm [shape: bf16[2,256,256], index: 8, kind: input, shape index: {}]
  %s9 = inlined_call_operand.hbm [shape: f32[2,1,256], index: 9, kind: input, shape index: {}]
  %s10 = inlined_call_operand.hbm [shape: bf16[2,256,512], index: 10, kind: input, shape index: {}]
  %s11 = inlined_call_operand.hbm [shape: f32[2,1,512], index: 11, kind: input, shape index: {}]
  %s12 = inlined_call_operand.hbm [shape: bf16[2,256,256], index: 12, kind: input, shape index: {}]
  %s13 = inlined_call_operand.hbm [shape: f32[2,1,256], index: 13, kind: input, shape index: {}]
  %s14 = inlined_call_operand.vmem [shape: f32[2,3,256], index: 14, kind: input, shape index: {}]
  %s15 = inlined_call_operand.vmem [shape: f32[2,3,256], index: 15, kind: input, shape index: {}]
  %s16 = inlined_call_operand.hbm [shape: bf16[2,256,1024], index: 16, kind: input, shape index: {}]
  %s17 = inlined_call_operand.hbm [shape: f32[2,1,1024], index: 17, kind: input, shape index: {}]
  %s18 = inlined_call_operand.hbm [shape: bf16[2,1024,256], index: 18, kind: input, shape index: {}]
  %s19 = inlined_call_operand.vmem [shape: f32[2,1,256], index: 19, kind: input, shape index: {}]
  %s20 = inlined_call_operand.vmem [shape: f32[1,256], index: 20, kind: input, shape index: {}]
  %s21 = inlined_call_operand.vmem [shape: f32[1,256], index: 21, kind: input, shape index: {}]
  %s22 = inlined_call_operand.hbm [shape: f32[2,8,256], index: 22, kind: output, shape index: {}]
  %s23 = sld [smem:[#allocation0]]
  $region189: #{tpu_custom_call.1} parent=0
    _
  %s25 = ssub.s32 1, %s23
  %s26 = scalar_select 0, %s25, %s23
  $region1: #{tpu_custom_call.1} parent=0
    #allocation3 [shape = 'u8[16384]{0}', space=vmem, size = 0x4000, scoped, tag = 'input window, operand 1']
    #allocation4 [shape = 's32[2]{0}', space=sflag, size = 0x8, scoped, tag = 'scoped memory for tpu_custom_call.1']
    #allocation5 [shape = 's32[2]{0}', space=sflag, size = 0x8, scoped, tag = 'scoped memory for tpu_custom_call.1']
    #allocation6 [shape = 'u8[4096]{0}', space=vmem, size = 0x1000, scoped, tag = 'input window, operand 2, single buffered']
    #allocation7 [shape = 's32[1]{0}', space=sflag, size = 0x4, scoped, tag = 'scoped memory for tpu_custom_call.1']
    #allocation8 [shape = 'u8[1024]{0}', space=vmem, size = 0x400, scoped, tag = 'input window, operand 3']
    #allocation9 [shape = 'u8[786432]{0}', space=vmem, size = 0xc0000, scoped, tag = 'input window, operand 4']
    #allocation10 [shape = 'u8[262144]{0}', space=vmem, size = 0x40000, scoped, tag = 'input window, operand 6']
    #allocation11 [shape = 'u8[2048]{0}', space=vmem, size = 0x800, scoped, tag = 'input window, operand 7']
    #allocation12 [shape = 'u8[262144]{0}', space=vmem, size = 0x40000, scoped, tag = 'input window, operand 8']
    #allocation13 [shape = 'u8[2048]{0}', space=vmem, size = 0x800, scoped, tag = 'input window, operand 9']
    #allocation14 [shape = 'u8[524288]{0}', space=vmem, size = 0x80000, scoped, tag = 'input window, operand 10']
    #allocation15 [shape = 'u8[4096]{0}', space=vmem, size = 0x1000, scoped, tag = 'input window, operand 11']
    #allocation16 [shape = 'u8[262144]{0}', space=vmem, size = 0x40000, scoped, tag = 'input window, operand 12']
    #allocation17 [shape = 'u8[2048]{0}', space=vmem, size = 0x800, scoped, tag = 'input window, operand 13']
    #allocation18 [shape = 'u8[1048576]{0}', space=vmem, size = 0x100000, scoped, tag = 'input window, operand 16']
    #allocation19 [shape = 'u8[8192]{0}', space=vmem, size = 0x2000, scoped, tag = 'input window, operand 17']
    #allocation20 [shape = 'u8[1048576]{0}', space=vmem, size = 0x100000, scoped, tag = 'input window, operand 18']
    #allocation21 [shape = 'u8[16384]{0}', space=vmem, size = 0x4000, scoped, tag = 'output window, operand 0']
    %27 = vsyncpa [#allocation4], 0
    %s28 = scalar_lea.sflag [#allocation4], 1
    %29 = vsyncpa %s28, 0
    %30 = vsyncpa [#allocation7], 0
    %31 = vsyncpa [#allocation5], 0
    %s32 = scalar_lea.sflag [#allocation5], 1
    %33 = vsyncpa %s32, 0
    loop: start=0, step=1, limit=6
    $region2: #{tpu_custom_call.1} parent=1 // loop_pre_header
      _
    $region3: #{tpu_custom_call.1} parent=1 // loop_header
      %s35 = sphi 0, %s39
      %p36 = scmp.ge.s32.totalorder %s35, 6
      %s42 = sphi 0, %s54
      %s43 = sphi 0, %s50
      %s44 = sphi 0, %s42
      %s45 = sphi 0, %s43
      %s46 = sphi 0, %s44
      %s47 = sphi 0, %s45
      %s57 = sphi 0, %s59
      %s60 = sphi 0, %s57
      %s61 = sphi 0, %s60
      %s77 = sphi 0, %s61
      %s83 = sphi 0, %s85
      %s86 = sphi 0, %s83
      %s87 = sphi 0, %s86
      %s103 = sphi 0, %s87
      %s107 = sphi 0, %s107
      %s109 = sphi 0, %s107
      %s110 = sphi 0, %s109
      %s124 = sphi 0, %s110
      %s130 = sphi 0, %s132
      %s133 = sphi 0, %s130
      %s134 = sphi 0, %s133
      %s150 = sphi 0, %s134
      %s156 = sphi 0, %s158
      %s159 = sphi 0, %s156
      %s160 = sphi 0, %s159
      %s176 = sphi 0, %s160
      %s182 = sphi 0, %s184
      %s185 = sphi 0, %s182
      %s186 = sphi 0, %s185
      %s202 = sphi 0, %s186
      %s208 = sphi 0, %s210
      %s211 = sphi 0, %s208
      %s212 = sphi 0, %s211
      %s228 = sphi 0, %s212
      %s234 = sphi 0, %s236
      %s237 = sphi 0, %s234
      %s238 = sphi 0, %s237
      %s254 = sphi 0, %s238
      %s260 = sphi 0, %s262
      %s263 = sphi 0, %s260
      %s264 = sphi 0, %s263
      %s280 = sphi 0, %s264
      %s286 = sphi 0, %s288
      %s289 = sphi 0, %s286
      %s290 = sphi 0, %s289
      %s306 = sphi 0, %s290
      %s312 = sphi 0, %s314
      %s315 = sphi 0, %s312
      %s316 = sphi 0, %s315
      %s332 = sphi 0, %s316
      %s338 = sphi 0, %s340
      %s341 = sphi 0, %s338
      %s342 = sphi 0, %s341
      %s358 = sphi 0, %s342
      %s364 = sphi 0, %s366
      %s367 = sphi 0, %s364
      %s368 = sphi 0, %s367
      %s384 = sphi 0, %s368
      %s390 = sphi 0, %s392
      %s393 = sphi 0, %s390
      %s394 = sphi 0, %s393
      %s410 = sphi 0, %s394
      %s416 = sphi 0, %s418
      %s419 = sphi 0, %s416
      %s420 = sphi 0, %s419
      %s436 = sphi 0, %s420
      %s442 = sphi 0, %s444
      %s445 = sphi 0, %s442
      %s446 = sphi 0, %s445
      %s462 = sphi 0, %s446
      %s468 = sphi 0, %s470
      %s471 = sphi 0, %s468
      %s472 = sphi 0, %s471
      %s488 = sphi 0, %s472
      %s494 = sphi 0, %s496
      %s497 = sphi 0, %s494
      %s498 = sphi 0, %s497
      %s514 = sphi 0, %s498
      %s520 = sphi 0, %s522
      %s523 = sphi 0, %s520
      %s524 = sphi 0, %s523
      %s540 = sphi 0, %s524
      %s546 = sphi 0, %s548
      %s549 = sphi 0, %s546
      %s550 = sphi 0, %s549
      %s566 = sphi 0, %s550
      %s570 = sphi 0, %s570
      %s572 = sphi 0, %s570
      %s573 = sphi 0, %s572
      %s587 = sphi 0, %s573
      %s591 = sphi 0, %s591
      %s593 = sphi 0, %s591
      %s594 = sphi 0, %s593
      %s608 = sphi 0, %s594
      %s614 = sphi 0, %s616
      %s617 = sphi 0, %s614
      %s618 = sphi 0, %s617
      %s634 = sphi 0, %s618
    $region4: #{tpu_custom_call.1} parent=1 // loop_header_branch
      %38 = sbr.rel (%p36) target = $region8
    $region5: #{tpu_custom_call.1} parent=1 // loop_body
      %s40 = ssub.s32 %s35, 1
      %s41 = ssub.s32 %s35, 2
      %s48 = sadd.s32 1, %s43
      %p49 = scmp.ge.s32.totalorder %s48, 2
      %s50 = scalar_select %p49, 0, %s48
      %s51 = sadd.s32 1, %s42
      %s52 = scalar_select %p49, %s51, %s42
      %p53 = scmp.ge.s32.totalorder %s52, 2
      %s54 = scalar_select %p53, 0, %s52
      %s55 = ssub.s32 %s42, %s54
      %p56 = scmp.eq.s32.totalorder %s55, 0
      %s58 = sadd.s32 %s57, 1
      %s59 = scalar_select %p56, %s57, %s58
      %p62 = pneg %p56
      %p63 = scmp.eq.s32.totalorder %s35, 3
      %p64 = por %p62, %p63
      %p65 = scmp.ne.s32.totalorder %s57, %s60
      %p66 = scmp.eq.s32.totalorder %s35, 0
      %p67 = por %p65, %p66
      %p68 = scmp.ne.s32.totalorder %s57, %s60
      %p69 = scmp.eq.s32.totalorder %s40, 3
      %p70 = por %p68, %p69
      %p71 = scmp.ne.s32.totalorder %s60, %s61
      %p72 = scmp.eq.s32.totalorder %s40, 0
      %p73 = por %p71, %p72
      %p74 = scmp.ne.s32.totalorder %s60, %s61
      %p75 = scmp.eq.s32.totalorder %s41, 3
      %p76 = por %p74, %p75
      %p78 = scmp.ne.s32.totalorder %s61, %s77
      %p79 = scmp.eq.s32.totalorder %s41, 0
      %p80 = por %p78, %p79
      %s81 = ssub.s32 %s42, %s54
      %p82 = scmp.eq.s32.totalorder %s81, 0
      %s84 = sadd.s32 %s83, 1
      %s85 = scalar_select %p82, %s83, %s84
      %p88 = pneg %p82
      %p89 = scmp.eq.s32.totalorder %s35, 3
      %p90 = por %p88, %p89
      %p91 = scmp.ne.s32.totalorder %s83, %s86
      %p92 = scmp.eq.s32.totalorder %s35, 0
      %p93 = por %p91, %p92
      %p94 = scmp.ne.s32.totalorder %s83, %s86
      %p95 = scmp.eq.s32.totalorder %s40, 3
      %p96 = por %p94, %p95
      %p97 = scmp.ne.s32.totalorder %s86, %s87
      %p98 = scmp.eq.s32.totalorder %s40, 0
      %p99 = por %p97, %p98
      %p100 = scmp.ne.s32.totalorder %s86, %s87
      %p101 = scmp.eq.s32.totalorder %s41, 3
      %p102 = por %p100, %p101
      %p104 = scmp.ne.s32.totalorder %s87, %s103
      %p105 = scmp.eq.s32.totalorder %s41, 0
      %p106 = por %p104, %p105
      %s108 = sadd.s32 %s107, 1
      %p111 = scmp.eq.s32.totalorder %s35, 3
      %p112 = scmp.ne.s32.totalorder %s107, %s109
      %p113 = scmp.eq.s32.totalorder %s35, 0
      %p114 = por %p112, %p113
      %p115 = scmp.ne.s32.totalorder %s107, %s109
      %p116 = scmp.eq.s32.totalorder %s40, 3
      %p117 = por %p115, %p116
      %p118 = scmp.ne.s32.totalorder %s109, %s110
      %p119 = scmp.eq.s32.totalorder %s40, 0
      %p120 = por %p118, %p119
      %p121 = scmp.ne.s32.totalorder %s109, %s110
      %p122 = scmp.eq.s32.totalorder %s41, 3
      %p123 = por %p121, %p122
      %p125 = scmp.ne.s32.totalorder %s110, %s124
      %p126 = scmp.eq.s32.totalorder %s41, 0
      %p127 = por %p125, %p126
      %s128 = ssub.s32 %s42, %s54
      %p129 = scmp.eq.s32.totalorder %s128, 0
      %s131 = sadd.s32 %s130, 1
      %s132 = scalar_select %p129, %s130, %s131
      %p135 = pneg %p129
      %p136 = scmp.eq.s32.totalorder %s35, 3
      %p137 = por %p135, %p136
      %p138 = scmp.ne.s32.totalorder %s130, %s133
      %p139 = scmp.eq.s32.totalorder %s35, 0
      %p140 = por %p138, %p139
      %p141 = scmp.ne.s32.totalorder %s130, %s133
      %p142 = scmp.eq.s32.totalorder %s40, 3
      %p143 = por %p141, %p142
      %p144 = scmp.ne.s32.totalorder %s133, %s134
      %p145 = scmp.eq.s32.totalorder %s40, 0
      %p146 = por %p144, %p145
      %p147 = scmp.ne.s32.totalorder %s133, %s134
      %p148 = scmp.eq.s32.totalorder %s41, 3
      %p149 = por %p147, %p148
      %p151 = scmp.ne.s32.totalorder %s134, %s150
      %p152 = scmp.eq.s32.totalorder %s41, 0
      %p153 = por %p151, %p152
      %s154 = ssub.s32 %s43, %s50
      %p155 = scmp.eq.s32.totalorder %s154, 0
      %s157 = sadd.s32 %s156, 1
      %s158 = scalar_select %p155, %s156, %s157
      %p161 = pneg %p155
      %p162 = scmp.eq.s32.totalorder %s35, 3
      %p163 = por %p161, %p162
      %p164 = scmp.ne.s32.totalorder %s156, %s159
      %p165 = scmp.eq.s32.totalorder %s35, 0
      %p166 = por %p164, %p165
      %p167 = scmp.ne.s32.totalorder %s156, %s159
      %p168 = scmp.eq.s32.totalorder %s40, 3
      %p169 = por %p167, %p168
      %p170 = scmp.ne.s32.totalorder %s159, %s160
      %p171 = scmp.eq.s32.totalorder %s40, 0
      %p172 = por %p170, %p171
      %p173 = scmp.ne.s32.totalorder %s159, %s160
      %p174 = scmp.eq.s32.totalorder %s41, 3
      %p175 = por %p173, %p174
      %p177 = scmp.ne.s32.totalorder %s160, %s176
      %p178 = scmp.eq.s32.totalorder %s41, 0
      %p179 = por %p177, %p178
      %s180 = ssub.s32 %s43, %s50
      %p181 = scmp.eq.s32.totalorder %s180, 0
      %s183 = sadd.s32 %s182, 1
      %s184 = scalar_select %p181, %s182, %s183
      %p187 = pneg %p181
      %p188 = scmp.eq.s32.totalorder %s35, 3
      %p189 = por %p187, %p188
      %p190 = scmp.ne.s32.totalorder %s182, %s185
      %p191 = scmp.eq.s32.totalorder %s35, 0
      %p192 = por %p190, %p191
      %p193 = scmp.ne.s32.totalorder %s182, %s185
      %p194 = scmp.eq.s32.totalorder %s40, 3
      %p195 = por %p193, %p194
      %p196 = scmp.ne.s32.totalorder %s185, %s186
      %p197 = scmp.eq.s32.totalorder %s40, 0
      %p198 = por %p196, %p197
      %p199 = scmp.ne.s32.totalorder %s185, %s186
      %p200 = scmp.eq.s32.totalorder %s41, 3
      %p201 = por %p199, %p200
      %p203 = scmp.ne.s32.totalorder %s186, %s202
      %p204 = scmp.eq.s32.totalorder %s41, 0
      %p205 = por %p203, %p204
      %s206 = ssub.s32 %s43, %s50
      %p207 = scmp.eq.s32.totalorder %s206, 0
      %s209 = sadd.s32 %s208, 1
      %s210 = scalar_select %p207, %s208, %s209
      %p213 = pneg %p207
      %p214 = scmp.eq.s32.totalorder %s35, 3
      %p215 = por %p213, %p214
      %p216 = scmp.ne.s32.totalorder %s208, %s211
      %p217 = scmp.eq.s32.totalorder %s35, 0
      %p218 = por %p216, %p217
      %p219 = scmp.ne.s32.totalorder %s208, %s211
      %p220 = scmp.eq.s32.totalorder %s40, 3
      %p221 = por %p219, %p220
      %p222 = scmp.ne.s32.totalorder %s211, %s212
      %p223 = scmp.eq.s32.totalorder %s40, 0
      %p224 = por %p222, %p223
      %p225 = scmp.ne.s32.totalorder %s211, %s212
      %p226 = scmp.eq.s32.totalorder %s41, 3
      %p227 = por %p225, %p226
      %p229 = scmp.ne.s32.totalorder %s212, %s228
      %p230 = scmp.eq.s32.totalorder %s41, 0
      %p231 = por %p229, %p230
      %s232 = ssub.s32 %s43, %s50
      %p233 = scmp.eq.s32.totalorder %s232, 0
      %s235 = sadd.s32 %s234, 1
      %s236 = scalar_select %p233, %s234, %s235
      %p239 = pneg %p233
      %p240 = scmp.eq.s32.totalorder %s35, 3
      %p241 = por %p239, %p240
      %p242 = scmp.ne.s32.totalorder %s234, %s237
      %p243 = scmp.eq.s32.totalorder %s35, 0
      %p244 = por %p242, %p243
      %p245 = scmp.ne.s32.totalorder %s234, %s237
      %p246 = scmp.eq.s32.totalorder %s40, 3
      %p247 = por %p245, %p246
      %p248 = scmp.ne.s32.totalorder %s237, %s238
      %p249 = scmp.eq.s32.totalorder %s40, 0
      %p250 = por %p248, %p249
      %p251 = scmp.ne.s32.totalorder %s237, %s238
      %p252 = scmp.eq.s32.totalorder %s41, 3
      %p253 = por %p251, %p252
      %p255 = scmp.ne.s32.totalorder %s238, %s254
      %p256 = scmp.eq.s32.totalorder %s41, 0
      %p257 = por %p255, %p256
      %s258 = ssub.s32 %s43, %s50
      %p259 = scmp.eq.s32.totalorder %s258, 0
      %s261 = sadd.s32 %s260, 1
      %s262 = scalar_select %p259, %s260, %s261
      %p265 = pneg %p259
      %p266 = scmp.eq.s32.totalorder %s35, 3
      %p267 = por %p265, %p266
      %p268 = scmp.ne.s32.totalorder %s260, %s263
      %p269 = scmp.eq.s32.totalorder %s35, 0
      %p270 = por %p268, %p269
      %p271 = scmp.ne.s32.totalorder %s260, %s263
      %p272 = scmp.eq.s32.totalorder %s40, 3
      %p273 = por %p271, %p272
      %p274 = scmp.ne.s32.totalorder %s263, %s264
      %p275 = scmp.eq.s32.totalorder %s40, 0
      %p276 = por %p274, %p275
      %p277 = scmp.ne.s32.totalorder %s263, %s264
      %p278 = scmp.eq.s32.totalorder %s41, 3
      %p279 = por %p277, %p278
      %p281 = scmp.ne.s32.totalorder %s264, %s280
      %p282 = scmp.eq.s32.totalorder %s41, 0
      %p283 = por %p281, %p282
      %s284 = ssub.s32 %s43, %s50
      %p285 = scmp.eq.s32.totalorder %s284, 0
      %s287 = sadd.s32 %s286, 1
      %s288 = scalar_select %p285, %s286, %s287
      %p291 = pneg %p285
      %p292 = scmp.eq.s32.totalorder %s35, 3
      %p293 = por %p291, %p292
      %p294 = scmp.ne.s32.totalorder %s286, %s289
      %p295 = scmp.eq.s32.totalorder %s35, 0
      %p296 = por %p294, %p295
      %p297 = scmp.ne.s32.totalorder %s286, %s289
      %p298 = scmp.eq.s32.totalorder %s40, 3
      %p299 = por %p297, %p298
      %p300 = scmp.ne.s32.totalorder %s289, %s290
      %p301 = scmp.eq.s32.totalorder %s40, 0
      %p302 = por %p300, %p301
      %p303 = scmp.ne.s32.totalorder %s289, %s290
      %p304 = scmp.eq.s32.totalorder %s41, 3
      %p305 = por %p303, %p304
      %p307 = scmp.ne.s32.totalorder %s290, %s306
      %p308 = scmp.eq.s32.totalorder %s41, 0
      %p309 = por %p307, %p308
      %s310 = ssub.s32 %s43, %s50
      %p311 = scmp.eq.s32.totalorder %s310, 0
      %s313 = sadd.s32 %s312, 1
      %s314 = scalar_select %p311, %s312, %s313
      %p317 = pneg %p311
      %p318 = scmp.eq.s32.totalorder %s35, 3
      %p319 = por %p317, %p318
      %p320 = scmp.ne.s32.totalorder %s312, %s315
      %p321 = scmp.eq.s32.totalorder %s35, 0
      %p322 = por %p320, %p321
      %p323 = scmp.ne.s32.totalorder %s312, %s315
      %p324 = scmp.eq.s32.totalorder %s40, 3
      %p325 = por %p323, %p324
      %p326 = scmp.ne.s32.totalorder %s315, %s316
      %p327 = scmp.eq.s32.totalorder %s40, 0
      %p328 = por %p326, %p327
      %p329 = scmp.ne.s32.totalorder %s315, %s316
      %p330 = scmp.eq.s32.totalorder %s41, 3
      %p331 = por %p329, %p330
      %p333 = scmp.ne.s32.totalorder %s316, %s332
      %p334 = scmp.eq.s32.totalorder %s41, 0
      %p335 = por %p333, %p334
      %s336 = ssub.s32 %s43, %s50
      %p337 = scmp.eq.s32.totalorder %s336, 0
      %s339 = sadd.s32 %s338, 1
      %s340 = scalar_select %p337, %s338, %s339
      %p343 = pneg %p337
      %p344 = scmp.eq.s32.totalorder %s35, 3
      %p345 = por %p343, %p344
      %p346 = scmp.ne.s32.totalorder %s338, %s341
      %p347 = scmp.eq.s32.totalorder %s35, 0
      %p348 = por %p346, %p347
      %p349 = scmp.ne.s32.totalorder %s338, %s341
      %p350 = scmp.eq.s32.totalorder %s40, 3
      %p351 = por %p349, %p350
      %p352 = scmp.ne.s32.totalorder %s341, %s342
      %p353 = scmp.eq.s32.totalorder %s40, 0
      %p354 = por %p352, %p353
      %p355 = scmp.ne.s32.totalorder %s341, %s342
      %p356 = scmp.eq.s32.totalorder %s41, 3
      %p357 = por %p355, %p356
      %p359 = scmp.ne.s32.totalorder %s342, %s358
      %p360 = scmp.eq.s32.totalorder %s41, 0
      %p361 = por %p359, %p360
      %s362 = ssub.s32 %s43, %s50
      %p363 = scmp.eq.s32.totalorder %s362, 0
      %s365 = sadd.s32 %s364, 1
      %s366 = scalar_select %p363, %s364, %s365
      %p369 = pneg %p363
      %p370 = scmp.eq.s32.totalorder %s35, 3
      %p371 = por %p369, %p370
      %p372 = scmp.ne.s32.totalorder %s364, %s367
      %p373 = scmp.eq.s32.totalorder %s35, 0
      %p374 = por %p372, %p373
      %p375 = scmp.ne.s32.totalorder %s364, %s367
      %p376 = scmp.eq.s32.totalorder %s40, 3
      %p377 = por %p375, %p376
      %p378 = scmp.ne.s32.totalorder %s367, %s368
      %p379 = scmp.eq.s32.totalorder %s40, 0
      %p380 = por %p378, %p379
      %p381 = scmp.ne.s32.totalorder %s367, %s368
      %p382 = scmp.eq.s32.totalorder %s41, 3
      %p383 = por %p381, %p382
      %p385 = scmp.ne.s32.totalorder %s368, %s384
      %p386 = scmp.eq.s32.totalorder %s41, 0
      %p387 = por %p385, %p386
      %s388 = ssub.s32 %s43, %s50
      %p389 = scmp.eq.s32.totalorder %s388, 0
      %s391 = sadd.s32 %s390, 1
      %s392 = scalar_select %p389, %s390, %s391
      %p395 = pneg %p389
      %p396 = scmp.eq.s32.totalorder %s35, 3
      %p397 = por %p395, %p396
      %p398 = scmp.ne.s32.totalorder %s390, %s393
      %p399 = scmp.eq.s32.totalorder %s35, 0
      %p400 = por %p398, %p399
      %p401 = scmp.ne.s32.totalorder %s390, %s393
      %p402 = scmp.eq.s32.totalorder %s40, 3
      %p403 = por %p401, %p402
      %p404 = scmp.ne.s32.totalorder %s393, %s394
      %p405 = scmp.eq.s32.totalorder %s40, 0
      %p406 = por %p404, %p405
      %p407 = scmp.ne.s32.totalorder %s393, %s394
      %p408 = scmp.eq.s32.totalorder %s41, 3
      %p409 = por %p407, %p408
      %p411 = scmp.ne.s32.totalorder %s394, %s410
      %p412 = scmp.eq.s32.totalorder %s41, 0
      %p413 = por %p411, %p412
      %s414 = ssub.s32 %s43, %s50
      %p415 = scmp.eq.s32.totalorder %s414, 0
      %s417 = sadd.s32 %s416, 1
      %s418 = scalar_select %p415, %s416, %s417
      %p421 = pneg %p415
      %p422 = scmp.eq.s32.totalorder %s35, 3
      %p423 = por %p421, %p422
      %p424 = scmp.ne.s32.totalorder %s416, %s419
      %p425 = scmp.eq.s32.totalorder %s35, 0
      %p426 = por %p424, %p425
      %p427 = scmp.ne.s32.totalorder %s416, %s419
      %p428 = scmp.eq.s32.totalorder %s40, 3
      %p429 = por %p427, %p428
      %p430 = scmp.ne.s32.totalorder %s419, %s420
      %p431 = scmp.eq.s32.totalorder %s40, 0
      %p432 = por %p430, %p431
      %p433 = scmp.ne.s32.totalorder %s419, %s420
      %p434 = scmp.eq.s32.totalorder %s41, 3
      %p435 = por %p433, %p434
      %p437 = scmp.ne.s32.totalorder %s420, %s436
      %p438 = scmp.eq.s32.totalorder %s41, 0
      %p439 = por %p437, %p438
      %s440 = ssub.s32 %s43, %s50
      %p441 = scmp.eq.s32.totalorder %s440, 0
      %s443 = sadd.s32 %s442, 1
      %s444 = scalar_select %p441, %s442, %s443
      %p447 = pneg %p441
      %p448 = scmp.eq.s32.totalorder %s35, 3
      %p449 = por %p447, %p448
      %p450 = scmp.ne.s32.totalorder %s442, %s445
      %p451 = scmp.eq.s32.totalorder %s35, 0
      %p452 = por %p450, %p451
      %p453 = scmp.ne.s32.totalorder %s442, %s445
      %p454 = scmp.eq.s32.totalorder %s40, 3
      %p455 = por %p453, %p454
      %p456 = scmp.ne.s32.totalorder %s445, %s446
      %p457 = scmp.eq.s32.totalorder %s40, 0
      %p458 = por %p456, %p457
      %p459 = scmp.ne.s32.totalorder %s445, %s446
      %p460 = scmp.eq.s32.totalorder %s41, 3
      %p461 = por %p459, %p460
      %p463 = scmp.ne.s32.totalorder %s446, %s462
      %p464 = scmp.eq.s32.totalorder %s41, 0
      %p465 = por %p463, %p464
      %s466 = ssub.s32 %s43, %s50
      %p467 = scmp.eq.s32.totalorder %s466, 0
      %s469 = sadd.s32 %s468, 1
      %s470 = scalar_select %p467, %s468, %s469
      %p473 = pneg %p467
      %p474 = scmp.eq.s32.totalorder %s35, 3
      %p475 = por %p473, %p474
      %p476 = scmp.ne.s32.totalorder %s468, %s471
      %p477 = scmp.eq.s32.totalorder %s35, 0
      %p478 = por %p476, %p477
      %p479 = scmp.ne.s32.totalorder %s468, %s471
      %p480 = scmp.eq.s32.totalorder %s40, 3
      %p481 = por %p479, %p480
      %p482 = scmp.ne.s32.totalorder %s471, %s472
      %p483 = scmp.eq.s32.totalorder %s40, 0
      %p484 = por %p482, %p483
      %p485 = scmp.ne.s32.totalorder %s471, %s472
      %p486 = scmp.eq.s32.totalorder %s41, 3
      %p487 = por %p485, %p486
      %p489 = scmp.ne.s32.totalorder %s472, %s488
      %p490 = scmp.eq.s32.totalorder %s41, 0
      %p491 = por %p489, %p490
      %s492 = ssub.s32 %s43, %s50
      %p493 = scmp.eq.s32.totalorder %s492, 0
      %s495 = sadd.s32 %s494, 1
      %s496 = scalar_select %p493, %s494, %s495
      %p499 = pneg %p493
      %p500 = scmp.eq.s32.totalorder %s35, 3
      %p501 = por %p499, %p500
      %p502 = scmp.ne.s32.totalorder %s494, %s497
      %p503 = scmp.eq.s32.totalorder %s35, 0
      %p504 = por %p502, %p503
      %p505 = scmp.ne.s32.totalorder %s494, %s497
      %p506 = scmp.eq.s32.totalorder %s40, 3
      %p507 = por %p505, %p506
      %p508 = scmp.ne.s32.totalorder %s497, %s498
      %p509 = scmp.eq.s32.totalorder %s40, 0
      %p510 = por %p508, %p509
      %p511 = scmp.ne.s32.totalorder %s497, %s498
      %p512 = scmp.eq.s32.totalorder %s41, 3
      %p513 = por %p511, %p512
      %p515 = scmp.ne.s32.totalorder %s498, %s514
      %p516 = scmp.eq.s32.totalorder %s41, 0
      %p517 = por %p515, %p516
      %s518 = ssub.s32 %s43, %s50
      %p519 = scmp.eq.s32.totalorder %s518, 0
      %s521 = sadd.s32 %s520, 1
      %s522 = scalar_select %p519, %s520, %s521
      %p525 = pneg %p519
      %p526 = scmp.eq.s32.totalorder %s35, 3
      %p527 = por %p525, %p526
      %p528 = scmp.ne.s32.totalorder %s520, %s523
      %p529 = scmp.eq.s32.totalorder %s35, 0
      %p530 = por %p528, %p529
      %p531 = scmp.ne.s32.totalorder %s520, %s523
      %p532 = scmp.eq.s32.totalorder %s40, 3
      %p533 = por %p531, %p532
      %p534 = scmp.ne.s32.totalorder %s523, %s524
      %p535 = scmp.eq.s32.totalorder %s40, 0
      %p536 = por %p534, %p535
      %p537 = scmp.ne.s32.totalorder %s523, %s524
      %p538 = scmp.eq.s32.totalorder %s41, 3
      %p539 = por %p537, %p538
      %p541 = scmp.ne.s32.totalorder %s524, %s540
      %p542 = scmp.eq.s32.totalorder %s41, 0
      %p543 = por %p541, %p542
      %s544 = ssub.s32 %s43, %s50
      %p545 = scmp.eq.s32.totalorder %s544, 0
      %s547 = sadd.s32 %s546, 1
      %s548 = scalar_select %p545, %s546, %s547
      %p551 = pneg %p545
      %p552 = scmp.eq.s32.totalorder %s35, 3
      %p553 = por %p551, %p552
      %p554 = scmp.ne.s32.totalorder %s546, %s549
      %p555 = scmp.eq.s32.totalorder %s35, 0
      %p556 = por %p554, %p555
      %p557 = scmp.ne.s32.totalorder %s546, %s549
      %p558 = scmp.eq.s32.totalorder %s40, 3
      %p559 = por %p557, %p558
      %p560 = scmp.ne.s32.totalorder %s549, %s550
      %p561 = scmp.eq.s32.totalorder %s40, 0
      %p562 = por %p560, %p561
      %p563 = scmp.ne.s32.totalorder %s549, %s550
      %p564 = scmp.eq.s32.totalorder %s41, 3
      %p565 = por %p563, %p564
      %p567 = scmp.ne.s32.totalorder %s550, %s566
      %p568 = scmp.eq.s32.totalorder %s41, 0
      %p569 = por %p567, %p568
      %s571 = sadd.s32 %s570, 1
      %p574 = scmp.eq.s32.totalorder %s35, 3
      %p575 = scmp.ne.s32.totalorder %s570, %s572
      %p576 = scmp.eq.s32.totalorder %s35, 0
      %p577 = por %p575, %p576
      %p578 = scmp.ne.s32.totalorder %s570, %s572
      %p579 = scmp.eq.s32.totalorder %s40, 3
      %p580 = por %p578, %p579
      %p581 = scmp.ne.s32.totalorder %s572, %s573
      %p582 = scmp.eq.s32.totalorder %s40, 0
      %p583 = por %p581, %p582
      %p584 = scmp.ne.s32.totalorder %s572, %s573
      %p585 = scmp.eq.s32.totalorder %s41, 3
      %p586 = por %p584, %p585
      %p588 = scmp.ne.s32.totalorder %s573, %s587
      %p589 = scmp.eq.s32.totalorder %s41, 0
      %p590 = por %p588, %p589
      %s592 = sadd.s32 %s591, 1
      %p595 = scmp.eq.s32.totalorder %s35, 3
      %p596 = scmp.ne.s32.totalorder %s591, %s593
      %p597 = scmp.eq.s32.totalorder %s35, 0
      %p598 = por %p596, %p597
      %p599 = scmp.ne.s32.totalorder %s591, %s593
      %p600 = scmp.eq.s32.totalorder %s40, 3
      %p601 = por %p599, %p600
      %p602 = scmp.ne.s32.totalorder %s593, %s594
      %p603 = scmp.eq.s32.totalorder %s40, 0
      %p604 = por %p602, %p603
      %p605 = scmp.ne.s32.totalorder %s593, %s594
      %p606 = scmp.eq.s32.totalorder %s41, 3
      %p607 = por %p605, %p606
      %p609 = scmp.ne.s32.totalorder %s594, %s608
      %p610 = scmp.eq.s32.totalorder %s41, 0
      %p611 = por %p609, %p610
      %s612 = ssub.s32 %s42, %s54
      %p613 = scmp.eq.s32.totalorder %s612, 0
      %s615 = sadd.s32 %s614, 1
      %s616 = scalar_select %p613, %s614, %s615
      %p619 = pneg %p613
      %p620 = scmp.eq.s32.totalorder %s35, 3
      %p621 = por %p619, %p620
      %p622 = scmp.ne.s32.totalorder %s614, %s617
      %p623 = scmp.eq.s32.totalorder %s35, 0
      %p624 = por %p622, %p623
      %p625 = scmp.ne.s32.totalorder %s614, %s617
      %p626 = scmp.eq.s32.totalorder %s40, 3
      %p627 = por %p625, %p626
      %p628 = scmp.ne.s32.totalorder %s617, %s618
      %p629 = scmp.eq.s32.totalorder %s40, 0
      %p630 = por %p628, %p629
      %p631 = scmp.ne.s32.totalorder %s617, %s618
      %p632 = scmp.eq.s32.totalorder %s41, 3
      %p633 = por %p631, %p632
      %p635 = scmp.ne.s32.totalorder %s618, %s634
      %p636 = scmp.eq.s32.totalorder %s41, 0
      %p637 = por %p635, %p636
      %p638 = scmp.le.s32.totalorder 1, %s35
      %p639 = scmp.lt.s32.totalorder %s35, 5
      %p640 = pnand %p638, %p639
      %p641 = pneg %p640
      // Predicated region
      $region9: #{tpu_custom_call.1} parent=5 // pred_check
        _
      $region10: #{tpu_custom_call.1} parent=5 // pred_check_branch
        %643 = sbr.rel (%p640) target = $region12
      $region11: #{tpu_custom_call.1} parent=5 // pred_region
        %s644 = ssub.s32 %s35, 1
        // Predicated region
        $region13: #{tpu_custom_call.1} parent=11 // pred_check
          %p645 = pneg %p120
        $region14: #{tpu_custom_call.1} parent=11 // pred_check_branch
          %647 = sbr.rel (%p645) target = $region16
        $region15: #{tpu_custom_call.1} parent=11 // pred_region
          %649 = vsyncadd [#allocation7], 0
          %s651 = sshll.u32 %s2, 4
          %s652 = int_to_ptr.hbm [resolvable:$true] %s651
          %s653 = sshll.u32 [#allocation6], 4
          %s654 = int_to_ptr.vmem [resolvable:$true] %s653
          %656 = dma.hbm_to_vmem [thread:$0]  %s652, 128, %s654, [#allocation7]
        $region16: #{tpu_custom_call.1} parent=11 // pred_fallthru
          _
        // Predicated region
        $region17: #{tpu_custom_call.1} parent=11 // pred_check
          %p657 = pneg %p583
        $region18: #{tpu_custom_call.1} parent=11 // pred_check_branch
          %659 = sbr.rel (%p657) target = $region20
        $region19: #{tpu_custom_call.1} parent=11 // pred_region
          _
        $region20: #{tpu_custom_call.1} parent=11 // pred_fallthru
          _
        // Predicated region
        $region21: #{tpu_custom_call.1} parent=11 // pred_check
          %p660 = pneg %p604
        $region22: #{tpu_custom_call.1} parent=11 // pred_check_branch
          %662 = sbr.rel (%p660) target = $region24
        $region23: #{tpu_custom_call.1} parent=11 // pred_region
          _
        $region24: #{tpu_custom_call.1} parent=11 // pred_fallthru
          _
      $region12: #{tpu_custom_call.1} parent=5 // pred_fallthru
        _
      %p663 = scmp.lt.s32.totalorder %s35, 4
      // Predicated region
      $region25: #{tpu_custom_call.1} parent=5 // pred_check
        %p664 = pneg %p663
      $region26: #{tpu_custom_call.1} parent=5 // pred_check_branch
        %666 = sbr.rel (%p664) target = $region28
      $region27: #{tpu_custom_call.1} parent=5 // pred_region
        // Predicated region
        $region29: #{tpu_custom_call.1} parent=27 // pred_check
          %p667 = pneg %p67
        $region30: #{tpu_custom_call.1} parent=27 // pred_check_branch
          %669 = sbr.rel (%p667) target = $region32
        $region31: #{tpu_custom_call.1} parent=27 // pred_region
          %p670 = scmp.lt.s32.totalorder %s42, 1
          %s671 = scalar_select %p670, %s42, 1
          %s672 = smul.addr %s671, 2
          %s673 = smul.addr %s672, 8
          %s674 = scalar_lea.vmem %s0, %s673
        $region32: #{tpu_custom_call.1} parent=27 // pred_fallthru
          _
        // Predicated region
        $region33: #{tpu_custom_call.1} parent=27 // pred_check
          %p675 = pneg %p93
        $region34: #{tpu_custom_call.1} parent=27 // pred_check_branch
          %677 = sbr.rel (%p675) target = $region36
        $region35: #{tpu_custom_call.1} parent=27 // pred_region
          %s678 = sand.u32 %s35, 1
          %s679 = scalar_lea.sflag [#allocation4], %s678
          %s680 = sand.u32 %s83, 1
          %s681 = smul.addr %s680, 16
          %s682 = scalar_lea.vmem [#allocation3], %s681
          %684 = vsyncadd %s679, 0
          %s685 = smul.addr %s42, 4
          %s686 = smul.addr %s685, 4
          %s687 = scalar_lea.hbm %s1, %s686
          %s688 = sshll.u32 %s687, 4
          %s689 = int_to_ptr.hbm [resolvable:$true] %s688
          %s690 = sshll.u32 %s682, 4
          %s691 = int_to_ptr.vmem [resolvable:$true] %s690
          %696 = dma.hbm_to_vmem [thread:$0]  %s689, 256, %s691, %s679, 128, 128, 8
        $region36: #{tpu_custom_call.1} parent=27 // pred_fallthru
          _
        // Predicated region
        $region37: #{tpu_custom_call.1} parent=27 // pred_check
          %p697 = pneg %p140
        $region38: #{tpu_custom_call.1} parent=27 // pred_check_branch
          %699 = sbr.rel (%p697) target = $region40
        $region39: #{tpu_custom_call.1} parent=27 // pred_region
          %s700 = sand.u32 %s35, 1
          %s701 = scalar_lea.sflag [#allocation4], %s700
          %s702 = sand.u32 %s130, 1
          %s703 = scalar_lea.vmem [#allocation8], %s702
          %705 = vsyncadd %s701, 0
          %s706 = scalar_lea.hbm %s3, %s42
          %s708 = sshll.u32 %s706, 4
          %s709 = int_to_ptr.hbm [resolvable:$true] %s708
          %s710 = sshll.u32 %s703, 4
          %s711 = int_to_ptr.vmem [resolvable:$true] %s710
          %713 = dma.hbm_to_vmem [thread:$0]  %s709, 16, %s711, %s701
        $region40: #{tpu_custom_call.1} parent=27 // pred_fallthru
          _
        // Predicated region
        $region41: #{tpu_custom_call.1} parent=27 // pred_check
          %p714 = pneg %p166
        $region42: #{tpu_custom_call.1} parent=27 // pred_check_branch
          %716 = sbr.rel (%p714) target = $region44
        $region43: #{tpu_custom_call.1} parent=27 // pred_region
          %s717 = sand.u32 %s35, 1
          %s718 = scalar_lea.sflag [#allocation4], %s717
          %s719 = sand.u32 %s156, 1
          %s720 = smul.addr %s719, 768
          %s721 = scalar_lea.vmem [#allocation9], %s720
          %723 = vsyncadd %s718, 0
          %s724 = smul.addr %s43, 192
          %s725 = smul.addr %s724, 4
          %s726 = scalar_lea.hbm %s4, %s725
          %s727 = sshll.u32 %s726, 4
          %s728 = int_to_ptr.hbm [resolvable:$true] %s727
          %s729 = sshll.u32 %s721, 4
          %s730 = int_to_ptr.vmem [resolvable:$true] %s729
          %735 = dma.hbm_to_vmem [thread:$0]  %s728, 12288, %s730, %s718, 384, 384, 24
        $region44: #{tpu_custom_call.1} parent=27 // pred_fallthru
          _
        // Predicated region
        $region45: #{tpu_custom_call.1} parent=27 // pred_check
          %p736 = pneg %p192
        $region46: #{tpu_custom_call.1} parent=27 // pred_check_branch
          %738 = sbr.rel (%p736) target = $region48
        $region47: #{tpu_custom_call.1} parent=27 // pred_region
          %p739 = scmp.lt.s32.totalorder %s43, 1
          %s740 = scalar_select %p739, %s43, 1
          %s741 = smul.addr %s740, 6
          %s742 = scalar_lea.vmem %s5, %s741
        $region48: #{tpu_custom_call.1} parent=27 // pred_fallthru
          _
        // Predicated region
        $region49: #{tpu_custom_call.1} parent=27 // pred_check
          %p743 = pneg %p218
        $region50: #{tpu_custom_call.1} parent=27 // pred_check_branch
          %745 = sbr.rel (%p743) target = $region52
        $region51: #{tpu_custom_call.1} parent=27 // pred_region
          %s746 = sand.u32 %s35, 1
          %s747 = scalar_lea.sflag [#allocation4], %s746
          %s748 = sand.u32 %s208, 1
          %s749 = smul.addr %s748, 256
          %s750 = scalar_lea.vmem [#allocation10], %s749
          %752 = vsyncadd %s747, 0
          %s753 = smul.addr %s43, 64
          %s754 = smul.addr %s753, 4
          %s755 = scalar_lea.hbm %s6, %s754
          %s756 = sshll.u32 %s755, 4
          %s757 = int_to_ptr.hbm [resolvable:$true] %s756
          %s758 = sshll.u32 %s750, 4
          %s759 = int_to_ptr.vmem [resolvable:$true] %s758
          %764 = dma.hbm_to_vmem [thread:$0]  %s757, 4096, %s759, %s747, 128, 128, 8
        $region52: #{tpu_custom_call.1} parent=27 // pred_fallthru
          _
        // Predicated region
        $region53: #{tpu_custom_call.1} parent=27 // pred_check
          %p765 = pneg %p244
        $region54: #{tpu_custom_call.1} parent=27 // pred_check_branch
          %767 = sbr.rel (%p765) target = $region56
        $region55: #{tpu_custom_call.1} parent=27 // pred_region
          %s768 = sand.u32 %s35, 1
          %s769 = scalar_lea.sflag [#allocation4], %s768
          %s770 = sand.u32 %s234, 1
          %s771 = smul.addr %s770, 2
          %s772 = scalar_lea.vmem [#allocation11], %s771
          %774 = vsyncadd %s769, 0
          %s775 = smul.addr %s43, 2
          %s776 = scalar_lea.hbm %s7, %s775
          %s778 = sshll.u32 %s776, 4
          %s779 = int_to_ptr.hbm [resolvable:$true] %s778
          %s780 = sshll.u32 %s772, 4
          %s781 = int_to_ptr.vmem [resolvable:$true] %s780
          %783 = dma.hbm_to_vmem [thread:$0]  %s779, 32, %s781, %s769
        $region56: #{tpu_custom_call.1} parent=27 // pred_fallthru
          _
        // Predicated region
        $region57: #{tpu_custom_call.1} parent=27 // pred_check
          %p784 = pneg %p270
        $region58: #{tpu_custom_call.1} parent=27 // pred_check_branch
          %786 = sbr.rel (%p784) target = $region60
        $region59: #{tpu_custom_call.1} parent=27 // pred_region
          %s787 = sand.u32 %s35, 1
          %s788 = scalar_lea.sflag [#allocation4], %s787
          %s789 = sand.u32 %s260, 1
          %s790 = smul.addr %s789, 256
          %s791 = scalar_lea.vmem [#allocation12], %s790
          %793 = vsyncadd %s788, 0
          %s794 = smul.addr %s43, 64
          %s795 = smul.addr %s794, 4
          %s796 = scalar_lea.hbm %s8, %s795
          %s797 = sshll.u32 %s796, 4
          %s798 = int_to_ptr.hbm [resolvable:$true] %s797
          %s799 = sshll.u32 %s791, 4
          %s800 = int_to_ptr.vmem [resolvable:$true] %s799
          %805 = dma.hbm_to_vmem [thread:$0]  %s798, 4096, %s800, %s788, 128, 128, 8
        $region60: #{tpu_custom_call.1} parent=27 // pred_fallthru
          _
        // Predicated region
        $region61: #{tpu_custom_call.1} parent=27 // pred_check
          %p806 = pneg %p296
        $region62: #{tpu_custom_call.1} parent=27 // pred_check_branch
          %808 = sbr.rel (%p806) target = $region64
        $region63: #{tpu_custom_call.1} parent=27 // pred_region
          %s809 = sand.u32 %s35, 1
          %s810 = scalar_lea.sflag [#allocation4], %s809
          %s811 = sand.u32 %s286, 1
          %s812 = smul.addr %s811, 2
          %s813 = scalar_lea.vmem [#allocation13], %s812
          %815 = vsyncadd %s810, 0
          %s816 = smul.addr %s43, 2
          %s817 = scalar_lea.hbm %s9, %s816
          %s819 = sshll.u32 %s817, 4
          %s820 = int_to_ptr.hbm [resolvable:$true] %s819
          %s821 = sshll.u32 %s813, 4
          %s822 = int_to_ptr.vmem [resolvable:$true] %s821
          %824 = dma.hbm_to_vmem [thread:$0]  %s820, 32, %s822, %s810
        $region64: #{tpu_custom_call.1} parent=27 // pred_fallthru
          _
        // Predicated region
        $region65: #{tpu_custom_call.1} parent=27 // pred_check
          %p825 = pneg %p322
        $region66: #{tpu_custom_call.1} parent=27 // pred_check_branch
          %827 = sbr.rel (%p825) target = $region68
        $region67: #{tpu_custom_call.1} parent=27 // pred_region
          %s828 = sand.u32 %s35, 1
          %s829 = scalar_lea.sflag [#allocation4], %s828
          %s830 = sand.u32 %s312, 1
          %s831 = smul.addr %s830, 512
          %s832 = scalar_lea.vmem [#allocation14], %s831
          %834 = vsyncadd %s829, 0
          %s835 = smul.addr %s43, 128
          %s836 = smul.addr %s835, 4
          %s837 = scalar_lea.hbm %s10, %s836
          %s838 = sshll.u32 %s837, 4
          %s839 = int_to_ptr.hbm [resolvable:$true] %s838
          %s840 = sshll.u32 %s832, 4
          %s841 = int_to_ptr.vmem [resolvable:$true] %s840
          %846 = dma.hbm_to_vmem [thread:$0]  %s839, 8192, %s841, %s829, 256, 256, 16
        $region68: #{tpu_custom_call.1} parent=27 // pred_fallthru
          _
        // Predicated region
        $region69: #{tpu_custom_call.1} parent=27 // pred_check
          %p847 = pneg %p348
        $region70: #{tpu_custom_call.1} parent=27 // pred_check_branch
          %849 = sbr.rel (%p847) target = $region72
        $region71: #{tpu_custom_call.1} parent=27 // pred_region
          %s850 = sand.u32 %s35, 1
          %s851 = scalar_lea.sflag [#allocation4], %s850
          %s852 = sand.u32 %s338, 1
          %s853 = smul.addr %s852, 4
          %s854 = scalar_lea.vmem [#allocation15], %s853
          %856 = vsyncadd %s851, 0
          %s857 = smul.addr %s43, 4
          %s858 = scalar_lea.hbm %s11, %s857
          %s860 = sshll.u32 %s858, 4
          %s861 = int_to_ptr.hbm [resolvable:$true] %s860
          %s862 = sshll.u32 %s854, 4
          %s863 = int_to_ptr.vmem [resolvable:$true] %s862
          %865 = dma.hbm_to_vmem [thread:$0]  %s861, 64, %s863, %s851
        $region72: #{tpu_custom_call.1} parent=27 // pred_fallthru
          _
        // Predicated region
        $region73: #{tpu_custom_call.1} parent=27 // pred_check
          %p866 = pneg %p374
        $region74: #{tpu_custom_call.1} parent=27 // pred_check_branch
          %868 = sbr.rel (%p866) target = $region76
        $region75: #{tpu_custom_call.1} parent=27 // pred_region
          %s869 = sand.u32 %s35, 1
          %s870 = scalar_lea.sflag [#allocation4], %s869
          %s871 = sand.u32 %s364, 1
          %s872 = smul.addr %s871, 256
          %s873 = scalar_lea.vmem [#allocation16], %s872
          %875 = vsyncadd %s870, 0
          %s876 = smul.addr %s43, 64
          %s877 = smul.addr %s876, 4
          %s878 = scalar_lea.hbm %s12, %s877
          %s879 = sshll.u32 %s878, 4
          %s880 = int_to_ptr.hbm [resolvable:$true] %s879
          %s881 = sshll.u32 %s873, 4
          %s882 = int_to_ptr.vmem [resolvable:$true] %s881
          %887 = dma.hbm_to_vmem [thread:$0]  %s880, 4096, %s882, %s870, 128, 128, 8
        $region76: #{tpu_custom_call.1} parent=27 // pred_fallthru
          _
        // Predicated region
        $region77: #{tpu_custom_call.1} parent=27 // pred_check
          %p888 = pneg %p400
        $region78: #{tpu_custom_call.1} parent=27 // pred_check_branch
          %890 = sbr.rel (%p888) target = $region80
        $region79: #{tpu_custom_call.1} parent=27 // pred_region
          %s891 = sand.u32 %s35, 1
          %s892 = scalar_lea.sflag [#allocation4], %s891
          %s893 = sand.u32 %s390, 1
          %s894 = smul.addr %s893, 2
          %s895 = scalar_lea.vmem [#allocation17], %s894
          %897 = vsyncadd %s892, 0
          %s898 = smul.addr %s43, 2
          %s899 = scalar_lea.hbm %s13, %s898
          %s901 = sshll.u32 %s899, 4
          %s902 = int_to_ptr.hbm [resolvable:$true] %s901
          %s903 = sshll.u32 %s895, 4
          %s904 = int_to_ptr.vmem [resolvable:$true] %s903
          %906 = dma.hbm_to_vmem [thread:$0]  %s902, 32, %s904, %s892
        $region80: #{tpu_custom_call.1} parent=27 // pred_fallthru
          _
        // Predicated region
        $region81: #{tpu_custom_call.1} parent=27 // pred_check
          %p907 = pneg %p426
        $region82: #{tpu_custom_call.1} parent=27 // pred_check_branch
          %909 = sbr.rel (%p907) target = $region84
        $region83: #{tpu_custom_call.1} parent=27 // pred_region
          %p910 = scmp.lt.s32.totalorder %s43, 1
          %s911 = scalar_select %p910, %s43, 1
          %s912 = smul.addr %s911, 2
          %s913 = smul.addr %s912, 4
          %s914 = scalar_lea.vmem %s14, %s913
        $region84: #{tpu_custom_call.1} parent=27 // pred_fallthru
          _
        // Predicated region
        $region85: #{tpu_custom_call.1} parent=27 // pred_check
          %p915 = pneg %p452
        $region86: #{tpu_custom_call.1} parent=27 // pred_check_branch
          %917 = sbr.rel (%p915) target = $region88
        $region87: #{tpu_custom_call.1} parent=27 // pred_region
          %p918 = scmp.lt.s32.totalorder %s43, 1
          %s919 = scalar_select %p918, %s43, 1
          %s920 = smul.addr %s919, 2
          %s921 = smul.addr %s920, 4
          %s922 = scalar_lea.vmem %s15, %s921
        $region88: #{tpu_custom_call.1} parent=27 // pred_fallthru
          _
        // Predicated region
        $region89: #{tpu_custom_call.1} parent=27 // pred_check
          %p923 = pneg %p478
        $region90: #{tpu_custom_call.1} parent=27 // pred_check_branch
          %925 = sbr.rel (%p923) target = $region92
        $region91: #{tpu_custom_call.1} parent=27 // pred_region
          %s926 = sand.u32 %s35, 1
          %s927 = scalar_lea.sflag [#allocation4], %s926
          %s928 = sand.u32 %s468, 1
          %s929 = smul.addr %s928, 1024
          %s930 = scalar_lea.vmem [#allocation18], %s929
          %932 = vsyncadd %s927, 0
          %s933 = smul.addr %s43, 256
          %s934 = smul.addr %s933, 4
          %s935 = scalar_lea.hbm %s16, %s934
          %s936 = sshll.u32 %s935, 4
          %s937 = int_to_ptr.hbm [resolvable:$true] %s936
          %s938 = sshll.u32 %s930, 4
          %s939 = int_to_ptr.vmem [resolvable:$true] %s938
          %944 = dma.hbm_to_vmem [thread:$0]  %s937, 16384, %s939, %s927, 512, 512, 32
        $region92: #{tpu_custom_call.1} parent=27 // pred_fallthru
          _
        // Predicated region
        $region93: #{tpu_custom_call.1} parent=27 // pred_check
          %p945 = pneg %p504
        $region94: #{tpu_custom_call.1} parent=27 // pred_check_branch
          %947 = sbr.rel (%p945) target = $region96
        $region95: #{tpu_custom_call.1} parent=27 // pred_region
          %s948 = sand.u32 %s35, 1
          %s949 = scalar_lea.sflag [#allocation4], %s948
          %s950 = sand.u32 %s494, 1
          %s951 = smul.addr %s950, 8
          %s952 = scalar_lea.vmem [#allocation19], %s951
          %954 = vsyncadd %s949, 0
          %s955 = smul.addr %s43, 8
          %s956 = scalar_lea.hbm %s17, %s955
          %s958 = sshll.u32 %s956, 4
          %s959 = int_to_ptr.hbm [resolvable:$true] %s958
          %s960 = sshll.u32 %s952, 4
          %s961 = int_to_ptr.vmem [resolvable:$true] %s960
          %963 = dma.hbm_to_vmem [thread:$0]  %s959, 128, %s961, %s949
        $region96: #{tpu_custom_call.1} parent=27 // pred_fallthru
          _
        // Predicated region
        $region97: #{tpu_custom_call.1} parent=27 // pred_check
          %p964 = pneg %p530
        $region98: #{tpu_custom_call.1} parent=27 // pred_check_branch
          %966 = sbr.rel (%p964) target = $region100
        $region99: #{tpu_custom_call.1} parent=27 // pred_region
          %s967 = sand.u32 %s35, 1
          %s968 = scalar_lea.sflag [#allocation4], %s967
          %s969 = sand.u32 %s520, 1
          %s970 = smul.addr %s969, 1024
          %s971 = scalar_lea.vmem [#allocation20], %s970
          %973 = vsyncadd %s968, 0
          %s974 = smul.addr %s43, 256
          %s975 = smul.addr %s974, 4
          %s976 = scalar_lea.hbm %s18, %s975
          %s977 = sshll.u32 %s976, 4
          %s978 = int_to_ptr.hbm [resolvable:$true] %s977
          %s979 = sshll.u32 %s971, 4
          %s980 = int_to_ptr.vmem [resolvable:$true] %s979
          %985 = dma.hbm_to_vmem [thread:$0]  %s978, 16384, %s980, %s968, 128, 128, 8
        $region100: #{tpu_custom_call.1} parent=27 // pred_fallthru
          _
        // Predicated region
        $region101: #{tpu_custom_call.1} parent=27 // pred_check
          %p986 = pneg %p556
        $region102: #{tpu_custom_call.1} parent=27 // pred_check_branch
          %988 = sbr.rel (%p986) target = $region104
        $region103: #{tpu_custom_call.1} parent=27 // pred_region
          %p989 = scmp.lt.s32.totalorder %s43, 1
          %s990 = scalar_select %p989, %s43, 1
          %s991 = smul.addr %s990, 2
          %s992 = scalar_lea.vmem %s19, %s991
        $region104: #{tpu_custom_call.1} parent=27 // pred_fallthru
          _
      $region28: #{tpu_custom_call.1} parent=5 // pred_fallthru
        _
      %p993 = scmp.le.s32.totalorder 1, %s35
      %p994 = scmp.lt.s32.totalorder %s35, 5
      %p995 = pnand %p993, %p994
      %p996 = pneg %p995
      // Predicated region
      $region105: #{tpu_custom_call.1} parent=5 // pred_check
        _
      $region106: #{tpu_custom_call.1} parent=5 // pred_check_branch
        %998 = sbr.rel (%p995) target = $region108
      $region107: #{tpu_custom_call.1} parent=5 // pred_region
        %s999 = ssub.s32 %s35, 1
        %s1000 = sand.u32 %s40, 1
        %s1001 = scalar_lea.sflag [#allocation4], %s1000
        %s1002 = sand.u32 %s86, 1
        %s1003 = smul.addr %s1002, 16
        %s1004 = scalar_lea.vmem [#allocation3], %s1003
        // Predicated region
        $region109: #{tpu_custom_call.1} parent=107 // pred_check
          %p1005 = pneg %p99
        $region110: #{tpu_custom_call.1} parent=107 // pred_check_branch
          %1007 = sbr.rel (%p1005) target = $region112
        $region111: #{tpu_custom_call.1} parent=107 // pred_region
          %1009 = dma.done %s1001, 256
        $region112: #{tpu_custom_call.1} parent=107 // pred_fallthru
          _
        // Predicated region
        $region113: #{tpu_custom_call.1} parent=107 // pred_check
          %p1010 = pneg %p120
        $region114: #{tpu_custom_call.1} parent=107 // pred_check_branch
          %1012 = sbr.rel (%p1010) target = $region116
        $region115: #{tpu_custom_call.1} parent=107 // pred_region
          %1014 = dma.done [#allocation7], 128
        $region116: #{tpu_custom_call.1} parent=107 // pred_fallthru
          _
        %s1015 = sand.u32 %s40, 1
        %s1016 = scalar_lea.sflag [#allocation4], %s1015
        %s1017 = sand.u32 %s133, 1
        %s1018 = scalar_lea.vmem [#allocation8], %s1017
        // Predicated region
        $region117: #{tpu_custom_call.1} parent=107 // pred_check
          %p1019 = pneg %p146
        $region118: #{tpu_custom_call.1} parent=107 // pred_check_branch
          %1021 = sbr.rel (%p1019) target = $region120
        $region119: #{tpu_custom_call.1} parent=107 // pred_region
          %1023 = dma.done %s1016, 16
        $region120: #{tpu_custom_call.1} parent=107 // pred_fallthru
          _
        %s1024 = sand.u32 %s40, 1
        %s1025 = scalar_lea.sflag [#allocation4], %s1024
        %s1026 = sand.u32 %s159, 1
        %s1027 = smul.addr %s1026, 768
        %s1028 = scalar_lea.vmem [#allocation9], %s1027
        // Predicated region
        $region121: #{tpu_custom_call.1} parent=107 // pred_check
          %p1029 = pneg %p172
        $region122: #{tpu_custom_call.1} parent=107 // pred_check_branch
          %1031 = sbr.rel (%p1029) target = $region124
        $region123: #{tpu_custom_call.1} parent=107 // pred_region
          %1033 = dma.done %s1025, 12288
        $region124: #{tpu_custom_call.1} parent=107 // pred_fallthru
          _
        %s1034 = sand.u32 %s40, 1
        %s1035 = scalar_lea.sflag [#allocation4], %s1034
        %s1036 = sand.u32 %s211, 1
        %s1037 = smul.addr %s1036, 256
        %s1038 = scalar_lea.vmem [#allocation10], %s1037
        // Predicated region
        $region125: #{tpu_custom_call.1} parent=107 // pred_check
          %p1039 = pneg %p224
        $region126: #{tpu_custom_call.1} parent=107 // pred_check_branch
          %1041 = sbr.rel (%p1039) target = $region128
        $region127: #{tpu_custom_call.1} parent=107 // pred_region
          %1043 = dma.done %s1035, 4096
        $region128: #{tpu_custom_call.1} parent=107 // pred_fallthru
          _
        %s1044 = sand.u32 %s40, 1
        %s1045 = scalar_lea.sflag [#allocation4], %s1044
        %s1046 = sand.u32 %s237, 1
        %s1047 = smul.addr %s1046, 2
        %s1048 = scalar_lea.vmem [#allocation11], %s1047
        // Predicated region
        $region129: #{tpu_custom_call.1} parent=107 // pred_check
          %p1049 = pneg %p250
        $region130: #{tpu_custom_call.1} parent=107 // pred_check_branch
          %1051 = sbr.rel (%p1049) target = $region132
        $region131: #{tpu_custom_call.1} parent=107 // pred_region
          %1053 = dma.done %s1045, 32
        $region132: #{tpu_custom_call.1} parent=107 // pred_fallthru
          _
        %s1054 = sand.u32 %s40, 1
        %s1055 = scalar_lea.sflag [#allocation4], %s1054
        %s1056 = sand.u32 %s263, 1
        %s1057 = smul.addr %s1056, 256
        %s1058 = scalar_lea.vmem [#allocation12], %s1057
        // Predicated region
        $region133: #{tpu_custom_call.1} parent=107 // pred_check
          %p1059 = pneg %p276
        $region134: #{tpu_custom_call.1} parent=107 // pred_check_branch
          %1061 = sbr.rel (%p1059) target = $region136
        $region135: #{tpu_custom_call.1} parent=107 // pred_region
          %1063 = dma.done %s1055, 4096
        $region136: #{tpu_custom_call.1} parent=107 // pred_fallthru
          _
        %s1064 = sand.u32 %s40, 1
        %s1065 = scalar_lea.sflag [#allocation4], %s1064
        %s1066 = sand.u32 %s289, 1
        %s1067 = smul.addr %s1066, 2
        %s1068 = scalar_lea.vmem [#allocation13], %s1067
        // Predicated region
        $region137: #{tpu_custom_call.1} parent=107 // pred_check
          %p1069 = pneg %p302
        $region138: #{tpu_custom_call.1} parent=107 // pred_check_branch
          %1071 = sbr.rel (%p1069) target = $region140
        $region139: #{tpu_custom_call.1} parent=107 // pred_region
          %1073 = dma.done %s1065, 32
        $region140: #{tpu_custom_call.1} parent=107 // pred_fallthru
          _
        %s1074 = sand.u32 %s40, 1
        %s1075 = scalar_lea.sflag [#allocation4], %s1074
        %s1076 = sand.u32 %s315, 1
        %s1077 = smul.addr %s1076, 512
        %s1078 = scalar_lea.vmem [#allocation14], %s1077
        // Predicated region
        $region141: #{tpu_custom_call.1} parent=107 // pred_check
          %p1079 = pneg %p328
        $region142: #{tpu_custom_call.1} parent=107 // pred_check_branch
          %1081 = sbr.rel (%p1079) target = $region144
        $region143: #{tpu_custom_call.1} parent=107 // pred_region
          %1083 = dma.done %s1075, 8192
        $region144: #{tpu_custom_call.1} parent=107 // pred_fallthru
          _
        %s1084 = sand.u32 %s40, 1
        %s1085 = scalar_lea.sflag [#allocation4], %s1084
        %s1086 = sand.u32 %s341, 1
        %s1087 = smul.addr %s1086, 4
        %s1088 = scalar_lea.vmem [#allocation15], %s1087
        // Predicated region
        $region145: #{tpu_custom_call.1} parent=107 // pred_check
          %p1089 = pneg %p354
        $region146: #{tpu_custom_call.1} parent=107 // pred_check_branch
          %1091 = sbr.rel (%p1089) target = $region148
        $region147: #{tpu_custom_call.1} parent=107 // pred_region
          %1093 = dma.done %s1085, 64
        $region148: #{tpu_custom_call.1} parent=107 // pred_fallthru
          _
        %s1094 = sand.u32 %s40, 1
        %s1095 = scalar_lea.sflag [#allocation4], %s1094
        %s1096 = sand.u32 %s367, 1
        %s1097 = smul.addr %s1096, 256
        %s1098 = scalar_lea.vmem [#allocation16], %s1097
        // Predicated region
        $region149: #{tpu_custom_call.1} parent=107 // pred_check
          %p1099 = pneg %p380
        $region150: #{tpu_custom_call.1} parent=107 // pred_check_branch
          %1101 = sbr.rel (%p1099) target = $region152
        $region151: #{tpu_custom_call.1} parent=107 // pred_region
          %1103 = dma.done %s1095, 4096
        $region152: #{tpu_custom_call.1} parent=107 // pred_fallthru
          _
        %s1104 = sand.u32 %s40, 1
        %s1105 = scalar_lea.sflag [#allocation4], %s1104
        %s1106 = sand.u32 %s393, 1
        %s1107 = smul.addr %s1106, 2
        %s1108 = scalar_lea.vmem [#allocation17], %s1107
        // Predicated region
        $region153: #{tpu_custom_call.1} parent=107 // pred_check
          %p1109 = pneg %p406
        $region154: #{tpu_custom_call.1} parent=107 // pred_check_branch
          %1111 = sbr.rel (%p1109) target = $region156
        $region155: #{tpu_custom_call.1} parent=107 // pred_region
          %1113 = dma.done %s1105, 32
        $region156: #{tpu_custom_call.1} parent=107 // pred_fallthru
          _
        %s1114 = sand.u32 %s40, 1
        %s1115 = scalar_lea.sflag [#allocation4], %s1114
        %s1116 = sand.u32 %s471, 1
        %s1117 = smul.addr %s1116, 1024
        %s1118 = scalar_lea.vmem [#allocation18], %s1117
        // Predicated region
        $region157: #{tpu_custom_call.1} parent=107 // pred_check
          %p1119 = pneg %p484
        $region158: #{tpu_custom_call.1} parent=107 // pred_check_branch
          %1121 = sbr.rel (%p1119) target = $region160
        $region159: #{tpu_custom_call.1} parent=107 // pred_region
          %1123 = dma.done %s1115, 16384
        $region160: #{tpu_custom_call.1} parent=107 // pred_fallthru
          _
        %s1124 = sand.u32 %s40, 1
        %s1125 = scalar_lea.sflag [#allocation4], %s1124
        %s1126 = sand.u32 %s497, 1
        %s1127 = smul.addr %s1126, 8
        %s1128 = scalar_lea.vmem [#allocation19], %s1127
        // Predicated region
        $region161: #{tpu_custom_call.1} parent=107 // pred_check
          %p1129 = pneg %p510
        $region162: #{tpu_custom_call.1} parent=107 // pred_check_branch
          %1131 = sbr.rel (%p1129) target = $region164
        $region163: #{tpu_custom_call.1} parent=107 // pred_region
          %1133 = dma.done %s1125, 128
        $region164: #{tpu_custom_call.1} parent=107 // pred_fallthru
          _
        %s1134 = sand.u32 %s40, 1
        %s1135 = scalar_lea.sflag [#allocation4], %s1134
        %s1136 = sand.u32 %s523, 1
        %s1137 = smul.addr %s1136, 1024
        %s1138 = scalar_lea.vmem [#allocation20], %s1137
        // Predicated region
        $region165: #{tpu_custom_call.1} parent=107 // pred_check
          %p1139 = pneg %p536
        $region166: #{tpu_custom_call.1} parent=107 // pred_check_branch
          %1141 = sbr.rel (%p1139) target = $region168
        $region167: #{tpu_custom_call.1} parent=107 // pred_region
          %1143 = dma.done %s1135, 16384
        $region168: #{tpu_custom_call.1} parent=107 // pred_fallthru
          _
        %p1144 = scmp.lt.s32.totalorder %s44, 1
        %s1145 = scalar_select %p1144, %s44, 1
        %s1146 = smul.addr %s1145, 2
        %s1147 = smul.addr %s1146, 8
        %s1148 = scalar_lea.vmem %s0, %s1147
        %p1149 = pneg %p73
        %p1150 = pneg %p70
        %s1151 = sand.u32 %s40, 1
        %s1152 = scalar_lea.sflag [#allocation4], %s1151
        %s1153 = sand.u32 %s86, 1
        %s1154 = smul.addr %s1153, 16
        %s1155 = scalar_lea.vmem [#allocation3], %s1154
        %p1156 = pneg %p99
        %p1157 = pneg %p96
        %p1158 = pneg %p120
        %p1159 = pneg %p117
        %s1160 = sand.u32 %s40, 1
        %s1161 = scalar_lea.sflag [#allocation4], %s1160
        %s1162 = sand.u32 %s133, 1
        %s1163 = scalar_lea.vmem [#allocation8], %s1162
        %p1164 = pneg %p146
        %p1165 = pneg %p143
        %s1166 = sand.u32 %s40, 1
        %s1167 = scalar_lea.sflag [#allocation4], %s1166
        %s1168 = sand.u32 %s159, 1
        %s1169 = smul.addr %s1168, 768
        %s1170 = scalar_lea.vmem [#allocation9], %s1169
        %p1171 = pneg %p172
        %p1172 = pneg %p169
        %p1173 = scmp.lt.s32.totalorder %s45, 1
        %s1174 = scalar_select %p1173, %s45, 1
        %s1175 = smul.addr %s1174, 6
        %s1176 = scalar_lea.vmem %s5, %s1175
        %p1177 = pneg %p198
        %p1178 = pneg %p195
        %s1179 = sand.u32 %s40, 1
        %s1180 = scalar_lea.sflag [#allocation4], %s1179
        %s1181 = sand.u32 %s211, 1
        %s1182 = smul.addr %s1181, 256
        %s1183 = scalar_lea.vmem [#allocation10], %s1182
        %p1184 = pneg %p224
        %p1185 = pneg %p221
        %s1186 = sand.u32 %s40, 1
        %s1187 = scalar_lea.sflag [#allocation4], %s1186
        %s1188 = sand.u32 %s237, 1
        %s1189 = smul.addr %s1188, 2
        %s1190 = scalar_lea.vmem [#allocation11], %s1189
        %p1191 = pneg %p250
        %p1192 = pneg %p247
        %s1193 = sand.u32 %s40, 1
        %s1194 = scalar_lea.sflag [#allocation4], %s1193
        %s1195 = sand.u32 %s263, 1
        %s1196 = smul.addr %s1195, 256
        %s1197 = scalar_lea.vmem [#allocation12], %s1196
        %p1198 = pneg %p276
        %p1199 = pneg %p273
        %s1200 = sand.u32 %s40, 1
        %s1201 = scalar_lea.sflag [#allocation4], %s1200
        %s1202 = sand.u32 %s289, 1
        %s1203 = smul.addr %s1202, 2
        %s1204 = scalar_lea.vmem [#allocation13], %s1203
        %p1205 = pneg %p302
        %p1206 = pneg %p299
        %s1207 = sand.u32 %s40, 1
        %s1208 = scalar_lea.sflag [#allocation4], %s1207
        %s1209 = sand.u32 %s315, 1
        %s1210 = smul.addr %s1209, 512
        %s1211 = scalar_lea.vmem [#allocation14], %s1210
        %p1212 = pneg %p328
        %p1213 = pneg %p325
        %s1214 = sand.u32 %s40, 1
        %s1215 = scalar_lea.sflag [#allocation4], %s1214
        %s1216 = sand.u32 %s341, 1
        %s1217 = smul.addr %s1216, 4
        %s1218 = scalar_lea.vmem [#allocation15], %s1217
        %p1219 = pneg %p354
        %p1220 = pneg %p351
        %s1221 = sand.u32 %s40, 1
        %s1222 = scalar_lea.sflag [#allocation4], %s1221
        %s1223 = sand.u32 %s367, 1
        %s1224 = smul.addr %s1223, 256
        %s1225 = scalar_lea.vmem [#allocation16], %s1224
        %p1226 = pneg %p380
        %p1227 = pneg %p377
        %s1228 = sand.u32 %s40, 1
        %s1229 = scalar_lea.sflag [#allocation4], %s1228
        %s1230 = sand.u32 %s393, 1
        %s1231 = smul.addr %s1230, 2
        %s1232 = scalar_lea.vmem [#allocation17], %s1231
        %p1233 = pneg %p406
        %p1234 = pneg %p403
        %p1235 = scmp.lt.s32.totalorder %s45, 1
        %s1236 = scalar_select %p1235, %s45, 1
        %s1237 = smul.addr %s1236, 2
        %s1238 = smul.addr %s1237, 4
        %s1239 = scalar_lea.vmem %s14, %s1238
        %p1240 = pneg %p432
        %p1241 = pneg %p429
        %p1242 = scmp.lt.s32.totalorder %s45, 1
        %s1243 = scalar_select %p1242, %s45, 1
        %s1244 = smul.addr %s1243, 2
        %s1245 = smul.addr %s1244, 4
        %s1246 = scalar_lea.vmem %s15, %s1245
        %p1247 = pneg %p458
        %p1248 = pneg %p455
        %s1249 = sand.u32 %s40, 1
        %s1250 = scalar_lea.sflag [#allocation4], %s1249
        %s1251 = sand.u32 %s471, 1
        %s1252 = smul.addr %s1251, 1024
        %s1253 = scalar_lea.vmem [#allocation18], %s1252
        %p1254 = pneg %p484
        %p1255 = pneg %p481
        %s1256 = sand.u32 %s40, 1
        %s1257 = scalar_lea.sflag [#allocation4], %s1256
        %s1258 = sand.u32 %s497, 1
        %s1259 = smul.addr %s1258, 8
        %s1260 = scalar_lea.vmem [#allocation19], %s1259
        %p1261 = pneg %p510
        %p1262 = pneg %p507
        %s1263 = sand.u32 %s40, 1
        %s1264 = scalar_lea.sflag [#allocation4], %s1263
        %s1265 = sand.u32 %s523, 1
        %s1266 = smul.addr %s1265, 1024
        %s1267 = scalar_lea.vmem [#allocation20], %s1266
        %p1268 = pneg %p536
        %p1269 = pneg %p533
        %p1270 = scmp.lt.s32.totalorder %s45, 1
        %s1271 = scalar_select %p1270, %s45, 1
        %s1272 = smul.addr %s1271, 2
        %s1273 = scalar_lea.vmem %s19, %s1272
        %p1274 = pneg %p562
        %p1275 = pneg %p559
        %p1276 = pneg %p583
        %p1277 = pneg %p580
        %p1278 = pneg %p604
        %p1279 = pneg %p601
        %p1280 = pneg %p630
        %p1281 = pneg %p627
        %s1282 = sand.u32 %s617, 1
        %s1283 = scalar_lea.sflag [#allocation5], %s1282
        %s1284 = sand.u32 %s617, 1
        %s1285 = smul.addr %s1284, 16
        %s1286 = scalar_lea.vmem [#allocation21], %s1285
        %p1287 = scmp.lt.s32.totalorder %s44, 1
        %s1288 = scalar_select %p1287, %s44, 1
        %s1289 = smul.addr %s1288, 2
        %s1290 = smul.addr %s1289, 8
        %s1291 = scalar_lea.vmem %s0, %s1290
        %p1292 = scmp.lt.s32.totalorder %s45, 1
        %s1293 = scalar_select %p1292, %s45, 1
        %s1294 = smul.addr %s1293, 6
        %s1295 = scalar_lea.vmem %s5, %s1294
        %p1296 = scmp.lt.s32.totalorder %s45, 1
        %s1297 = scalar_select %p1296, %s45, 1
        %s1298 = smul.addr %s1297, 2
        %s1299 = smul.addr %s1298, 4
        %s1300 = scalar_lea.vmem %s14, %s1299
        %p1301 = scmp.lt.s32.totalorder %s45, 1
        %s1302 = scalar_select %p1301, %s45, 1
        %s1303 = smul.addr %s1302, 2
        %s1304 = smul.addr %s1303, 4
        %s1305 = scalar_lea.vmem %s15, %s1304
        %p1306 = scmp.lt.s32.totalorder %s45, 1
        %s1307 = scalar_select %p1306, %s45, 1
        %s1308 = smul.addr %s1307, 2
        %s1309 = scalar_lea.vmem %s19, %s1308
        %p1311 = scmp.eq.s32.totalorder %s45, 0
        // Predicated region
        $region169: #{tpu_custom_call.1} parent=107 // pred_check
          %p1312 = pneg %p1311
        $region170: #{tpu_custom_call.1} parent=107 // pred_check_branch
          %1314 = sbr.rel (%p1312) target = $region172
        $region171: #{tpu_custom_call.1} parent=107 // pred_region
          %v1315 = vld [vmem:[%s1291] sm:$0xff]
          %v1316 = vld [vmem:[%s1291 + $0x8] sm:$0xff]
          %1317 = vst [vmem:[#allocation2] sm:$0xff] %v1315
          %1318 = vst [vmem:[#allocation2 + $0x8] sm:$0xff] %v1316
        $region172: #{tpu_custom_call.1} parent=107 // pred_fallthru
          _
        %v1319 = vld [vmem:[#allocation2] sm:$0xff]
        %v1320 = vld [vmem:[#allocation2 + $0x8] sm:$0xff]
        %v1321 = vld [vmem:[%s1300] sm:$0x77]
        %v1322 = vld [vmem:[%s1305] sm:$0x77]
        %v1323 = vpack.c.bf16 %v1319, %v1319
        %v1324 = vpack.c.bf16 %v1320, %v1320
        %v1325 = vld [vmem:[%s1028] sm:$0xff]
        %v1326 = vld [vmem:[%s1028 + $0x8] sm:$0xff]
        %v1327 = vld [vmem:[%s1028 + $0x10] sm:$0xff]
        %v1328 = vld [vmem:[%s1028 + $0x18] sm:$0xff]
        %v1329 = vld [vmem:[%s1028 + $0x20] sm:$0xff]
        %v1330 = vld [vmem:[%s1028 + $0x28] sm:$0xff]
        %v1331 = vld [vmem:[%s1028 + $0x30] sm:$0xff]
        %v1332 = vld [vmem:[%s1028 + $0x38] sm:$0xff]
        %v1333 = vld [vmem:[%s1028 + $0x40] sm:$0xff]
        %v1334 = vld [vmem:[%s1028 + $0x48] sm:$0xff]
        %v1335 = vld [vmem:[%s1028 + $0x50] sm:$0xff]
        %v1336 = vld [vmem:[%s1028 + $0x58] sm:$0xff]
        %v1337 = vld [vmem:[%s1028 + $0x60] sm:$0xff]
        %v1338 = vld [vmem:[%s1028 + $0x68] sm:$0xff]
        %v1339 = vld [vmem:[%s1028 + $0x70] sm:$0xff]
        %v1340 = vld [vmem:[%s1028 + $0x78] sm:$0xff]
        %v1341 = vld [vmem:[%s1028 + $0x80] sm:$0xff]
        %v1342 = vld [vmem:[%s1028 + $0x88] sm:$0xff]
        %v1343 = vld [vmem:[%s1028 + $0x90] sm:$0xff]
        %v1344 = vld [vmem:[%s1028 + $0x98] sm:$0xff]
        %v1345 = vld [vmem:[%s1028 + $0xa0] sm:$0xff]
        %v1346 = vld [vmem:[%s1028 + $0xa8] sm:$0xff]
        %v1347 = vld [vmem:[%s1028 + $0xb0] sm:$0xff]
        %v1348 = vld [vmem:[%s1028 + $0xb8] sm:$0xff]
        %v1349 = vld [vmem:[%s1028 + $0xc0] sm:$0xff]
        %v1350 = vld [vmem:[%s1028 + $0xc8] sm:$0xff]
        %v1351 = vld [vmem:[%s1028 + $0xd0] sm:$0xff]
        %v1352 = vld [vmem:[%s1028 + $0xd8] sm:$0xff]
        %v1353 = vld [vmem:[%s1028 + $0xe0] sm:$0xff]
        %v1354 = vld [vmem:[%s1028 + $0xe8] sm:$0xff]
        %v1355 = vld [vmem:[%s1028 + $0xf0] sm:$0xff]
        %v1356 = vld [vmem:[%s1028 + $0xf8] sm:$0xff]
        %v1357 = vld [vmem:[%s1028 + $0x100] sm:$0xff]
        %v1358 = vld [vmem:[%s1028 + $0x108] sm:$0xff]
        %v1359 = vld [vmem:[%s1028 + $0x110] sm:$0xff]
        %v1360 = vld [vmem:[%s1028 + $0x118] sm:$0xff]
        %v1361 = vld [vmem:[%s1028 + $0x120] sm:$0xff]
        %v1362 = vld [vmem:[%s1028 + $0x128] sm:$0xff]
        %v1363 = vld [vmem:[%s1028 + $0x130] sm:$0xff]
        %v1364 = vld [vmem:[%s1028 + $0x138] sm:$0xff]
        %v1365 = vld [vmem:[%s1028 + $0x140] sm:$0xff]
        %v1366 = vld [vmem:[%s1028 + $0x148] sm:$0xff]
        %v1367 = vld [vmem:[%s1028 + $0x150] sm:$0xff]
        %v1368 = vld [vmem:[%s1028 + $0x158] sm:$0xff]
        %v1369 = vld [vmem:[%s1028 + $0x160] sm:$0xff]
        %v1370 = vld [vmem:[%s1028 + $0x168] sm:$0xff]
        %v1371 = vld [vmem:[%s1028 + $0x170] sm:$0xff]
        %v1372 = vld [vmem:[%s1028 + $0x178] sm:$0xff]
        %v1373 = vld [vmem:[%s1028 + $0x180] sm:$0xff]
        %v1374 = vld [vmem:[%s1028 + $0x188] sm:$0xff]
        %v1375 = vld [vmem:[%s1028 + $0x190] sm:$0xff]
        %v1376 = vld [vmem:[%s1028 + $0x198] sm:$0xff]
        %v1377 = vld [vmem:[%s1028 + $0x1a0] sm:$0xff]
        %v1378 = vld [vmem:[%s1028 + $0x1a8] sm:$0xff]
        %v1379 = vld [vmem:[%s1028 + $0x1b0] sm:$0xff]
        %v1380 = vld [vmem:[%s1028 + $0x1b8] sm:$0xff]
        %v1381 = vld [vmem:[%s1028 + $0x1c0] sm:$0xff]
        %v1382 = vld [vmem:[%s1028 + $0x1c8] sm:$0xff]
        %v1383 = vld [vmem:[%s1028 + $0x1d0] sm:$0xff]
        %v1384 = vld [vmem:[%s1028 + $0x1d8] sm:$0xff]
        %v1385 = vld [vmem:[%s1028 + $0x1e0] sm:$0xff]
        %v1386 = vld [vmem:[%s1028 + $0x1e8] sm:$0xff]
        %v1387 = vld [vmem:[%s1028 + $0x1f0] sm:$0xff]
        %v1388 = vld [vmem:[%s1028 + $0x1f8] sm:$0xff]
        %v1389 = vld [vmem:[%s1028 + $0x200] sm:$0xff]
        %v1390 = vld [vmem:[%s1028 + $0x208] sm:$0xff]
        %v1391 = vld [vmem:[%s1028 + $0x210] sm:$0xff]
        %v1392 = vld [vmem:[%s1028 + $0x218] sm:$0xff]
        %v1393 = vld [vmem:[%s1028 + $0x220] sm:$0xff]
        %v1394 = vld [vmem:[%s1028 + $0x228] sm:$0xff]
        %v1395 = vld [vmem:[%s1028 + $0x230] sm:$0xff]
        %v1396 = vld [vmem:[%s1028 + $0x238] sm:$0xff]
        %v1397 = vld [vmem:[%s1028 + $0x240] sm:$0xff]
        %v1398 = vld [vmem:[%s1028 + $0x248] sm:$0xff]
        %v1399 = vld [vmem:[%s1028 + $0x250] sm:$0xff]
        %v1400 = vld [vmem:[%s1028 + $0x258] sm:$0xff]
        %v1401 = vld [vmem:[%s1028 + $0x260] sm:$0xff]
        %v1402 = vld [vmem:[%s1028 + $0x268] sm:$0xff]
        %v1403 = vld [vmem:[%s1028 + $0x270] sm:$0xff]
        %v1404 = vld [vmem:[%s1028 + $0x278] sm:$0xff]
        %v1405 = vld [vmem:[%s1028 + $0x280] sm:$0xff]
        %v1406 = vld [vmem:[%s1028 + $0x288] sm:$0xff]
        %v1407 = vld [vmem:[%s1028 + $0x290] sm:$0xff]
        %v1408 = vld [vmem:[%s1028 + $0x298] sm:$0xff]
        %v1409 = vld [vmem:[%s1028 + $0x2a0] sm:$0xff]
        %v1410 = vld [vmem:[%s1028 + $0x2a8] sm:$0xff]
        %v1411 = vld [vmem:[%s1028 + $0x2b0] sm:$0xff]
        %v1412 = vld [vmem:[%s1028 + $0x2b8] sm:$0xff]
        %v1413 = vld [vmem:[%s1028 + $0x2c0] sm:$0xff]
        %v1414 = vld [vmem:[%s1028 + $0x2c8] sm:$0xff]
        %v1415 = vld [vmem:[%s1028 + $0x2d0] sm:$0xff]
        %v1416 = vld [vmem:[%s1028 + $0x2d8] sm:$0xff]
        %v1417 = vld [vmem:[%s1028 + $0x2e0] sm:$0xff]
        %v1418 = vld [vmem:[%s1028 + $0x2e8] sm:$0xff]
        %v1419 = vld [vmem:[%s1028 + $0x2f0] sm:$0xff]
        %v1420 = vld [vmem:[%s1028 + $0x2f8] sm:$0xff]
        %v1421 = vld [vmem:[%s1295] sm:$0x3f]
        %v1423 = vperm.slane %v1421, 0
        %v1424 = vperm.slane %v1421, 1
        %v1425 = vperm.slane %v1421, 2
        %v1426 = vperm.slane %v1421, 3
        %v1427 = vperm.slane %v1421, 4
        %v1428 = vperm.slane %v1421, 5
        %v1531 = vunpack.c.l.b16 %v1325
        %v1532 = vunpack.c.h.b16 %v1325
        %v1533 = vunpack.c.l.b16 %v1326
        %v1534 = vunpack.c.h.b16 %v1326
        %v1535 = vunpack.c.l.b16 %v1327
        %v1536 = vunpack.c.h.b16 %v1327
        %v1537 = vunpack.c.l.b16 %v1328
        %v1538 = vunpack.c.h.b16 %v1328
        %v1539 = vunpack.c.l.b16 %v1329
        %v1540 = vunpack.c.h.b16 %v1329
        %v1541 = vunpack.c.l.b16 %v1330
        %v1542 = vunpack.c.h.b16 %v1330
        %v1543 = vunpack.c.l.b16 %v1331
        %v1544 = vunpack.c.h.b16 %v1331
        %v1545 = vunpack.c.l.b16 %v1332
        %v1546 = vunpack.c.h.b16 %v1332
        %v1547 = vunpack.c.l.b16 %v1333
        %v1548 = vunpack.c.h.b16 %v1333
        %v1549 = vunpack.c.l.b16 %v1334
        %v1550 = vunpack.c.h.b16 %v1334
        %v1551 = vunpack.c.l.b16 %v1335
        %v1552 = vunpack.c.h.b16 %v1335
        %v1553 = vunpack.c.l.b16 %v1336
        %v1554 = vunpack.c.h.b16 %v1336
        %v1555 = vunpack.c.l.b16 %v1337
        %v1556 = vunpack.c.h.b16 %v1337
        %v1557 = vunpack.c.l.b16 %v1338
        %v1558 = vunpack.c.h.b16 %v1338
        %v1559 = vunpack.c.l.b16 %v1339
        %v1560 = vunpack.c.h.b16 %v1339
        %v1561 = vunpack.c.l.b16 %v1340
        %v1562 = vunpack.c.h.b16 %v1340
        %v1563 = vunpack.c.l.b16 %v1341
        %v1564 = vunpack.c.h.b16 %v1341
        %v1565 = vunpack.c.l.b16 %v1342
        %v1566 = vunpack.c.h.b16 %v1342
        %v1567 = vunpack.c.l.b16 %v1343
        %v1568 = vunpack.c.h.b16 %v1343
        %v1569 = vunpack.c.l.b16 %v1344
        %v1570 = vunpack.c.h.b16 %v1344
        %v1571 = vunpack.c.l.b16 %v1345
        %v1572 = vunpack.c.h.b16 %v1345
        %v1573 = vunpack.c.l.b16 %v1346
        %v1574 = vunpack.c.h.b16 %v1346
        %v1575 = vunpack.c.l.b16 %v1347
        %v1576 = vunpack.c.h.b16 %v1347
        %v1577 = vunpack.c.l.b16 %v1348
        %v1578 = vunpack.c.h.b16 %v1348
        %v1579 = vunpack.c.l.b16 %v1349
        %v1580 = vunpack.c.h.b16 %v1349
        %v1581 = vunpack.c.l.b16 %v1350
        %v1582 = vunpack.c.h.b16 %v1350
        %v1583 = vunpack.c.l.b16 %v1351
        %v1584 = vunpack.c.h.b16 %v1351
        %v1585 = vunpack.c.l.b16 %v1352
        %v1586 = vunpack.c.h.b16 %v1352
        %v1587 = vunpack.c.l.b16 %v1353
        %v1588 = vunpack.c.h.b16 %v1353
        %v1589 = vunpack.c.l.b16 %v1354
        %v1590 = vunpack.c.h.b16 %v1354
        %v1591 = vunpack.c.l.b16 %v1355
        %v1592 = vunpack.c.h.b16 %v1355
        %v1593 = vunpack.c.l.b16 %v1356
        %v1594 = vunpack.c.h.b16 %v1356
        %v1595 = vunpack.c.l.b16 %v1357
        %v1596 = vunpack.c.h.b16 %v1357
        %v1597 = vunpack.c.l.b16 %v1358
        %v1598 = vunpack.c.h.b16 %v1358
        %v1599 = vunpack.c.l.b16 %v1359
        %v1600 = vunpack.c.h.b16 %v1359
        %v1601 = vunpack.c.l.b16 %v1360
        %v1602 = vunpack.c.h.b16 %v1360
        %v1603 = vunpack.c.l.b16 %v1361
        %v1604 = vunpack.c.h.b16 %v1361
        %v1605 = vunpack.c.l.b16 %v1362
        %v1606 = vunpack.c.h.b16 %v1362
        %v1607 = vunpack.c.l.b16 %v1363
        %v1608 = vunpack.c.h.b16 %v1363
        %v1609 = vunpack.c.l.b16 %v1364
        %v1610 = vunpack.c.h.b16 %v1364
        %v1611 = vunpack.c.l.b16 %v1365
        %v1612 = vunpack.c.h.b16 %v1365
        %v1613 = vunpack.c.l.b16 %v1366
        %v1614 = vunpack.c.h.b16 %v1366
        %v1615 = vunpack.c.l.b16 %v1367
        %v1616 = vunpack.c.h.b16 %v1367
        %v1617 = vunpack.c.l.b16 %v1368
        %v1618 = vunpack.c.h.b16 %v1368
        %v1619 = vunpack.c.l.b16 %v1369
        %v1620 = vunpack.c.h.b16 %v1369
        %v1621 = vunpack.c.l.b16 %v1370
        %v1622 = vunpack.c.h.b16 %v1370
        %v1623 = vunpack.c.l.b16 %v1371
        %v1624 = vunpack.c.h.b16 %v1371
        %v1625 = vunpack.c.l.b16 %v1372
        %v1626 = vunpack.c.h.b16 %v1372
        %v1627 = vunpack.c.l.b16 %v1373
        %v1628 = vunpack.c.h.b16 %v1373
        %v1629 = vunpack.c.l.b16 %v1374
        %v1630 = vunpack.c.h.b16 %v1374
        %v1631 = vunpack.c.l.b16 %v1375
        %v1632 = vunpack.c.h.b16 %v1375
        %v1633 = vunpack.c.l.b16 %v1376
        %v1634 = vunpack.c.h.b16 %v1376
        %v1635 = vunpack.c.l.b16 %v1377
        %v1636 = vunpack.c.h.b16 %v1377
        %v1637 = vunpack.c.l.b16 %v1378
        %v1638 = vunpack.c.h.b16 %v1378
        %v1639 = vunpack.c.l.b16 %v1379
        %v1640 = vunpack.c.h.b16 %v1379
        %v1641 = vunpack.c.l.b16 %v1380
        %v1642 = vunpack.c.h.b16 %v1380
        %v1643 = vunpack.c.l.b16 %v1381
        %v1644 = vunpack.c.h.b16 %v1381
        %v1645 = vunpack.c.l.b16 %v1382
        %v1646 = vunpack.c.h.b16 %v1382
        %v1647 = vunpack.c.l.b16 %v1383
        %v1648 = vunpack.c.h.b16 %v1383
        %v1649 = vunpack.c.l.b16 %v1384
        %v1650 = vunpack.c.h.b16 %v1384
        %v1651 = vunpack.c.l.b16 %v1385
        %v1652 = vunpack.c.h.b16 %v1385
        %v1653 = vunpack.c.l.b16 %v1386
        %v1654 = vunpack.c.h.b16 %v1386
        %v1655 = vunpack.c.l.b16 %v1387
        %v1656 = vunpack.c.h.b16 %v1387
        %v1657 = vunpack.c.l.b16 %v1388
        %v1658 = vunpack.c.h.b16 %v1388
        %v1659 = vunpack.c.l.b16 %v1389
        %v1660 = vunpack.c.h.b16 %v1389
        %v1661 = vunpack.c.l.b16 %v1390
        %v1662 = vunpack.c.h.b16 %v1390
        %v1663 = vunpack.c.l.b16 %v1391
        %v1664 = vunpack.c.h.b16 %v1391
        %v1665 = vunpack.c.l.b16 %v1392
        %v1666 = vunpack.c.h.b16 %v1392
        %v1667 = vunpack.c.l.b16 %v1393
        %v1668 = vunpack.c.h.b16 %v1393
        %v1669 = vunpack.c.l.b16 %v1394
        %v1670 = vunpack.c.h.b16 %v1394
        %v1671 = vunpack.c.l.b16 %v1395
        %v1672 = vunpack.c.h.b16 %v1395
        %v1673 = vunpack.c.l.b16 %v1396
        %v1674 = vunpack.c.h.b16 %v1396
        %v1675 = vunpack.c.l.b16 %v1397
        %v1676 = vunpack.c.h.b16 %v1397
        %v1677 = vunpack.c.l.b16 %v1398
        %v1678 = vunpack.c.h.b16 %v1398
        %v1679 = vunpack.c.l.b16 %v1399
        %v1680 = vunpack.c.h.b16 %v1399
        %v1681 = vunpack.c.l.b16 %v1400
        %v1682 = vunpack.c.h.b16 %v1400
        %v1683 = vunpack.c.l.b16 %v1401
        %v1684 = vunpack.c.h.b16 %v1401
        %v1685 = vunpack.c.l.b16 %v1402
        %v1686 = vunpack.c.h.b16 %v1402
        %v1687 = vunpack.c.l.b16 %v1403
        %v1688 = vunpack.c.h.b16 %v1403
        %v1689 = vunpack.c.l.b16 %v1404
        %v1690 = vunpack.c.h.b16 %v1404
        %v1691 = vunpack.c.l.b16 %v1405
        %v1692 = vunpack.c.h.b16 %v1405
        %v1693 = vunpack.c.l.b16 %v1406
        %v1694 = vunpack.c.h.b16 %v1406
        %v1695 = vunpack.c.l.b16 %v1407
        %v1696 = vunpack.c.h.b16 %v1407
        %v1697 = vunpack.c.l.b16 %v1408
        %v1698 = vunpack.c.h.b16 %v1408
        %v1699 = vunpack.c.l.b16 %v1409
        %v1700 = vunpack.c.h.b16 %v1409
        %v1701 = vunpack.c.l.b16 %v1410
        %v1702 = vunpack.c.h.b16 %v1410
        %v1703 = vunpack.c.l.b16 %v1411
        %v1704 = vunpack.c.h.b16 %v1411
        %v1705 = vunpack.c.l.b16 %v1412
        %v1706 = vunpack.c.h.b16 %v1412
        %v1707 = vunpack.c.l.b16 %v1413
        %v1708 = vunpack.c.h.b16 %v1413
        %v1709 = vunpack.c.l.b16 %v1414
        %v1710 = vunpack.c.h.b16 %v1414
        %v1711 = vunpack.c.l.b16 %v1415
        %v1712 = vunpack.c.h.b16 %v1415
        %v1713 = vunpack.c.l.b16 %v1416
        %v1714 = vunpack.c.h.b16 %v1416
        %v1715 = vunpack.c.l.b16 %v1417
        %v1716 = vunpack.c.h.b16 %v1417
        %v1717 = vunpack.c.l.b16 %v1418
        %v1718 = vunpack.c.h.b16 %v1418
        %v1719 = vunpack.c.l.b16 %v1419
        %v1720 = vunpack.c.h.b16 %v1419
        %v1721 = vunpack.c.l.b16 %v1420
        %v1722 = vunpack.c.h.b16 %v1420
        %v1723 = vpack.c.b16 %v1537, %v1531
        %v1724 = vpack.c.b16 %v1538, %v1532
        %v1725 = vpack.c.b16 %v1539, %v1533
        %v1726 = vpack.c.b16 %v1540, %v1534
        %v1727 = vpack.c.b16 %v1541, %v1535
        %v1728 = vpack.c.b16 %v1542, %v1536
        %v1729 = vpack.c.b16 %v1549, %v1543
        %v1730 = vpack.c.b16 %v1550, %v1544
        %v1731 = vpack.c.b16 %v1551, %v1545
        %v1732 = vpack.c.b16 %v1552, %v1546
        %v1733 = vpack.c.b16 %v1553, %v1547
        %v1734 = vpack.c.b16 %v1554, %v1548
        %v1735 = vpack.c.b16 %v1561, %v1555
        %v1736 = vpack.c.b16 %v1562, %v1556
        %v1737 = vpack.c.b16 %v1563, %v1557
        %v1738 = vpack.c.b16 %v1564, %v1558
        %v1739 = vpack.c.b16 %v1565, %v1559
        %v1740 = vpack.c.b16 %v1566, %v1560
        %v1741 = vpack.c.b16 %v1573, %v1567
        %v1742 = vpack.c.b16 %v1574, %v1568
        %v1743 = vpack.c.b16 %v1575, %v1569
        %v1744 = vpack.c.b16 %v1576, %v1570
        %v1745 = vpack.c.b16 %v1577, %v1571
        %v1746 = vpack.c.b16 %v1578, %v1572
        %v1747 = vpack.c.b16 %v1585, %v1579
        %v1748 = vpack.c.b16 %v1586, %v1580
        %v1749 = vpack.c.b16 %v1587, %v1581
        %v1750 = vpack.c.b16 %v1588, %v1582
        %v1751 = vpack.c.b16 %v1589, %v1583
        %v1752 = vpack.c.b16 %v1590, %v1584
        %v1753 = vpack.c.b16 %v1597, %v1591
        %v1754 = vpack.c.b16 %v1598, %v1592
        %v1755 = vpack.c.b16 %v1599, %v1593
        %v1756 = vpack.c.b16 %v1600, %v1594
        %v1757 = vpack.c.b16 %v1601, %v1595
        %v1758 = vpack.c.b16 %v1602, %v1596
        %v1759 = vpack.c.b16 %v1609, %v1603
        %v1760 = vpack.c.b16 %v1610, %v1604
        %v1761 = vpack.c.b16 %v1611, %v1605
        %v1762 = vpack.c.b16 %v1612, %v1606
        %v1763 = vpack.c.b16 %v1613, %v1607
        %v1764 = vpack.c.b16 %v1614, %v1608
        %v1765 = vpack.c.b16 %v1621, %v1615
        %v1766 = vpack.c.b16 %v1622, %v1616
        %v1767 = vpack.c.b16 %v1623, %v1617
        %v1768 = vpack.c.b16 %v1624, %v1618
        %v1769 = vpack.c.b16 %v1625, %v1619
        %v1770 = vpack.c.b16 %v1626, %v1620
        %v1771 = vpack.c.b16 %v1633, %v1627
        %v1772 = vpack.c.b16 %v1634, %v1628
        %v1773 = vpack.c.b16 %v1635, %v1629
        %v1774 = vpack.c.b16 %v1636, %v1630
        %v1775 = vpack.c.b16 %v1637, %v1631
        %v1776 = vpack.c.b16 %v1638, %v1632
        %v1777 = vpack.c.b16 %v1645, %v1639
        %v1778 = vpack.c.b16 %v1646, %v1640
        %v1779 = vpack.c.b16 %v1647, %v1641
        %v1780 = vpack.c.b16 %v1648, %v1642
        %v1781 = vpack.c.b16 %v1649, %v1643
        %v1782 = vpack.c.b16 %v1650, %v1644
        %v1783 = vpack.c.b16 %v1657, %v1651
        %v1784 = vpack.c.b16 %v1658, %v1652
        %v1785 = vpack.c.b16 %v1659, %v1653
        %v1786 = vpack.c.b16 %v1660, %v1654
        %v1787 = vpack.c.b16 %v1661, %v1655
        %v1788 = vpack.c.b16 %v1662, %v1656
        %v1789 = vpack.c.b16 %v1669, %v1663
        %v1790 = vpack.c.b16 %v1670, %v1664
        %v1791 = vpack.c.b16 %v1671, %v1665
        %v1792 = vpack.c.b16 %v1672, %v1666
        %v1793 = vpack.c.b16 %v1673, %v1667
        %v1794 = vpack.c.b16 %v1674, %v1668
        %v1795 = vpack.c.b16 %v1681, %v1675
        %v1796 = vpack.c.b16 %v1682, %v1676
        %v1797 = vpack.c.b16 %v1683, %v1677
        %v1798 = vpack.c.b16 %v1684, %v1678
        %v1799 = vpack.c.b16 %v1685, %v1679
        %v1800 = vpack.c.b16 %v1686, %v1680
        %v1801 = vpack.c.b16 %v1693, %v1687
        %v1802 = vpack.c.b16 %v1694, %v1688
        %v1803 = vpack.c.b16 %v1695, %v1689
        %v1804 = vpack.c.b16 %v1696, %v1690
        %v1805 = vpack.c.b16 %v1697, %v1691
        %v1806 = vpack.c.b16 %v1698, %v1692
        %v1807 = vpack.c.b16 %v1705, %v1699
        %v1808 = vpack.c.b16 %v1706, %v1700
        %v1809 = vpack.c.b16 %v1707, %v1701
        %v1810 = vpack.c.b16 %v1708, %v1702
        %v1811 = vpack.c.b16 %v1709, %v1703
        %v1812 = vpack.c.b16 %v1710, %v1704
        %v1813 = vpack.c.b16 %v1717, %v1711
        %v1814 = vpack.c.b16 %v1718, %v1712
        %v1815 = vpack.c.b16 %v1719, %v1713
        %v1816 = vpack.c.b16 %v1720, %v1714
        %v1817 = vpack.c.b16 %v1721, %v1715
        %v1818 = vpack.c.b16 %v1722, %v1716
        %1915 = vmatpush.bf16.msra.mxu0 %v1765
        %1916 = vmatpush.bf16.msra.mxu0 %v1759
        %1917 = vmatpush.bf16.msra.mxu0 %v1753
        %1918 = vmatpush.bf16.msra.mxu0 %v1747
        %1919 = vmatpush.bf16.msra.mxu0 %v1741
        %1920 = vmatpush.bf16.msra.mxu0 %v1735
        %1921 = vmatpush.bf16.msra.mxu0 %v1729
        %1922 = vmatpush.bf16.msra.mxu0 %v1723
        %1923 = vmatmul.bf16.gmra.mxu0 %v1323
        %v1924 = vpop.f32.mrf.mxu0
        %v1925 = vadd.f32 %v1423, %v1924
        %v1926 = vpop.f32.mrf.mxu0
        %1927 = vdwg.mxu0
        %1928 = vmatpush.bf16.msra.mxu0 %v1813
        %1929 = vmatpush.bf16.msra.mxu0 %v1807
        %1930 = vmatpush.bf16.msra.mxu0 %v1801
        %1931 = vmatpush.bf16.msra.mxu0 %v1795
        %1932 = vmatpush.bf16.msra.mxu0 %v1789
        %1933 = vmatpush.bf16.msra.mxu0 %v1783
        %1934 = vmatpush.bf16.msra.mxu0 %v1777
        %1935 = vmatpush.bf16.msra.mxu0 %v1771
        %1936 = vmatmul.bf16.gmra.mxu0 %v1324
        %v1937 = vpop.f32.mrf.mxu0
        %v1938 = vadd.f32 %v1925, %v1937
        %v1939 = vpop.f32.mrf.mxu0
        %1940 = vdwg.mxu0
        %1941 = vmatpush.bf16.msra.mxu0 %v1766
        %1942 = vmatpush.bf16.msra.mxu0 %v1760
        %1943 = vmatpush.bf16.msra.mxu0 %v1754
        %1944 = vmatpush.bf16.msra.mxu0 %v1748
        %1945 = vmatpush.bf16.msra.mxu0 %v1742
        %1946 = vmatpush.bf16.msra.mxu0 %v1736
        %1947 = vmatpush.bf16.msra.mxu0 %v1730
        %1948 = vmatpush.bf16.msra.mxu0 %v1724
        %1949 = vmatmul.bf16.gmra.mxu0 %v1323
        %v1950 = vpop.f32.mrf.mxu0
        %v1951 = vadd.f32 %v1424, %v1950
        %v1952 = vpop.f32.mrf.mxu0
        %1953 = vdwg.mxu0
        %1954 = vmatpush.bf16.msra.mxu0 %v1814
        %1955 = vmatpush.bf16.msra.mxu0 %v1808
        %1956 = vmatpush.bf16.msra.mxu0 %v1802
        %1957 = vmatpush.bf16.msra.mxu0 %v1796
        %1958 = vmatpush.bf16.msra.mxu0 %v1790
        %1959 = vmatpush.bf16.msra.mxu0 %v1784
        %1960 = vmatpush.bf16.msra.mxu0 %v1778
        %1961 = vmatpush.bf16.msra.mxu0 %v1772
        %1962 = vmatmul.bf16.gmra.mxu0 %v1324
        %v1963 = vpop.f32.mrf.mxu0
        %v1964 = vadd.f32 %v1951, %v1963
        %v1965 = vpop.f32.mrf.mxu0
        %1966 = vdwg.mxu0
        %1967 = vmatpush.bf16.msra.mxu0 %v1767
        %1968 = vmatpush.bf16.msra.mxu0 %v1761
        %1969 = vmatpush.bf16.msra.mxu0 %v1755
        %1970 = vmatpush.bf16.msra.mxu0 %v1749
        %1971 = vmatpush.bf16.msra.mxu0 %v1743
        %1972 = vmatpush.bf16.msra.mxu0 %v1737
        %1973 = vmatpush.bf16.msra.mxu0 %v1731
        %1974 = vmatpush.bf16.msra.mxu0 %v1725
        %1975 = vmatmul.bf16.gmra.mxu0 %v1323
        %v1976 = vpop.f32.mrf.mxu0
        %v1977 = vadd.f32 %v1425, %v1976
        %v1978 = vpop.f32.mrf.mxu0
        %1979 = vdwg.mxu0
        %1980 = vmatpush.bf16.msra.mxu0 %v1815
        %1981 = vmatpush.bf16.msra.mxu0 %v1809
        %1982 = vmatpush.bf16.msra.mxu0 %v1803
        %1983 = vmatpush.bf16.msra.mxu0 %v1797
        %1984 = vmatpush.bf16.msra.mxu0 %v1791
        %1985 = vmatpush.bf16.msra.mxu0 %v1785
        %1986 = vmatpush.bf16.msra.mxu0 %v1779
        %1987 = vmatpush.bf16.msra.mxu0 %v1773
        %1988 = vmatmul.bf16.gmra.mxu0 %v1324
        %v1989 = vpop.f32.mrf.mxu0
        %v1990 = vadd.f32 %v1977, %v1989
        %v1991 = vpop.f32.mrf.mxu0
        %1992 = vdwg.mxu0
        %1993 = vmatpush.bf16.msra.mxu0 %v1768
        %1994 = vmatpush.bf16.msra.mxu0 %v1762
        %1995 = vmatpush.bf16.msra.mxu0 %v1756
        %1996 = vmatpush.bf16.msra.mxu0 %v1750
        %1997 = vmatpush.bf16.msra.mxu0 %v1744
        %1998 = vmatpush.bf16.msra.mxu0 %v1738
        %1999 = vmatpush.bf16.msra.mxu0 %v1732
        %2000 = vmatpush.bf16.msra.mxu0 %v1726
        %2001 = vmatmul.bf16.gmra.mxu0 %v1323
        %v2002 = vpop.f32.mrf.mxu0
        %v2003 = vadd.f32 %v1426, %v2002
        %v2004 = vpop.f32.mrf.mxu0
        %2005 = vdwg.mxu0
        %2006 = vmatpush.bf16.msra.mxu0 %v1816
        %2007 = vmatpush.bf16.msra.mxu0 %v1810
        %2008 = vmatpush.bf16.msra.mxu0 %v1804
        %2009 = vmatpush.bf16.msra.mxu0 %v1798
        %2010 = vmatpush.bf16.msra.mxu0 %v1792
        %2011 = vmatpush.bf16.msra.mxu0 %v1786
        %2012 = vmatpush.bf16.msra.mxu0 %v1780
        %2013 = vmatpush.bf16.msra.mxu0 %v1774
        %2014 = vmatmul.bf16.gmra.mxu0 %v1324
        %v2015 = vpop.f32.mrf.mxu0
        %v2016 = vadd.f32 %v2003, %v2015
        %v2017 = vpop.f32.mrf.mxu0
        %2018 = vdwg.mxu0
        %2019 = vmatpush.bf16.msra.mxu0 %v1769
        %2020 = vmatpush.bf16.msra.mxu0 %v1763
        %2021 = vmatpush.bf16.msra.mxu0 %v1757
        %2022 = vmatpush.bf16.msra.mxu0 %v1751
        %2023 = vmatpush.bf16.msra.mxu0 %v1745
        %2024 = vmatpush.bf16.msra.mxu0 %v1739
        %2025 = vmatpush.bf16.msra.mxu0 %v1733
        %2026 = vmatpush.bf16.msra.mxu0 %v1727
        %2027 = vmatmul.bf16.gmra.mxu0 %v1323
        %v2028 = vpop.f32.mrf.mxu0
        %v2029 = vadd.f32 %v1427, %v2028
        %v2030 = vpop.f32.mrf.mxu0
        %2031 = vdwg.mxu0
        %2032 = vmatpush.bf16.msra.mxu0 %v1817
        %2033 = vmatpush.bf16.msra.mxu0 %v1811
        %2034 = vmatpush.bf16.msra.mxu0 %v1805
        %2035 = vmatpush.bf16.msra.mxu0 %v1799
        %2036 = vmatpush.bf16.msra.mxu0 %v1793
        %2037 = vmatpush.bf16.msra.mxu0 %v1787
        %2038 = vmatpush.bf16.msra.mxu0 %v1781
        %2039 = vmatpush.bf16.msra.mxu0 %v1775
        %2040 = vmatmul.bf16.gmra.mxu0 %v1324
        %v2041 = vpop.f32.mrf.mxu0
        %v2042 = vadd.f32 %v2029, %v2041
        %v2043 = vpop.f32.mrf.mxu0
        %2044 = vdwg.mxu0
        %2045 = vmatpush.bf16.msra.mxu0 %v1770
        %2046 = vmatpush.bf16.msra.mxu0 %v1764
        %2047 = vmatpush.bf16.msra.mxu0 %v1758
        %2048 = vmatpush.bf16.msra.mxu0 %v1752
        %2049 = vmatpush.bf16.msra.mxu0 %v1746
        %2050 = vmatpush.bf16.msra.mxu0 %v1740
        %2051 = vmatpush.bf16.msra.mxu0 %v1734
        %2052 = vmatpush.bf16.msra.mxu0 %v1728
        %2053 = vmatmul.bf16.gmra.mxu0 %v1323
        %v2054 = vpop.f32.mrf.mxu0
        %v2055 = vadd.f32 %v1428, %v2054
        %v2056 = vpop.f32.mrf.mxu0
        %2057 = vdwg.mxu0
        %2058 = vmatpush.bf16.msra.mxu0 %v1818
        %2059 = vmatpush.bf16.msra.mxu0 %v1812
        %2060 = vmatpush.bf16.msra.mxu0 %v1806
        %2061 = vmatpush.bf16.msra.mxu0 %v1800
        %2062 = vmatpush.bf16.msra.mxu0 %v1794
        %2063 = vmatpush.bf16.msra.mxu0 %v1788
        %2064 = vmatpush.bf16.msra.mxu0 %v1782
        %2065 = vmatpush.bf16.msra.mxu0 %v1776
        %2066 = vmatmul.bf16.gmra.mxu0 %v1324
        %v2067 = vpop.f32.mrf.mxu0
        %v2068 = vadd.f32 %v2055, %v2067
        %v2069 = vpop.f32.mrf.mxu0
        %2070 = vdwg.mxu0
        %v2071 = vmul.f32 %v1938, 0.088388346
        %v2072 = vmul.f32 %v1964, 0.088388346
        %v2073 = vld [vmem:[#allocation6] sm:$0xff]
        %v2074 = vrot.slane %v2071, 4
        %vm2075 = vcmask 1047556
        %v2076 = vsel %vm2075, 0.0, %v2074
        %v2078 = vunpack.c.l.s4 1983009808
        %v2079 = vunpack.c.0.s8 %v2078
        %v2080 = vperm.slane %v2071, %v2079
        %v2082 = vunpack.c.l.s4 1983009808
        %v2083 = vunpack.c.0.s8 %v2082
        %v2084 = vperm.slane %v2076, %v2083
        %v2085 = vrot.slane %v2072, 4
        %v2086 = vsel %vm2075, 0.0, %v2085
        %v2088 = vunpack.c.l.s4 1983009808
        %v2089 = vunpack.c.0.s8 %v2088
        %v2090 = vperm.slane %v2072, %v2089
        %v2092 = vunpack.c.l.s4 1983009808
        %v2093 = vunpack.c.0.s8 %v2092
        %v2094 = vperm.slane %v2086, %v2093
        %v2095 = vrot.slane %v2090, 4
        %v2096 = vsel %vm2075, %v2095, %v2080
        %v2097 = vrot.slane %v2080, 4
        %v2098 = vsel %vm2075, %v2090, %v2097
        %v2100 = vunpack.c.l.s4 1934713408
        %v2101 = vunpack.c.0.s8 %v2100
        %v2102 = vperm.slane %v2096, %v2101
        %v2104 = vunpack.c.l.s4 1934713408
        %v2105 = vunpack.c.0.s8 %v2104
        %v2106 = vperm.slane %v2098, %v2105
        %v2107 = vrot.slane %v2094, 4
        %v2108 = vsel %vm2075, %v2107, %v2084
        %v2109 = vrot.slane %v2084, 4
        %v2110 = vsel %vm2075, %v2094, %v2109
        %v2112 = vunpack.c.l.s4 1934713408
        %v2113 = vunpack.c.0.s8 %v2112
        %v2114 = vperm.slane %v2108, %v2113
        %v2116 = vunpack.c.l.s4 1934713408
        %v2117 = vunpack.c.0.s8 %v2116
        %v2118 = vperm.slane %v2110, %v2117
        %v2119 = vrot.slane %v2102, 4
        %v2120 = vsel %vm2075, 0.0, %v2119
        %v2121 = vrot.slane %v2106, 4
        %v2122 = vsel %vm2075, 0.0, %v2121
        %v2123 = vrot.slane %v2114, 4
        %v2124 = vsel %vm2075, 0.0, %v2123
        %v2125 = vrot.slane %v2118, 4
        %v2126 = vsel %vm2075, 0.0, %v2125
        %v2127 = vsel %vm2075, %v2121, %v2102
        %v2129 = vunpack.c.l.s4 1983009808
        %v2130 = vunpack.c.0.s8 %v2129
        %v2131 = vperm.slane %v2127, %v2130
        %v2132 = vrot.slane %v2122, 4
        %v2133 = vsel %vm2075, %v2132, %v2120
        %v2135 = vunpack.c.l.s4 1983009808
        %v2136 = vunpack.c.0.s8 %v2135
        %v2137 = vperm.slane %v2133, %v2136
        %v2138 = vsel %vm2075, %v2125, %v2114
        %v2140 = vunpack.c.l.s4 1983009808
        %v2141 = vunpack.c.0.s8 %v2140
        %v2142 = vperm.slane %v2138, %v2141
        %v2143 = vrot.slane %v2126, 4
        %v2144 = vsel %vm2075, %v2143, %v2124
        %v2146 = vunpack.c.l.s4 1983009808
        %v2147 = vunpack.c.0.s8 %v2146
        %v2148 = vperm.slane %v2144, %v2147
        %v2149 = vrot.slane %v2137, 4
        %v2150 = vsel %vm2075, %v2149, %v2131
        %v2152 = vunpack.c.l.s4 1934713408
        %v2153 = vunpack.c.0.s8 %v2152
        %v2154 = vperm.slane %v2150, %v2153
        %v2155 = vrot.slane %v2148, 4
        %v2156 = vsel %vm2075, %v2155, %v2142
        %v2158 = vunpack.c.l.s4 1934713408
        %v2159 = vunpack.c.0.s8 %v2158
        %v2160 = vperm.slane %v2156, %v2159
        %v2161 = vrot.slane %v2160, 4
        %v2162 = vsel %vm2075, %v2161, %v2154
        %v2163 = vrot.slane %v2154, 4
        %v2164 = vsel %vm2075, %v2160, %v2163
        %v2165 = vpack.c.bf16 %v2162, %v2162
        %v2166 = vpack.c.bf16 %v2164, %v2164
        %v2167 = vrot.slane %v1990, 4
        %v2168 = vsel %vm2075, 0.0, %v2167
        %v2170 = vunpack.c.l.s4 1983009808
        %v2171 = vunpack.c.0.s8 %v2170
        %v2172 = vperm.slane %v1990, %v2171
        %v2174 = vunpack.c.l.s4 1983009808
        %v2175 = vunpack.c.0.s8 %v2174
        %v2176 = vperm.slane %v2168, %v2175
        %v2177 = vrot.slane %v2016, 4
        %v2178 = vsel %vm2075, 0.0, %v2177
        %v2180 = vunpack.c.l.s4 1983009808
        %v2181 = vunpack.c.0.s8 %v2180
        %v2182 = vperm.slane %v2016, %v2181
        %v2184 = vunpack.c.l.s4 1983009808
        %v2185 = vunpack.c.0.s8 %v2184
        %v2186 = vperm.slane %v2178, %v2185
        %v2187 = vrot.slane %v2182, 4
        %v2188 = vsel %vm2075, %v2187, %v2172
        %v2189 = vrot.slane %v2172, 4
        %v2190 = vsel %vm2075, %v2182, %v2189
        %v2192 = vunpack.c.l.s4 1934713408
        %v2193 = vunpack.c.0.s8 %v2192
        %v2194 = vperm.slane %v2188, %v2193
        %v2196 = vunpack.c.l.s4 1934713408
        %v2197 = vunpack.c.0.s8 %v2196
        %v2198 = vperm.slane %v2190, %v2197
        %v2199 = vrot.slane %v2186, 4
        %v2200 = vsel %vm2075, %v2199, %v2176
        %v2201 = vrot.slane %v2176, 4
        %v2202 = vsel %vm2075, %v2186, %v2201
        %v2204 = vunpack.c.l.s4 1934713408
        %v2205 = vunpack.c.0.s8 %v2204
        %v2206 = vperm.slane %v2200, %v2205
        %v2208 = vunpack.c.l.s4 1934713408
        %v2209 = vunpack.c.0.s8 %v2208
        %v2210 = vperm.slane %v2202, %v2209
        %v2211 = vrot.slane %v2194, 4
        %v2212 = vsel %vm2075, 0.0, %v2211
        %v2213 = vrot.slane %v2198, 4
        %v2214 = vsel %vm2075, 0.0, %v2213
        %v2215 = vrot.slane %v2206, 4
        %v2216 = vsel %vm2075, 0.0, %v2215
        %v2217 = vrot.slane %v2210, 4
        %v2218 = vsel %vm2075, 0.0, %v2217
        %v2219 = vsel %vm2075, %v2213, %v2194
        %v2221 = vunpack.c.l.s4 1983009808
        %v2222 = vunpack.c.0.s8 %v2221
        %v2223 = vperm.slane %v2219, %v2222
        %v2224 = vrot.slane %v2214, 4
        %v2225 = vsel %vm2075, %v2224, %v2212
        %v2227 = vunpack.c.l.s4 1983009808
        %v2228 = vunpack.c.0.s8 %v2227
        %v2229 = vperm.slane %v2225, %v2228
        %v2230 = vsel %vm2075, %v2217, %v2206
        %v2232 = vunpack.c.l.s4 1983009808
        %v2233 = vunpack.c.0.s8 %v2232
        %v2234 = vperm.slane %v2230, %v2233
        %v2235 = vrot.slane %v2218, 4
        %v2236 = vsel %vm2075, %v2235, %v2216
        %v2238 = vunpack.c.l.s4 1983009808
        %v2239 = vunpack.c.0.s8 %v2238
        %v2240 = vperm.slane %v2236, %v2239
        %v2241 = vrot.slane %v2229, 4
        %v2242 = vsel %vm2075, %v2241, %v2223
        %v2244 = vunpack.c.l.s4 1934713408
        %v2245 = vunpack.c.0.s8 %v2244
        %v2246 = vperm.slane %v2242, %v2245
        %v2247 = vrot.slane %v2240, 4
        %v2248 = vsel %vm2075, %v2247, %v2234
        %v2250 = vunpack.c.l.s4 1934713408
        %v2251 = vunpack.c.0.s8 %v2250
        %v2252 = vperm.slane %v2248, %v2251
        %v2253 = vrot.slane %v2252, 4
        %v2254 = vsel %vm2075, %v2253, %v2246
        %v2255 = vrot.slane %v2246, 4
        %v2256 = vsel %vm2075, %v2252, %v2255
        %v2257 = vpack.c.bf16 %v2254, %v2254
        %v2258 = vpack.c.bf16 %v2256, %v2256
        %v2259 = vrot.slane %v2042, 4
        %v2260 = vsel %vm2075, 0.0, %v2259
        %v2262 = vunpack.c.l.s4 1983009808
        %v2263 = vunpack.c.0.s8 %v2262
        %v2264 = vperm.slane %v2042, %v2263
        %v2266 = vunpack.c.l.s4 1983009808
        %v2267 = vunpack.c.0.s8 %v2266
        %v2268 = vperm.slane %v2260, %v2267
        %v2269 = vrot.slane %v2068, 4
        %v2270 = vsel %vm2075, 0.0, %v2269
        %v2272 = vunpack.c.l.s4 1983009808
        %v2273 = vunpack.c.0.s8 %v2272
        %v2274 = vperm.slane %v2068, %v2273
        %v2276 = vunpack.c.l.s4 1983009808
        %v2277 = vunpack.c.0.s8 %v2276
        %v2278 = vperm.slane %v2270, %v2277
        %v2279 = vrot.slane %v2274, 4
        %v2280 = vsel %vm2075, %v2279, %v2264
        %v2281 = vrot.slane %v2264, 4
        %v2282 = vsel %vm2075, %v2274, %v2281
        %v2284 = vunpack.c.l.s4 1934713408
        %v2285 = vunpack.c.0.s8 %v2284
        %v2286 = vperm.slane %v2280, %v2285
        %v2288 = vunpack.c.l.s4 1934713408
        %v2289 = vunpack.c.0.s8 %v2288
        %v2290 = vperm.slane %v2282, %v2289
        %v2291 = vrot.slane %v2278, 4
        %v2292 = vsel %vm2075, %v2291, %v2268
        %v2293 = vrot.slane %v2268, 4
        %v2294 = vsel %vm2075, %v2278, %v2293
        %v2296 = vunpack.c.l.s4 1934713408
        %v2297 = vunpack.c.0.s8 %v2296
        %v2298 = vperm.slane %v2292, %v2297
        %v2300 = vunpack.c.l.s4 1934713408
        %v2301 = vunpack.c.0.s8 %v2300
        %v2302 = vperm.slane %v2294, %v2301
        %v2303 = vrot.slane %v2286, 4
        %v2304 = vsel %vm2075, 0.0, %v2303
        %v2305 = vrot.slane %v2290, 4
        %v2306 = vsel %vm2075, 0.0, %v2305
        %v2307 = vrot.slane %v2298, 4
        %v2308 = vsel %vm2075, 0.0, %v2307
        %v2309 = vrot.slane %v2302, 4
        %v2310 = vsel %vm2075, 0.0, %v2309
        %v2311 = vsel %vm2075, %v2305, %v2286
        %v2313 = vunpack.c.l.s4 1983009808
        %v2314 = vunpack.c.0.s8 %v2313
        %v2315 = vperm.slane %v2311, %v2314
        %v2316 = vrot.slane %v2306, 4
        %v2317 = vsel %vm2075, %v2316, %v2304
        %v2319 = vunpack.c.l.s4 1983009808
        %v2320 = vunpack.c.0.s8 %v2319
        %v2321 = vperm.slane %v2317, %v2320
        %v2322 = vsel %vm2075, %v2309, %v2298
        %v2324 = vunpack.c.l.s4 1983009808
        %v2325 = vunpack.c.0.s8 %v2324
        %v2326 = vperm.slane %v2322, %v2325
        %v2327 = vrot.slane %v2310, 4
        %v2328 = vsel %vm2075, %v2327, %v2308
        %v2330 = vunpack.c.l.s4 1983009808
        %v2331 = vunpack.c.0.s8 %v2330
        %v2332 = vperm.slane %v2328, %v2331
        %v2333 = vrot.slane %v2321, 4
        %v2334 = vsel %vm2075, %v2333, %v2315
        %v2336 = vunpack.c.l.s4 1934713408
        %v2337 = vunpack.c.0.s8 %v2336
        %v2338 = vperm.slane %v2334, %v2337
        %v2339 = vrot.slane %v2332, 4
        %v2340 = vsel %vm2075, %v2339, %v2326
        %v2342 = vunpack.c.l.s4 1934713408
        %v2343 = vunpack.c.0.s8 %v2342
        %v2344 = vperm.slane %v2340, %v2343
        %v2345 = vrot.slane %v2344, 4
        %v2346 = vsel %vm2075, %v2345, %v2338
        %v2347 = vrot.slane %v2338, 4
        %v2348 = vsel %vm2075, %v2344, %v2347
        %v2349 = vpack.c.bf16 %v2346, %v2346
        %v2350 = vpack.c.bf16 %v2348, %v2348
        %2351 = vmatpush.bf16.xpose.msra.mxu0 0
        %2352 = vmatpush.bf16.xpose.msra.mxu0 0
        %2353 = vmatpush.bf16.xpose.msra.mxu0 0
        %2354 = vmatpush.bf16.xpose.msra.mxu0 0
        %2355 = vmatpush.bf16.xpose.msra.mxu0 0
        %2356 = vmatpush.bf16.xpose.msra.mxu0 0
        %2357 = vmatpush.bf16.xpose.msra.mxu0 0
        %2358 = vmatpush.bf16.xpose.msra.mxu0 %v2257
        %2359 = vmatmul.bf16.gmra.mxu0 %v2165
        %v2360 = vpop.f32.mrf.mxu0
        %v2361 = vadd.f32 %v2073, %v2360
        %v2362 = vpop.f32.mrf.mxu0
        %2363 = vdwg.mxu0
        %2364 = vmatpush.bf16.xpose.msra.mxu0 0
        %2365 = vmatpush.bf16.xpose.msra.mxu0 0
        %2366 = vmatpush.bf16.xpose.msra.mxu0 0
        %2367 = vmatpush.bf16.xpose.msra.mxu0 0
        %2368 = vmatpush.bf16.xpose.msra.mxu0 0
        %2369 = vmatpush.bf16.xpose.msra.mxu0 0
        %2370 = vmatpush.bf16.xpose.msra.mxu0 0
        %2371 = vmatpush.bf16.xpose.msra.mxu0 %v2258
        %2372 = vmatmul.bf16.gmra.mxu0 %v2166
        %v2373 = vpop.f32.mrf.mxu0
        %v2374 = vadd.f32 %v2073, %v2373
        %v2375 = vpop.f32.mrf.mxu0
        %2376 = vdwg.mxu0
        %vm2377 = vcmask 64512
        %v2378 = vsel %vm2377, %v2361, -inf
        %2379 = vmax.xlane.f32.xlu0 %v2378
        %v2380 = vpop.xlane.xlu0 %2379
        %v2381 = vsel %vm2377, %v2374, -inf
        %2382 = vmax.xlane.f32.xlu0 %v2381
        %v2383 = vpop.xlane.xlu0 %2382
        %v2384 = vsub.f32 %v2361, %v2380
        %v2385 = vsub.f32 %v2374, %v2383
        %v2386 = vmul.f32 %v2384, 1.442695
        %v2387 = vpow.pop %v2386
        %v2388 = vmul.f32 %v2385, 1.442695
        %v2389 = vpow.pop %v2388
        %v2390 = vsel %vm2377, %v2387, 0.0
        %2391 = vadd.xlane.f32.xlu0 %v2390
        %v2392 = vpop.xlane.xlu0 %2391
        %v2393 = vsel %vm2377, %v2389, 0.0
        %2394 = vadd.xlane.f32.xlu0 %v2393
        %v2395 = vpop.xlane.xlu0 %2394
        %v2396 = vrcp.pop %v2392
        %v2397 = vmul.f32 %v2392, %v2396
        %v2398 = vsub.f32 1.0, %v2397
        %v2399 = vmul.f32 %v2396, %v2398
        %v2400 = vadd.f32 %v2396, %v2399
        %vm2401 = vweird.f32 %v2392
        %vm2402 = vweird.f32 %v2396
        %vm2403 = vmor %vm2401, %vm2402
        %v2404 = vsel %vm2403, %v2396, %v2400
        %v2405 = vand.u32 2147483647, %v2392
        %vm2406 = vcmp.eq.f32.partialorder %v2405, 8.507059e+37
        %v2407 = vand.u32 %v2392, 2147483648
        %v2408 = vor.u32 1.1754944e-38, %v2407
        %v2409 = vsel %vm2406, %v2408, %v2404
        %v2410 = vmul.f32 %v2387, %v2409
        %v2411 = vrcp.pop %v2395
        %v2412 = vmul.f32 %v2395, %v2411
        %v2413 = vsub.f32 1.0, %v2412
        %v2414 = vmul.f32 %v2411, %v2413
        %v2415 = vadd.f32 %v2411, %v2414
        %vm2416 = vweird.f32 %v2395
        %vm2417 = vweird.f32 %v2411
        %vm2418 = vmor %vm2416, %vm2417
        %v2419 = vsel %vm2418, %v2411, %v2415
        %v2420 = vand.u32 2147483647, %v2395
        %vm2421 = vcmp.eq.f32.partialorder %v2420, 8.507059e+37
        %v2422 = vand.u32 %v2395, 2147483648
        %v2423 = vor.u32 1.1754944e-38, %v2422
        %v2424 = vsel %vm2421, %v2423, %v2419
        %v2425 = vmul.f32 %v2389, %v2424
        %v2426 = vpack.c.bf16 %v2410, %v2410
        %v2427 = vpack.c.bf16 %v2425, %v2425
        %v2429 = vsel %vm2377, %v2426, 0
        %vm2431 = vcmask 1043456
        %v2433 = vsel %vm2431, %v2349, 0
        %2435 = vmatpush.bf16.msra.mxu0 0
        %2436 = vmatpush.bf16.msra.mxu0 0
        %2437 = vmatpush.bf16.msra.mxu0 0
        %2438 = vmatpush.bf16.msra.mxu0 0
        %2439 = vmatpush.bf16.msra.mxu0 0
        %2440 = vmatpush.bf16.msra.mxu0 0
        %2441 = vmatpush.bf16.msra.mxu0 0
        %2442 = vmatpush.bf16.msra.mxu0 %v2433
        %2443 = vmatmul.bf16.gmra.mxu0 %v2429
        %v2444 = vpop.f32.mrf.mxu0
        %v2445 = vadd.f32 0.0, %v2444
        %v2446 = vpop.f32.mrf.mxu0
        %2447 = vdwg.mxu0
        %v2449 = vsel %vm2377, %v2427, 0
        %v2452 = vsel %vm2431, %v2350, 0
        %2454 = vmatpush.bf16.msra.mxu0 0
        %2455 = vmatpush.bf16.msra.mxu0 0
        %2456 = vmatpush.bf16.msra.mxu0 0
        %2457 = vmatpush.bf16.msra.mxu0 0
        %2458 = vmatpush.bf16.msra.mxu0 0
        %2459 = vmatpush.bf16.msra.mxu0 0
        %2460 = vmatpush.bf16.msra.mxu0 0
        %2461 = vmatpush.bf16.msra.mxu0 %v2452
        %2462 = vmatmul.bf16.gmra.mxu0 %v2449
        %v2463 = vpop.f32.mrf.mxu0
        %v2464 = vadd.f32 0.0, %v2463
        %v2465 = vpop.f32.mrf.mxu0
        %2466 = vdwg.mxu0
        %v2467 = vrot.slane %v2445, 4
        %v2468 = vsel %vm2075, 0.0, %v2467
        %v2470 = vunpack.c.l.s4 1983009808
        %v2471 = vunpack.c.0.s8 %v2470
        %v2472 = vperm.slane %v2445, %v2471
        %v2474 = vunpack.c.l.s4 1983009808
        %v2475 = vunpack.c.0.s8 %v2474
        %v2476 = vperm.slane %v2468, %v2475
        %v2477 = vrot.slane %v2464, 4
        %v2478 = vsel %vm2075, 0.0, %v2477
        %v2480 = vunpack.c.l.s4 1983009808
        %v2481 = vunpack.c.0.s8 %v2480
        %v2482 = vperm.slane %v2464, %v2481
        %v2484 = vunpack.c.l.s4 1983009808
        %v2485 = vunpack.c.0.s8 %v2484
        %v2486 = vperm.slane %v2478, %v2485
        %v2487 = vrot.slane %v2482, 4
        %v2488 = vsel %vm2075, %v2487, %v2472
        %v2489 = vrot.slane %v2472, 4
        %v2490 = vsel %vm2075, %v2482, %v2489
        %v2492 = vunpack.c.l.s4 1934713408
        %v2493 = vunpack.c.0.s8 %v2492
        %v2494 = vperm.slane %v2488, %v2493
        %v2496 = vunpack.c.l.s4 1934713408
        %v2497 = vunpack.c.0.s8 %v2496
        %v2498 = vperm.slane %v2490, %v2497
        %v2499 = vrot.slane %v2486, 4
        %v2500 = vsel %vm2075, %v2499, %v2476
        %v2501 = vrot.slane %v2476, 4
        %v2502 = vsel %vm2075, %v2486, %v2501
        %v2504 = vunpack.c.l.s4 1934713408
        %v2505 = vunpack.c.0.s8 %v2504
        %v2506 = vperm.slane %v2500, %v2505
        %v2508 = vunpack.c.l.s4 1934713408
        %v2509 = vunpack.c.0.s8 %v2508
        %v2510 = vperm.slane %v2502, %v2509
        %v2511 = vrot.slane %v2494, 4
        %v2512 = vsel %vm2075, 0.0, %v2511
        %v2513 = vrot.slane %v2498, 4
        %v2514 = vsel %vm2075, 0.0, %v2513
        %v2515 = vrot.slane %v2506, 4
        %v2516 = vsel %vm2075, 0.0, %v2515
        %v2517 = vrot.slane %v2510, 4
        %v2518 = vsel %vm2075, 0.0, %v2517
        %v2519 = vsel %vm2075, %v2513, %v2494
        %v2521 = vunpack.c.l.s4 1983009808
        %v2522 = vunpack.c.0.s8 %v2521
        %v2523 = vperm.slane %v2519, %v2522
        %v2524 = vrot.slane %v2514, 4
        %v2525 = vsel %vm2075, %v2524, %v2512
        %v2527 = vunpack.c.l.s4 1983009808
        %v2528 = vunpack.c.0.s8 %v2527
        %v2529 = vperm.slane %v2525, %v2528
        %v2530 = vsel %vm2075, %v2517, %v2506
        %v2532 = vunpack.c.l.s4 1983009808
        %v2533 = vunpack.c.0.s8 %v2532
        %v2534 = vperm.slane %v2530, %v2533
        %v2535 = vrot.slane %v2518, 4
        %v2536 = vsel %vm2075, %v2535, %v2516
        %v2538 = vunpack.c.l.s4 1983009808
        %v2539 = vunpack.c.0.s8 %v2538
        %v2540 = vperm.slane %v2536, %v2539
        %v2541 = vrot.slane %v2529, 4
        %v2542 = vsel %vm2075, %v2541, %v2523
        %v2544 = vunpack.c.l.s4 1934713408
        %v2545 = vunpack.c.0.s8 %v2544
        %v2546 = vperm.slane %v2542, %v2545
        %v2547 = vrot.slane %v2540, 4
        %v2548 = vsel %vm2075, %v2547, %v2534
        %v2550 = vunpack.c.l.s4 1934713408
        %v2551 = vunpack.c.0.s8 %v2550
        %v2552 = vperm.slane %v2548, %v2551
        %v2553 = vrot.slane %v2552, 4
        %v2554 = vsel %vm2075, %v2553, %v2546
        %v2555 = vrot.slane %v2546, 4
        %v2556 = vsel %vm2075, %v2552, %v2555
        %v2557 = vpack.c.bf16 %v2554, %v2554
        %v2558 = vpack.c.bf16 %v2556, %v2556
        %v2559 = vld [vmem:[%s1038] sm:$0xff]
        %v2560 = vld [vmem:[%s1038 + $0x8] sm:$0xff]
        %v2561 = vld [vmem:[%s1038 + $0x10] sm:$0xff]
        %v2562 = vld [vmem:[%s1038 + $0x18] sm:$0xff]
        %v2563 = vld [vmem:[%s1038 + $0x20] sm:$0xff]
        %v2564 = vld [vmem:[%s1038 + $0x28] sm:$0xff]
        %v2565 = vld [vmem:[%s1038 + $0x30] sm:$0xff]
        %v2566 = vld [vmem:[%s1038 + $0x38] sm:$0xff]
        %v2567 = vld [vmem:[%s1038 + $0x40] sm:$0xff]
        %v2568 = vld [vmem:[%s1038 + $0x48] sm:$0xff]
        %v2569 = vld [vmem:[%s1038 + $0x50] sm:$0xff]
        %v2570 = vld [vmem:[%s1038 + $0x58] sm:$0xff]
        %v2571 = vld [vmem:[%s1038 + $0x60] sm:$0xff]
        %v2572 = vld [vmem:[%s1038 + $0x68] sm:$0xff]
        %v2573 = vld [vmem:[%s1038 + $0x70] sm:$0xff]
        %v2574 = vld [vmem:[%s1038 + $0x78] sm:$0xff]
        %v2575 = vld [vmem:[%s1038 + $0x80] sm:$0xff]
        %v2576 = vld [vmem:[%s1038 + $0x88] sm:$0xff]
        %v2577 = vld [vmem:[%s1038 + $0x90] sm:$0xff]
        %v2578 = vld [vmem:[%s1038 + $0x98] sm:$0xff]
        %v2579 = vld [vmem:[%s1038 + $0xa0] sm:$0xff]
        %v2580 = vld [vmem:[%s1038 + $0xa8] sm:$0xff]
        %v2581 = vld [vmem:[%s1038 + $0xb0] sm:$0xff]
        %v2582 = vld [vmem:[%s1038 + $0xb8] sm:$0xff]
        %v2583 = vld [vmem:[%s1038 + $0xc0] sm:$0xff]
        %v2584 = vld [vmem:[%s1038 + $0xc8] sm:$0xff]
        %v2585 = vld [vmem:[%s1038 + $0xd0] sm:$0xff]
        %v2586 = vld [vmem:[%s1038 + $0xd8] sm:$0xff]
        %v2587 = vld [vmem:[%s1038 + $0xe0] sm:$0xff]
        %v2588 = vld [vmem:[%s1038 + $0xe8] sm:$0xff]
        %v2589 = vld [vmem:[%s1038 + $0xf0] sm:$0xff]
        %v2590 = vld [vmem:[%s1038 + $0xf8] sm:$0xff]
        %v2591 = vld [vmem:[%s1048] sm:$0x3]
        %v2593 = vperm.slane %v2591, 0
        %v2594 = vperm.slane %v2591, 1
        %v2629 = vunpack.c.l.b16 %v2559
        %v2630 = vunpack.c.h.b16 %v2559
        %v2631 = vunpack.c.l.b16 %v2560
        %v2632 = vunpack.c.h.b16 %v2560
        %v2633 = vunpack.c.l.b16 %v2561
        %v2634 = vunpack.c.h.b16 %v2561
        %v2635 = vunpack.c.l.b16 %v2562
        %v2636 = vunpack.c.h.b16 %v2562
        %v2637 = vunpack.c.l.b16 %v2563
        %v2638 = vunpack.c.h.b16 %v2563
        %v2639 = vunpack.c.l.b16 %v2564
        %v2640 = vunpack.c.h.b16 %v2564
        %v2641 = vunpack.c.l.b16 %v2565
        %v2642 = vunpack.c.h.b16 %v2565
        %v2643 = vunpack.c.l.b16 %v2566
        %v2644 = vunpack.c.h.b16 %v2566
        %v2645 = vunpack.c.l.b16 %v2567
        %v2646 = vunpack.c.h.b16 %v2567
        %v2647 = vunpack.c.l.b16 %v2568
        %v2648 = vunpack.c.h.b16 %v2568
        %v2649 = vunpack.c.l.b16 %v2569
        %v2650 = vunpack.c.h.b16 %v2569
        %v2651 = vunpack.c.l.b16 %v2570
        %v2652 = vunpack.c.h.b16 %v2570
        %v2653 = vunpack.c.l.b16 %v2571
        %v2654 = vunpack.c.h.b16 %v2571
        %v2655 = vunpack.c.l.b16 %v2572
        %v2656 = vunpack.c.h.b16 %v2572
        %v2657 = vunpack.c.l.b16 %v2573
        %v2658 = vunpack.c.h.b16 %v2573
        %v2659 = vunpack.c.l.b16 %v2574
        %v2660 = vunpack.c.h.b16 %v2574
        %v2661 = vunpack.c.l.b16 %v2575
        %v2662 = vunpack.c.h.b16 %v2575
        %v2663 = vunpack.c.l.b16 %v2576
        %v2664 = vunpack.c.h.b16 %v2576
        %v2665 = vunpack.c.l.b16 %v2577
        %v2666 = vunpack.c.h.b16 %v2577
        %v2667 = vunpack.c.l.b16 %v2578
        %v2668 = vunpack.c.h.b16 %v2578
        %v2669 = vunpack.c.l.b16 %v2579
        %v2670 = vunpack.c.h.b16 %v2579
        %v2671 = vunpack.c.l.b16 %v2580
        %v2672 = vunpack.c.h.b16 %v2580
        %v2673 = vunpack.c.l.b16 %v2581
        %v2674 = vunpack.c.h.b16 %v2581
        %v2675 = vunpack.c.l.b16 %v2582
        %v2676 = vunpack.c.h.b16 %v2582
        %v2677 = vunpack.c.l.b16 %v2583
        %v2678 = vunpack.c.h.b16 %v2583
        %v2679 = vunpack.c.l.b16 %v2584
        %v2680 = vunpack.c.h.b16 %v2584
        %v2681 = vunpack.c.l.b16 %v2585
        %v2682 = vunpack.c.h.b16 %v2585
        %v2683 = vunpack.c.l.b16 %v2586
        %v2684 = vunpack.c.h.b16 %v2586
        %v2685 = vunpack.c.l.b16 %v2587
        %v2686 = vunpack.c.h.b16 %v2587
        %v2687 = vunpack.c.l.b16 %v2588
        %v2688 = vunpack.c.h.b16 %v2588
        %v2689 = vunpack.c.l.b16 %v2589
        %v2690 = vunpack.c.h.b16 %v2589
        %v2691 = vunpack.c.l.b16 %v2590
        %v2692 = vunpack.c.h.b16 %v2590
        %v2693 = vpack.c.b16 %v2631, %v2629
        %v2694 = vpack.c.b16 %v2632, %v2630
        %v2695 = vpack.c.b16 %v2635, %v2633
        %v2696 = vpack.c.b16 %v2636, %v2634
        %v2697 = vpack.c.b16 %v2639, %v2637
        %v2698 = vpack.c.b16 %v2640, %v2638
        %v2699 = vpack.c.b16 %v2643, %v2641
        %v2700 = vpack.c.b16 %v2644, %v2642
        %v2701 = vpack.c.b16 %v2647, %v2645
        %v2702 = vpack.c.b16 %v2648, %v2646
        %v2703 = vpack.c.b16 %v2651, %v2649
        %v2704 = vpack.c.b16 %v2652, %v2650
        %v2705 = vpack.c.b16 %v2655, %v2653
        %v2706 = vpack.c.b16 %v2656, %v2654
        %v2707 = vpack.c.b16 %v2659, %v2657
        %v2708 = vpack.c.b16 %v2660, %v2658
        %v2709 = vpack.c.b16 %v2663, %v2661
        %v2710 = vpack.c.b16 %v2664, %v2662
        %v2711 = vpack.c.b16 %v2667, %v2665
        %v2712 = vpack.c.b16 %v2668, %v2666
        %v2713 = vpack.c.b16 %v2671, %v2669
        %v2714 = vpack.c.b16 %v2672, %v2670
        %v2715 = vpack.c.b16 %v2675, %v2673
        %v2716 = vpack.c.b16 %v2676, %v2674
        %v2717 = vpack.c.b16 %v2679, %v2677
        %v2718 = vpack.c.b16 %v2680, %v2678
        %v2719 = vpack.c.b16 %v2683, %v2681
        %v2720 = vpack.c.b16 %v2684, %v2682
        %v2721 = vpack.c.b16 %v2687, %v2685
        %v2722 = vpack.c.b16 %v2688, %v2686
        %v2723 = vpack.c.b16 %v2691, %v2689
        %v2724 = vpack.c.b16 %v2692, %v2690
        %2757 = vmatpush.bf16.msra.mxu0 %v2707
        %2758 = vmatpush.bf16.msra.mxu0 %v2705
        %2759 = vmatpush.bf16.msra.mxu0 %v2703
        %2760 = vmatpush.bf16.msra.mxu0 %v2701
        %2761 = vmatpush.bf16.msra.mxu0 %v2699
        %2762 = vmatpush.bf16.msra.mxu0 %v2697
        %2763 = vmatpush.bf16.msra.mxu0 %v2695
        %2764 = vmatpush.bf16.msra.mxu0 %v2693
        %2765 = vmatmul.bf16.gmra.mxu0 %v2557
        %v2766 = vpop.f32.mrf.mxu0
        %v2767 = vadd.f32 %v2593, %v2766
        %v2768 = vpop.f32.mrf.mxu0
        %2769 = vdwg.mxu0
        %2770 = vmatpush.bf16.msra.mxu0 %v2723
        %2771 = vmatpush.bf16.msra.mxu0 %v2721
        %2772 = vmatpush.bf16.msra.mxu0 %v2719
        %2773 = vmatpush.bf16.msra.mxu0 %v2717
        %2774 = vmatpush.bf16.msra.mxu0 %v2715
        %2775 = vmatpush.bf16.msra.mxu0 %v2713
        %2776 = vmatpush.bf16.msra.mxu0 %v2711
        %2777 = vmatpush.bf16.msra.mxu0 %v2709
        %2778 = vmatmul.bf16.gmra.mxu0 %v2558
        %v2779 = vpop.f32.mrf.mxu0
        %v2780 = vadd.f32 %v2767, %v2779
        %v2781 = vpop.f32.mrf.mxu0
        %2782 = vdwg.mxu0
        %2783 = vmatpush.bf16.msra.mxu0 %v2708
        %2784 = vmatpush.bf16.msra.mxu0 %v2706
        %2785 = vmatpush.bf16.msra.mxu0 %v2704
        %2786 = vmatpush.bf16.msra.mxu0 %v2702
        %2787 = vmatpush.bf16.msra.mxu0 %v2700
        %2788 = vmatpush.bf16.msra.mxu0 %v2698
        %2789 = vmatpush.bf16.msra.mxu0 %v2696
        %2790 = vmatpush.bf16.msra.mxu0 %v2694
        %2791 = vmatmul.bf16.gmra.mxu0 %v2557
        %v2792 = vpop.f32.mrf.mxu0
        %v2793 = vadd.f32 %v2594, %v2792
        %v2794 = vpop.f32.mrf.mxu0
        %2795 = vdwg.mxu0
        %2796 = vmatpush.bf16.msra.mxu0 %v2724
        %2797 = vmatpush.bf16.msra.mxu0 %v2722
        %2798 = vmatpush.bf16.msra.mxu0 %v2720
        %2799 = vmatpush.bf16.msra.mxu0 %v2718
        %2800 = vmatpush.bf16.msra.mxu0 %v2716
        %2801 = vmatpush.bf16.msra.mxu0 %v2714
        %2802 = vmatpush.bf16.msra.mxu0 %v2712
        %2803 = vmatpush.bf16.msra.mxu0 %v2710
        %2804 = vmatmul.bf16.gmra.mxu0 %v2558
        %v2805 = vpop.f32.mrf.mxu0
        %v2806 = vadd.f32 %v2793, %v2805
        %v2807 = vpop.f32.mrf.mxu0
        %2808 = vdwg.mxu0
        %v2809 = vadd.f32 %v1319, %v2780
        %v2810 = vadd.f32 %v1320, %v2806
        %v2811 = vadd.f32 %v2809, %v2810
        %2812 = vadd.xlane.f32.xlu0 %v2811
        %v2813 = vpop.xlane.xlu0 %2812
        %v2814 = vrcp.pop 256.0
        %v2815 = vmul.f32 256.0, %v2814
        %v2816 = vsub.f32 1.0, %v2815
        %v2817 = vmul.f32 %v2814, %v2816
        %v2818 = vadd.f32 %v2814, %v2817
        %vm2819 = vweird.f32 %v2814
        %v2820 = vsel %vm2819, %v2814, %v2818
        %v2821 = vmul.f32 %v2813, %v2820
        %v2822 = vsub.f32 %v2809, %v2821
        %v2823 = vsub.f32 %v2810, %v2821
        %v2824 = vmul.f32 %v2822, %v2822
        %v2825 = vmul.f32 %v2823, %v2823
        %v2826 = vadd.f32 %v2824, %v2825
        %2827 = vadd.xlane.f32.xlu0 %v2826
        %v2828 = vpop.xlane.xlu0 %2827
        %v2829 = vmul.f32 %v2828, %v2820
        %v2830 = vadd.f32 %v2829, 1e-05
        %v2831 = vrsqrt.pop %v2830
        %v2832 = vmul.f32 %v2831, %v2830
        %v2833 = vmul.f32 %v2832, %v2831
        %v2834 = vmul.f32 0.5, %v2833
        %v2835 = vsub.f32 1.5, %v2834
        %v2836 = vmul.f32 %v2831, %v2835
        %vm2837 = vweird.f32 %v2830
        %vm2838 = vweird.f32 %v2831
        %vm2839 = vmor %vm2837, %vm2838
        %v2840 = vsel %vm2839, %v2831, %v2836
        %v2841 = vmul.f32 %v2822, %v2840
        %v2842 = vmul.f32 %v2823, %v2840
        %v2844 = vperm.slane %v1321, 0
        %v2845 = vperm.slane %v1321, 4
        %v2848 = vperm.slane %v2844, 0
        %v2849 = vperm.slane %v2845, 0
        %v2850 = vmul.f32 %v2841, %v2848
        %v2851 = vmul.f32 %v2842, %v2849
        %v2853 = vperm.slane %v1322, 0
        %v2854 = vperm.slane %v1322, 4
        %v2857 = vperm.slane %v2853, 0
        %v2858 = vperm.slane %v2854, 0
        %v2859 = vadd.f32 %v2850, %v2857
        %v2860 = vadd.f32 %v2851, %v2858
        %v2861 = vpack.c.bf16 %v2859, %v2859
        %v2862 = vpack.c.bf16 %v2860, %v2860
        %v2863 = vld [vmem:[%s1058] sm:$0xff]
        %v2864 = vld [vmem:[%s1058 + $0x8] sm:$0xff]
        %v2865 = vld [vmem:[%s1058 + $0x10] sm:$0xff]
        %v2866 = vld [vmem:[%s1058 + $0x18] sm:$0xff]
        %v2867 = vld [vmem:[%s1058 + $0x20] sm:$0xff]
        %v2868 = vld [vmem:[%s1058 + $0x28] sm:$0xff]
        %v2869 = vld [vmem:[%s1058 + $0x30] sm:$0xff]
        %v2870 = vld [vmem:[%s1058 + $0x38] sm:$0xff]
        %v2871 = vld [vmem:[%s1058 + $0x40] sm:$0xff]
        %v2872 = vld [vmem:[%s1058 + $0x48] sm:$0xff]
        %v2873 = vld [vmem:[%s1058 + $0x50] sm:$0xff]
        %v2874 = vld [vmem:[%s1058 + $0x58] sm:$0xff]
        %v2875 = vld [vmem:[%s1058 + $0x60] sm:$0xff]
        %v2876 = vld [vmem:[%s1058 + $0x68] sm:$0xff]
        %v2877 = vld [vmem:[%s1058 + $0x70] sm:$0xff]
        %v2878 = vld [vmem:[%s1058 + $0x78] sm:$0xff]
        %v2879 = vld [vmem:[%s1058 + $0x80] sm:$0xff]
        %v2880 = vld [vmem:[%s1058 + $0x88] sm:$0xff]
        %v2881 = vld [vmem:[%s1058 + $0x90] sm:$0xff]
        %v2882 = vld [vmem:[%s1058 + $0x98] sm:$0xff]
        %v2883 = vld [vmem:[%s1058 + $0xa0] sm:$0xff]
        %v2884 = vld [vmem:[%s1058 + $0xa8] sm:$0xff]
        %v2885 = vld [vmem:[%s1058 + $0xb0] sm:$0xff]
        %v2886 = vld [vmem:[%s1058 + $0xb8] sm:$0xff]
        %v2887 = vld [vmem:[%s1058 + $0xc0] sm:$0xff]
        %v2888 = vld [vmem:[%s1058 + $0xc8] sm:$0xff]
        %v2889 = vld [vmem:[%s1058 + $0xd0] sm:$0xff]
        %v2890 = vld [vmem:[%s1058 + $0xd8] sm:$0xff]
        %v2891 = vld [vmem:[%s1058 + $0xe0] sm:$0xff]
        %v2892 = vld [vmem:[%s1058 + $0xe8] sm:$0xff]
        %v2893 = vld [vmem:[%s1058 + $0xf0] sm:$0xff]
        %v2894 = vld [vmem:[%s1058 + $0xf8] sm:$0xff]
        %v2895 = vld [vmem:[%s1068] sm:$0x3]
        %v2897 = vperm.slane %v2895, 0
        %v2898 = vperm.slane %v2895, 1
        %v2933 = vunpack.c.l.b16 %v2863
        %v2934 = vunpack.c.h.b16 %v2863
        %v2935 = vunpack.c.l.b16 %v2864
        %v2936 = vunpack.c.h.b16 %v2864
        %v2937 = vunpack.c.l.b16 %v2865
        %v2938 = vunpack.c.h.b16 %v2865
        %v2939 = vunpack.c.l.b16 %v2866
        %v2940 = vunpack.c.h.b16 %v2866
        %v2941 = vunpack.c.l.b16 %v2867
        %v2942 = vunpack.c.h.b16 %v2867
        %v2943 = vunpack.c.l.b16 %v2868
        %v2944 = vunpack.c.h.b16 %v2868
        %v2945 = vunpack.c.l.b16 %v2869
        %v2946 = vunpack.c.h.b16 %v2869
        %v2947 = vunpack.c.l.b16 %v2870
        %v2948 = vunpack.c.h.b16 %v2870
        %v2949 = vunpack.c.l.b16 %v2871
        %v2950 = vunpack.c.h.b16 %v2871
        %v2951 = vunpack.c.l.b16 %v2872
        %v2952 = vunpack.c.h.b16 %v2872
        %v2953 = vunpack.c.l.b16 %v2873
        %v2954 = vunpack.c.h.b16 %v2873
        %v2955 = vunpack.c.l.b16 %v2874
        %v2956 = vunpack.c.h.b16 %v2874
        %v2957 = vunpack.c.l.b16 %v2875
        %v2958 = vunpack.c.h.b16 %v2875
        %v2959 = vunpack.c.l.b16 %v2876
        %v2960 = vunpack.c.h.b16 %v2876
        %v2961 = vunpack.c.l.b16 %v2877
        %v2962 = vunpack.c.h.b16 %v2877
        %v2963 = vunpack.c.l.b16 %v2878
        %v2964 = vunpack.c.h.b16 %v2878
        %v2965 = vunpack.c.l.b16 %v2879
        %v2966 = vunpack.c.h.b16 %v2879
        %v2967 = vunpack.c.l.b16 %v2880
        %v2968 = vunpack.c.h.b16 %v2880
        %v2969 = vunpack.c.l.b16 %v2881
        %v2970 = vunpack.c.h.b16 %v2881
        %v2971 = vunpack.c.l.b16 %v2882
        %v2972 = vunpack.c.h.b16 %v2882
        %v2973 = vunpack.c.l.b16 %v2883
        %v2974 = vunpack.c.h.b16 %v2883
        %v2975 = vunpack.c.l.b16 %v2884
        %v2976 = vunpack.c.h.b16 %v2884
        %v2977 = vunpack.c.l.b16 %v2885
        %v2978 = vunpack.c.h.b16 %v2885
        %v2979 = vunpack.c.l.b16 %v2886
        %v2980 = vunpack.c.h.b16 %v2886
        %v2981 = vunpack.c.l.b16 %v2887
        %v2982 = vunpack.c.h.b16 %v2887
        %v2983 = vunpack.c.l.b16 %v2888
        %v2984 = vunpack.c.h.b16 %v2888
        %v2985 = vunpack.c.l.b16 %v2889
        %v2986 = vunpack.c.h.b16 %v2889
        %v2987 = vunpack.c.l.b16 %v2890
        %v2988 = vunpack.c.h.b16 %v2890
        %v2989 = vunpack.c.l.b16 %v2891
        %v2990 = vunpack.c.h.b16 %v2891
        %v2991 = vunpack.c.l.b16 %v2892
        %v2992 = vunpack.c.h.b16 %v2892
        %v2993 = vunpack.c.l.b16 %v2893
        %v2994 = vunpack.c.h.b16 %v2893
        %v2995 = vunpack.c.l.b16 %v2894
        %v2996 = vunpack.c.h.b16 %v2894
        %v2997 = vpack.c.b16 %v2935, %v2933
        %v2998 = vpack.c.b16 %v2936, %v2934
        %v2999 = vpack.c.b16 %v2939, %v2937
        %v3000 = vpack.c.b16 %v2940, %v2938
        %v3001 = vpack.c.b16 %v2943, %v2941
        %v3002 = vpack.c.b16 %v2944, %v2942
        %v3003 = vpack.c.b16 %v2947, %v2945
        %v3004 = vpack.c.b16 %v2948, %v2946
        %v3005 = vpack.c.b16 %v2951, %v2949
        %v3006 = vpack.c.b16 %v2952, %v2950
        %v3007 = vpack.c.b16 %v2955, %v2953
        %v3008 = vpack.c.b16 %v2956, %v2954
        %v3009 = vpack.c.b16 %v2959, %v2957
        %v3010 = vpack.c.b16 %v2960, %v2958
        %v3011 = vpack.c.b16 %v2963, %v2961
        %v3012 = vpack.c.b16 %v2964, %v2962
        %v3013 = vpack.c.b16 %v2967, %v2965
        %v3014 = vpack.c.b16 %v2968, %v2966
        %v3015 = vpack.c.b16 %v2971, %v2969
        %v3016 = vpack.c.b16 %v2972, %v2970
        %v3017 = vpack.c.b16 %v2975, %v2973
        %v3018 = vpack.c.b16 %v2976, %v2974
        %v3019 = vpack.c.b16 %v2979, %v2977
        %v3020 = vpack.c.b16 %v2980, %v2978
        %v3021 = vpack.c.b16 %v2983, %v2981
        %v3022 = vpack.c.b16 %v2984, %v2982
        %v3023 = vpack.c.b16 %v2987, %v2985
        %v3024 = vpack.c.b16 %v2988, %v2986
        %v3025 = vpack.c.b16 %v2991, %v2989
        %v3026 = vpack.c.b16 %v2992, %v2990
        %v3027 = vpack.c.b16 %v2995, %v2993
        %v3028 = vpack.c.b16 %v2996, %v2994
        %3061 = vmatpush.bf16.msra.mxu0 %v3011
        %3062 = vmatpush.bf16.msra.mxu0 %v3009
        %3063 = vmatpush.bf16.msra.mxu0 %v3007
        %3064 = vmatpush.bf16.msra.mxu0 %v3005
        %3065 = vmatpush.bf16.msra.mxu0 %v3003
        %3066 = vmatpush.bf16.msra.mxu0 %v3001
        %3067 = vmatpush.bf16.msra.mxu0 %v2999
        %3068 = vmatpush.bf16.msra.mxu0 %v2997
        %3069 = vmatmul.bf16.gmra.mxu0 %v2861
        %v3070 = vpop.f32.mrf.mxu0
        %v3071 = vadd.f32 %v2897, %v3070
        %v3072 = vpop.f32.mrf.mxu0
        %3073 = vdwg.mxu0
        %3074 = vmatpush.bf16.msra.mxu0 %v3027
        %3075 = vmatpush.bf16.msra.mxu0 %v3025
        %3076 = vmatpush.bf16.msra.mxu0 %v3023
        %3077 = vmatpush.bf16.msra.mxu0 %v3021
        %3078 = vmatpush.bf16.msra.mxu0 %v3019
        %3079 = vmatpush.bf16.msra.mxu0 %v3017
        %3080 = vmatpush.bf16.msra.mxu0 %v3015
        %3081 = vmatpush.bf16.msra.mxu0 %v3013
        %3082 = vmatmul.bf16.gmra.mxu0 %v2862
        %v3083 = vpop.f32.mrf.mxu0
        %v3084 = vadd.f32 %v3071, %v3083
        %v3085 = vpop.f32.mrf.mxu0
        %3086 = vdwg.mxu0
        %3087 = vmatpush.bf16.msra.mxu0 %v3012
        %3088 = vmatpush.bf16.msra.mxu0 %v3010
        %3089 = vmatpush.bf16.msra.mxu0 %v3008
        %3090 = vmatpush.bf16.msra.mxu0 %v3006
        %3091 = vmatpush.bf16.msra.mxu0 %v3004
        %3092 = vmatpush.bf16.msra.mxu0 %v3002
        %3093 = vmatpush.bf16.msra.mxu0 %v3000
        %3094 = vmatpush.bf16.msra.mxu0 %v2998
        %3095 = vmatmul.bf16.gmra.mxu0 %v2861
        %v3096 = vpop.f32.mrf.mxu0
        %v3097 = vadd.f32 %v2898, %v3096
        %v3098 = vpop.f32.mrf.mxu0
        %3099 = vdwg.mxu0
        %3100 = vmatpush.bf16.msra.mxu0 %v3028
        %3101 = vmatpush.bf16.msra.mxu0 %v3026
        %3102 = vmatpush.bf16.msra.mxu0 %v3024
        %3103 = vmatpush.bf16.msra.mxu0 %v3022
        %3104 = vmatpush.bf16.msra.mxu0 %v3020
        %3105 = vmatpush.bf16.msra.mxu0 %v3018
        %3106 = vmatpush.bf16.msra.mxu0 %v3016
        %3107 = vmatpush.bf16.msra.mxu0 %v3014
        %3108 = vmatmul.bf16.gmra.mxu0 %v2862
        %v3109 = vpop.f32.mrf.mxu0
        %v3110 = vadd.f32 %v3097, %v3109
        %v3111 = vpop.f32.mrf.mxu0
        %3112 = vdwg.mxu0
        %v3113 = vmul.f32 %v3084, 0.088388346
        %v3114 = vmul.f32 %v3110, 0.088388346
        %v3115 = vld [vmem:[%s1004] sm:$0xff]
        %v3116 = vld [vmem:[%s1004 + $0x8] sm:$0xff]
        %v3117 = vld [vmem:[%s1078] sm:$0xff]
        %v3118 = vld [vmem:[%s1078 + $0x8] sm:$0xff]
        %v3119 = vld [vmem:[%s1078 + $0x10] sm:$0xff]
        %v3120 = vld [vmem:[%s1078 + $0x18] sm:$0xff]
        %v3121 = vld [vmem:[%s1078 + $0x20] sm:$0xff]
        %v3122 = vld [vmem:[%s1078 + $0x28] sm:$0xff]
        %v3123 = vld [vmem:[%s1078 + $0x30] sm:$0xff]
        %v3124 = vld [vmem:[%s1078 + $0x38] sm:$0xff]
        %v3125 = vld [vmem:[%s1078 + $0x40] sm:$0xff]
        %v3126 = vld [vmem:[%s1078 + $0x48] sm:$0xff]
        %v3127 = vld [vmem:[%s1078 + $0x50] sm:$0xff]
        %v3128 = vld [vmem:[%s1078 + $0x58] sm:$0xff]
        %v3129 = vld [vmem:[%s1078 + $0x60] sm:$0xff]
        %v3130 = vld [vmem:[%s1078 + $0x68] sm:$0xff]
        %v3131 = vld [vmem:[%s1078 + $0x70] sm:$0xff]
        %v3132 = vld [vmem:[%s1078 + $0x78] sm:$0xff]
        %v3133 = vld [vmem:[%s1078 + $0x80] sm:$0xff]
        %v3134 = vld [vmem:[%s1078 + $0x88] sm:$0xff]
        %v3135 = vld [vmem:[%s1078 + $0x90] sm:$0xff]
        %v3136 = vld [vmem:[%s1078 + $0x98] sm:$0xff]
        %v3137 = vld [vmem:[%s1078 + $0xa0] sm:$0xff]
        %v3138 = vld [vmem:[%s1078 + $0xa8] sm:$0xff]
        %v3139 = vld [vmem:[%s1078 + $0xb0] sm:$0xff]
        %v3140 = vld [vmem:[%s1078 + $0xb8] sm:$0xff]
        %v3141 = vld [vmem:[%s1078 + $0xc0] sm:$0xff]
        %v3142 = vld [vmem:[%s1078 + $0xc8] sm:$0xff]
        %v3143 = vld [vmem:[%s1078 + $0xd0] sm:$0xff]
        %v3144 = vld [vmem:[%s1078 + $0xd8] sm:$0xff]
        %v3145 = vld [vmem:[%s1078 + $0xe0] sm:$0xff]
        %v3146 = vld [vmem:[%s1078 + $0xe8] sm:$0xff]
        %v3147 = vld [vmem:[%s1078 + $0xf0] sm:$0xff]
        %v3148 = vld [vmem:[%s1078 + $0xf8] sm:$0xff]
        %v3149 = vld [vmem:[%s1078 + $0x100] sm:$0xff]
        %v3150 = vld [vmem:[%s1078 + $0x108] sm:$0xff]
        %v3151 = vld [vmem:[%s1078 + $0x110] sm:$0xff]
        %v3152 = vld [vmem:[%s1078 + $0x118] sm:$0xff]
        %v3153 = vld [vmem:[%s1078 + $0x120] sm:$0xff]
        %v3154 = vld [vmem:[%s1078 + $0x128] sm:$0xff]
        %v3155 = vld [vmem:[%s1078 + $0x130] sm:$0xff]
        %v3156 = vld [vmem:[%s1078 + $0x138] sm:$0xff]
        %v3157 = vld [vmem:[%s1078 + $0x140] sm:$0xff]
        %v3158 = vld [vmem:[%s1078 + $0x148] sm:$0xff]
        %v3159 = vld [vmem:[%s1078 + $0x150] sm:$0xff]
        %v3160 = vld [vmem:[%s1078 + $0x158] sm:$0xff]
        %v3161 = vld [vmem:[%s1078 + $0x160] sm:$0xff]
        %v3162 = vld [vmem:[%s1078 + $0x168] sm:$0xff]
        %v3163 = vld [vmem:[%s1078 + $0x170] sm:$0xff]
        %v3164 = vld [vmem:[%s1078 + $0x178] sm:$0xff]
        %v3165 = vld [vmem:[%s1078 + $0x180] sm:$0xff]
        %v3166 = vld [vmem:[%s1078 + $0x188] sm:$0xff]
        %v3167 = vld [vmem:[%s1078 + $0x190] sm:$0xff]
        %v3168 = vld [vmem:[%s1078 + $0x198] sm:$0xff]
        %v3169 = vld [vmem:[%s1078 + $0x1a0] sm:$0xff]
        %v3170 = vld [vmem:[%s1078 + $0x1a8] sm:$0xff]
        %v3171 = vld [vmem:[%s1078 + $0x1b0] sm:$0xff]
        %v3172 = vld [vmem:[%s1078 + $0x1b8] sm:$0xff]
        %v3173 = vld [vmem:[%s1078 + $0x1c0] sm:$0xff]
        %v3174 = vld [vmem:[%s1078 + $0x1c8] sm:$0xff]
        %v3175 = vld [vmem:[%s1078 + $0x1d0] sm:$0xff]
        %v3176 = vld [vmem:[%s1078 + $0x1d8] sm:$0xff]
        %v3177 = vld [vmem:[%s1078 + $0x1e0] sm:$0xff]
        %v3178 = vld [vmem:[%s1078 + $0x1e8] sm:$0xff]
        %v3179 = vld [vmem:[%s1078 + $0x1f0] sm:$0xff]
        %v3180 = vld [vmem:[%s1078 + $0x1f8] sm:$0xff]
        %v3181 = vld [vmem:[%s1088] sm:$0xf]
        %v3183 = vperm.slane %v3181, 0
        %v3184 = vperm.slane %v3181, 1
        %v3185 = vperm.slane %v3181, 2
        %v3186 = vperm.slane %v3181, 3
        %v3193 = vunpack.c.l.b16 %v3115
        %v3194 = vunpack.c.h.b16 %v3115
        %v3195 = vunpack.c.l.b16 %v3116
        %v3196 = vunpack.c.h.b16 %v3116
        %v3197 = vpack.c.b16 %v3195, %v3193
        %v3198 = vpack.c.b16 %v3196, %v3194
        %v3265 = vunpack.c.l.b16 %v3117
        %v3266 = vunpack.c.h.b16 %v3117
        %v3267 = vunpack.c.l.b16 %v3118
        %v3268 = vunpack.c.h.b16 %v3118
        %v3269 = vunpack.c.l.b16 %v3119
        %v3270 = vunpack.c.h.b16 %v3119
        %v3271 = vunpack.c.l.b16 %v3120
        %v3272 = vunpack.c.h.b16 %v3120
        %v3273 = vunpack.c.l.b16 %v3121
        %v3274 = vunpack.c.h.b16 %v3121
        %v3275 = vunpack.c.l.b16 %v3122
        %v3276 = vunpack.c.h.b16 %v3122
        %v3277 = vunpack.c.l.b16 %v3123
        %v3278 = vunpack.c.h.b16 %v3123
        %v3279 = vunpack.c.l.b16 %v3124
        %v3280 = vunpack.c.h.b16 %v3124
        %v3281 = vunpack.c.l.b16 %v3125
        %v3282 = vunpack.c.h.b16 %v3125
        %v3283 = vunpack.c.l.b16 %v3126
        %v3284 = vunpack.c.h.b16 %v3126
        %v3285 = vunpack.c.l.b16 %v3127
        %v3286 = vunpack.c.h.b16 %v3127
        %v3287 = vunpack.c.l.b16 %v3128
        %v3288 = vunpack.c.h.b16 %v3128
        %v3289 = vunpack.c.l.b16 %v3129
        %v3290 = vunpack.c.h.b16 %v3129
        %v3291 = vunpack.c.l.b16 %v3130
        %v3292 = vunpack.c.h.b16 %v3130
        %v3293 = vunpack.c.l.b16 %v3131
        %v3294 = vunpack.c.h.b16 %v3131
        %v3295 = vunpack.c.l.b16 %v3132
        %v3296 = vunpack.c.h.b16 %v3132
        %v3297 = vunpack.c.l.b16 %v3133
        %v3298 = vunpack.c.h.b16 %v3133
        %v3299 = vunpack.c.l.b16 %v3134
        %v3300 = vunpack.c.h.b16 %v3134
        %v3301 = vunpack.c.l.b16 %v3135
        %v3302 = vunpack.c.h.b16 %v3135
        %v3303 = vunpack.c.l.b16 %v3136
        %v3304 = vunpack.c.h.b16 %v3136
        %v3305 = vunpack.c.l.b16 %v3137
        %v3306 = vunpack.c.h.b16 %v3137
        %v3307 = vunpack.c.l.b16 %v3138
        %v3308 = vunpack.c.h.b16 %v3138
        %v3309 = vunpack.c.l.b16 %v3139
        %v3310 = vunpack.c.h.b16 %v3139
        %v3311 = vunpack.c.l.b16 %v3140
        %v3312 = vunpack.c.h.b16 %v3140
        %v3313 = vunpack.c.l.b16 %v3141
        %v3314 = vunpack.c.h.b16 %v3141
        %v3315 = vunpack.c.l.b16 %v3142
        %v3316 = vunpack.c.h.b16 %v3142
        %v3317 = vunpack.c.l.b16 %v3143
        %v3318 = vunpack.c.h.b16 %v3143
        %v3319 = vunpack.c.l.b16 %v3144
        %v3320 = vunpack.c.h.b16 %v3144
        %v3321 = vunpack.c.l.b16 %v3145
        %v3322 = vunpack.c.h.b16 %v3145
        %v3323 = vunpack.c.l.b16 %v3146
        %v3324 = vunpack.c.h.b16 %v3146
        %v3325 = vunpack.c.l.b16 %v3147
        %v3326 = vunpack.c.h.b16 %v3147
        %v3327 = vunpack.c.l.b16 %v3148
        %v3328 = vunpack.c.h.b16 %v3148
        %v3329 = vunpack.c.l.b16 %v3149
        %v3330 = vunpack.c.h.b16 %v3149
        %v3331 = vunpack.c.l.b16 %v3150
        %v3332 = vunpack.c.h.b16 %v3150
        %v3333 = vunpack.c.l.b16 %v3151
        %v3334 = vunpack.c.h.b16 %v3151
        %v3335 = vunpack.c.l.b16 %v3152
        %v3336 = vunpack.c.h.b16 %v3152
        %v3337 = vunpack.c.l.b16 %v3153
        %v3338 = vunpack.c.h.b16 %v3153
        %v3339 = vunpack.c.l.b16 %v3154
        %v3340 = vunpack.c.h.b16 %v3154
        %v3341 = vunpack.c.l.b16 %v3155
        %v3342 = vunpack.c.h.b16 %v3155
        %v3343 = vunpack.c.l.b16 %v3156
        %v3344 = vunpack.c.h.b16 %v3156
        %v3345 = vunpack.c.l.b16 %v3157
        %v3346 = vunpack.c.h.b16 %v3157
        %v3347 = vunpack.c.l.b16 %v3158
        %v3348 = vunpack.c.h.b16 %v3158
        %v3349 = vunpack.c.l.b16 %v3159
        %v3350 = vunpack.c.h.b16 %v3159
        %v3351 = vunpack.c.l.b16 %v3160
        %v3352 = vunpack.c.h.b16 %v3160
        %v3353 = vunpack.c.l.b16 %v3161
        %v3354 = vunpack.c.h.b16 %v3161
        %v3355 = vunpack.c.l.b16 %v3162
        %v3356 = vunpack.c.h.b16 %v3162
        %v3357 = vunpack.c.l.b16 %v3163
        %v3358 = vunpack.c.h.b16 %v3163
        %v3359 = vunpack.c.l.b16 %v3164
        %v3360 = vunpack.c.h.b16 %v3164
        %v3361 = vunpack.c.l.b16 %v3165
        %v3362 = vunpack.c.h.b16 %v3165
        %v3363 = vunpack.c.l.b16 %v3166
        %v3364 = vunpack.c.h.b16 %v3166
        %v3365 = vunpack.c.l.b16 %v3167
        %v3366 = vunpack.c.h.b16 %v3167
        %v3367 = vunpack.c.l.b16 %v3168
        %v3368 = vunpack.c.h.b16 %v3168
        %v3369 = vunpack.c.l.b16 %v3169
        %v3370 = vunpack.c.h.b16 %v3169
        %v3371 = vunpack.c.l.b16 %v3170
        %v3372 = vunpack.c.h.b16 %v3170
        %v3373 = vunpack.c.l.b16 %v3171
        %v3374 = vunpack.c.h.b16 %v3171
        %v3375 = vunpack.c.l.b16 %v3172
        %v3376 = vunpack.c.h.b16 %v3172
        %v3377 = vunpack.c.l.b16 %v3173
        %v3378 = vunpack.c.h.b16 %v3173
        %v3379 = vunpack.c.l.b16 %v3174
        %v3380 = vunpack.c.h.b16 %v3174
        %v3381 = vunpack.c.l.b16 %v3175
        %v3382 = vunpack.c.h.b16 %v3175
        %v3383 = vunpack.c.l.b16 %v3176
        %v3384 = vunpack.c.h.b16 %v3176
        %v3385 = vunpack.c.l.b16 %v3177
        %v3386 = vunpack.c.h.b16 %v3177
        %v3387 = vunpack.c.l.b16 %v3178
        %v3388 = vunpack.c.h.b16 %v3178
        %v3389 = vunpack.c.l.b16 %v3179
        %v3390 = vunpack.c.h.b16 %v3179
        %v3391 = vunpack.c.l.b16 %v3180
        %v3392 = vunpack.c.h.b16 %v3180
        %v3393 = vpack.c.b16 %v3269, %v3265
        %v3394 = vpack.c.b16 %v3270, %v3266
        %v3395 = vpack.c.b16 %v3271, %v3267
        %v3396 = vpack.c.b16 %v3272, %v3268
        %v3397 = vpack.c.b16 %v3277, %v3273
        %v3398 = vpack.c.b16 %v3278, %v3274
        %v3399 = vpack.c.b16 %v3279, %v3275
        %v3400 = vpack.c.b16 %v3280, %v3276
        %v3401 = vpack.c.b16 %v3285, %v3281
        %v3402 = vpack.c.b16 %v3286, %v3282
        %v3403 = vpack.c.b16 %v3287, %v3283
        %v3404 = vpack.c.b16 %v3288, %v3284
        %v3405 = vpack.c.b16 %v3293, %v3289
        %v3406 = vpack.c.b16 %v3294, %v3290
        %v3407 = vpack.c.b16 %v3295, %v3291
        %v3408 = vpack.c.b16 %v3296, %v3292
        %v3409 = vpack.c.b16 %v3301, %v3297
        %v3410 = vpack.c.b16 %v3302, %v3298
        %v3411 = vpack.c.b16 %v3303, %v3299
        %v3412 = vpack.c.b16 %v3304, %v3300
        %v3413 = vpack.c.b16 %v3309, %v3305
        %v3414 = vpack.c.b16 %v3310, %v3306
        %v3415 = vpack.c.b16 %v3311, %v3307
        %v3416 = vpack.c.b16 %v3312, %v3308
        %v3417 = vpack.c.b16 %v3317, %v3313
        %v3418 = vpack.c.b16 %v3318, %v3314
        %v3419 = vpack.c.b16 %v3319, %v3315
        %v3420 = vpack.c.b16 %v3320, %v3316
        %v3421 = vpack.c.b16 %v3325, %v3321
        %v3422 = vpack.c.b16 %v3326, %v3322
        %v3423 = vpack.c.b16 %v3327, %v3323
        %v3424 = vpack.c.b16 %v3328, %v3324
        %v3425 = vpack.c.b16 %v3333, %v3329
        %v3426 = vpack.c.b16 %v3334, %v3330
        %v3427 = vpack.c.b16 %v3335, %v3331
        %v3428 = vpack.c.b16 %v3336, %v3332
        %v3429 = vpack.c.b16 %v3341, %v3337
        %v3430 = vpack.c.b16 %v3342, %v3338
        %v3431 = vpack.c.b16 %v3343, %v3339
        %v3432 = vpack.c.b16 %v3344, %v3340
        %v3433 = vpack.c.b16 %v3349, %v3345
        %v3434 = vpack.c.b16 %v3350, %v3346
        %v3435 = vpack.c.b16 %v3351, %v3347
        %v3436 = vpack.c.b16 %v3352, %v3348
        %v3437 = vpack.c.b16 %v3357, %v3353
        %v3438 = vpack.c.b16 %v3358, %v3354
        %v3439 = vpack.c.b16 %v3359, %v3355
        %v3440 = vpack.c.b16 %v3360, %v3356
        %v3441 = vpack.c.b16 %v3365, %v3361
        %v3442 = vpack.c.b16 %v3366, %v3362
        %v3443 = vpack.c.b16 %v3367, %v3363
        %v3444 = vpack.c.b16 %v3368, %v3364
        %v3445 = vpack.c.b16 %v3373, %v3369
        %v3446 = vpack.c.b16 %v3374, %v3370
        %v3447 = vpack.c.b16 %v3375, %v3371
        %v3448 = vpack.c.b16 %v3376, %v3372
        %v3449 = vpack.c.b16 %v3381, %v3377
        %v3450 = vpack.c.b16 %v3382, %v3378
        %v3451 = vpack.c.b16 %v3383, %v3379
        %v3452 = vpack.c.b16 %v3384, %v3380
        %v3453 = vpack.c.b16 %v3389, %v3385
        %v3454 = vpack.c.b16 %v3390, %v3386
        %v3455 = vpack.c.b16 %v3391, %v3387
        %v3456 = vpack.c.b16 %v3392, %v3388
        %3521 = vmatpush.bf16.msra.mxu0 %v3421
        %3522 = vmatpush.bf16.msra.mxu0 %v3417
        %3523 = vmatpush.bf16.msra.mxu0 %v3413
        %3524 = vmatpush.bf16.msra.mxu0 %v3409
        %3525 = vmatpush.bf16.msra.mxu0 %v3405
        %3526 = vmatpush.bf16.msra.mxu0 %v3401
        %3527 = vmatpush.bf16.msra.mxu0 %v3397
        %3528 = vmatpush.bf16.msra.mxu0 %v3393
        %3529 = vmatmul.bf16.gmra.mxu0 %v3197
        %v3530 = vpop.f32.mrf.mxu0
        %v3531 = vadd.f32 %v3183, %v3530
        %v3532 = vpop.f32.mrf.mxu0
        %v3533 = vadd.f32 %v3183, %v3532
        %3534 = vdwg.mxu0
        %3535 = vmatpush.bf16.msra.mxu0 %v3453
        %3536 = vmatpush.bf16.msra.mxu0 %v3449
        %3537 = vmatpush.bf16.msra.mxu0 %v3445
        %3538 = vmatpush.bf16.msra.mxu0 %v3441
        %3539 = vmatpush.bf16.msra.mxu0 %v3437
        %3540 = vmatpush.bf16.msra.mxu0 %v3433
        %3541 = vmatpush.bf16.msra.mxu0 %v3429
        %3542 = vmatpush.bf16.msra.mxu0 %v3425
        %3543 = vmatmul.bf16.gmra.mxu0 %v3198
        %v3544 = vpop.f32.mrf.mxu0
        %v3545 = vadd.f32 %v3531, %v3544
        %v3546 = vpop.f32.mrf.mxu0
        %v3547 = vadd.f32 %v3533, %v3546
        %3548 = vdwg.mxu0
        %3549 = vmatpush.bf16.msra.mxu0 %v3422
        %3550 = vmatpush.bf16.msra.mxu0 %v3418
        %3551 = vmatpush.bf16.msra.mxu0 %v3414
        %3552 = vmatpush.bf16.msra.mxu0 %v3410
        %3553 = vmatpush.bf16.msra.mxu0 %v3406
        %3554 = vmatpush.bf16.msra.mxu0 %v3402
        %3555 = vmatpush.bf16.msra.mxu0 %v3398
        %3556 = vmatpush.bf16.msra.mxu0 %v3394
        %3557 = vmatmul.bf16.gmra.mxu0 %v3197
        %v3558 = vpop.f32.mrf.mxu0
        %v3559 = vadd.f32 %v3184, %v3558
        %v3560 = vpop.f32.mrf.mxu0
        %v3561 = vadd.f32 %v3184, %v3560
        %3562 = vdwg.mxu0
        %3563 = vmatpush.bf16.msra.mxu0 %v3454
        %3564 = vmatpush.bf16.msra.mxu0 %v3450
        %3565 = vmatpush.bf16.msra.mxu0 %v3446
        %3566 = vmatpush.bf16.msra.mxu0 %v3442
        %3567 = vmatpush.bf16.msra.mxu0 %v3438
        %3568 = vmatpush.bf16.msra.mxu0 %v3434
        %3569 = vmatpush.bf16.msra.mxu0 %v3430
        %3570 = vmatpush.bf16.msra.mxu0 %v3426
        %3571 = vmatmul.bf16.gmra.mxu0 %v3198
        %v3572 = vpop.f32.mrf.mxu0
        %v3573 = vadd.f32 %v3559, %v3572
        %v3574 = vpop.f32.mrf.mxu0
        %v3575 = vadd.f32 %v3561, %v3574
        %3576 = vdwg.mxu0
        %3577 = vmatpush.bf16.msra.mxu0 %v3423
        %3578 = vmatpush.bf16.msra.mxu0 %v3419
        %3579 = vmatpush.bf16.msra.mxu0 %v3415
        %3580 = vmatpush.bf16.msra.mxu0 %v3411
        %3581 = vmatpush.bf16.msra.mxu0 %v3407
        %3582 = vmatpush.bf16.msra.mxu0 %v3403
        %3583 = vmatpush.bf16.msra.mxu0 %v3399
        %3584 = vmatpush.bf16.msra.mxu0 %v3395
        %3585 = vmatmul.bf16.gmra.mxu0 %v3197
        %v3586 = vpop.f32.mrf.mxu0
        %v3587 = vadd.f32 %v3185, %v3586
        %v3588 = vpop.f32.mrf.mxu0
        %v3589 = vadd.f32 %v3185, %v3588
        %3590 = vdwg.mxu0
        %3591 = vmatpush.bf16.msra.mxu0 %v3455
        %3592 = vmatpush.bf16.msra.mxu0 %v3451
        %3593 = vmatpush.bf16.msra.mxu0 %v3447
        %3594 = vmatpush.bf16.msra.mxu0 %v3443
        %3595 = vmatpush.bf16.msra.mxu0 %v3439
        %3596 = vmatpush.bf16.msra.mxu0 %v3435
        %3597 = vmatpush.bf16.msra.mxu0 %v3431
        %3598 = vmatpush.bf16.msra.mxu0 %v3427
        %3599 = vmatmul.bf16.gmra.mxu0 %v3198
        %v3600 = vpop.f32.mrf.mxu0
        %v3601 = vadd.f32 %v3587, %v3600
        %v3602 = vpop.f32.mrf.mxu0
        %v3603 = vadd.f32 %v3589, %v3602
        %3604 = vdwg.mxu0
        %3605 = vmatpush.bf16.msra.mxu0 %v3424
        %3606 = vmatpush.bf16.msra.mxu0 %v3420
        %3607 = vmatpush.bf16.msra.mxu0 %v3416
        %3608 = vmatpush.bf16.msra.mxu0 %v3412
        %3609 = vmatpush.bf16.msra.mxu0 %v3408
        %3610 = vmatpush.bf16.msra.mxu0 %v3404
        %3611 = vmatpush.bf16.msra.mxu0 %v3400
        %3612 = vmatpush.bf16.msra.mxu0 %v3396
        %3613 = vmatmul.bf16.gmra.mxu0 %v3197
        %v3614 = vpop.f32.mrf.mxu0
        %v3615 = vadd.f32 %v3186, %v3614
        %v3616 = vpop.f32.mrf.mxu0
        %v3617 = vadd.f32 %v3186, %v3616
        %3618 = vdwg.mxu0
        %3619 = vmatpush.bf16.msra.mxu0 %v3456
        %3620 = vmatpush.bf16.msra.mxu0 %v3452
        %3621 = vmatpush.bf16.msra.mxu0 %v3448
        %3622 = vmatpush.bf16.msra.mxu0 %v3444
        %3623 = vmatpush.bf16.msra.mxu0 %v3440
        %3624 = vmatpush.bf16.msra.mxu0 %v3436
        %3625 = vmatpush.bf16.msra.mxu0 %v3432
        %3626 = vmatpush.bf16.msra.mxu0 %v3428
        %3627 = vmatmul.bf16.gmra.mxu0 %v3198
        %v3628 = vpop.f32.mrf.mxu0
        %v3629 = vadd.f32 %v3615, %v3628
        %v3630 = vpop.f32.mrf.mxu0
        %v3631 = vadd.f32 %v3617, %v3630
        %3632 = vdwg.mxu0
        %v3633 = vld [vmem:[%s1018] sm:$0x1]
        %v3634 = vrot.slane %v3113, 4
        %v3635 = vsel %vm2075, 0.0, %v3634
        %v3637 = vunpack.c.l.s4 1983009808
        %v3638 = vunpack.c.0.s8 %v3637
        %v3639 = vperm.slane %v3113, %v3638
        %v3641 = vunpack.c.l.s4 1983009808
        %v3642 = vunpack.c.0.s8 %v3641
        %v3643 = vperm.slane %v3635, %v3642
        %v3644 = vrot.slane %v3114, 4
        %v3645 = vsel %vm2075, 0.0, %v3644
        %v3647 = vunpack.c.l.s4 1983009808
        %v3648 = vunpack.c.0.s8 %v3647
        %v3649 = vperm.slane %v3114, %v3648
        %v3651 = vunpack.c.l.s4 1983009808
        %v3652 = vunpack.c.0.s8 %v3651
        %v3653 = vperm.slane %v3645, %v3652
        %v3654 = vrot.slane %v3649, 4
        %v3655 = vsel %vm2075, %v3654, %v3639
        %v3656 = vrot.slane %v3639, 4
        %v3657 = vsel %vm2075, %v3649, %v3656
        %v3659 = vunpack.c.l.s4 1934713408
        %v3660 = vunpack.c.0.s8 %v3659
        %v3661 = vperm.slane %v3655, %v3660
        %v3663 = vunpack.c.l.s4 1934713408
        %v3664 = vunpack.c.0.s8 %v3663
        %v3665 = vperm.slane %v3657, %v3664
        %v3666 = vrot.slane %v3653, 4
        %v3667 = vsel %vm2075, %v3666, %v3643
        %v3668 = vrot.slane %v3643, 4
        %v3669 = vsel %vm2075, %v3653, %v3668
        %v3671 = vunpack.c.l.s4 1934713408
        %v3672 = vunpack.c.0.s8 %v3671
        %v3673 = vperm.slane %v3667, %v3672
        %v3675 = vunpack.c.l.s4 1934713408
        %v3676 = vunpack.c.0.s8 %v3675
        %v3677 = vperm.slane %v3669, %v3676
        %v3678 = vrot.slane %v3661, 4
        %v3679 = vsel %vm2075, 0.0, %v3678
        %v3680 = vrot.slane %v3665, 4
        %v3681 = vsel %vm2075, 0.0, %v3680
        %v3682 = vrot.slane %v3673, 4
        %v3683 = vsel %vm2075, 0.0, %v3682
        %v3684 = vrot.slane %v3677, 4
        %v3685 = vsel %vm2075, 0.0, %v3684
        %v3686 = vsel %vm2075, %v3680, %v3661
        %v3688 = vunpack.c.l.s4 1983009808
        %v3689 = vunpack.c.0.s8 %v3688
        %v3690 = vperm.slane %v3686, %v3689
        %v3691 = vrot.slane %v3681, 4
        %v3692 = vsel %vm2075, %v3691, %v3679
        %v3694 = vunpack.c.l.s4 1983009808
        %v3695 = vunpack.c.0.s8 %v3694
        %v3696 = vperm.slane %v3692, %v3695
        %v3697 = vsel %vm2075, %v3684, %v3673
        %v3699 = vunpack.c.l.s4 1983009808
        %v3700 = vunpack.c.0.s8 %v3699
        %v3701 = vperm.slane %v3697, %v3700
        %v3702 = vrot.slane %v3685, 4
        %v3703 = vsel %vm2075, %v3702, %v3683
        %v3705 = vunpack.c.l.s4 1983009808
        %v3706 = vunpack.c.0.s8 %v3705
        %v3707 = vperm.slane %v3703, %v3706
        %v3708 = vrot.slane %v3696, 4
        %v3709 = vsel %vm2075, %v3708, %v3690
        %v3711 = vunpack.c.l.s4 1934713408
        %v3712 = vunpack.c.0.s8 %v3711
        %v3713 = vperm.slane %v3709, %v3712
        %v3714 = vrot.slane %v3707, 4
        %v3715 = vsel %vm2075, %v3714, %v3701
        %v3717 = vunpack.c.l.s4 1934713408
        %v3718 = vunpack.c.0.s8 %v3717
        %v3719 = vperm.slane %v3715, %v3718
        %v3720 = vrot.slane %v3719, 4
        %v3721 = vsel %vm2075, %v3720, %v3713
        %v3722 = vrot.slane %v3713, 4
        %v3723 = vsel %vm2075, %v3719, %v3722
        %v3724 = vpack.c.bf16 %v3721, %v3721
        %v3725 = vpack.c.bf16 %v3723, %v3723
        %v3726 = vrot.slane %v3545, 4
        %v3727 = vsel %vm2075, 0.0, %v3726
        %v3729 = vunpack.c.l.s4 1983009808
        %v3730 = vunpack.c.0.s8 %v3729
        %v3731 = vperm.slane %v3545, %v3730
        %v3733 = vunpack.c.l.s4 1983009808
        %v3734 = vunpack.c.0.s8 %v3733
        %v3735 = vperm.slane %v3727, %v3734
        %v3736 = vrot.slane %v3573, 4
        %v3737 = vsel %vm2075, 0.0, %v3736
        %v3739 = vunpack.c.l.s4 1983009808
        %v3740 = vunpack.c.0.s8 %v3739
        %v3741 = vperm.slane %v3573, %v3740
        %v3743 = vunpack.c.l.s4 1983009808
        %v3744 = vunpack.c.0.s8 %v3743
        %v3745 = vperm.slane %v3737, %v3744
        %v3746 = vrot.slane %v3741, 4
        %v3747 = vsel %vm2075, %v3746, %v3731
        %v3748 = vrot.slane %v3731, 4
        %v3749 = vsel %vm2075, %v3741, %v3748
        %v3751 = vunpack.c.l.s4 1934713408
        %v3752 = vunpack.c.0.s8 %v3751
        %v3753 = vperm.slane %v3747, %v3752
        %v3755 = vunpack.c.l.s4 1934713408
        %v3756 = vunpack.c.0.s8 %v3755
        %v3757 = vperm.slane %v3749, %v3756
        %v3758 = vrot.slane %v3745, 4
        %v3759 = vsel %vm2075, %v3758, %v3735
        %v3760 = vrot.slane %v3735, 4
        %v3761 = vsel %vm2075, %v3745, %v3760
        %v3763 = vunpack.c.l.s4 1934713408
        %v3764 = vunpack.c.0.s8 %v3763
        %v3765 = vperm.slane %v3759, %v3764
        %v3767 = vunpack.c.l.s4 1934713408
        %v3768 = vunpack.c.0.s8 %v3767
        %v3769 = vperm.slane %v3761, %v3768
        %v3770 = vrot.slane %v3753, 4
        %v3771 = vsel %vm2075, 0.0, %v3770
        %v3772 = vrot.slane %v3757, 4
        %v3773 = vsel %vm2075, 0.0, %v3772
        %v3774 = vrot.slane %v3765, 4
        %v3775 = vsel %vm2075, 0.0, %v3774
        %v3776 = vrot.slane %v3769, 4
        %v3777 = vsel %vm2075, 0.0, %v3776
        %v3778 = vrot.slane %v3547, 4
        %v3779 = vsel %vm2075, 0.0, %v3778
        %v3781 = vunpack.c.l.s4 1983009808
        %v3782 = vunpack.c.0.s8 %v3781
        %v3783 = vperm.slane %v3547, %v3782
        %v3785 = vunpack.c.l.s4 1983009808
        %v3786 = vunpack.c.0.s8 %v3785
        %v3787 = vperm.slane %v3779, %v3786
        %v3788 = vrot.slane %v3575, 4
        %v3789 = vsel %vm2075, 0.0, %v3788
        %v3791 = vunpack.c.l.s4 1983009808
        %v3792 = vunpack.c.0.s8 %v3791
        %v3793 = vperm.slane %v3575, %v3792
        %v3795 = vunpack.c.l.s4 1983009808
        %v3796 = vunpack.c.0.s8 %v3795
        %v3797 = vperm.slane %v3789, %v3796
        %v3798 = vrot.slane %v3793, 4
        %v3799 = vsel %vm2075, %v3798, %v3783
        %v3800 = vrot.slane %v3783, 4
        %v3801 = vsel %vm2075, %v3793, %v3800
        %v3803 = vunpack.c.l.s4 1934713408
        %v3804 = vunpack.c.0.s8 %v3803
        %v3805 = vperm.slane %v3799, %v3804
        %v3807 = vunpack.c.l.s4 1934713408
        %v3808 = vunpack.c.0.s8 %v3807
        %v3809 = vperm.slane %v3801, %v3808
        %v3810 = vrot.slane %v3797, 4
        %v3811 = vsel %vm2075, %v3810, %v3787
        %v3812 = vrot.slane %v3787, 4
        %v3813 = vsel %vm2075, %v3797, %v3812
        %v3815 = vunpack.c.l.s4 1934713408
        %v3816 = vunpack.c.0.s8 %v3815
        %v3817 = vperm.slane %v3811, %v3816
        %v3819 = vunpack.c.l.s4 1934713408
        %v3820 = vunpack.c.0.s8 %v3819
        %v3821 = vperm.slane %v3813, %v3820
        %v3822 = vrot.slane %v3805, 4
        %v3823 = vsel %vm2075, 0.0, %v3822
        %v3824 = vrot.slane %v3809, 4
        %v3825 = vsel %vm2075, 0.0, %v3824
        %v3826 = vrot.slane %v3817, 4
        %v3827 = vsel %vm2075, 0.0, %v3826
        %v3828 = vrot.slane %v3821, 4
        %v3829 = vsel %vm2075, 0.0, %v3828
        %v3830 = vsel %vm2075, %v3772, %v3753
        %v3832 = vunpack.c.l.s4 1983009808
        %v3833 = vunpack.c.0.s8 %v3832
        %v3834 = vperm.slane %v3830, %v3833
        %v3835 = vrot.slane %v3773, 4
        %v3836 = vsel %vm2075, %v3835, %v3771
        %v3838 = vunpack.c.l.s4 1983009808
        %v3839 = vunpack.c.0.s8 %v3838
        %v3840 = vperm.slane %v3836, %v3839
        %v3841 = vsel %vm2075, %v3776, %v3765
        %v3843 = vunpack.c.l.s4 1983009808
        %v3844 = vunpack.c.0.s8 %v3843
        %v3845 = vperm.slane %v3841, %v3844
        %v3846 = vrot.slane %v3777, 4
        %v3847 = vsel %vm2075, %v3846, %v3775
        %v3849 = vunpack.c.l.s4 1983009808
        %v3850 = vunpack.c.0.s8 %v3849
        %v3851 = vperm.slane %v3847, %v3850
        %v3852 = vrot.slane %v3840, 4
        %v3853 = vsel %vm2075, %v3852, %v3834
        %v3855 = vunpack.c.l.s4 1934713408
        %v3856 = vunpack.c.0.s8 %v3855
        %v3857 = vperm.slane %v3853, %v3856
        %v3858 = vrot.slane %v3851, 4
        %v3859 = vsel %vm2075, %v3858, %v3845
        %v3861 = vunpack.c.l.s4 1934713408
        %v3862 = vunpack.c.0.s8 %v3861
        %v3863 = vperm.slane %v3859, %v3862
        %v3864 = vrot.slane %v3863, 4
        %v3865 = vsel %vm2075, %v3864, %v3857
        %v3866 = vrot.slane %v3857, 4
        %v3867 = vsel %vm2075, %v3863, %v3866
        %v3868 = vsel %vm2075, %v3824, %v3805
        %v3870 = vunpack.c.l.s4 1983009808
        %v3871 = vunpack.c.0.s8 %v3870
        %v3872 = vperm.slane %v3868, %v3871
        %v3873 = vrot.slane %v3825, 4
        %v3874 = vsel %vm2075, %v3873, %v3823
        %v3876 = vunpack.c.l.s4 1983009808
        %v3877 = vunpack.c.0.s8 %v3876
        %v3878 = vperm.slane %v3874, %v3877
        %v3879 = vsel %vm2075, %v3828, %v3817
        %v3881 = vunpack.c.l.s4 1983009808
        %v3882 = vunpack.c.0.s8 %v3881
        %v3883 = vperm.slane %v3879, %v3882
        %v3884 = vrot.slane %v3829, 4
        %v3885 = vsel %vm2075, %v3884, %v3827
        %v3887 = vunpack.c.l.s4 1983009808
        %v3888 = vunpack.c.0.s8 %v3887
        %v3889 = vperm.slane %v3885, %v3888
        %v3890 = vrot.slane %v3878, 4
        %v3891 = vsel %vm2075, %v3890, %v3872
        %v3893 = vunpack.c.l.s4 1934713408
        %v3894 = vunpack.c.0.s8 %v3893
        %v3895 = vperm.slane %v3891, %v3894
        %v3896 = vrot.slane %v3889, 4
        %v3897 = vsel %vm2075, %v3896, %v3883
        %v3899 = vunpack.c.l.s4 1934713408
        %v3900 = vunpack.c.0.s8 %v3899
        %v3901 = vperm.slane %v3897, %v3900
        %v3902 = vrot.slane %v3901, 4
        %v3903 = vsel %vm2075, %v3902, %v3895
        %v3904 = vrot.slane %v3895, 4
        %v3905 = vsel %vm2075, %v3901, %v3904
        %v3906 = vpack.c.bf16 %v3865, %v3865
        %v3907 = vpack.c.bf16 %v3903, %v3903
        %v3908 = vpack.c.bf16 %v3867, %v3867
        %v3909 = vpack.c.bf16 %v3905, %v3905
        %v3910 = vrot.slane %v3601, 4
        %v3911 = vsel %vm2075, 0.0, %v3910
        %v3913 = vunpack.c.l.s4 1983009808
        %v3914 = vunpack.c.0.s8 %v3913
        %v3915 = vperm.slane %v3601, %v3914
        %v3917 = vunpack.c.l.s4 1983009808
        %v3918 = vunpack.c.0.s8 %v3917
        %v3919 = vperm.slane %v3911, %v3918
        %v3920 = vrot.slane %v3629, 4
        %v3921 = vsel %vm2075, 0.0, %v3920
        %v3923 = vunpack.c.l.s4 1983009808
        %v3924 = vunpack.c.0.s8 %v3923
        %v3925 = vperm.slane %v3629, %v3924
        %v3927 = vunpack.c.l.s4 1983009808
        %v3928 = vunpack.c.0.s8 %v3927
        %v3929 = vperm.slane %v3921, %v3928
        %v3930 = vrot.slane %v3925, 4
        %v3931 = vsel %vm2075, %v3930, %v3915
        %v3932 = vrot.slane %v3915, 4
        %v3933 = vsel %vm2075, %v3925, %v3932
        %v3935 = vunpack.c.l.s4 1934713408
        %v3936 = vunpack.c.0.s8 %v3935
        %v3937 = vperm.slane %v3931, %v3936
        %v3939 = vunpack.c.l.s4 1934713408
        %v3940 = vunpack.c.0.s8 %v3939
        %v3941 = vperm.slane %v3933, %v3940
        %v3942 = vrot.slane %v3929, 4
        %v3943 = vsel %vm2075, %v3942, %v3919
        %v3944 = vrot.slane %v3919, 4
        %v3945 = vsel %vm2075, %v3929, %v3944
        %v3947 = vunpack.c.l.s4 1934713408
        %v3948 = vunpack.c.0.s8 %v3947
        %v3949 = vperm.slane %v3943, %v3948
        %v3951 = vunpack.c.l.s4 1934713408
        %v3952 = vunpack.c.0.s8 %v3951
        %v3953 = vperm.slane %v3945, %v3952
        %v3954 = vrot.slane %v3937, 4
        %v3955 = vsel %vm2075, 0.0, %v3954
        %v3956 = vrot.slane %v3941, 4
        %v3957 = vsel %vm2075, 0.0, %v3956
        %v3958 = vrot.slane %v3949, 4
        %v3959 = vsel %vm2075, 0.0, %v3958
        %v3960 = vrot.slane %v3953, 4
        %v3961 = vsel %vm2075, 0.0, %v3960
        %v3962 = vrot.slane %v3603, 4
        %v3963 = vsel %vm2075, 0.0, %v3962
        %v3965 = vunpack.c.l.s4 1983009808
        %v3966 = vunpack.c.0.s8 %v3965
        %v3967 = vperm.slane %v3603, %v3966
        %v3969 = vunpack.c.l.s4 1983009808
        %v3970 = vunpack.c.0.s8 %v3969
        %v3971 = vperm.slane %v3963, %v3970
        %v3972 = vrot.slane %v3631, 4
        %v3973 = vsel %vm2075, 0.0, %v3972
        %v3975 = vunpack.c.l.s4 1983009808
        %v3976 = vunpack.c.0.s8 %v3975
        %v3977 = vperm.slane %v3631, %v3976
        %v3979 = vunpack.c.l.s4 1983009808
        %v3980 = vunpack.c.0.s8 %v3979
        %v3981 = vperm.slane %v3973, %v3980
        %v3982 = vrot.slane %v3977, 4
        %v3983 = vsel %vm2075, %v3982, %v3967
        %v3984 = vrot.slane %v3967, 4
        %v3985 = vsel %vm2075, %v3977, %v3984
        %v3987 = vunpack.c.l.s4 1934713408
        %v3988 = vunpack.c.0.s8 %v3987
        %v3989 = vperm.slane %v3983, %v3988
        %v3991 = vunpack.c.l.s4 1934713408
        %v3992 = vunpack.c.0.s8 %v3991
        %v3993 = vperm.slane %v3985, %v3992
        %v3994 = vrot.slane %v3981, 4
        %v3995 = vsel %vm2075, %v3994, %v3971
        %v3996 = vrot.slane %v3971, 4
        %v3997 = vsel %vm2075, %v3981, %v3996
        %v3999 = vunpack.c.l.s4 1934713408
        %v4000 = vunpack.c.0.s8 %v3999
        %v4001 = vperm.slane %v3995, %v4000
        %v4003 = vunpack.c.l.s4 1934713408
        %v4004 = vunpack.c.0.s8 %v4003
        %v4005 = vperm.slane %v3997, %v4004
        %v4006 = vrot.slane %v3989, 4
        %v4007 = vsel %vm2075, 0.0, %v4006
        %v4008 = vrot.slane %v3993, 4
        %v4009 = vsel %vm2075, 0.0, %v4008
        %v4010 = vrot.slane %v4001, 4
        %v4011 = vsel %vm2075, 0.0, %v4010
        %v4012 = vrot.slane %v4005, 4
        %v4013 = vsel %vm2075, 0.0, %v4012
        %v4014 = vsel %vm2075, %v3956, %v3937
        %v4016 = vunpack.c.l.s4 1983009808
        %v4017 = vunpack.c.0.s8 %v4016
        %v4018 = vperm.slane %v4014, %v4017
        %v4019 = vrot.slane %v3957, 4
        %v4020 = vsel %vm2075, %v4019, %v3955
        %v4022 = vunpack.c.l.s4 1983009808
        %v4023 = vunpack.c.0.s8 %v4022
        %v4024 = vperm.slane %v4020, %v4023
        %v4025 = vsel %vm2075, %v3960, %v3949
        %v4027 = vunpack.c.l.s4 1983009808
        %v4028 = vunpack.c.0.s8 %v4027
        %v4029 = vperm.slane %v4025, %v4028
        %v4030 = vrot.slane %v3961, 4
        %v4031 = vsel %vm2075, %v4030, %v3959
        %v4033 = vunpack.c.l.s4 1983009808
        %v4034 = vunpack.c.0.s8 %v4033
        %v4035 = vperm.slane %v4031, %v4034
        %v4036 = vrot.slane %v4024, 4
        %v4037 = vsel %vm2075, %v4036, %v4018
        %v4039 = vunpack.c.l.s4 1934713408
        %v4040 = vunpack.c.0.s8 %v4039
        %v4041 = vperm.slane %v4037, %v4040
        %v4042 = vrot.slane %v4035, 4
        %v4043 = vsel %vm2075, %v4042, %v4029
        %v4045 = vunpack.c.l.s4 1934713408
        %v4046 = vunpack.c.0.s8 %v4045
        %v4047 = vperm.slane %v4043, %v4046
        %v4048 = vrot.slane %v4047, 4
        %v4049 = vsel %vm2075, %v4048, %v4041
        %v4050 = vrot.slane %v4041, 4
        %v4051 = vsel %vm2075, %v4047, %v4050
        %v4052 = vsel %vm2075, %v4008, %v3989
        %v4054 = vunpack.c.l.s4 1983009808
        %v4055 = vunpack.c.0.s8 %v4054
        %v4056 = vperm.slane %v4052, %v4055
        %v4057 = vrot.slane %v4009, 4
        %v4058 = vsel %vm2075, %v4057, %v4007
        %v4060 = vunpack.c.l.s4 1983009808
        %v4061 = vunpack.c.0.s8 %v4060
        %v4062 = vperm.slane %v4058, %v4061
        %v4063 = vsel %vm2075, %v4012, %v4001
        %v4065 = vunpack.c.l.s4 1983009808
        %v4066 = vunpack.c.0.s8 %v4065
        %v4067 = vperm.slane %v4063, %v4066
        %v4068 = vrot.slane %v4013, 4
        %v4069 = vsel %vm2075, %v4068, %v4011
        %v4071 = vunpack.c.l.s4 1983009808
        %v4072 = vunpack.c.0.s8 %v4071
        %v4073 = vperm.slane %v4069, %v4072
        %v4074 = vrot.slane %v4062, 4
        %v4075 = vsel %vm2075, %v4074, %v4056
        %v4077 = vunpack.c.l.s4 1934713408
        %v4078 = vunpack.c.0.s8 %v4077
        %v4079 = vperm.slane %v4075, %v4078
        %v4080 = vrot.slane %v4073, 4
        %v4081 = vsel %vm2075, %v4080, %v4067
        %v4083 = vunpack.c.l.s4 1934713408
        %v4084 = vunpack.c.0.s8 %v4083
        %v4085 = vperm.slane %v4081, %v4084
        %v4086 = vrot.slane %v4085, 4
        %v4087 = vsel %vm2075, %v4086, %v4079
        %v4088 = vrot.slane %v4079, 4
        %v4089 = vsel %vm2075, %v4085, %v4088
        %v4090 = vpack.c.bf16 %v4049, %v4049
        %v4091 = vpack.c.bf16 %v4087, %v4087
        %v4092 = vpack.c.bf16 %v4051, %v4051
        %v4093 = vpack.c.bf16 %v4089, %v4089
        %v4095 = vperm.slane %v3633, 0
        %v4099 = vunpack.c.l.b16 %v3906
        %v4100 = vunpack.c.l.b16 %v3907
        %v4101 = vpack.c.b16 %v4100, %v4099
        %4103 = vmatpush.bf16.xpose.msra.mxu0 0
        %4104 = vmatpush.bf16.xpose.msra.mxu0 0
        %4105 = vmatpush.bf16.xpose.msra.mxu0 0
        %4106 = vmatpush.bf16.xpose.msra.mxu0 0
        %4107 = vmatpush.bf16.xpose.msra.mxu0 0
        %4108 = vmatpush.bf16.xpose.msra.mxu0 0
        %4109 = vmatpush.bf16.xpose.msra.mxu0 0
        %4110 = vmatpush.bf16.xpose.msra.mxu0 %v4101
        %4111 = vmatmul.bf16.gmra.mxu0 %v3724
        %v4112 = vpop.f32.mrf.mxu0
        %v4113 = vadd.f32 %v4095, %v4112
        %v4114 = vpop.f32.mrf.mxu0
        %4115 = vdwg.mxu0
        %v4118 = vunpack.c.l.b16 %v3908
        %v4119 = vunpack.c.l.b16 %v3909
        %v4120 = vpack.c.b16 %v4119, %v4118
        %4122 = vmatpush.bf16.xpose.msra.mxu0 0
        %4123 = vmatpush.bf16.xpose.msra.mxu0 0
        %4124 = vmatpush.bf16.xpose.msra.mxu0 0
        %4125 = vmatpush.bf16.xpose.msra.mxu0 0
        %4126 = vmatpush.bf16.xpose.msra.mxu0 0
        %4127 = vmatpush.bf16.xpose.msra.mxu0 0
        %4128 = vmatpush.bf16.xpose.msra.mxu0 0
        %4129 = vmatpush.bf16.xpose.msra.mxu0 %v4120
        %4130 = vmatmul.bf16.gmra.mxu0 %v3725
        %v4131 = vpop.f32.mrf.mxu0
        %v4132 = vadd.f32 %v4095, %v4131
        %v4133 = vpop.f32.mrf.mxu0
        %4134 = vdwg.mxu0
        %vm4135 = vcmask 130048
        %v4136 = vsel %vm4135, %v4113, -inf
        %4137 = vmax.xlane.f32.xlu0 %v4136
        %v4138 = vpop.xlane.xlu0 %4137
        %v4139 = vsel %vm4135, %v4132, -inf
        %4140 = vmax.xlane.f32.xlu0 %v4139
        %v4141 = vpop.xlane.xlu0 %4140
        %v4142 = vsub.f32 %v4113, %v4138
        %v4143 = vsub.f32 %v4132, %v4141
        %v4144 = vmul.f32 %v4142, 1.442695
        %v4145 = vpow.pop %v4144
        %v4146 = vmul.f32 %v4143, 1.442695
        %v4147 = vpow.pop %v4146
        %v4148 = vsel %vm4135, %v4145, 0.0
        %4149 = vadd.xlane.f32.xlu0 %v4148
        %v4150 = vpop.xlane.xlu0 %4149
        %v4151 = vsel %vm4135, %v4147, 0.0
        %4152 = vadd.xlane.f32.xlu0 %v4151
        %v4153 = vpop.xlane.xlu0 %4152
        %v4154 = vrcp.pop %v4150
        %v4155 = vmul.f32 %v4150, %v4154
        %v4156 = vsub.f32 1.0, %v4155
        %v4157 = vmul.f32 %v4154, %v4156
        %v4158 = vadd.f32 %v4154, %v4157
        %vm4159 = vweird.f32 %v4150
        %vm4160 = vweird.f32 %v4154
        %vm4161 = vmor %vm4159, %vm4160
        %v4162 = vsel %vm4161, %v4154, %v4158
        %v4163 = vand.u32 2147483647, %v4150
        %vm4164 = vcmp.eq.f32.partialorder %v4163, 8.507059e+37
        %v4165 = vand.u32 %v4150, 2147483648
        %v4166 = vor.u32 1.1754944e-38, %v4165
        %v4167 = vsel %vm4164, %v4166, %v4162
        %v4168 = vmul.f32 %v4145, %v4167
        %v4169 = vrcp.pop %v4153
        %v4170 = vmul.f32 %v4153, %v4169
        %v4171 = vsub.f32 1.0, %v4170
        %v4172 = vmul.f32 %v4169, %v4171
        %v4173 = vadd.f32 %v4169, %v4172
        %vm4174 = vweird.f32 %v4153
        %vm4175 = vweird.f32 %v4169
        %vm4176 = vmor %vm4174, %vm4175
        %v4177 = vsel %vm4176, %v4169, %v4173
        %v4178 = vand.u32 2147483647, %v4153
        %vm4179 = vcmp.eq.f32.partialorder %v4178, 8.507059e+37
        %v4180 = vand.u32 %v4153, 2147483648
        %v4181 = vor.u32 1.1754944e-38, %v4180
        %v4182 = vsel %vm4179, %v4181, %v4177
        %v4183 = vmul.f32 %v4147, %v4182
        %v4184 = vpack.c.bf16 %v4168, %v4168
        %v4185 = vpack.c.bf16 %v4183, %v4183
        %v4188 = vunpack.c.l.b16 %v4090
        %v4189 = vunpack.c.l.b16 %v4091
        %v4190 = vpack.c.b16 %v4189, %v4188
        %v4193 = vsel %vm4135, %v4184, 0
        %4195 = vmatpush.bf16.msra.mxu0 0
        %4196 = vmatpush.bf16.msra.mxu0 0
        %4197 = vmatpush.bf16.msra.mxu0 0
        %4198 = vmatpush.bf16.msra.mxu0 0
        %4199 = vmatpush.bf16.msra.mxu0 0
        %4200 = vmatpush.bf16.msra.mxu0 0
        %4201 = vmatpush.bf16.msra.mxu0 0
        %4202 = vmatpush.bf16.msra.mxu0 %v4190
        %4203 = vmatmul.bf16.gmra.mxu0 %v4193
        %v4204 = vpop.f32.mrf.mxu0
        %v4205 = vadd.f32 0.0, %v4204
        %v4206 = vpop.f32.mrf.mxu0
        %4207 = vdwg.mxu0
        %v4210 = vunpack.c.l.b16 %v4092
        %v4211 = vunpack.c.l.b16 %v4093
        %v4212 = vpack.c.b16 %v4211, %v4210
        %v4215 = vsel %vm4135, %v4185, 0
        %4217 = vmatpush.bf16.msra.mxu0 0
        %4218 = vmatpush.bf16.msra.mxu0 0
        %4219 = vmatpush.bf16.msra.mxu0 0
        %4220 = vmatpush.bf16.msra.mxu0 0
        %4221 = vmatpush.bf16.msra.mxu0 0
        %4222 = vmatpush.bf16.msra.mxu0 0
        %4223 = vmatpush.bf16.msra.mxu0 0
        %4224 = vmatpush.bf16.msra.mxu0 %v4212
        %4225 = vmatmul.bf16.gmra.mxu0 %v4215
        %v4226 = vpop.f32.mrf.mxu0
        %v4227 = vadd.f32 0.0, %v4226
        %v4228 = vpop.f32.mrf.mxu0
        %4229 = vdwg.mxu0
        %v4230 = vrot.slane %v4205, 4
        %v4231 = vsel %vm2075, 0.0, %v4230
        %v4233 = vunpack.c.l.s4 1983009808
        %v4234 = vunpack.c.0.s8 %v4233
        %v4235 = vperm.slane %v4205, %v4234
        %v4237 = vunpack.c.l.s4 1983009808
        %v4238 = vunpack.c.0.s8 %v4237
        %v4239 = vperm.slane %v4231, %v4238
        %v4240 = vrot.slane %v4227, 4
        %v4241 = vsel %vm2075, 0.0, %v4240
        %v4243 = vunpack.c.l.s4 1983009808
        %v4244 = vunpack.c.0.s8 %v4243
        %v4245 = vperm.slane %v4227, %v4244
        %v4247 = vunpack.c.l.s4 1983009808
        %v4248 = vunpack.c.0.s8 %v4247
        %v4249 = vperm.slane %v4241, %v4248
        %v4250 = vrot.slane %v4245, 4
        %v4251 = vsel %vm2075, %v4250, %v4235
        %v4252 = vrot.slane %v4235, 4
        %v4253 = vsel %vm2075, %v4245, %v4252
        %v4255 = vunpack.c.l.s4 1934713408
        %v4256 = vunpack.c.0.s8 %v4255
        %v4257 = vperm.slane %v4251, %v4256
        %v4259 = vunpack.c.l.s4 1934713408
        %v4260 = vunpack.c.0.s8 %v4259
        %v4261 = vperm.slane %v4253, %v4260
        %v4262 = vrot.slane %v4249, 4
        %v4263 = vsel %vm2075, %v4262, %v4239
        %v4264 = vrot.slane %v4239, 4
        %v4265 = vsel %vm2075, %v4249, %v4264
        %v4267 = vunpack.c.l.s4 1934713408
        %v4268 = vunpack.c.0.s8 %v4267
        %v4269 = vperm.slane %v4263, %v4268
        %v4271 = vunpack.c.l.s4 1934713408
        %v4272 = vunpack.c.0.s8 %v4271
        %v4273 = vperm.slane %v4265, %v4272
        %v4274 = vrot.slane %v4257, 4
        %v4275 = vsel %vm2075, 0.0, %v4274
        %v4276 = vrot.slane %v4261, 4
        %v4277 = vsel %vm2075, 0.0, %v4276
        %v4278 = vrot.slane %v4269, 4
        %v4279 = vsel %vm2075, 0.0, %v4278
        %v4280 = vrot.slane %v4273, 4
        %v4281 = vsel %vm2075, 0.0, %v4280
        %v4282 = vsel %vm2075, %v4276, %v4257
        %v4284 = vunpack.c.l.s4 1983009808
        %v4285 = vunpack.c.0.s8 %v4284
        %v4286 = vperm.slane %v4282, %v4285
        %v4287 = vrot.slane %v4277, 4
        %v4288 = vsel %vm2075, %v4287, %v4275
        %v4290 = vunpack.c.l.s4 1983009808
        %v4291 = vunpack.c.0.s8 %v4290
        %v4292 = vperm.slane %v4288, %v4291
        %v4293 = vsel %vm2075, %v4280, %v4269
        %v4295 = vunpack.c.l.s4 1983009808
        %v4296 = vunpack.c.0.s8 %v4295
        %v4297 = vperm.slane %v4293, %v4296
        %v4298 = vrot.slane %v4281, 4
        %v4299 = vsel %vm2075, %v4298, %v4279
        %v4301 = vunpack.c.l.s4 1983009808
        %v4302 = vunpack.c.0.s8 %v4301
        %v4303 = vperm.slane %v4299, %v4302
        %v4304 = vrot.slane %v4292, 4
        %v4305 = vsel %vm2075, %v4304, %v4286
        %v4307 = vunpack.c.l.s4 1934713408
        %v4308 = vunpack.c.0.s8 %v4307
        %v4309 = vperm.slane %v4305, %v4308
        %v4310 = vrot.slane %v4303, 4
        %v4311 = vsel %vm2075, %v4310, %v4297
        %v4313 = vunpack.c.l.s4 1934713408
        %v4314 = vunpack.c.0.s8 %v4313
        %v4315 = vperm.slane %v4311, %v4314
        %v4316 = vrot.slane %v4315, 4
        %v4317 = vsel %vm2075, %v4316, %v4309
        %v4318 = vrot.slane %v4309, 4
        %v4319 = vsel %vm2075, %v4315, %v4318
        %v4320 = vpack.c.bf16 %v4317, %v4317
        %v4321 = vpack.c.bf16 %v4319, %v4319
        %v4322 = vld [vmem:[%s1098] sm:$0xff]
        %v4323 = vld [vmem:[%s1098 + $0x8] sm:$0xff]
        %v4324 = vld [vmem:[%s1098 + $0x10] sm:$0xff]
        %v4325 = vld [vmem:[%s1098 + $0x18] sm:$0xff]
        %v4326 = vld [vmem:[%s1098 + $0x20] sm:$0xff]
        %v4327 = vld [vmem:[%s1098 + $0x28] sm:$0xff]
        %v4328 = vld [vmem:[%s1098 + $0x30] sm:$0xff]
        %v4329 = vld [vmem:[%s1098 + $0x38] sm:$0xff]
        %v4330 = vld [vmem:[%s1098 + $0x40] sm:$0xff]
        %v4331 = vld [vmem:[%s1098 + $0x48] sm:$0xff]
        %v4332 = vld [vmem:[%s1098 + $0x50] sm:$0xff]
        %v4333 = vld [vmem:[%s1098 + $0x58] sm:$0xff]
        %v4334 = vld [vmem:[%s1098 + $0x60] sm:$0xff]
        %v4335 = vld [vmem:[%s1098 + $0x68] sm:$0xff]
        %v4336 = vld [vmem:[%s1098 + $0x70] sm:$0xff]
        %v4337 = vld [vmem:[%s1098 + $0x78] sm:$0xff]
        %v4338 = vld [vmem:[%s1098 + $0x80] sm:$0xff]
        %v4339 = vld [vmem:[%s1098 + $0x88] sm:$0xff]
        %v4340 = vld [vmem:[%s1098 + $0x90] sm:$0xff]
        %v4341 = vld [vmem:[%s1098 + $0x98] sm:$0xff]
        %v4342 = vld [vmem:[%s1098 + $0xa0] sm:$0xff]
        %v4343 = vld [vmem:[%s1098 + $0xa8] sm:$0xff]
        %v4344 = vld [vmem:[%s1098 + $0xb0] sm:$0xff]
        %v4345 = vld [vmem:[%s1098 + $0xb8] sm:$0xff]
        %v4346 = vld [vmem:[%s1098 + $0xc0] sm:$0xff]
        %v4347 = vld [vmem:[%s1098 + $0xc8] sm:$0xff]
        %v4348 = vld [vmem:[%s1098 + $0xd0] sm:$0xff]
        %v4349 = vld [vmem:[%s1098 + $0xd8] sm:$0xff]
        %v4350 = vld [vmem:[%s1098 + $0xe0] sm:$0xff]
        %v4351 = vld [vmem:[%s1098 + $0xe8] sm:$0xff]
        %v4352 = vld [vmem:[%s1098 + $0xf0] sm:$0xff]
        %v4353 = vld [vmem:[%s1098 + $0xf8] sm:$0xff]
        %v4354 = vld [vmem:[%s1108] sm:$0x3]
        %v4356 = vperm.slane %v4354, 0
        %v4357 = vperm.slane %v4354, 1
        %v4392 = vunpack.c.l.b16 %v4322
        %v4393 = vunpack.c.h.b16 %v4322
        %v4394 = vunpack.c.l.b16 %v4323
        %v4395 = vunpack.c.h.b16 %v4323
        %v4396 = vunpack.c.l.b16 %v4324
        %v4397 = vunpack.c.h.b16 %v4324
        %v4398 = vunpack.c.l.b16 %v4325
        %v4399 = vunpack.c.h.b16 %v4325
        %v4400 = vunpack.c.l.b16 %v4326
        %v4401 = vunpack.c.h.b16 %v4326
        %v4402 = vunpack.c.l.b16 %v4327
        %v4403 = vunpack.c.h.b16 %v4327
        %v4404 = vunpack.c.l.b16 %v4328
        %v4405 = vunpack.c.h.b16 %v4328
        %v4406 = vunpack.c.l.b16 %v4329
        %v4407 = vunpack.c.h.b16 %v4329
        %v4408 = vunpack.c.l.b16 %v4330
        %v4409 = vunpack.c.h.b16 %v4330
        %v4410 = vunpack.c.l.b16 %v4331
        %v4411 = vunpack.c.h.b16 %v4331
        %v4412 = vunpack.c.l.b16 %v4332
        %v4413 = vunpack.c.h.b16 %v4332
        %v4414 = vunpack.c.l.b16 %v4333
        %v4415 = vunpack.c.h.b16 %v4333
        %v4416 = vunpack.c.l.b16 %v4334
        %v4417 = vunpack.c.h.b16 %v4334
        %v4418 = vunpack.c.l.b16 %v4335
        %v4419 = vunpack.c.h.b16 %v4335
        %v4420 = vunpack.c.l.b16 %v4336
        %v4421 = vunpack.c.h.b16 %v4336
        %v4422 = vunpack.c.l.b16 %v4337
        %v4423 = vunpack.c.h.b16 %v4337
        %v4424 = vunpack.c.l.b16 %v4338
        %v4425 = vunpack.c.h.b16 %v4338
        %v4426 = vunpack.c.l.b16 %v4339
        %v4427 = vunpack.c.h.b16 %v4339
        %v4428 = vunpack.c.l.b16 %v4340
        %v4429 = vunpack.c.h.b16 %v4340
        %v4430 = vunpack.c.l.b16 %v4341
        %v4431 = vunpack.c.h.b16 %v4341
        %v4432 = vunpack.c.l.b16 %v4342
        %v4433 = vunpack.c.h.b16 %v4342
        %v4434 = vunpack.c.l.b16 %v4343
        %v4435 = vunpack.c.h.b16 %v4343
        %v4436 = vunpack.c.l.b16 %v4344
        %v4437 = vunpack.c.h.b16 %v4344
        %v4438 = vunpack.c.l.b16 %v4345
        %v4439 = vunpack.c.h.b16 %v4345
        %v4440 = vunpack.c.l.b16 %v4346
        %v4441 = vunpack.c.h.b16 %v4346
        %v4442 = vunpack.c.l.b16 %v4347
        %v4443 = vunpack.c.h.b16 %v4347
        %v4444 = vunpack.c.l.b16 %v4348
        %v4445 = vunpack.c.h.b16 %v4348
        %v4446 = vunpack.c.l.b16 %v4349
        %v4447 = vunpack.c.h.b16 %v4349
        %v4448 = vunpack.c.l.b16 %v4350
        %v4449 = vunpack.c.h.b16 %v4350
        %v4450 = vunpack.c.l.b16 %v4351
        %v4451 = vunpack.c.h.b16 %v4351
        %v4452 = vunpack.c.l.b16 %v4352
        %v4453 = vunpack.c.h.b16 %v4352
        %v4454 = vunpack.c.l.b16 %v4353
        %v4455 = vunpack.c.h.b16 %v4353
        %v4456 = vpack.c.b16 %v4394, %v4392
        %v4457 = vpack.c.b16 %v4395, %v4393
        %v4458 = vpack.c.b16 %v4398, %v4396
        %v4459 = vpack.c.b16 %v4399, %v4397
        %v4460 = vpack.c.b16 %v4402, %v4400
        %v4461 = vpack.c.b16 %v4403, %v4401
        %v4462 = vpack.c.b16 %v4406, %v4404
        %v4463 = vpack.c.b16 %v4407, %v4405
        %v4464 = vpack.c.b16 %v4410, %v4408
        %v4465 = vpack.c.b16 %v4411, %v4409
        %v4466 = vpack.c.b16 %v4414, %v4412
        %v4467 = vpack.c.b16 %v4415, %v4413
        %v4468 = vpack.c.b16 %v4418, %v4416
        %v4469 = vpack.c.b16 %v4419, %v4417
        %v4470 = vpack.c.b16 %v4422, %v4420
        %v4471 = vpack.c.b16 %v4423, %v4421
        %v4472 = vpack.c.b16 %v4426, %v4424
        %v4473 = vpack.c.b16 %v4427, %v4425
        %v4474 = vpack.c.b16 %v4430, %v4428
        %v4475 = vpack.c.b16 %v4431, %v4429
        %v4476 = vpack.c.b16 %v4434, %v4432
        %v4477 = vpack.c.b16 %v4435, %v4433
        %v4478 = vpack.c.b16 %v4438, %v4436
        %v4479 = vpack.c.b16 %v4439, %v4437
        %v4480 = vpack.c.b16 %v4442, %v4440
        %v4481 = vpack.c.b16 %v4443, %v4441
        %v4482 = vpack.c.b16 %v4446, %v4444
        %v4483 = vpack.c.b16 %v4447, %v4445
        %v4484 = vpack.c.b16 %v4450, %v4448
        %v4485 = vpack.c.b16 %v4451, %v4449
        %v4486 = vpack.c.b16 %v4454, %v4452
        %v4487 = vpack.c.b16 %v4455, %v4453
        %4520 = vmatpush.bf16.msra.mxu0 %v4470
        %4521 = vmatpush.bf16.msra.mxu0 %v4468
        %4522 = vmatpush.bf16.msra.mxu0 %v4466
        %4523 = vmatpush.bf16.msra.mxu0 %v4464
        %4524 = vmatpush.bf16.msra.mxu0 %v4462
        %4525 = vmatpush.bf16.msra.mxu0 %v4460
        %4526 = vmatpush.bf16.msra.mxu0 %v4458
        %4527 = vmatpush.bf16.msra.mxu0 %v4456
        %4528 = vmatmul.bf16.gmra.mxu0 %v4320
        %v4529 = vpop.f32.mrf.mxu0
        %v4530 = vadd.f32 %v4356, %v4529
        %v4531 = vpop.f32.mrf.mxu0
        %4532 = vdwg.mxu0
        %4533 = vmatpush.bf16.msra.mxu0 %v4486
        %4534 = vmatpush.bf16.msra.mxu0 %v4484
        %4535 = vmatpush.bf16.msra.mxu0 %v4482
        %4536 = vmatpush.bf16.msra.mxu0 %v4480
        %4537 = vmatpush.bf16.msra.mxu0 %v4478
        %4538 = vmatpush.bf16.msra.mxu0 %v4476
        %4539 = vmatpush.bf16.msra.mxu0 %v4474
        %4540 = vmatpush.bf16.msra.mxu0 %v4472
        %4541 = vmatmul.bf16.gmra.mxu0 %v4321
        %v4542 = vpop.f32.mrf.mxu0
        %v4543 = vadd.f32 %v4530, %v4542
        %v4544 = vpop.f32.mrf.mxu0
        %4545 = vdwg.mxu0
        %4546 = vmatpush.bf16.msra.mxu0 %v4471
        %4547 = vmatpush.bf16.msra.mxu0 %v4469
        %4548 = vmatpush.bf16.msra.mxu0 %v4467
        %4549 = vmatpush.bf16.msra.mxu0 %v4465
        %4550 = vmatpush.bf16.msra.mxu0 %v4463
        %4551 = vmatpush.bf16.msra.mxu0 %v4461
        %4552 = vmatpush.bf16.msra.mxu0 %v4459
        %4553 = vmatpush.bf16.msra.mxu0 %v4457
        %4554 = vmatmul.bf16.gmra.mxu0 %v4320
        %v4555 = vpop.f32.mrf.mxu0
        %v4556 = vadd.f32 %v4357, %v4555
        %v4557 = vpop.f32.mrf.mxu0
        %4558 = vdwg.mxu0
        %4559 = vmatpush.bf16.msra.mxu0 %v4487
        %4560 = vmatpush.bf16.msra.mxu0 %v4485
        %4561 = vmatpush.bf16.msra.mxu0 %v4483
        %4562 = vmatpush.bf16.msra.mxu0 %v4481
        %4563 = vmatpush.bf16.msra.mxu0 %v4479
        %4564 = vmatpush.bf16.msra.mxu0 %v4477
        %4565 = vmatpush.bf16.msra.mxu0 %v4475
        %4566 = vmatpush.bf16.msra.mxu0 %v4473
        %4567 = vmatmul.bf16.gmra.mxu0 %v4321
        %v4568 = vpop.f32.mrf.mxu0
        %v4569 = vadd.f32 %v4556, %v4568
        %v4570 = vpop.f32.mrf.mxu0
        %4571 = vdwg.mxu0
        %v4572 = vadd.f32 %v2859, %v4543
        %v4573 = vadd.f32 %v2860, %v4569
        %v4574 = vadd.f32 %v4572, %v4573
        %4575 = vadd.xlane.f32.xlu0 %v4574
        %v4576 = vpop.xlane.xlu0 %4575
        %v4577 = vmul.f32 %v4576, %v2820
        %v4578 = vsub.f32 %v4572, %v4577
        %v4579 = vsub.f32 %v4573, %v4577
        %v4580 = vmul.f32 %v4578, %v4578
        %v4581 = vmul.f32 %v4579, %v4579
        %v4582 = vadd.f32 %v4580, %v4581
        %4583 = vadd.xlane.f32.xlu0 %v4582
        %v4584 = vpop.xlane.xlu0 %4583
        %v4585 = vmul.f32 %v4584, %v2820
        %v4586 = vadd.f32 %v4585, 1e-05
        %v4587 = vrsqrt.pop %v4586
        %v4588 = vmul.f32 %v4587, %v4586
        %v4589 = vmul.f32 %v4588, %v4587
        %v4590 = vmul.f32 0.5, %v4589
        %v4591 = vsub.f32 1.5, %v4590
        %v4592 = vmul.f32 %v4587, %v4591
        %vm4593 = vweird.f32 %v4586
        %vm4594 = vweird.f32 %v4587
        %vm4595 = vmor %vm4593, %vm4594
        %v4596 = vsel %vm4595, %v4587, %v4592
        %v4597 = vmul.f32 %v4578, %v4596
        %v4598 = vmul.f32 %v4579, %v4596
        %v4599 = vperm.slane %v1321, 1
        %v4600 = vperm.slane %v1321, 5
        %v4603 = vperm.slane %v4599, 1
        %v4604 = vperm.slane %v4600, 1
        %v4605 = vmul.f32 %v4597, %v4603
        %v4606 = vmul.f32 %v4598, %v4604
        %v4607 = vperm.slane %v1322, 1
        %v4608 = vperm.slane %v1322, 5
        %v4611 = vperm.slane %v4607, 1
        %v4612 = vperm.slane %v4608, 1
        %v4613 = vadd.f32 %v4605, %v4611
        %v4614 = vadd.f32 %v4606, %v4612
        %v4615 = vpack.c.bf16 %v4613, %v4613
        %v4616 = vpack.c.bf16 %v4614, %v4614
        %v4617 = vld [vmem:[%s1118] sm:$0xff]
        %v4618 = vld [vmem:[%s1118 + $0x8] sm:$0xff]
        %v4619 = vld [vmem:[%s1118 + $0x10] sm:$0xff]
        %v4620 = vld [vmem:[%s1118 + $0x18] sm:$0xff]
        %v4621 = vld [vmem:[%s1118 + $0x20] sm:$0xff]
        %v4622 = vld [vmem:[%s1118 + $0x28] sm:$0xff]
        %v4623 = vld [vmem:[%s1118 + $0x30] sm:$0xff]
        %v4624 = vld [vmem:[%s1118 + $0x38] sm:$0xff]
        %v4625 = vld [vmem:[%s1118 + $0x40] sm:$0xff]
        %v4626 = vld [vmem:[%s1118 + $0x48] sm:$0xff]
        %v4627 = vld [vmem:[%s1118 + $0x50] sm:$0xff]
        %v4628 = vld [vmem:[%s1118 + $0x58] sm:$0xff]
        %v4629 = vld [vmem:[%s1118 + $0x60] sm:$0xff]
        %v4630 = vld [vmem:[%s1118 + $0x68] sm:$0xff]
        %v4631 = vld [vmem:[%s1118 + $0x70] sm:$0xff]
        %v4632 = vld [vmem:[%s1118 + $0x78] sm:$0xff]
        %v4633 = vld [vmem:[%s1118 + $0x80] sm:$0xff]
        %v4634 = vld [vmem:[%s1118 + $0x88] sm:$0xff]
        %v4635 = vld [vmem:[%s1118 + $0x90] sm:$0xff]
        %v4636 = vld [vmem:[%s1118 + $0x98] sm:$0xff]
        %v4637 = vld [vmem:[%s1118 + $0xa0] sm:$0xff]
        %v4638 = vld [vmem:[%s1118 + $0xa8] sm:$0xff]
        %v4639 = vld [vmem:[%s1118 + $0xb0] sm:$0xff]
        %v4640 = vld [vmem:[%s1118 + $0xb8] sm:$0xff]
        %v4641 = vld [vmem:[%s1118 + $0xc0] sm:$0xff]
        %v4642 = vld [vmem:[%s1118 + $0xc8] sm:$0xff]
        %v4643 = vld [vmem:[%s1118 + $0xd0] sm:$0xff]
        %v4644 = vld [vmem:[%s1118 + $0xd8] sm:$0xff]
        %v4645 = vld [vmem:[%s1118 + $0xe0] sm:$0xff]
        %v4646 = vld [vmem:[%s1118 + $0xe8] sm:$0xff]
        %v4647 = vld [vmem:[%s1118 + $0xf0] sm:$0xff]
        %v4648 = vld [vmem:[%s1118 + $0xf8] sm:$0xff]
        %v4649 = vld [vmem:[%s1118 + $0x100] sm:$0xff]
        %v4650 = vld [vmem:[%s1118 + $0x108] sm:$0xff]
        %v4651 = vld [vmem:[%s1118 + $0x110] sm:$0xff]
        %v4652 = vld [vmem:[%s1118 + $0x118] sm:$0xff]
        %v4653 = vld [vmem:[%s1118 + $0x120] sm:$0xff]
        %v4654 = vld [vmem:[%s1118 + $0x128] sm:$0xff]
        %v4655 = vld [vmem:[%s1118 + $0x130] sm:$0xff]
        %v4656 = vld [vmem:[%s1118 + $0x138] sm:$0xff]
        %v4657 = vld [vmem:[%s1118 + $0x140] sm:$0xff]
        %v4658 = vld [vmem:[%s1118 + $0x148] sm:$0xff]
        %v4659 = vld [vmem:[%s1118 + $0x150] sm:$0xff]
        %v4660 = vld [vmem:[%s1118 + $0x158] sm:$0xff]
        %v4661 = vld [vmem:[%s1118 + $0x160] sm:$0xff]
        %v4662 = vld [vmem:[%s1118 + $0x168] sm:$0xff]
        %v4663 = vld [vmem:[%s1118 + $0x170] sm:$0xff]
        %v4664 = vld [vmem:[%s1118 + $0x178] sm:$0xff]
        %v4665 = vld [vmem:[%s1118 + $0x180] sm:$0xff]
        %v4666 = vld [vmem:[%s1118 + $0x188] sm:$0xff]
        %v4667 = vld [vmem:[%s1118 + $0x190] sm:$0xff]
        %v4668 = vld [vmem:[%s1118 + $0x198] sm:$0xff]
        %v4669 = vld [vmem:[%s1118 + $0x1a0] sm:$0xff]
        %v4670 = vld [vmem:[%s1118 + $0x1a8] sm:$0xff]
        %v4671 = vld [vmem:[%s1118 + $0x1b0] sm:$0xff]
        %v4672 = vld [vmem:[%s1118 + $0x1b8] sm:$0xff]
        %v4673 = vld [vmem:[%s1118 + $0x1c0] sm:$0xff]
        %v4674 = vld [vmem:[%s1118 + $0x1c8] sm:$0xff]
        %v4675 = vld [vmem:[%s1118 + $0x1d0] sm:$0xff]
        %v4676 = vld [vmem:[%s1118 + $0x1d8] sm:$0xff]
        %v4677 = vld [vmem:[%s1118 + $0x1e0] sm:$0xff]
        %v4678 = vld [vmem:[%s1118 + $0x1e8] sm:$0xff]
        %v4679 = vld [vmem:[%s1118 + $0x1f0] sm:$0xff]
        %v4680 = vld [vmem:[%s1118 + $0x1f8] sm:$0xff]
        %v4681 = vld [vmem:[%s1118 + $0x200] sm:$0xff]
        %v4682 = vld [vmem:[%s1118 + $0x208] sm:$0xff]
        %v4683 = vld [vmem:[%s1118 + $0x210] sm:$0xff]
        %v4684 = vld [vmem:[%s1118 + $0x218] sm:$0xff]
        %v4685 = vld [vmem:[%s1118 + $0x220] sm:$0xff]
        %v4686 = vld [vmem:[%s1118 + $0x228] sm:$0xff]
        %v4687 = vld [vmem:[%s1118 + $0x230] sm:$0xff]
        %v4688 = vld [vmem:[%s1118 + $0x238] sm:$0xff]
        %v4689 = vld [vmem:[%s1118 + $0x240] sm:$0xff]
        %v4690 = vld [vmem:[%s1118 + $0x248] sm:$0xff]
        %v4691 = vld [vmem:[%s1118 + $0x250] sm:$0xff]
        %v4692 = vld [vmem:[%s1118 + $0x258] sm:$0xff]
        %v4693 = vld [vmem:[%s1118 + $0x260] sm:$0xff]
        %v4694 = vld [vmem:[%s1118 + $0x268] sm:$0xff]
        %v4695 = vld [vmem:[%s1118 + $0x270] sm:$0xff]
        %v4696 = vld [vmem:[%s1118 + $0x278] sm:$0xff]
        %v4697 = vld [vmem:[%s1118 + $0x280] sm:$0xff]
        %v4698 = vld [vmem:[%s1118 + $0x288] sm:$0xff]
        %v4699 = vld [vmem:[%s1118 + $0x290] sm:$0xff]
        %v4700 = vld [vmem:[%s1118 + $0x298] sm:$0xff]
        %v4701 = vld [vmem:[%s1118 + $0x2a0] sm:$0xff]
        %v4702 = vld [vmem:[%s1118 + $0x2a8] sm:$0xff]
        %v4703 = vld [vmem:[%s1118 + $0x2b0] sm:$0xff]
        %v4704 = vld [vmem:[%s1118 + $0x2b8] sm:$0xff]
        %v4705 = vld [vmem:[%s1118 + $0x2c0] sm:$0xff]
        %v4706 = vld [vmem:[%s1118 + $0x2c8] sm:$0xff]
        %v4707 = vld [vmem:[%s1118 + $0x2d0] sm:$0xff]
        %v4708 = vld [vmem:[%s1118 + $0x2d8] sm:$0xff]
        %v4709 = vld [vmem:[%s1118 + $0x2e0] sm:$0xff]
        %v4710 = vld [vmem:[%s1118 + $0x2e8] sm:$0xff]
        %v4711 = vld [vmem:[%s1118 + $0x2f0] sm:$0xff]
        %v4712 = vld [vmem:[%s1118 + $0x2f8] sm:$0xff]
        %v4713 = vld [vmem:[%s1118 + $0x300] sm:$0xff]
        %v4714 = vld [vmem:[%s1118 + $0x308] sm:$0xff]
        %v4715 = vld [vmem:[%s1118 + $0x310] sm:$0xff]
        %v4716 = vld [vmem:[%s1118 + $0x318] sm:$0xff]
        %v4717 = vld [vmem:[%s1118 + $0x320] sm:$0xff]
        %v4718 = vld [vmem:[%s1118 + $0x328] sm:$0xff]
        %v4719 = vld [vmem:[%s1118 + $0x330] sm:$0xff]
        %v4720 = vld [vmem:[%s1118 + $0x338] sm:$0xff]
        %v4721 = vld [vmem:[%s1118 + $0x340] sm:$0xff]
        %v4722 = vld [vmem:[%s1118 + $0x348] sm:$0xff]
        %v4723 = vld [vmem:[%s1118 + $0x350] sm:$0xff]
        %v4724 = vld [vmem:[%s1118 + $0x358] sm:$0xff]
        %v4725 = vld [vmem:[%s1118 + $0x360] sm:$0xff]
        %v4726 = vld [vmem:[%s1118 + $0x368] sm:$0xff]
        %v4727 = vld [vmem:[%s1118 + $0x370] sm:$0xff]
        %v4728 = vld [vmem:[%s1118 + $0x378] sm:$0xff]
        %v4729 = vld [vmem:[%s1118 + $0x380] sm:$0xff]
        %v4730 = vld [vmem:[%s1118 + $0x388] sm:$0xff]
        %v4731 = vld [vmem:[%s1118 + $0x390] sm:$0xff]
        %v4732 = vld [vmem:[%s1118 + $0x398] sm:$0xff]
        %v4733 = vld [vmem:[%s1118 + $0x3a0] sm:$0xff]
        %v4734 = vld [vmem:[%s1118 + $0x3a8] sm:$0xff]
        %v4735 = vld [vmem:[%s1118 + $0x3b0] sm:$0xff]
        %v4736 = vld [vmem:[%s1118 + $0x3b8] sm:$0xff]
        %v4737 = vld [vmem:[%s1118 + $0x3c0] sm:$0xff]
        %v4738 = vld [vmem:[%s1118 + $0x3c8] sm:$0xff]
        %v4739 = vld [vmem:[%s1118 + $0x3d0] sm:$0xff]
        %v4740 = vld [vmem:[%s1118 + $0x3d8] sm:$0xff]
        %v4741 = vld [vmem:[%s1118 + $0x3e0] sm:$0xff]
        %v4742 = vld [vmem:[%s1118 + $0x3e8] sm:$0xff]
        %v4743 = vld [vmem:[%s1118 + $0x3f0] sm:$0xff]
        %v4744 = vld [vmem:[%s1118 + $0x3f8] sm:$0xff]
        %v4745 = vld [vmem:[%s1128] sm:$0xff]
        %v4747 = vperm.slane %v4745, 0
        %v4748 = vperm.slane %v4745, 1
        %v4749 = vperm.slane %v4745, 2
        %v4750 = vperm.slane %v4745, 3
        %v4751 = vperm.slane %v4745, 4
        %v4752 = vperm.slane %v4745, 5
        %v4753 = vperm.slane %v4745, 6
        %v4754 = vperm.slane %v4745, 7
        %v4891 = vunpack.c.l.b16 %v4617
        %v4892 = vunpack.c.h.b16 %v4617
        %v4893 = vunpack.c.l.b16 %v4618
        %v4894 = vunpack.c.h.b16 %v4618
        %v4895 = vunpack.c.l.b16 %v4619
        %v4896 = vunpack.c.h.b16 %v4619
        %v4897 = vunpack.c.l.b16 %v4620
        %v4898 = vunpack.c.h.b16 %v4620
        %v4899 = vunpack.c.l.b16 %v4621
        %v4900 = vunpack.c.h.b16 %v4621
        %v4901 = vunpack.c.l.b16 %v4622
        %v4902 = vunpack.c.h.b16 %v4622
        %v4903 = vunpack.c.l.b16 %v4623
        %v4904 = vunpack.c.h.b16 %v4623
        %v4905 = vunpack.c.l.b16 %v4624
        %v4906 = vunpack.c.h.b16 %v4624
        %v4907 = vunpack.c.l.b16 %v4625
        %v4908 = vunpack.c.h.b16 %v4625
        %v4909 = vunpack.c.l.b16 %v4626
        %v4910 = vunpack.c.h.b16 %v4626
        %v4911 = vunpack.c.l.b16 %v4627
        %v4912 = vunpack.c.h.b16 %v4627
        %v4913 = vunpack.c.l.b16 %v4628
        %v4914 = vunpack.c.h.b16 %v4628
        %v4915 = vunpack.c.l.b16 %v4629
        %v4916 = vunpack.c.h.b16 %v4629
        %v4917 = vunpack.c.l.b16 %v4630
        %v4918 = vunpack.c.h.b16 %v4630
        %v4919 = vunpack.c.l.b16 %v4631
        %v4920 = vunpack.c.h.b16 %v4631
        %v4921 = vunpack.c.l.b16 %v4632
        %v4922 = vunpack.c.h.b16 %v4632
        %v4923 = vunpack.c.l.b16 %v4633
        %v4924 = vunpack.c.h.b16 %v4633
        %v4925 = vunpack.c.l.b16 %v4634
        %v4926 = vunpack.c.h.b16 %v4634
        %v4927 = vunpack.c.l.b16 %v4635
        %v4928 = vunpack.c.h.b16 %v4635
        %v4929 = vunpack.c.l.b16 %v4636
        %v4930 = vunpack.c.h.b16 %v4636
        %v4931 = vunpack.c.l.b16 %v4637
        %v4932 = vunpack.c.h.b16 %v4637
        %v4933 = vunpack.c.l.b16 %v4638
        %v4934 = vunpack.c.h.b16 %v4638
        %v4935 = vunpack.c.l.b16 %v4639
        %v4936 = vunpack.c.h.b16 %v4639
        %v4937 = vunpack.c.l.b16 %v4640
        %v4938 = vunpack.c.h.b16 %v4640
        %v4939 = vunpack.c.l.b16 %v4641
        %v4940 = vunpack.c.h.b16 %v4641
        %v4941 = vunpack.c.l.b16 %v4642
        %v4942 = vunpack.c.h.b16 %v4642
        %v4943 = vunpack.c.l.b16 %v4643
        %v4944 = vunpack.c.h.b16 %v4643
        %v4945 = vunpack.c.l.b16 %v4644
        %v4946 = vunpack.c.h.b16 %v4644
        %v4947 = vunpack.c.l.b16 %v4645
        %v4948 = vunpack.c.h.b16 %v4645
        %v4949 = vunpack.c.l.b16 %v4646
        %v4950 = vunpack.c.h.b16 %v4646
        %v4951 = vunpack.c.l.b16 %v4647
        %v4952 = vunpack.c.h.b16 %v4647
        %v4953 = vunpack.c.l.b16 %v4648
        %v4954 = vunpack.c.h.b16 %v4648
        %v4955 = vunpack.c.l.b16 %v4649
        %v4956 = vunpack.c.h.b16 %v4649
        %v4957 = vunpack.c.l.b16 %v4650
        %v4958 = vunpack.c.h.b16 %v4650
        %v4959 = vunpack.c.l.b16 %v4651
        %v4960 = vunpack.c.h.b16 %v4651
        %v4961 = vunpack.c.l.b16 %v4652
        %v4962 = vunpack.c.h.b16 %v4652
        %v4963 = vunpack.c.l.b16 %v4653
        %v4964 = vunpack.c.h.b16 %v4653
        %v4965 = vunpack.c.l.b16 %v4654
        %v4966 = vunpack.c.h.b16 %v4654
        %v4967 = vunpack.c.l.b16 %v4655
        %v4968 = vunpack.c.h.b16 %v4655
        %v4969 = vunpack.c.l.b16 %v4656
        %v4970 = vunpack.c.h.b16 %v4656
        %v4971 = vunpack.c.l.b16 %v4657
        %v4972 = vunpack.c.h.b16 %v4657
        %v4973 = vunpack.c.l.b16 %v4658
        %v4974 = vunpack.c.h.b16 %v4658
        %v4975 = vunpack.c.l.b16 %v4659
        %v4976 = vunpack.c.h.b16 %v4659
        %v4977 = vunpack.c.l.b16 %v4660
        %v4978 = vunpack.c.h.b16 %v4660
        %v4979 = vunpack.c.l.b16 %v4661
        %v4980 = vunpack.c.h.b16 %v4661
        %v4981 = vunpack.c.l.b16 %v4662
        %v4982 = vunpack.c.h.b16 %v4662
        %v4983 = vunpack.c.l.b16 %v4663
        %v4984 = vunpack.c.h.b16 %v4663
        %v4985 = vunpack.c.l.b16 %v4664
        %v4986 = vunpack.c.h.b16 %v4664
        %v4987 = vunpack.c.l.b16 %v4665
        %v4988 = vunpack.c.h.b16 %v4665
        %v4989 = vunpack.c.l.b16 %v4666
        %v4990 = vunpack.c.h.b16 %v4666
        %v4991 = vunpack.c.l.b16 %v4667
        %v4992 = vunpack.c.h.b16 %v4667
        %v4993 = vunpack.c.l.b16 %v4668
        %v4994 = vunpack.c.h.b16 %v4668
        %v4995 = vunpack.c.l.b16 %v4669
        %v4996 = vunpack.c.h.b16 %v4669
        %v4997 = vunpack.c.l.b16 %v4670
        %v4998 = vunpack.c.h.b16 %v4670
        %v4999 = vunpack.c.l.b16 %v4671
        %v5000 = vunpack.c.h.b16 %v4671
        %v5001 = vunpack.c.l.b16 %v4672
        %v5002 = vunpack.c.h.b16 %v4672
        %v5003 = vunpack.c.l.b16 %v4673
        %v5004 = vunpack.c.h.b16 %v4673
        %v5005 = vunpack.c.l.b16 %v4674
        %v5006 = vunpack.c.h.b16 %v4674
        %v5007 = vunpack.c.l.b16 %v4675
        %v5008 = vunpack.c.h.b16 %v4675
        %v5009 = vunpack.c.l.b16 %v4676
        %v5010 = vunpack.c.h.b16 %v4676
        %v5011 = vunpack.c.l.b16 %v4677
        %v5012 = vunpack.c.h.b16 %v4677
        %v5013 = vunpack.c.l.b16 %v4678
        %v5014 = vunpack.c.h.b16 %v4678
        %v5015 = vunpack.c.l.b16 %v4679
        %v5016 = vunpack.c.h.b16 %v4679
        %v5017 = vunpack.c.l.b16 %v4680
        %v5018 = vunpack.c.h.b16 %v4680
        %v5019 = vunpack.c.l.b16 %v4681
        %v5020 = vunpack.c.h.b16 %v4681
        %v5021 = vunpack.c.l.b16 %v4682
        %v5022 = vunpack.c.h.b16 %v4682
        %v5023 = vunpack.c.l.b16 %v4683
        %v5024 = vunpack.c.h.b16 %v4683
        %v5025 = vunpack.c.l.b16 %v4684
        %v5026 = vunpack.c.h.b16 %v4684
        %v5027 = vunpack.c.l.b16 %v4685
        %v5028 = vunpack.c.h.b16 %v4685
        %v5029 = vunpack.c.l.b16 %v4686
        %v5030 = vunpack.c.h.b16 %v4686
        %v5031 = vunpack.c.l.b16 %v4687
        %v5032 = vunpack.c.h.b16 %v4687
        %v5033 = vunpack.c.l.b16 %v4688
        %v5034 = vunpack.c.h.b16 %v4688
        %v5035 = vunpack.c.l.b16 %v4689
        %v5036 = vunpack.c.h.b16 %v4689
        %v5037 = vunpack.c.l.b16 %v4690
        %v5038 = vunpack.c.h.b16 %v4690
        %v5039 = vunpack.c.l.b16 %v4691
        %v5040 = vunpack.c.h.b16 %v4691
        %v5041 = vunpack.c.l.b16 %v4692
        %v5042 = vunpack.c.h.b16 %v4692
        %v5043 = vunpack.c.l.b16 %v4693
        %v5044 = vunpack.c.h.b16 %v4693
        %v5045 = vunpack.c.l.b16 %v4694
        %v5046 = vunpack.c.h.b16 %v4694
        %v5047 = vunpack.c.l.b16 %v4695
        %v5048 = vunpack.c.h.b16 %v4695
        %v5049 = vunpack.c.l.b16 %v4696
        %v5050 = vunpack.c.h.b16 %v4696
        %v5051 = vunpack.c.l.b16 %v4697
        %v5052 = vunpack.c.h.b16 %v4697
        %v5053 = vunpack.c.l.b16 %v4698
        %v5054 = vunpack.c.h.b16 %v4698
        %v5055 = vunpack.c.l.b16 %v4699
        %v5056 = vunpack.c.h.b16 %v4699
        %v5057 = vunpack.c.l.b16 %v4700
        %v5058 = vunpack.c.h.b16 %v4700
        %v5059 = vunpack.c.l.b16 %v4701
        %v5060 = vunpack.c.h.b16 %v4701
        %v5061 = vunpack.c.l.b16 %v4702
        %v5062 = vunpack.c.h.b16 %v4702
        %v5063 = vunpack.c.l.b16 %v4703
        %v5064 = vunpack.c.h.b16 %v4703
        %v5065 = vunpack.c.l.b16 %v4704
        %v5066 = vunpack.c.h.b16 %v4704
        %v5067 = vunpack.c.l.b16 %v4705
        %v5068 = vunpack.c.h.b16 %v4705
        %v5069 = vunpack.c.l.b16 %v4706
        %v5070 = vunpack.c.h.b16 %v4706
        %v5071 = vunpack.c.l.b16 %v4707
        %v5072 = vunpack.c.h.b16 %v4707
        %v5073 = vunpack.c.l.b16 %v4708
        %v5074 = vunpack.c.h.b16 %v4708
        %v5075 = vunpack.c.l.b16 %v4709
        %v5076 = vunpack.c.h.b16 %v4709
        %v5077 = vunpack.c.l.b16 %v4710
        %v5078 = vunpack.c.h.b16 %v4710
        %v5079 = vunpack.c.l.b16 %v4711
        %v5080 = vunpack.c.h.b16 %v4711
        %v5081 = vunpack.c.l.b16 %v4712
        %v5082 = vunpack.c.h.b16 %v4712
        %v5083 = vunpack.c.l.b16 %v4713
        %v5084 = vunpack.c.h.b16 %v4713
        %v5085 = vunpack.c.l.b16 %v4714
        %v5086 = vunpack.c.h.b16 %v4714
        %v5087 = vunpack.c.l.b16 %v4715
        %v5088 = vunpack.c.h.b16 %v4715
        %v5089 = vunpack.c.l.b16 %v4716
        %v5090 = vunpack.c.h.b16 %v4716
        %v5091 = vunpack.c.l.b16 %v4717
        %v5092 = vunpack.c.h.b16 %v4717
        %v5093 = vunpack.c.l.b16 %v4718
        %v5094 = vunpack.c.h.b16 %v4718
        %v5095 = vunpack.c.l.b16 %v4719
        %v5096 = vunpack.c.h.b16 %v4719
        %v5097 = vunpack.c.l.b16 %v4720
        %v5098 = vunpack.c.h.b16 %v4720
        %v5099 = vunpack.c.l.b16 %v4721
        %v5100 = vunpack.c.h.b16 %v4721
        %v5101 = vunpack.c.l.b16 %v4722
        %v5102 = vunpack.c.h.b16 %v4722
        %v5103 = vunpack.c.l.b16 %v4723
        %v5104 = vunpack.c.h.b16 %v4723
        %v5105 = vunpack.c.l.b16 %v4724
        %v5106 = vunpack.c.h.b16 %v4724
        %v5107 = vunpack.c.l.b16 %v4725
        %v5108 = vunpack.c.h.b16 %v4725
        %v5109 = vunpack.c.l.b16 %v4726
        %v5110 = vunpack.c.h.b16 %v4726
        %v5111 = vunpack.c.l.b16 %v4727
        %v5112 = vunpack.c.h.b16 %v4727
        %v5113 = vunpack.c.l.b16 %v4728
        %v5114 = vunpack.c.h.b16 %v4728
        %v5115 = vunpack.c.l.b16 %v4729
        %v5116 = vunpack.c.h.b16 %v4729
        %v5117 = vunpack.c.l.b16 %v4730
        %v5118 = vunpack.c.h.b16 %v4730
        %v5119 = vunpack.c.l.b16 %v4731
        %v5120 = vunpack.c.h.b16 %v4731
        %v5121 = vunpack.c.l.b16 %v4732
        %v5122 = vunpack.c.h.b16 %v4732
        %v5123 = vunpack.c.l.b16 %v4733
        %v5124 = vunpack.c.h.b16 %v4733
        %v5125 = vunpack.c.l.b16 %v4734
        %v5126 = vunpack.c.h.b16 %v4734
        %v5127 = vunpack.c.l.b16 %v4735
        %v5128 = vunpack.c.h.b16 %v4735
        %v5129 = vunpack.c.l.b16 %v4736
        %v5130 = vunpack.c.h.b16 %v4736
        %v5131 = vunpack.c.l.b16 %v4737
        %v5132 = vunpack.c.h.b16 %v4737
        %v5133 = vunpack.c.l.b16 %v4738
        %v5134 = vunpack.c.h.b16 %v4738
        %v5135 = vunpack.c.l.b16 %v4739
        %v5136 = vunpack.c.h.b16 %v4739
        %v5137 = vunpack.c.l.b16 %v4740
        %v5138 = vunpack.c.h.b16 %v4740
        %v5139 = vunpack.c.l.b16 %v4741
        %v5140 = vunpack.c.h.b16 %v4741
        %v5141 = vunpack.c.l.b16 %v4742
        %v5142 = vunpack.c.h.b16 %v4742
        %v5143 = vunpack.c.l.b16 %v4743
        %v5144 = vunpack.c.h.b16 %v4743
        %v5145 = vunpack.c.l.b16 %v4744
        %v5146 = vunpack.c.h.b16 %v4744
        %v5147 = vpack.c.b16 %v4899, %v4891
        %v5148 = vpack.c.b16 %v4900, %v4892
        %v5149 = vpack.c.b16 %v4901, %v4893
        %v5150 = vpack.c.b16 %v4902, %v4894
        %v5151 = vpack.c.b16 %v4903, %v4895
        %v5152 = vpack.c.b16 %v4904, %v4896
        %v5153 = vpack.c.b16 %v4905, %v4897
        %v5154 = vpack.c.b16 %v4906, %v4898
        %v5155 = vpack.c.b16 %v4915, %v4907
        %v5156 = vpack.c.b16 %v4916, %v4908
        %v5157 = vpack.c.b16 %v4917, %v4909
        %v5158 = vpack.c.b16 %v4918, %v4910
        %v5159 = vpack.c.b16 %v4919, %v4911
        %v5160 = vpack.c.b16 %v4920, %v4912
        %v5161 = vpack.c.b16 %v4921, %v4913
        %v5162 = vpack.c.b16 %v4922, %v4914
        %v5163 = vpack.c.b16 %v4931, %v4923
        %v5164 = vpack.c.b16 %v4932, %v4924
        %v5165 = vpack.c.b16 %v4933, %v4925
        %v5166 = vpack.c.b16 %v4934, %v4926
        %v5167 = vpack.c.b16 %v4935, %v4927
        %v5168 = vpack.c.b16 %v4936, %v4928
        %v5169 = vpack.c.b16 %v4937, %v4929
        %v5170 = vpack.c.b16 %v4938, %v4930
        %v5171 = vpack.c.b16 %v4947, %v4939
        %v5172 = vpack.c.b16 %v4948, %v4940
        %v5173 = vpack.c.b16 %v4949, %v4941
        %v5174 = vpack.c.b16 %v4950, %v4942
        %v5175 = vpack.c.b16 %v4951, %v4943
        %v5176 = vpack.c.b16 %v4952, %v4944
        %v5177 = vpack.c.b16 %v4953, %v4945
        %v5178 = vpack.c.b16 %v4954, %v4946
        %v5179 = vpack.c.b16 %v4963, %v4955
        %v5180 = vpack.c.b16 %v4964, %v4956
        %v5181 = vpack.c.b16 %v4965, %v4957
        %v5182 = vpack.c.b16 %v4966, %v4958
        %v5183 = vpack.c.b16 %v4967, %v4959
        %v5184 = vpack.c.b16 %v4968, %v4960
        %v5185 = vpack.c.b16 %v4969, %v4961
        %v5186 = vpack.c.b16 %v4970, %v4962
        %v5187 = vpack.c.b16 %v4979, %v4971
        %v5188 = vpack.c.b16 %v4980, %v4972
        %v5189 = vpack.c.b16 %v4981, %v4973
        %v5190 = vpack.c.b16 %v4982, %v4974
        %v5191 = vpack.c.b16 %v4983, %v4975
        %v5192 = vpack.c.b16 %v4984, %v4976
        %v5193 = vpack.c.b16 %v4985, %v4977
        %v5194 = vpack.c.b16 %v4986, %v4978
        %v5195 = vpack.c.b16 %v4995, %v4987
        %v5196 = vpack.c.b16 %v4996, %v4988
        %v5197 = vpack.c.b16 %v4997, %v4989
        %v5198 = vpack.c.b16 %v4998, %v4990
        %v5199 = vpack.c.b16 %v4999, %v4991
        %v5200 = vpack.c.b16 %v5000, %v4992
        %v5201 = vpack.c.b16 %v5001, %v4993
        %v5202 = vpack.c.b16 %v5002, %v4994
        %v5203 = vpack.c.b16 %v5011, %v5003
        %v5204 = vpack.c.b16 %v5012, %v5004
        %v5205 = vpack.c.b16 %v5013, %v5005
        %v5206 = vpack.c.b16 %v5014, %v5006
        %v5207 = vpack.c.b16 %v5015, %v5007
        %v5208 = vpack.c.b16 %v5016, %v5008
        %v5209 = vpack.c.b16 %v5017, %v5009
        %v5210 = vpack.c.b16 %v5018, %v5010
        %v5211 = vpack.c.b16 %v5027, %v5019
        %v5212 = vpack.c.b16 %v5028, %v5020
        %v5213 = vpack.c.b16 %v5029, %v5021
        %v5214 = vpack.c.b16 %v5030, %v5022
        %v5215 = vpack.c.b16 %v5031, %v5023
        %v5216 = vpack.c.b16 %v5032, %v5024
        %v5217 = vpack.c.b16 %v5033, %v5025
        %v5218 = vpack.c.b16 %v5034, %v5026
        %v5219 = vpack.c.b16 %v5043, %v5035
        %v5220 = vpack.c.b16 %v5044, %v5036
        %v5221 = vpack.c.b16 %v5045, %v5037
        %v5222 = vpack.c.b16 %v5046, %v5038
        %v5223 = vpack.c.b16 %v5047, %v5039
        %v5224 = vpack.c.b16 %v5048, %v5040
        %v5225 = vpack.c.b16 %v5049, %v5041
        %v5226 = vpack.c.b16 %v5050, %v5042
        %v5227 = vpack.c.b16 %v5059, %v5051
        %v5228 = vpack.c.b16 %v5060, %v5052
        %v5229 = vpack.c.b16 %v5061, %v5053
        %v5230 = vpack.c.b16 %v5062, %v5054
        %v5231 = vpack.c.b16 %v5063, %v5055
        %v5232 = vpack.c.b16 %v5064, %v5056
        %v5233 = vpack.c.b16 %v5065, %v5057
        %v5234 = vpack.c.b16 %v5066, %v5058
        %v5235 = vpack.c.b16 %v5075, %v5067
        %v5236 = vpack.c.b16 %v5076, %v5068
        %v5237 = vpack.c.b16 %v5077, %v5069
        %v5238 = vpack.c.b16 %v5078, %v5070
        %v5239 = vpack.c.b16 %v5079, %v5071
        %v5240 = vpack.c.b16 %v5080, %v5072
        %v5241 = vpack.c.b16 %v5081, %v5073
        %v5242 = vpack.c.b16 %v5082, %v5074
        %v5243 = vpack.c.b16 %v5091, %v5083
        %v5244 = vpack.c.b16 %v5092, %v5084
        %v5245 = vpack.c.b16 %v5093, %v5085
        %v5246 = vpack.c.b16 %v5094, %v5086
        %v5247 = vpack.c.b16 %v5095, %v5087
        %v5248 = vpack.c.b16 %v5096, %v5088
        %v5249 = vpack.c.b16 %v5097, %v5089
        %v5250 = vpack.c.b16 %v5098, %v5090
        %v5251 = vpack.c.b16 %v5107, %v5099
        %v5252 = vpack.c.b16 %v5108, %v5100
        %v5253 = vpack.c.b16 %v5109, %v5101
        %v5254 = vpack.c.b16 %v5110, %v5102
        %v5255 = vpack.c.b16 %v5111, %v5103
        %v5256 = vpack.c.b16 %v5112, %v5104
        %v5257 = vpack.c.b16 %v5113, %v5105
        %v5258 = vpack.c.b16 %v5114, %v5106
        %v5259 = vpack.c.b16 %v5123, %v5115
        %v5260 = vpack.c.b16 %v5124, %v5116
        %v5261 = vpack.c.b16 %v5125, %v5117
        %v5262 = vpack.c.b16 %v5126, %v5118
        %v5263 = vpack.c.b16 %v5127, %v5119
        %v5264 = vpack.c.b16 %v5128, %v5120
        %v5265 = vpack.c.b16 %v5129, %v5121
        %v5266 = vpack.c.b16 %v5130, %v5122
        %v5267 = vpack.c.b16 %v5139, %v5131
        %v5268 = vpack.c.b16 %v5140, %v5132
        %v5269 = vpack.c.b16 %v5141, %v5133
        %v5270 = vpack.c.b16 %v5142, %v5134
        %v5271 = vpack.c.b16 %v5143, %v5135
        %v5272 = vpack.c.b16 %v5144, %v5136
        %v5273 = vpack.c.b16 %v5145, %v5137
        %v5274 = vpack.c.b16 %v5146, %v5138
        %5403 = vmatpush.bf16.msra.mxu0 %v5203
        %5404 = vmatpush.bf16.msra.mxu0 %v5195
        %5405 = vmatpush.bf16.msra.mxu0 %v5187
        %5406 = vmatpush.bf16.msra.mxu0 %v5179
        %5407 = vmatpush.bf16.msra.mxu0 %v5171
        %5408 = vmatpush.bf16.msra.mxu0 %v5163
        %5409 = vmatpush.bf16.msra.mxu0 %v5155
        %5410 = vmatpush.bf16.msra.mxu0 %v5147
        %5411 = vmatmul.bf16.gmra.mxu0 %v4615
        %v5412 = vpop.f32.mrf.mxu0
        %v5413 = vadd.f32 %v4747, %v5412
        %v5414 = vpop.f32.mrf.mxu0
        %5415 = vdwg.mxu0
        %5416 = vmatpush.bf16.msra.mxu0 %v5267
        %5417 = vmatpush.bf16.msra.mxu0 %v5259
        %5418 = vmatpush.bf16.msra.mxu0 %v5251
        %5419 = vmatpush.bf16.msra.mxu0 %v5243
        %5420 = vmatpush.bf16.msra.mxu0 %v5235
        %5421 = vmatpush.bf16.msra.mxu0 %v5227
        %5422 = vmatpush.bf16.msra.mxu0 %v5219
        %5423 = vmatpush.bf16.msra.mxu0 %v5211
        %5424 = vmatmul.bf16.gmra.mxu0 %v4616
        %v5425 = vpop.f32.mrf.mxu0
        %v5426 = vadd.f32 %v5413, %v5425
        %v5427 = vpop.f32.mrf.mxu0
        %5428 = vdwg.mxu0
        %5429 = vmatpush.bf16.msra.mxu0 %v5204
        %5430 = vmatpush.bf16.msra.mxu0 %v5196
        %5431 = vmatpush.bf16.msra.mxu0 %v5188
        %5432 = vmatpush.bf16.msra.mxu0 %v5180
        %5433 = vmatpush.bf16.msra.mxu0 %v5172
        %5434 = vmatpush.bf16.msra.mxu0 %v5164
        %5435 = vmatpush.bf16.msra.mxu0 %v5156
        %5436 = vmatpush.bf16.msra.mxu0 %v5148
        %5437 = vmatmul.bf16.gmra.mxu0 %v4615
        %v5438 = vpop.f32.mrf.mxu0
        %v5439 = vadd.f32 %v4748, %v5438
        %v5440 = vpop.f32.mrf.mxu0
        %5441 = vdwg.mxu0
        %5442 = vmatpush.bf16.msra.mxu0 %v5268
        %5443 = vmatpush.bf16.msra.mxu0 %v5260
        %5444 = vmatpush.bf16.msra.mxu0 %v5252
        %5445 = vmatpush.bf16.msra.mxu0 %v5244
        %5446 = vmatpush.bf16.msra.mxu0 %v5236
        %5447 = vmatpush.bf16.msra.mxu0 %v5228
        %5448 = vmatpush.bf16.msra.mxu0 %v5220
        %5449 = vmatpush.bf16.msra.mxu0 %v5212
        %5450 = vmatmul.bf16.gmra.mxu0 %v4616
        %v5451 = vpop.f32.mrf.mxu0
        %v5452 = vadd.f32 %v5439, %v5451
        %v5453 = vpop.f32.mrf.mxu0
        %5454 = vdwg.mxu0
        %5455 = vmatpush.bf16.msra.mxu0 %v5205
        %5456 = vmatpush.bf16.msra.mxu0 %v5197
        %5457 = vmatpush.bf16.msra.mxu0 %v5189
        %5458 = vmatpush.bf16.msra.mxu0 %v5181
        %5459 = vmatpush.bf16.msra.mxu0 %v5173
        %5460 = vmatpush.bf16.msra.mxu0 %v5165
        %5461 = vmatpush.bf16.msra.mxu0 %v5157
        %5462 = vmatpush.bf16.msra.mxu0 %v5149
        %5463 = vmatmul.bf16.gmra.mxu0 %v4615
        %v5464 = vpop.f32.mrf.mxu0
        %v5465 = vadd.f32 %v4749, %v5464
        %v5466 = vpop.f32.mrf.mxu0
        %5467 = vdwg.mxu0
        %5468 = vmatpush.bf16.msra.mxu0 %v5269
        %5469 = vmatpush.bf16.msra.mxu0 %v5261
        %5470 = vmatpush.bf16.msra.mxu0 %v5253
        %5471 = vmatpush.bf16.msra.mxu0 %v5245
        %5472 = vmatpush.bf16.msra.mxu0 %v5237
        %5473 = vmatpush.bf16.msra.mxu0 %v5229
        %5474 = vmatpush.bf16.msra.mxu0 %v5221
        %5475 = vmatpush.bf16.msra.mxu0 %v5213
        %5476 = vmatmul.bf16.gmra.mxu0 %v4616
        %v5477 = vpop.f32.mrf.mxu0
        %v5478 = vadd.f32 %v5465, %v5477
        %v5479 = vpop.f32.mrf.mxu0
        %5480 = vdwg.mxu0
        %5481 = vmatpush.bf16.msra.mxu0 %v5206
        %5482 = vmatpush.bf16.msra.mxu0 %v5198
        %5483 = vmatpush.bf16.msra.mxu0 %v5190
        %5484 = vmatpush.bf16.msra.mxu0 %v5182
        %5485 = vmatpush.bf16.msra.mxu0 %v5174
        %5486 = vmatpush.bf16.msra.mxu0 %v5166
        %5487 = vmatpush.bf16.msra.mxu0 %v5158
        %5488 = vmatpush.bf16.msra.mxu0 %v5150
        %5489 = vmatmul.bf16.gmra.mxu0 %v4615
        %v5490 = vpop.f32.mrf.mxu0
        %v5491 = vadd.f32 %v4750, %v5490
        %v5492 = vpop.f32.mrf.mxu0
        %5493 = vdwg.mxu0
        %5494 = vmatpush.bf16.msra.mxu0 %v5270
        %5495 = vmatpush.bf16.msra.mxu0 %v5262
        %5496 = vmatpush.bf16.msra.mxu0 %v5254
        %5497 = vmatpush.bf16.msra.mxu0 %v5246
        %5498 = vmatpush.bf16.msra.mxu0 %v5238
        %5499 = vmatpush.bf16.msra.mxu0 %v5230
        %5500 = vmatpush.bf16.msra.mxu0 %v5222
        %5501 = vmatpush.bf16.msra.mxu0 %v5214
        %5502 = vmatmul.bf16.gmra.mxu0 %v4616
        %v5503 = vpop.f32.mrf.mxu0
        %v5504 = vadd.f32 %v5491, %v5503
        %v5505 = vpop.f32.mrf.mxu0
        %5506 = vdwg.mxu0
        %5507 = vmatpush.bf16.msra.mxu0 %v5207
        %5508 = vmatpush.bf16.msra.mxu0 %v5199
        %5509 = vmatpush.bf16.msra.mxu0 %v5191
        %5510 = vmatpush.bf16.msra.mxu0 %v5183
        %5511 = vmatpush.bf16.msra.mxu0 %v5175
        %5512 = vmatpush.bf16.msra.mxu0 %v5167
        %5513 = vmatpush.bf16.msra.mxu0 %v5159
        %5514 = vmatpush.bf16.msra.mxu0 %v5151
        %5515 = vmatmul.bf16.gmra.mxu0 %v4615
        %v5516 = vpop.f32.mrf.mxu0
        %v5517 = vadd.f32 %v4751, %v5516
        %v5518 = vpop.f32.mrf.mxu0
        %5519 = vdwg.mxu0
        %5520 = vmatpush.bf16.msra.mxu0 %v5271
        %5521 = vmatpush.bf16.msra.mxu0 %v5263
        %5522 = vmatpush.bf16.msra.mxu0 %v5255
        %5523 = vmatpush.bf16.msra.mxu0 %v5247
        %5524 = vmatpush.bf16.msra.mxu0 %v5239
        %5525 = vmatpush.bf16.msra.mxu0 %v5231
        %5526 = vmatpush.bf16.msra.mxu0 %v5223
        %5527 = vmatpush.bf16.msra.mxu0 %v5215
        %5528 = vmatmul.bf16.gmra.mxu0 %v4616
        %v5529 = vpop.f32.mrf.mxu0
        %v5530 = vadd.f32 %v5517, %v5529
        %v5531 = vpop.f32.mrf.mxu0
        %5532 = vdwg.mxu0
        %5533 = vmatpush.bf16.msra.mxu0 %v5208
        %5534 = vmatpush.bf16.msra.mxu0 %v5200
        %5535 = vmatpush.bf16.msra.mxu0 %v5192
        %5536 = vmatpush.bf16.msra.mxu0 %v5184
        %5537 = vmatpush.bf16.msra.mxu0 %v5176
        %5538 = vmatpush.bf16.msra.mxu0 %v5168
        %5539 = vmatpush.bf16.msra.mxu0 %v5160
        %5540 = vmatpush.bf16.msra.mxu0 %v5152
        %5541 = vmatmul.bf16.gmra.mxu0 %v4615
        %v5542 = vpop.f32.mrf.mxu0
        %v5543 = vadd.f32 %v4752, %v5542
        %v5544 = vpop.f32.mrf.mxu0
        %5545 = vdwg.mxu0
        %5546 = vmatpush.bf16.msra.mxu0 %v5272
        %5547 = vmatpush.bf16.msra.mxu0 %v5264
        %5548 = vmatpush.bf16.msra.mxu0 %v5256
        %5549 = vmatpush.bf16.msra.mxu0 %v5248
        %5550 = vmatpush.bf16.msra.mxu0 %v5240
        %5551 = vmatpush.bf16.msra.mxu0 %v5232
        %5552 = vmatpush.bf16.msra.mxu0 %v5224
        %5553 = vmatpush.bf16.msra.mxu0 %v5216
        %5554 = vmatmul.bf16.gmra.mxu0 %v4616
        %v5555 = vpop.f32.mrf.mxu0
        %v5556 = vadd.f32 %v5543, %v5555
        %v5557 = vpop.f32.mrf.mxu0
        %5558 = vdwg.mxu0
        %5559 = vmatpush.bf16.msra.mxu0 %v5209
        %5560 = vmatpush.bf16.msra.mxu0 %v5201
        %5561 = vmatpush.bf16.msra.mxu0 %v5193
        %5562 = vmatpush.bf16.msra.mxu0 %v5185
        %5563 = vmatpush.bf16.msra.mxu0 %v5177
        %5564 = vmatpush.bf16.msra.mxu0 %v5169
        %5565 = vmatpush.bf16.msra.mxu0 %v5161
        %5566 = vmatpush.bf16.msra.mxu0 %v5153
        %5567 = vmatmul.bf16.gmra.mxu0 %v4615
        %v5568 = vpop.f32.mrf.mxu0
        %v5569 = vadd.f32 %v4753, %v5568
        %v5570 = vpop.f32.mrf.mxu0
        %5571 = vdwg.mxu0
        %5572 = vmatpush.bf16.msra.mxu0 %v5273
        %5573 = vmatpush.bf16.msra.mxu0 %v5265
        %5574 = vmatpush.bf16.msra.mxu0 %v5257
        %5575 = vmatpush.bf16.msra.mxu0 %v5249
        %5576 = vmatpush.bf16.msra.mxu0 %v5241
        %5577 = vmatpush.bf16.msra.mxu0 %v5233
        %5578 = vmatpush.bf16.msra.mxu0 %v5225
        %5579 = vmatpush.bf16.msra.mxu0 %v5217
        %5580 = vmatmul.bf16.gmra.mxu0 %v4616
        %v5581 = vpop.f32.mrf.mxu0
        %v5582 = vadd.f32 %v5569, %v5581
        %v5583 = vpop.f32.mrf.mxu0
        %5584 = vdwg.mxu0
        %5585 = vmatpush.bf16.msra.mxu0 %v5210
        %5586 = vmatpush.bf16.msra.mxu0 %v5202
        %5587 = vmatpush.bf16.msra.mxu0 %v5194
        %5588 = vmatpush.bf16.msra.mxu0 %v5186
        %5589 = vmatpush.bf16.msra.mxu0 %v5178
        %5590 = vmatpush.bf16.msra.mxu0 %v5170
        %5591 = vmatpush.bf16.msra.mxu0 %v5162
        %5592 = vmatpush.bf16.msra.mxu0 %v5154
        %5593 = vmatmul.bf16.gmra.mxu0 %v4615
        %v5594 = vpop.f32.mrf.mxu0
        %v5595 = vadd.f32 %v4754, %v5594
        %v5596 = vpop.f32.mrf.mxu0
        %5597 = vdwg.mxu0
        %5598 = vmatpush.bf16.msra.mxu0 %v5274
        %5599 = vmatpush.bf16.msra.mxu0 %v5266
        %5600 = vmatpush.bf16.msra.mxu0 %v5258
        %5601 = vmatpush.bf16.msra.mxu0 %v5250
        %5602 = vmatpush.bf16.msra.mxu0 %v5242
        %5603 = vmatpush.bf16.msra.mxu0 %v5234
        %5604 = vmatpush.bf16.msra.mxu0 %v5226
        %5605 = vmatpush.bf16.msra.mxu0 %v5218
        %5606 = vmatmul.bf16.gmra.mxu0 %v4616
        %v5607 = vpop.f32.mrf.mxu0
        %v5608 = vadd.f32 %v5595, %v5607
        %v5609 = vpop.f32.mrf.mxu0
        %5610 = vdwg.mxu0
        %v5611 = vmax.f32 %v5426, 0.0
        %v5612 = vmax.f32 %v5452, 0.0
        %v5613 = vmax.f32 %v5478, 0.0
        %v5614 = vmax.f32 %v5504, 0.0
        %v5615 = vmax.f32 %v5530, 0.0
        %v5616 = vmax.f32 %v5556, 0.0
        %v5617 = vmax.f32 %v5582, 0.0
        %v5618 = vmax.f32 %v5608, 0.0
        %v5619 = vpack.c.bf16 %v5611, %v5611
        %v5620 = vpack.c.bf16 %v5612, %v5612
        %v5621 = vpack.c.bf16 %v5613, %v5613
        %v5622 = vpack.c.bf16 %v5614, %v5614
        %v5623 = vpack.c.bf16 %v5615, %v5615
        %v5624 = vpack.c.bf16 %v5616, %v5616
        %v5625 = vpack.c.bf16 %v5617, %v5617
        %v5626 = vpack.c.bf16 %v5618, %v5618
        %v5627 = vld [vmem:[%s1138] sm:$0xff]
        %v5628 = vld [vmem:[%s1138 + $0x8] sm:$0xff]
        %v5629 = vld [vmem:[%s1138 + $0x10] sm:$0xff]
        %v5630 = vld [vmem:[%s1138 + $0x18] sm:$0xff]
        %v5631 = vld [vmem:[%s1138 + $0x20] sm:$0xff]
        %v5632 = vld [vmem:[%s1138 + $0x28] sm:$0xff]
        %v5633 = vld [vmem:[%s1138 + $0x30] sm:$0xff]
        %v5634 = vld [vmem:[%s1138 + $0x38] sm:$0xff]
        %v5635 = vld [vmem:[%s1138 + $0x40] sm:$0xff]
        %v5636 = vld [vmem:[%s1138 + $0x48] sm:$0xff]
        %v5637 = vld [vmem:[%s1138 + $0x50] sm:$0xff]
        %v5638 = vld [vmem:[%s1138 + $0x58] sm:$0xff]
        %v5639 = vld [vmem:[%s1138 + $0x60] sm:$0xff]
        %v5640 = vld [vmem:[%s1138 + $0x68] sm:$0xff]
        %v5641 = vld [vmem:[%s1138 + $0x70] sm:$0xff]
        %v5642 = vld [vmem:[%s1138 + $0x78] sm:$0xff]
        %v5643 = vld [vmem:[%s1138 + $0x80] sm:$0xff]
        %v5644 = vld [vmem:[%s1138 + $0x88] sm:$0xff]
        %v5645 = vld [vmem:[%s1138 + $0x90] sm:$0xff]
        %v5646 = vld [vmem:[%s1138 + $0x98] sm:$0xff]
        %v5647 = vld [vmem:[%s1138 + $0xa0] sm:$0xff]
        %v5648 = vld [vmem:[%s1138 + $0xa8] sm:$0xff]
        %v5649 = vld [vmem:[%s1138 + $0xb0] sm:$0xff]
        %v5650 = vld [vmem:[%s1138 + $0xb8] sm:$0xff]
        %v5651 = vld [vmem:[%s1138 + $0xc0] sm:$0xff]
        %v5652 = vld [vmem:[%s1138 + $0xc8] sm:$0xff]
        %v5653 = vld [vmem:[%s1138 + $0xd0] sm:$0xff]
        %v5654 = vld [vmem:[%s1138 + $0xd8] sm:$0xff]
        %v5655 = vld [vmem:[%s1138 + $0xe0] sm:$0xff]
        %v5656 = vld [vmem:[%s1138 + $0xe8] sm:$0xff]
        %v5657 = vld [vmem:[%s1138 + $0xf0] sm:$0xff]
        %v5658 = vld [vmem:[%s1138 + $0xf8] sm:$0xff]
        %v5659 = vld [vmem:[%s1138 + $0x100] sm:$0xff]
        %v5660 = vld [vmem:[%s1138 + $0x108] sm:$0xff]
        %v5661 = vld [vmem:[%s1138 + $0x110] sm:$0xff]
        %v5662 = vld [vmem:[%s1138 + $0x118] sm:$0xff]
        %v5663 = vld [vmem:[%s1138 + $0x120] sm:$0xff]
        %v5664 = vld [vmem:[%s1138 + $0x128] sm:$0xff]
        %v5665 = vld [vmem:[%s1138 + $0x130] sm:$0xff]
        %v5666 = vld [vmem:[%s1138 + $0x138] sm:$0xff]
        %v5667 = vld [vmem:[%s1138 + $0x140] sm:$0xff]
        %v5668 = vld [vmem:[%s1138 + $0x148] sm:$0xff]
        %v5669 = vld [vmem:[%s1138 + $0x150] sm:$0xff]
        %v5670 = vld [vmem:[%s1138 + $0x158] sm:$0xff]
        %v5671 = vld [vmem:[%s1138 + $0x160] sm:$0xff]
        %v5672 = vld [vmem:[%s1138 + $0x168] sm:$0xff]
        %v5673 = vld [vmem:[%s1138 + $0x170] sm:$0xff]
        %v5674 = vld [vmem:[%s1138 + $0x178] sm:$0xff]
        %v5675 = vld [vmem:[%s1138 + $0x180] sm:$0xff]
        %v5676 = vld [vmem:[%s1138 + $0x188] sm:$0xff]
        %v5677 = vld [vmem:[%s1138 + $0x190] sm:$0xff]
        %v5678 = vld [vmem:[%s1138 + $0x198] sm:$0xff]
        %v5679 = vld [vmem:[%s1138 + $0x1a0] sm:$0xff]
        %v5680 = vld [vmem:[%s1138 + $0x1a8] sm:$0xff]
        %v5681 = vld [vmem:[%s1138 + $0x1b0] sm:$0xff]
        %v5682 = vld [vmem:[%s1138 + $0x1b8] sm:$0xff]
        %v5683 = vld [vmem:[%s1138 + $0x1c0] sm:$0xff]
        %v5684 = vld [vmem:[%s1138 + $0x1c8] sm:$0xff]
        %v5685 = vld [vmem:[%s1138 + $0x1d0] sm:$0xff]
        %v5686 = vld [vmem:[%s1138 + $0x1d8] sm:$0xff]
        %v5687 = vld [vmem:[%s1138 + $0x1e0] sm:$0xff]
        %v5688 = vld [vmem:[%s1138 + $0x1e8] sm:$0xff]
        %v5689 = vld [vmem:[%s1138 + $0x1f0] sm:$0xff]
        %v5690 = vld [vmem:[%s1138 + $0x1f8] sm:$0xff]
        %v5691 = vld [vmem:[%s1138 + $0x200] sm:$0xff]
        %v5692 = vld [vmem:[%s1138 + $0x208] sm:$0xff]
        %v5693 = vld [vmem:[%s1138 + $0x210] sm:$0xff]
        %v5694 = vld [vmem:[%s1138 + $0x218] sm:$0xff]
        %v5695 = vld [vmem:[%s1138 + $0x220] sm:$0xff]
        %v5696 = vld [vmem:[%s1138 + $0x228] sm:$0xff]
        %v5697 = vld [vmem:[%s1138 + $0x230] sm:$0xff]
        %v5698 = vld [vmem:[%s1138 + $0x238] sm:$0xff]
        %v5699 = vld [vmem:[%s1138 + $0x240] sm:$0xff]
        %v5700 = vld [vmem:[%s1138 + $0x248] sm:$0xff]
        %v5701 = vld [vmem:[%s1138 + $0x250] sm:$0xff]
        %v5702 = vld [vmem:[%s1138 + $0x258] sm:$0xff]
        %v5703 = vld [vmem:[%s1138 + $0x260] sm:$0xff]
        %v5704 = vld [vmem:[%s1138 + $0x268] sm:$0xff]
        %v5705 = vld [vmem:[%s1138 + $0x270] sm:$0xff]
        %v5706 = vld [vmem:[%s1138 + $0x278] sm:$0xff]
        %v5707 = vld [vmem:[%s1138 + $0x280] sm:$0xff]
        %v5708 = vld [vmem:[%s1138 + $0x288] sm:$0xff]
        %v5709 = vld [vmem:[%s1138 + $0x290] sm:$0xff]
        %v5710 = vld [vmem:[%s1138 + $0x298] sm:$0xff]
        %v5711 = vld [vmem:[%s1138 + $0x2a0] sm:$0xff]
        %v5712 = vld [vmem:[%s1138 + $0x2a8] sm:$0xff]
        %v5713 = vld [vmem:[%s1138 + $0x2b0] sm:$0xff]
        %v5714 = vld [vmem:[%s1138 + $0x2b8] sm:$0xff]
        %v5715 = vld [vmem:[%s1138 + $0x2c0] sm:$0xff]
        %v5716 = vld [vmem:[%s1138 + $0x2c8] sm:$0xff]
        %v5717 = vld [vmem:[%s1138 + $0x2d0] sm:$0xff]
        %v5718 = vld [vmem:[%s1138 + $0x2d8] sm:$0xff]
        %v5719 = vld [vmem:[%s1138 + $0x2e0] sm:$0xff]
        %v5720 = vld [vmem:[%s1138 + $0x2e8] sm:$0xff]
        %v5721 = vld [vmem:[%s1138 + $0x2f0] sm:$0xff]
        %v5722 = vld [vmem:[%s1138 + $0x2f8] sm:$0xff]
        %v5723 = vld [vmem:[%s1138 + $0x300] sm:$0xff]
        %v5724 = vld [vmem:[%s1138 + $0x308] sm:$0xff]
        %v5725 = vld [vmem:[%s1138 + $0x310] sm:$0xff]
        %v5726 = vld [vmem:[%s1138 + $0x318] sm:$0xff]
        %v5727 = vld [vmem:[%s1138 + $0x320] sm:$0xff]
        %v5728 = vld [vmem:[%s1138 + $0x328] sm:$0xff]
        %v5729 = vld [vmem:[%s1138 + $0x330] sm:$0xff]
        %v5730 = vld [vmem:[%s1138 + $0x338] sm:$0xff]
        %v5731 = vld [vmem:[%s1138 + $0x340] sm:$0xff]
        %v5732 = vld [vmem:[%s1138 + $0x348] sm:$0xff]
        %v5733 = vld [vmem:[%s1138 + $0x350] sm:$0xff]
        %v5734 = vld [vmem:[%s1138 + $0x358] sm:$0xff]
        %v5735 = vld [vmem:[%s1138 + $0x360] sm:$0xff]
        %v5736 = vld [vmem:[%s1138 + $0x368] sm:$0xff]
        %v5737 = vld [vmem:[%s1138 + $0x370] sm:$0xff]
        %v5738 = vld [vmem:[%s1138 + $0x378] sm:$0xff]
        %v5739 = vld [vmem:[%s1138 + $0x380] sm:$0xff]
        %v5740 = vld [vmem:[%s1138 + $0x388] sm:$0xff]
        %v5741 = vld [vmem:[%s1138 + $0x390] sm:$0xff]
        %v5742 = vld [vmem:[%s1138 + $0x398] sm:$0xff]
        %v5743 = vld [vmem:[%s1138 + $0x3a0] sm:$0xff]
        %v5744 = vld [vmem:[%s1138 + $0x3a8] sm:$0xff]
        %v5745 = vld [vmem:[%s1138 + $0x3b0] sm:$0xff]
        %v5746 = vld [vmem:[%s1138 + $0x3b8] sm:$0xff]
        %v5747 = vld [vmem:[%s1138 + $0x3c0] sm:$0xff]
        %v5748 = vld [vmem:[%s1138 + $0x3c8] sm:$0xff]
        %v5749 = vld [vmem:[%s1138 + $0x3d0] sm:$0xff]
        %v5750 = vld [vmem:[%s1138 + $0x3d8] sm:$0xff]
        %v5751 = vld [vmem:[%s1138 + $0x3e0] sm:$0xff]
        %v5752 = vld [vmem:[%s1138 + $0x3e8] sm:$0xff]
        %v5753 = vld [vmem:[%s1138 + $0x3f0] sm:$0xff]
        %v5754 = vld [vmem:[%s1138 + $0x3f8] sm:$0xff]
        %v5755 = vld [vmem:[%s1309] sm:$0x3]
        %v5757 = vperm.slane %v5755, 0
        %v5758 = vperm.slane %v5755, 1
        %v5889 = vunpack.c.l.b16 %v5627
        %v5890 = vunpack.c.h.b16 %v5627
        %v5891 = vunpack.c.l.b16 %v5628
        %v5892 = vunpack.c.h.b16 %v5628
        %v5893 = vunpack.c.l.b16 %v5629
        %v5894 = vunpack.c.h.b16 %v5629
        %v5895 = vunpack.c.l.b16 %v5630
        %v5896 = vunpack.c.h.b16 %v5630
        %v5897 = vunpack.c.l.b16 %v5631
        %v5898 = vunpack.c.h.b16 %v5631
        %v5899 = vunpack.c.l.b16 %v5632
        %v5900 = vunpack.c.h.b16 %v5632
        %v5901 = vunpack.c.l.b16 %v5633
        %v5902 = vunpack.c.h.b16 %v5633
        %v5903 = vunpack.c.l.b16 %v5634
        %v5904 = vunpack.c.h.b16 %v5634
        %v5905 = vunpack.c.l.b16 %v5635
        %v5906 = vunpack.c.h.b16 %v5635
        %v5907 = vunpack.c.l.b16 %v5636
        %v5908 = vunpack.c.h.b16 %v5636
        %v5909 = vunpack.c.l.b16 %v5637
        %v5910 = vunpack.c.h.b16 %v5637
        %v5911 = vunpack.c.l.b16 %v5638
        %v5912 = vunpack.c.h.b16 %v5638
        %v5913 = vunpack.c.l.b16 %v5639
        %v5914 = vunpack.c.h.b16 %v5639
        %v5915 = vunpack.c.l.b16 %v5640
        %v5916 = vunpack.c.h.b16 %v5640
        %v5917 = vunpack.c.l.b16 %v5641
        %v5918 = vunpack.c.h.b16 %v5641
        %v5919 = vunpack.c.l.b16 %v5642
        %v5920 = vunpack.c.h.b16 %v5642
        %v5921 = vunpack.c.l.b16 %v5643
        %v5922 = vunpack.c.h.b16 %v5643
        %v5923 = vunpack.c.l.b16 %v5644
        %v5924 = vunpack.c.h.b16 %v5644
        %v5925 = vunpack.c.l.b16 %v5645
        %v5926 = vunpack.c.h.b16 %v5645
        %v5927 = vunpack.c.l.b16 %v5646
        %v5928 = vunpack.c.h.b16 %v5646
        %v5929 = vunpack.c.l.b16 %v5647
        %v5930 = vunpack.c.h.b16 %v5647
        %v5931 = vunpack.c.l.b16 %v5648
        %v5932 = vunpack.c.h.b16 %v5648
        %v5933 = vunpack.c.l.b16 %v5649
        %v5934 = vunpack.c.h.b16 %v5649
        %v5935 = vunpack.c.l.b16 %v5650
        %v5936 = vunpack.c.h.b16 %v5650
        %v5937 = vunpack.c.l.b16 %v5651
        %v5938 = vunpack.c.h.b16 %v5651
        %v5939 = vunpack.c.l.b16 %v5652
        %v5940 = vunpack.c.h.b16 %v5652
        %v5941 = vunpack.c.l.b16 %v5653
        %v5942 = vunpack.c.h.b16 %v5653
        %v5943 = vunpack.c.l.b16 %v5654
        %v5944 = vunpack.c.h.b16 %v5654
        %v5945 = vunpack.c.l.b16 %v5655
        %v5946 = vunpack.c.h.b16 %v5655
        %v5947 = vunpack.c.l.b16 %v5656
        %v5948 = vunpack.c.h.b16 %v5656
        %v5949 = vunpack.c.l.b16 %v5657
        %v5950 = vunpack.c.h.b16 %v5657
        %v5951 = vunpack.c.l.b16 %v5658
        %v5952 = vunpack.c.h.b16 %v5658
        %v5953 = vunpack.c.l.b16 %v5659
        %v5954 = vunpack.c.h.b16 %v5659
        %v5955 = vunpack.c.l.b16 %v5660
        %v5956 = vunpack.c.h.b16 %v5660
        %v5957 = vunpack.c.l.b16 %v5661
        %v5958 = vunpack.c.h.b16 %v5661
        %v5959 = vunpack.c.l.b16 %v5662
        %v5960 = vunpack.c.h.b16 %v5662
        %v5961 = vunpack.c.l.b16 %v5663
        %v5962 = vunpack.c.h.b16 %v5663
        %v5963 = vunpack.c.l.b16 %v5664
        %v5964 = vunpack.c.h.b16 %v5664
        %v5965 = vunpack.c.l.b16 %v5665
        %v5966 = vunpack.c.h.b16 %v5665
        %v5967 = vunpack.c.l.b16 %v5666
        %v5968 = vunpack.c.h.b16 %v5666
        %v5969 = vunpack.c.l.b16 %v5667
        %v5970 = vunpack.c.h.b16 %v5667
        %v5971 = vunpack.c.l.b16 %v5668
        %v5972 = vunpack.c.h.b16 %v5668
        %v5973 = vunpack.c.l.b16 %v5669
        %v5974 = vunpack.c.h.b16 %v5669
        %v5975 = vunpack.c.l.b16 %v5670
        %v5976 = vunpack.c.h.b16 %v5670
        %v5977 = vunpack.c.l.b16 %v5671
        %v5978 = vunpack.c.h.b16 %v5671
        %v5979 = vunpack.c.l.b16 %v5672
        %v5980 = vunpack.c.h.b16 %v5672
        %v5981 = vunpack.c.l.b16 %v5673
        %v5982 = vunpack.c.h.b16 %v5673
        %v5983 = vunpack.c.l.b16 %v5674
        %v5984 = vunpack.c.h.b16 %v5674
        %v5985 = vunpack.c.l.b16 %v5675
        %v5986 = vunpack.c.h.b16 %v5675
        %v5987 = vunpack.c.l.b16 %v5676
        %v5988 = vunpack.c.h.b16 %v5676
        %v5989 = vunpack.c.l.b16 %v5677
        %v5990 = vunpack.c.h.b16 %v5677
        %v5991 = vunpack.c.l.b16 %v5678
        %v5992 = vunpack.c.h.b16 %v5678
        %v5993 = vunpack.c.l.b16 %v5679
        %v5994 = vunpack.c.h.b16 %v5679
        %v5995 = vunpack.c.l.b16 %v5680
        %v5996 = vunpack.c.h.b16 %v5680
        %v5997 = vunpack.c.l.b16 %v5681
        %v5998 = vunpack.c.h.b16 %v5681
        %v5999 = vunpack.c.l.b16 %v5682
        %v6000 = vunpack.c.h.b16 %v5682
        %v6001 = vunpack.c.l.b16 %v5683
        %v6002 = vunpack.c.h.b16 %v5683
        %v6003 = vunpack.c.l.b16 %v5684
        %v6004 = vunpack.c.h.b16 %v5684
        %v6005 = vunpack.c.l.b16 %v5685
        %v6006 = vunpack.c.h.b16 %v5685
        %v6007 = vunpack.c.l.b16 %v5686
        %v6008 = vunpack.c.h.b16 %v5686
        %v6009 = vunpack.c.l.b16 %v5687
        %v6010 = vunpack.c.h.b16 %v5687
        %v6011 = vunpack.c.l.b16 %v5688
        %v6012 = vunpack.c.h.b16 %v5688
        %v6013 = vunpack.c.l.b16 %v5689
        %v6014 = vunpack.c.h.b16 %v5689
        %v6015 = vunpack.c.l.b16 %v5690
        %v6016 = vunpack.c.h.b16 %v5690
        %v6017 = vunpack.c.l.b16 %v5691
        %v6018 = vunpack.c.h.b16 %v5691
        %v6019 = vunpack.c.l.b16 %v5692
        %v6020 = vunpack.c.h.b16 %v5692
        %v6021 = vunpack.c.l.b16 %v5693
        %v6022 = vunpack.c.h.b16 %v5693
        %v6023 = vunpack.c.l.b16 %v5694
        %v6024 = vunpack.c.h.b16 %v5694
        %v6025 = vunpack.c.l.b16 %v5695
        %v6026 = vunpack.c.h.b16 %v5695
        %v6027 = vunpack.c.l.b16 %v5696
        %v6028 = vunpack.c.h.b16 %v5696
        %v6029 = vunpack.c.l.b16 %v5697
        %v6030 = vunpack.c.h.b16 %v5697
        %v6031 = vunpack.c.l.b16 %v5698
        %v6032 = vunpack.c.h.b16 %v5698
        %v6033 = vunpack.c.l.b16 %v5699
        %v6034 = vunpack.c.h.b16 %v5699
        %v6035 = vunpack.c.l.b16 %v5700
        %v6036 = vunpack.c.h.b16 %v5700
        %v6037 = vunpack.c.l.b16 %v5701
        %v6038 = vunpack.c.h.b16 %v5701
        %v6039 = vunpack.c.l.b16 %v5702
        %v6040 = vunpack.c.h.b16 %v5702
        %v6041 = vunpack.c.l.b16 %v5703
        %v6042 = vunpack.c.h.b16 %v5703
        %v6043 = vunpack.c.l.b16 %v5704
        %v6044 = vunpack.c.h.b16 %v5704
        %v6045 = vunpack.c.l.b16 %v5705
        %v6046 = vunpack.c.h.b16 %v5705
        %v6047 = vunpack.c.l.b16 %v5706
        %v6048 = vunpack.c.h.b16 %v5706
        %v6049 = vunpack.c.l.b16 %v5707
        %v6050 = vunpack.c.h.b16 %v5707
        %v6051 = vunpack.c.l.b16 %v5708
        %v6052 = vunpack.c.h.b16 %v5708
        %v6053 = vunpack.c.l.b16 %v5709
        %v6054 = vunpack.c.h.b16 %v5709
        %v6055 = vunpack.c.l.b16 %v5710
        %v6056 = vunpack.c.h.b16 %v5710
        %v6057 = vunpack.c.l.b16 %v5711
        %v6058 = vunpack.c.h.b16 %v5711
        %v6059 = vunpack.c.l.b16 %v5712
        %v6060 = vunpack.c.h.b16 %v5712
        %v6061 = vunpack.c.l.b16 %v5713
        %v6062 = vunpack.c.h.b16 %v5713
        %v6063 = vunpack.c.l.b16 %v5714
        %v6064 = vunpack.c.h.b16 %v5714
        %v6065 = vunpack.c.l.b16 %v5715
        %v6066 = vunpack.c.h.b16 %v5715
        %v6067 = vunpack.c.l.b16 %v5716
        %v6068 = vunpack.c.h.b16 %v5716
        %v6069 = vunpack.c.l.b16 %v5717
        %v6070 = vunpack.c.h.b16 %v5717
        %v6071 = vunpack.c.l.b16 %v5718
        %v6072 = vunpack.c.h.b16 %v5718
        %v6073 = vunpack.c.l.b16 %v5719
        %v6074 = vunpack.c.h.b16 %v5719
        %v6075 = vunpack.c.l.b16 %v5720
        %v6076 = vunpack.c.h.b16 %v5720
        %v6077 = vunpack.c.l.b16 %v5721
        %v6078 = vunpack.c.h.b16 %v5721
        %v6079 = vunpack.c.l.b16 %v5722
        %v6080 = vunpack.c.h.b16 %v5722
        %v6081 = vunpack.c.l.b16 %v5723
        %v6082 = vunpack.c.h.b16 %v5723
        %v6083 = vunpack.c.l.b16 %v5724
        %v6084 = vunpack.c.h.b16 %v5724
        %v6085 = vunpack.c.l.b16 %v5725
        %v6086 = vunpack.c.h.b16 %v5725
        %v6087 = vunpack.c.l.b16 %v5726
        %v6088 = vunpack.c.h.b16 %v5726
        %v6089 = vunpack.c.l.b16 %v5727
        %v6090 = vunpack.c.h.b16 %v5727
        %v6091 = vunpack.c.l.b16 %v5728
        %v6092 = vunpack.c.h.b16 %v5728
        %v6093 = vunpack.c.l.b16 %v5729
        %v6094 = vunpack.c.h.b16 %v5729
        %v6095 = vunpack.c.l.b16 %v5730
        %v6096 = vunpack.c.h.b16 %v5730
        %v6097 = vunpack.c.l.b16 %v5731
        %v6098 = vunpack.c.h.b16 %v5731
        %v6099 = vunpack.c.l.b16 %v5732
        %v6100 = vunpack.c.h.b16 %v5732
        %v6101 = vunpack.c.l.b16 %v5733
        %v6102 = vunpack.c.h.b16 %v5733
        %v6103 = vunpack.c.l.b16 %v5734
        %v6104 = vunpack.c.h.b16 %v5734
        %v6105 = vunpack.c.l.b16 %v5735
        %v6106 = vunpack.c.h.b16 %v5735
        %v6107 = vunpack.c.l.b16 %v5736
        %v6108 = vunpack.c.h.b16 %v5736
        %v6109 = vunpack.c.l.b16 %v5737
        %v6110 = vunpack.c.h.b16 %v5737
        %v6111 = vunpack.c.l.b16 %v5738
        %v6112 = vunpack.c.h.b16 %v5738
        %v6113 = vunpack.c.l.b16 %v5739
        %v6114 = vunpack.c.h.b16 %v5739
        %v6115 = vunpack.c.l.b16 %v5740
        %v6116 = vunpack.c.h.b16 %v5740
        %v6117 = vunpack.c.l.b16 %v5741
        %v6118 = vunpack.c.h.b16 %v5741
        %v6119 = vunpack.c.l.b16 %v5742
        %v6120 = vunpack.c.h.b16 %v5742
        %v6121 = vunpack.c.l.b16 %v5743
        %v6122 = vunpack.c.h.b16 %v5743
        %v6123 = vunpack.c.l.b16 %v5744
        %v6124 = vunpack.c.h.b16 %v5744
        %v6125 = vunpack.c.l.b16 %v5745
        %v6126 = vunpack.c.h.b16 %v5745
        %v6127 = vunpack.c.l.b16 %v5746
        %v6128 = vunpack.c.h.b16 %v5746
        %v6129 = vunpack.c.l.b16 %v5747
        %v6130 = vunpack.c.h.b16 %v5747
        %v6131 = vunpack.c.l.b16 %v5748
        %v6132 = vunpack.c.h.b16 %v5748
        %v6133 = vunpack.c.l.b16 %v5749
        %v6134 = vunpack.c.h.b16 %v5749
        %v6135 = vunpack.c.l.b16 %v5750
        %v6136 = vunpack.c.h.b16 %v5750
        %v6137 = vunpack.c.l.b16 %v5751
        %v6138 = vunpack.c.h.b16 %v5751
        %v6139 = vunpack.c.l.b16 %v5752
        %v6140 = vunpack.c.h.b16 %v5752
        %v6141 = vunpack.c.l.b16 %v5753
        %v6142 = vunpack.c.h.b16 %v5753
        %v6143 = vunpack.c.l.b16 %v5754
        %v6144 = vunpack.c.h.b16 %v5754
        %v6145 = vpack.c.b16 %v5891, %v5889
        %v6146 = vpack.c.b16 %v5892, %v5890
        %v6147 = vpack.c.b16 %v5895, %v5893
        %v6148 = vpack.c.b16 %v5896, %v5894
        %v6149 = vpack.c.b16 %v5899, %v5897
        %v6150 = vpack.c.b16 %v5900, %v5898
        %v6151 = vpack.c.b16 %v5903, %v5901
        %v6152 = vpack.c.b16 %v5904, %v5902
        %v6153 = vpack.c.b16 %v5907, %v5905
        %v6154 = vpack.c.b16 %v5908, %v5906
        %v6155 = vpack.c.b16 %v5911, %v5909
        %v6156 = vpack.c.b16 %v5912, %v5910
        %v6157 = vpack.c.b16 %v5915, %v5913
        %v6158 = vpack.c.b16 %v5916, %v5914
        %v6159 = vpack.c.b16 %v5919, %v5917
        %v6160 = vpack.c.b16 %v5920, %v5918
        %v6161 = vpack.c.b16 %v5923, %v5921
        %v6162 = vpack.c.b16 %v5924, %v5922
        %v6163 = vpack.c.b16 %v5927, %v5925
        %v6164 = vpack.c.b16 %v5928, %v5926
        %v6165 = vpack.c.b16 %v5931, %v5929
        %v6166 = vpack.c.b16 %v5932, %v5930
        %v6167 = vpack.c.b16 %v5935, %v5933
        %v6168 = vpack.c.b16 %v5936, %v5934
        %v6169 = vpack.c.b16 %v5939, %v5937
        %v6170 = vpack.c.b16 %v5940, %v5938
        %v6171 = vpack.c.b16 %v5943, %v5941
        %v6172 = vpack.c.b16 %v5944, %v5942
        %v6173 = vpack.c.b16 %v5947, %v5945
        %v6174 = vpack.c.b16 %v5948, %v5946
        %v6175 = vpack.c.b16 %v5951, %v5949
        %v6176 = vpack.c.b16 %v5952, %v5950
        %v6177 = vpack.c.b16 %v5955, %v5953
        %v6178 = vpack.c.b16 %v5956, %v5954
        %v6179 = vpack.c.b16 %v5959, %v5957
        %v6180 = vpack.c.b16 %v5960, %v5958
        %v6181 = vpack.c.b16 %v5963, %v5961
        %v6182 = vpack.c.b16 %v5964, %v5962
        %v6183 = vpack.c.b16 %v5967, %v5965
        %v6184 = vpack.c.b16 %v5968, %v5966
        %v6185 = vpack.c.b16 %v5971, %v5969
        %v6186 = vpack.c.b16 %v5972, %v5970
        %v6187 = vpack.c.b16 %v5975, %v5973
        %v6188 = vpack.c.b16 %v5976, %v5974
        %v6189 = vpack.c.b16 %v5979, %v5977
        %v6190 = vpack.c.b16 %v5980, %v5978
        %v6191 = vpack.c.b16 %v5983, %v5981
        %v6192 = vpack.c.b16 %v5984, %v5982
        %v6193 = vpack.c.b16 %v5987, %v5985
        %v6194 = vpack.c.b16 %v5988, %v5986
        %v6195 = vpack.c.b16 %v5991, %v5989
        %v6196 = vpack.c.b16 %v5992, %v5990
        %v6197 = vpack.c.b16 %v5995, %v5993
        %v6198 = vpack.c.b16 %v5996, %v5994
        %v6199 = vpack.c.b16 %v5999, %v5997
        %v6200 = vpack.c.b16 %v6000, %v5998
        %v6201 = vpack.c.b16 %v6003, %v6001
        %v6202 = vpack.c.b16 %v6004, %v6002
        %v6203 = vpack.c.b16 %v6007, %v6005
        %v6204 = vpack.c.b16 %v6008, %v6006
        %v6205 = vpack.c.b16 %v6011, %v6009
        %v6206 = vpack.c.b16 %v6012, %v6010
        %v6207 = vpack.c.b16 %v6015, %v6013
        %v6208 = vpack.c.b16 %v6016, %v6014
        %v6209 = vpack.c.b16 %v6019, %v6017
        %v6210 = vpack.c.b16 %v6020, %v6018
        %v6211 = vpack.c.b16 %v6023, %v6021
        %v6212 = vpack.c.b16 %v6024, %v6022
        %v6213 = vpack.c.b16 %v6027, %v6025
        %v6214 = vpack.c.b16 %v6028, %v6026
        %v6215 = vpack.c.b16 %v6031, %v6029
        %v6216 = vpack.c.b16 %v6032, %v6030
        %v6217 = vpack.c.b16 %v6035, %v6033
        %v6218 = vpack.c.b16 %v6036, %v6034
        %v6219 = vpack.c.b16 %v6039, %v6037
        %v6220 = vpack.c.b16 %v6040, %v6038
        %v6221 = vpack.c.b16 %v6043, %v6041
        %v6222 = vpack.c.b16 %v6044, %v6042
        %v6223 = vpack.c.b16 %v6047, %v6045
        %v6224 = vpack.c.b16 %v6048, %v6046
        %v6225 = vpack.c.b16 %v6051, %v6049
        %v6226 = vpack.c.b16 %v6052, %v6050
        %v6227 = vpack.c.b16 %v6055, %v6053
        %v6228 = vpack.c.b16 %v6056, %v6054
        %v6229 = vpack.c.b16 %v6059, %v6057
        %v6230 = vpack.c.b16 %v6060, %v6058
        %v6231 = vpack.c.b16 %v6063, %v6061
        %v6232 = vpack.c.b16 %v6064, %v6062
        %v6233 = vpack.c.b16 %v6067, %v6065
        %v6234 = vpack.c.b16 %v6068, %v6066
        %v6235 = vpack.c.b16 %v6071, %v6069
        %v6236 = vpack.c.b16 %v6072, %v6070
        %v6237 = vpack.c.b16 %v6075, %v6073
        %v6238 = vpack.c.b16 %v6076, %v6074
        %v6239 = vpack.c.b16 %v6079, %v6077
        %v6240 = vpack.c.b16 %v6080, %v6078
        %v6241 = vpack.c.b16 %v6083, %v6081
        %v6242 = vpack.c.b16 %v6084, %v6082
        %v6243 = vpack.c.b16 %v6087, %v6085
        %v6244 = vpack.c.b16 %v6088, %v6086
        %v6245 = vpack.c.b16 %v6091, %v6089
        %v6246 = vpack.c.b16 %v6092, %v6090
        %v6247 = vpack.c.b16 %v6095, %v6093
        %v6248 = vpack.c.b16 %v6096, %v6094
        %v6249 = vpack.c.b16 %v6099, %v6097
        %v6250 = vpack.c.b16 %v6100, %v6098
        %v6251 = vpack.c.b16 %v6103, %v6101
        %v6252 = vpack.c.b16 %v6104, %v6102
        %v6253 = vpack.c.b16 %v6107, %v6105
        %v6254 = vpack.c.b16 %v6108, %v6106
        %v6255 = vpack.c.b16 %v6111, %v6109
        %v6256 = vpack.c.b16 %v6112, %v6110
        %v6257 = vpack.c.b16 %v6115, %v6113
        %v6258 = vpack.c.b16 %v6116, %v6114
        %v6259 = vpack.c.b16 %v6119, %v6117
        %v6260 = vpack.c.b16 %v6120, %v6118
        %v6261 = vpack.c.b16 %v6123, %v6121
        %v6262 = vpack.c.b16 %v6124, %v6122
        %v6263 = vpack.c.b16 %v6127, %v6125
        %v6264 = vpack.c.b16 %v6128, %v6126
        %v6265 = vpack.c.b16 %v6131, %v6129
        %v6266 = vpack.c.b16 %v6132, %v6130
        %v6267 = vpack.c.b16 %v6135, %v6133
        %v6268 = vpack.c.b16 %v6136, %v6134
        %v6269 = vpack.c.b16 %v6139, %v6137
        %v6270 = vpack.c.b16 %v6140, %v6138
        %v6271 = vpack.c.b16 %v6143, %v6141
        %v6272 = vpack.c.b16 %v6144, %v6142
        %6401 = vmatpush.bf16.msra.mxu0 %v6159
        %6402 = vmatpush.bf16.msra.mxu0 %v6157
        %6403 = vmatpush.bf16.msra.mxu0 %v6155
        %6404 = vmatpush.bf16.msra.mxu0 %v6153
        %6405 = vmatpush.bf16.msra.mxu0 %v6151
        %6406 = vmatpush.bf16.msra.mxu0 %v6149
        %6407 = vmatpush.bf16.msra.mxu0 %v6147
        %6408 = vmatpush.bf16.msra.mxu0 %v6145
        %6409 = vmatmul.bf16.gmra.mxu0 %v5619
        %v6410 = vpop.f32.mrf.mxu0
        %v6411 = vadd.f32 %v5757, %v6410
        %v6412 = vpop.f32.mrf.mxu0
        %6413 = vdwg.mxu0
        %6414 = vmatpush.bf16.msra.mxu0 %v6175
        %6415 = vmatpush.bf16.msra.mxu0 %v6173
        %6416 = vmatpush.bf16.msra.mxu0 %v6171
        %6417 = vmatpush.bf16.msra.mxu0 %v6169
        %6418 = vmatpush.bf16.msra.mxu0 %v6167
        %6419 = vmatpush.bf16.msra.mxu0 %v6165
        %6420 = vmatpush.bf16.msra.mxu0 %v6163
        %6421 = vmatpush.bf16.msra.mxu0 %v6161
        %6422 = vmatmul.bf16.gmra.mxu0 %v5620
        %v6423 = vpop.f32.mrf.mxu0
        %v6424 = vadd.f32 %v6411, %v6423
        %v6425 = vpop.f32.mrf.mxu0
        %6426 = vdwg.mxu0
        %6427 = vmatpush.bf16.msra.mxu0 %v6191
        %6428 = vmatpush.bf16.msra.mxu0 %v6189
        %6429 = vmatpush.bf16.msra.mxu0 %v6187
        %6430 = vmatpush.bf16.msra.mxu0 %v6185
        %6431 = vmatpush.bf16.msra.mxu0 %v6183
        %6432 = vmatpush.bf16.msra.mxu0 %v6181
        %6433 = vmatpush.bf16.msra.mxu0 %v6179
        %6434 = vmatpush.bf16.msra.mxu0 %v6177
        %6435 = vmatmul.bf16.gmra.mxu0 %v5621
        %v6436 = vpop.f32.mrf.mxu0
        %v6437 = vadd.f32 %v6424, %v6436
        %v6438 = vpop.f32.mrf.mxu0
        %6439 = vdwg.mxu0
        %6440 = vmatpush.bf16.msra.mxu0 %v6207
        %6441 = vmatpush.bf16.msra.mxu0 %v6205
        %6442 = vmatpush.bf16.msra.mxu0 %v6203
        %6443 = vmatpush.bf16.msra.mxu0 %v6201
        %6444 = vmatpush.bf16.msra.mxu0 %v6199
        %6445 = vmatpush.bf16.msra.mxu0 %v6197
        %6446 = vmatpush.bf16.msra.mxu0 %v6195
        %6447 = vmatpush.bf16.msra.mxu0 %v6193
        %6448 = vmatmul.bf16.gmra.mxu0 %v5622
        %v6449 = vpop.f32.mrf.mxu0
        %v6450 = vadd.f32 %v6437, %v6449
        %v6451 = vpop.f32.mrf.mxu0
        %6452 = vdwg.mxu0
        %6453 = vmatpush.bf16.msra.mxu0 %v6223
        %6454 = vmatpush.bf16.msra.mxu0 %v6221
        %6455 = vmatpush.bf16.msra.mxu0 %v6219
        %6456 = vmatpush.bf16.msra.mxu0 %v6217
        %6457 = vmatpush.bf16.msra.mxu0 %v6215
        %6458 = vmatpush.bf16.msra.mxu0 %v6213
        %6459 = vmatpush.bf16.msra.mxu0 %v6211
        %6460 = vmatpush.bf16.msra.mxu0 %v6209
        %6461 = vmatmul.bf16.gmra.mxu0 %v5623
        %v6462 = vpop.f32.mrf.mxu0
        %v6463 = vadd.f32 %v6450, %v6462
        %v6464 = vpop.f32.mrf.mxu0
        %6465 = vdwg.mxu0
        %6466 = vmatpush.bf16.msra.mxu0 %v6239
        %6467 = vmatpush.bf16.msra.mxu0 %v6237
        %6468 = vmatpush.bf16.msra.mxu0 %v6235
        %6469 = vmatpush.bf16.msra.mxu0 %v6233
        %6470 = vmatpush.bf16.msra.mxu0 %v6231
        %6471 = vmatpush.bf16.msra.mxu0 %v6229
        %6472 = vmatpush.bf16.msra.mxu0 %v6227
        %6473 = vmatpush.bf16.msra.mxu0 %v6225
        %6474 = vmatmul.bf16.gmra.mxu0 %v5624
        %v6475 = vpop.f32.mrf.mxu0
        %v6476 = vadd.f32 %v6463, %v6475
        %v6477 = vpop.f32.mrf.mxu0
        %6478 = vdwg.mxu0
        %6479 = vmatpush.bf16.msra.mxu0 %v6255
        %6480 = vmatpush.bf16.msra.mxu0 %v6253
        %6481 = vmatpush.bf16.msra.mxu0 %v6251
        %6482 = vmatpush.bf16.msra.mxu0 %v6249
        %6483 = vmatpush.bf16.msra.mxu0 %v6247
        %6484 = vmatpush.bf16.msra.mxu0 %v6245
        %6485 = vmatpush.bf16.msra.mxu0 %v6243
        %6486 = vmatpush.bf16.msra.mxu0 %v6241
        %6487 = vmatmul.bf16.gmra.mxu0 %v5625
        %v6488 = vpop.f32.mrf.mxu0
        %v6489 = vadd.f32 %v6476, %v6488
        %v6490 = vpop.f32.mrf.mxu0
        %6491 = vdwg.mxu0
        %6492 = vmatpush.bf16.msra.mxu0 %v6271
        %6493 = vmatpush.bf16.msra.mxu0 %v6269
        %6494 = vmatpush.bf16.msra.mxu0 %v6267
        %6495 = vmatpush.bf16.msra.mxu0 %v6265
        %6496 = vmatpush.bf16.msra.mxu0 %v6263
        %6497 = vmatpush.bf16.msra.mxu0 %v6261
        %6498 = vmatpush.bf16.msra.mxu0 %v6259
        %6499 = vmatpush.bf16.msra.mxu0 %v6257
        %6500 = vmatmul.bf16.gmra.mxu0 %v5626
        %v6501 = vpop.f32.mrf.mxu0
        %v6502 = vadd.f32 %v6489, %v6501
        %v6503 = vpop.f32.mrf.mxu0
        %6504 = vdwg.mxu0
        %6505 = vmatpush.bf16.msra.mxu0 %v6160
        %6506 = vmatpush.bf16.msra.mxu0 %v6158
        %6507 = vmatpush.bf16.msra.mxu0 %v6156
        %6508 = vmatpush.bf16.msra.mxu0 %v6154
        %6509 = vmatpush.bf16.msra.mxu0 %v6152
        %6510 = vmatpush.bf16.msra.mxu0 %v6150
        %6511 = vmatpush.bf16.msra.mxu0 %v6148
        %6512 = vmatpush.bf16.msra.mxu0 %v6146
        %6513 = vmatmul.bf16.gmra.mxu0 %v5619
        %v6514 = vpop.f32.mrf.mxu0
        %v6515 = vadd.f32 %v5758, %v6514
        %v6516 = vpop.f32.mrf.mxu0
        %6517 = vdwg.mxu0
        %6518 = vmatpush.bf16.msra.mxu0 %v6176
        %6519 = vmatpush.bf16.msra.mxu0 %v6174
        %6520 = vmatpush.bf16.msra.mxu0 %v6172
        %6521 = vmatpush.bf16.msra.mxu0 %v6170
        %6522 = vmatpush.bf16.msra.mxu0 %v6168
        %6523 = vmatpush.bf16.msra.mxu0 %v6166
        %6524 = vmatpush.bf16.msra.mxu0 %v6164
        %6525 = vmatpush.bf16.msra.mxu0 %v6162
        %6526 = vmatmul.bf16.gmra.mxu0 %v5620
        %v6527 = vpop.f32.mrf.mxu0
        %v6528 = vadd.f32 %v6515, %v6527
        %v6529 = vpop.f32.mrf.mxu0
        %6530 = vdwg.mxu0
        %6531 = vmatpush.bf16.msra.mxu0 %v6192
        %6532 = vmatpush.bf16.msra.mxu0 %v6190
        %6533 = vmatpush.bf16.msra.mxu0 %v6188
        %6534 = vmatpush.bf16.msra.mxu0 %v6186
        %6535 = vmatpush.bf16.msra.mxu0 %v6184
        %6536 = vmatpush.bf16.msra.mxu0 %v6182
        %6537 = vmatpush.bf16.msra.mxu0 %v6180
        %6538 = vmatpush.bf16.msra.mxu0 %v6178
        %6539 = vmatmul.bf16.gmra.mxu0 %v5621
        %v6540 = vpop.f32.mrf.mxu0
        %v6541 = vadd.f32 %v6528, %v6540
        %v6542 = vpop.f32.mrf.mxu0
        %6543 = vdwg.mxu0
        %6544 = vmatpush.bf16.msra.mxu0 %v6208
        %6545 = vmatpush.bf16.msra.mxu0 %v6206
        %6546 = vmatpush.bf16.msra.mxu0 %v6204
        %6547 = vmatpush.bf16.msra.mxu0 %v6202
        %6548 = vmatpush.bf16.msra.mxu0 %v6200
        %6549 = vmatpush.bf16.msra.mxu0 %v6198
        %6550 = vmatpush.bf16.msra.mxu0 %v6196
        %6551 = vmatpush.bf16.msra.mxu0 %v6194
        %6552 = vmatmul.bf16.gmra.mxu0 %v5622
        %v6553 = vpop.f32.mrf.mxu0
        %v6554 = vadd.f32 %v6541, %v6553
        %v6555 = vpop.f32.mrf.mxu0
        %6556 = vdwg.mxu0
        %6557 = vmatpush.bf16.msra.mxu0 %v6224
        %6558 = vmatpush.bf16.msra.mxu0 %v6222
        %6559 = vmatpush.bf16.msra.mxu0 %v6220
        %6560 = vmatpush.bf16.msra.mxu0 %v6218
        %6561 = vmatpush.bf16.msra.mxu0 %v6216
        %6562 = vmatpush.bf16.msra.mxu0 %v6214
        %6563 = vmatpush.bf16.msra.mxu0 %v6212
        %6564 = vmatpush.bf16.msra.mxu0 %v6210
        %6565 = vmatmul.bf16.gmra.mxu0 %v5623
        %v6566 = vpop.f32.mrf.mxu0
        %v6567 = vadd.f32 %v6554, %v6566
        %v6568 = vpop.f32.mrf.mxu0
        %6569 = vdwg.mxu0
        %6570 = vmatpush.bf16.msra.mxu0 %v6240
        %6571 = vmatpush.bf16.msra.mxu0 %v6238
        %6572 = vmatpush.bf16.msra.mxu0 %v6236
        %6573 = vmatpush.bf16.msra.mxu0 %v6234
        %6574 = vmatpush.bf16.msra.mxu0 %v6232
        %6575 = vmatpush.bf16.msra.mxu0 %v6230
        %6576 = vmatpush.bf16.msra.mxu0 %v6228
        %6577 = vmatpush.bf16.msra.mxu0 %v6226
        %6578 = vmatmul.bf16.gmra.mxu0 %v5624
        %v6579 = vpop.f32.mrf.mxu0
        %v6580 = vadd.f32 %v6567, %v6579
        %v6581 = vpop.f32.mrf.mxu0
        %6582 = vdwg.mxu0
        %6583 = vmatpush.bf16.msra.mxu0 %v6256
        %6584 = vmatpush.bf16.msra.mxu0 %v6254
        %6585 = vmatpush.bf16.msra.mxu0 %v6252
        %6586 = vmatpush.bf16.msra.mxu0 %v6250
        %6587 = vmatpush.bf16.msra.mxu0 %v6248
        %6588 = vmatpush.bf16.msra.mxu0 %v6246
        %6589 = vmatpush.bf16.msra.mxu0 %v6244
        %6590 = vmatpush.bf16.msra.mxu0 %v6242
        %6591 = vmatmul.bf16.gmra.mxu0 %v5625
        %v6592 = vpop.f32.mrf.mxu0
        %v6593 = vadd.f32 %v6580, %v6592
        %v6594 = vpop.f32.mrf.mxu0
        %6595 = vdwg.mxu0
        %6596 = vmatpush.bf16.msra.mxu0 %v6272
        %6597 = vmatpush.bf16.msra.mxu0 %v6270
        %6598 = vmatpush.bf16.msra.mxu0 %v6268
        %6599 = vmatpush.bf16.msra.mxu0 %v6266
        %6600 = vmatpush.bf16.msra.mxu0 %v6264
        %6601 = vmatpush.bf16.msra.mxu0 %v6262
        %6602 = vmatpush.bf16.msra.mxu0 %v6260
        %6603 = vmatpush.bf16.msra.mxu0 %v6258
        %6604 = vmatmul.bf16.gmra.mxu0 %v5626
        %v6605 = vpop.f32.mrf.mxu0
        %v6606 = vadd.f32 %v6593, %v6605
        %v6607 = vpop.f32.mrf.mxu0
        %6608 = vdwg.mxu0
        %v6609 = vadd.f32 %v4613, %v6502
        %v6610 = vadd.f32 %v4614, %v6606
        %v6611 = vadd.f32 %v6609, %v6610
        %6612 = vadd.xlane.f32.xlu0 %v6611
        %v6613 = vpop.xlane.xlu0 %6612
        %v6614 = vmul.f32 %v6613, %v2820
        %v6615 = vsub.f32 %v6609, %v6614
        %v6616 = vsub.f32 %v6610, %v6614
        %v6617 = vmul.f32 %v6615, %v6615
        %v6618 = vmul.f32 %v6616, %v6616
        %v6619 = vadd.f32 %v6617, %v6618
        %6620 = vadd.xlane.f32.xlu0 %v6619
        %v6621 = vpop.xlane.xlu0 %6620
        %v6622 = vmul.f32 %v6621, %v2820
        %v6623 = vadd.f32 %v6622, 1e-05
        %v6624 = vrsqrt.pop %v6623
        %v6625 = vmul.f32 %v6624, %v6623
        %v6626 = vmul.f32 %v6625, %v6624
        %v6627 = vmul.f32 0.5, %v6626
        %v6628 = vsub.f32 1.5, %v6627
        %v6629 = vmul.f32 %v6624, %v6628
        %vm6630 = vweird.f32 %v6623
        %vm6631 = vweird.f32 %v6624
        %vm6632 = vmor %vm6630, %vm6631
        %v6633 = vsel %vm6632, %v6624, %v6629
        %v6634 = vmul.f32 %v6615, %v6633
        %v6635 = vmul.f32 %v6616, %v6633
        %v6636 = vperm.slane %v1321, 2
        %v6637 = vperm.slane %v1321, 6
        %v6640 = vperm.slane %v6636, 2
        %v6641 = vperm.slane %v6637, 2
        %v6642 = vmul.f32 %v6634, %v6640
        %v6643 = vmul.f32 %v6635, %v6641
        %v6644 = vperm.slane %v1322, 2
        %v6645 = vperm.slane %v1322, 6
        %v6648 = vperm.slane %v6644, 2
        %v6649 = vperm.slane %v6645, 2
        %v6650 = vadd.f32 %v6642, %v6648
        %v6651 = vadd.f32 %v6643, %v6649
        %6652 = vst [vmem:[#allocation2] sm:$0xff] %v6650
        %6653 = vst [vmem:[#allocation2 + $0x8] sm:$0xff] %v6651
        %p6654 = scmp.eq.s32.totalorder %s45, 1
        // Predicated region
        $region173: #{tpu_custom_call.1} parent=107 // pred_check
          %p6655 = pneg %p6654
        $region174: #{tpu_custom_call.1} parent=107 // pred_check_branch
          %6657 = sbr.rel (%p6655) target = $region176
        $region175: #{tpu_custom_call.1} parent=107 // pred_region
          %v6658 = vld [vmem:[%s20] sm:$0x3]
          %v6659 = vld [vmem:[%s21] sm:$0x3]
          %v6660 = vadd.f32 %v6650, %v6651
          %6661 = vadd.xlane.f32.xlu0 %v6660
          %v6662 = vpop.xlane.xlu0 %6661
          %v6663 = vmul.f32 %v6662, %v2820
          %v6664 = vsub.f32 %v6650, %v6663
          %v6665 = vsub.f32 %v6651, %v6663
          %v6666 = vmul.f32 %v6664, %v6664
          %v6667 = vmul.f32 %v6665, %v6665
          %v6668 = vadd.f32 %v6666, %v6667
          %6669 = vadd.xlane.f32.xlu0 %v6668
          %v6670 = vpop.xlane.xlu0 %6669
          %v6671 = vmul.f32 %v6670, %v2820
          %v6672 = vadd.f32 %v6671, 1e-05
          %v6673 = vrsqrt.pop %v6672
          %v6674 = vmul.f32 %v6673, %v6672
          %v6675 = vmul.f32 %v6674, %v6673
          %v6676 = vmul.f32 0.5, %v6675
          %v6677 = vsub.f32 1.5, %v6676
          %v6678 = vmul.f32 %v6673, %v6677
          %vm6679 = vweird.f32 %v6672
          %vm6680 = vweird.f32 %v6673
          %vm6681 = vmor %vm6679, %vm6680
          %v6682 = vsel %vm6681, %v6673, %v6678
          %v6683 = vmul.f32 %v6664, %v6682
          %v6684 = vmul.f32 %v6665, %v6682
          %v6686 = vperm.slane %v6658, 0
          %v6687 = vperm.slane %v6658, 1
          %v6690 = vmul.f32 %v6683, %v6686
          %v6691 = vmul.f32 %v6684, %v6687
          %v6693 = vperm.slane %v6659, 0
          %v6694 = vperm.slane %v6659, 1
          %v6697 = vadd.f32 %v6690, %v6693
          %v6698 = vadd.f32 %v6691, %v6694
          %6699 = vst [vmem:[%s1286] sm:$0xff] %v6697
          %6700 = vst [vmem:[%s1286 + $0x8] sm:$0xff] %v6698
        $region176: #{tpu_custom_call.1} parent=107 // pred_fallthru
          _
        %s6701 = sand.u32 %s617, 1
        %s6702 = scalar_lea.sflag [#allocation5], %s6701
        %s6703 = sand.u32 %s617, 1
        %s6704 = smul.addr %s6703, 16
        %s6705 = scalar_lea.vmem [#allocation21], %s6704
        // Predicated region
        $region177: #{tpu_custom_call.1} parent=107 // pred_check
          %p6706 = pneg %p627
        $region178: #{tpu_custom_call.1} parent=107 // pred_check_branch
          %6708 = sbr.rel (%p6706) target = $region180
        $region179: #{tpu_custom_call.1} parent=107 // pred_region
          %6710 = vsyncadd %s6702, 0
          %s6711 = smul.addr %s44, 2
          %s6712 = smul.addr %s6711, 8
          %s6713 = scalar_lea.hbm %s22, %s6712
          %s6715 = sshll.u32 %s6705, 4
          %s6716 = int_to_ptr.vmem [resolvable:$true] %s6715
          %s6717 = sshll.u32 %s6713, 4
          %s6718 = int_to_ptr.hbm [resolvable:$true] %s6717
          %6720 = dma.vmem_to_hbm [thread:$0]  %s6716, 256, %s6718, %s6702
        $region180: #{tpu_custom_call.1} parent=107 // pred_fallthru
          _
      $region108: #{tpu_custom_call.1} parent=5 // pred_fallthru
        _
      %p6721 = scmp.le.s32.totalorder 2, %s35
      // Predicated region
      $region181: #{tpu_custom_call.1} parent=5 // pred_check
        %p6722 = pneg %p6721
      $region182: #{tpu_custom_call.1} parent=5 // pred_check_branch
        %6724 = sbr.rel (%p6722) target = $region184
      $region183: #{tpu_custom_call.1} parent=5 // pred_region
        %s6725 = ssub.s32 %s35, 2
        // Predicated region
        $region185: #{tpu_custom_call.1} parent=183 // pred_check
          %p6726 = pneg %p633
        $region186: #{tpu_custom_call.1} parent=183 // pred_check_branch
          %6728 = sbr.rel (%p6726) target = $region188
        $region187: #{tpu_custom_call.1} parent=183 // pred_region
          %s6729 = sand.u32 %s618, 1
          %s6730 = scalar_lea.sflag [#allocation5], %s6729
          %s6731 = sand.u32 %s618, 1
          %s6732 = smul.addr %s6731, 16
          %s6733 = scalar_lea.vmem [#allocation21], %s6732
          %6735 = dma.done %s6730, 256
        $region188: #{tpu_custom_call.1} parent=183 // pred_fallthru
          _
      $region184: #{tpu_custom_call.1} parent=5 // pred_fallthru
        _
    $region6: #{tpu_custom_call.1} parent=1 // loop_footer
      %s39 = sadd.s32 1, %s35
    $region7: #{tpu_custom_call.1} parent=1 // loop_footer_branch
      %34 = sbr.rel target = $region3
    $region8: #{tpu_custom_call.1} parent=1 // loop_exit
      _
    %6736 = vsyncpa [#allocation4], 1
    %s6737 = scalar_lea.sflag [#allocation4], 1
    %6738 = vsyncpa %s6737, 1
    %6739 = vsyncpa [#allocation7], 1
    %6740 = vsyncpa [#allocation5], 1
    %s6741 = scalar_lea.sflag [#allocation5], 1
    %6742 = vsyncpa %s6741, 1

</llo_original>
